<compile_context>
chip_gen: v5e
topology: v5e:2x2
jax: 0.10.0
libtpu: 0.0.40
codegen_flags: <defaults>
</compile_context>

<pallas_src>
import numpy as np
import jax
import jax.numpy as jnp
from jax.experimental import pallas as pl
from jax.experimental.pallas import tpu as pltpu  # noqa: F401 (TPU backend)

# ------------------------------ configuration --------------------------------
DIM = 32                  # embedding dim C
INPUT_RES = (8, 8)        # (H, W)
DEPTH = 2                 # number of SwinTransformerBlocks (shift 0 / ws//2)
NUM_HEADS = 2
WINDOW_SIZE = 4
MLP_RATIO = 4.0
EPS = 1e-5                # nn.LayerNorm default eps
BATCH = 2

H_RES, W_RES = INPUT_RES
HEAD_DIM = DIM // NUM_HEADS
N_TOK = WINDOW_SIZE * WINDOW_SIZE
HIDDEN = int(DIM * MLP_RATIO)
L_TOK = H_RES * W_RES
BL = BATCH * L_TOK                                  # 128 rows
NW = (H_RES // WINDOW_SIZE) * (W_RES // WINDOW_SIZE)
B_WIN = BATCH * NW                                  # 8 windows

BLOCK_KEYS = ('g1', 'b1', 'wqkv', 'bqkv', 'rpb', 'wproj', 'bproj',
              'g2', 'b2', 'w1', 'b1f', 'w2', 'b2f')
NPB = len(BLOCK_KEYS)


# ------------------------------ in-kernel helpers -----------------------------
def _layernorm(x, gamma, beta):
    mu = jnp.mean(x, axis=-1, keepdims=True)
    var = jnp.mean((x - mu) ** 2, axis=-1, keepdims=True)
    return (x - mu) * jax.lax.rsqrt(var + EPS) * gamma + beta


def _gelu_exact(x):
    # TODO(synk): exact-erf GELU implemented with the Abramowitz-Stegun 7.1.26
    # rational approximation (|err| < 1.5e-7) so it lowers through exp on the
    # EUP without relying on a lax.erf Mosaic lowering rule.
    z = x * np.float32(1.0 / np.sqrt(2.0))
    az = jnp.abs(z)
    t = 1.0 / (1.0 + np.float32(0.3275911) * az)
    poly = ((((np.float32(1.061405429) * t + np.float32(-1.453152027)) * t
              + np.float32(1.421413741)) * t + np.float32(-0.284496736)) * t
            + np.float32(0.254829592)) * t
    erf_abs = 1.0 - poly * jnp.exp(-az * az)
    erf = jnp.where(z >= 0, erf_abs, -erf_abs)
    return 0.5 * x * (1.0 + erf)


def _swin_block(x, pf, pi, mask_b, g1, b1, wqkv, bqkv, rpb, wproj, bproj,
                g2, b2, w1, b1f, w2, b2f):
    """One SwinTransformerBlock, entirely on VMEM values. x: (BL, C)."""
    C = DIM
    hd = HEAD_DIM
    scale = np.float32(hd ** -0.5)

    shortcut = x
    xn = _layernorm(x, g1, b1)
    # cyclic shift + window partition == one static row permutation (tiny MXU matmul)
    xw = jnp.dot(pf, xn, preferred_element_type=jnp.float32)             # (BL, C)
    qkv = jnp.dot(xw, wqkv, preferred_element_type=jnp.float32) + bqkv   # (BL, 3C)

    proj_acc = None
    for h in range(NUM_HEADS):        # static tiny loop (NUM_HEADS=2)
        q = qkv[:, h * hd:(h + 1) * hd].reshape(B_WIN, N_TOK, hd) * scale
        k = qkv[:, C + h * hd:C + (h + 1) * hd].reshape(B_WIN, N_TOK, hd)
        v = qkv[:, 2 * C + h * hd:2 * C + (h + 1) * hd].reshape(B_WIN, N_TOK, hd)
        s = jnp.einsum('bnd,bmd->bnm', q, k, preferred_element_type=jnp.float32)
        s = s + rpb[h][None, :, :]
        if mask_b is not None:        # mask pre-broadcast to (B_, N, N) at setup
            s = s + mask_b
        p = jax.nn.softmax(s, axis=-1)
        ctx = jnp.einsum('bnm,bmd->bnd', p, v, preferred_element_type=jnp.float32)
        # per-head slice of the output projection -> no head concat / relayout
        contrib = jnp.dot(ctx.reshape(BL, hd), wproj[h * hd:(h + 1) * hd, :],
                          preferred_element_type=jnp.float32)
        proj_acc = contrib if proj_acc is None else proj_acc + contrib

    attn_w = proj_acc + bproj
    # window reverse + reverse cyclic shift == inverse permutation
    x = shortcut + jnp.dot(pi, attn_w, preferred_element_type=jnp.float32)

    xn2 = _layernorm(x, g2, b2)
    hid = jnp.dot(xn2, w1, preferred_element_type=jnp.float32) + b1f
    hid = _gelu_exact(hid)
    return x + jnp.dot(hid, w2, preferred_element_type=jnp.float32) + b2f


# ------------------------------ the fused kernel ------------------------------
def _rstb_kernel(*refs):
    (x_ref, mask_ref, p0_ref, p0i_ref, p1_ref, p1i_ref,
     s_ref, wc_ref, bc_ref) = refs[:9]
    blk_refs = refs[9:9 + DEPTH * NPB]
    o_ref = refs[9 + DEPTH * NPB]

    x_in = x_ref[...]                      # (BL, C) RSTB input (for final residual)
    mask_b = mask_ref[...]                 # (B_, N, N)
    x = x_in
    for bi in range(DEPTH):
        prm = [r[...] for r in blk_refs[bi * NPB:(bi + 1) * NPB]]
        shifted = (bi % 2 == 1)
        pf = (p1_ref if shifted else p0_ref)[...]
        pi = (p1i_ref if shifted else p0i_ref)[...]
        x = _swin_block(x, pf, pi, mask_b if shifted else None, *prm)

    # 3x3 conv (padding 1) as 9 accumulated tap matmuls + conv bias + RSTB residual
    out = x_in + bc_ref[...]
    for t in range(9):
        z = jnp.dot(x, wc_ref[t], preferred_element_type=jnp.float32)        # (BL, C)
        out = out + jnp.dot(s_ref[t], z, preferred_element_type=jnp.float32)  # shift+mask
    o_ref[...] = out


def rstb_forward(x, consts, blocks):
    B, Lx, C = x.shape
    flat = []
    for p in blocks:
        flat.extend(p[k] for k in BLOCK_KEYS)
    out2d = pl.pallas_call(
        _rstb_kernel,
        out_shape=jax.ShapeDtypeStruct((B * Lx, C), jnp.float32),
    )(x.reshape(B * Lx, C), consts['mask_b'], consts['p0'], consts['p0i'],
      consts['p1'], consts['p1i'], consts['smats'], consts['conv_wt'],
      consts['conv_b'], *flat)
    return out2d.reshape(B, Lx, C)


rstb_forward_jit = jax.jit(rstb_forward)


# ------------------------------ setup (numpy, one-off) ------------------------
def make_relative_position_index(ws):
    coords = np.stack(np.meshgrid(np.arange(ws), np.arange(ws), indexing="ij"))
    cf = coords.reshape(2, -1)
    rel = (cf[:, :, None] - cf[:, None, :]).transpose(1, 2, 0).copy()
    rel[:, :, 0] += ws - 1
    rel[:, :, 1] += ws - 1
    rel[:, :, 0] *= 2 * ws - 1
    return rel.sum(-1).astype(np.int32)          # (N, N)


def make_attn_mask_broadcast(B, H, W, ws, shift):
    img = np.zeros((H, W), np.float32)
    slices = (slice(0, -ws), slice(-ws, -shift), slice(-shift, None))
    cnt = 0
    for hs in slices:
        for wsl in slices:
            img[hs, wsl] = cnt
            cnt += 1
    mw = img.reshape(H // ws, ws, W // ws, ws).transpose(0, 2, 1, 3).reshape(-1, ws * ws)
    am = mw[:, None, :] - mw[:, :, None]                       # (nW, N, N)
    am = np.where(am != 0, -100.0, 0.0).astype(np.float32)
    nW, N, _ = am.shape
    return np.broadcast_to(am[None], (B, nW, N, N)).reshape(B * nW, N, N).copy()


def make_window_perm_matrices(B, H, W, ws, shift):
    idx = np.arange(B * H * W).reshape(B, H, W)
    if shift > 0:
        idx = np.roll(idx, (-shift, -shift), axis=(1, 2))
    perm = idx.reshape(B, H // ws, ws, W // ws, ws).transpose(0, 1, 3, 2, 4).reshape(-1)
    n = B * H * W
    P = np.zeros((n, n), np.float32)
    P[np.arange(n), perm] = 1.0
    return P, P.T.copy()                    # forward (roll+partition), inverse


def make_conv_shift_matrices(B, H, W):
    n = B * H * W
    S = np.zeros((9, n, n), np.float32)
    t = 0
    for kh in range(3):
        for kw in range(3):
            dy, dx = kh - 1, kw - 1
            for b in range(B):
                for y in range(H):
                    for x in range(W):
                        yy, xx = y + dy, x + dx
                        if 0 <= yy < H and 0 <= xx < W:
                            S[t, b * H * W + y * W + x, b * H * W + yy * W + xx] = 1.0
            t += 1
    return S


def init_params(key):
    keys = iter(jax.random.split(key, 64))

    def nrm(shape, std=0.02):
        return jax.random.normal(next(keys), shape, jnp.float32) * std

    rel_index = make_relative_position_index(WINDOW_SIZE).reshape(-1)
    blocks = []
    for _ in range(DEPTH):
        rpb_table = nrm(((2 * WINDOW_SIZE - 1) ** 2, NUM_HEADS))
        # pre-gather relative position bias to (nH, N, N) once, at init time
        rpb = rpb_table[rel_index].reshape(N_TOK, N_TOK, NUM_HEADS).transpose(2, 0, 1)
        blocks.append(dict(
            g1=jnp.ones((1, DIM), jnp.float32), b1=jnp.zeros((1, DIM), jnp.float32),
            wqkv=nrm((DIM, 3 * DIM)), bqkv=nrm((1, 3 * DIM)),
            rpb=rpb,
            wproj=nrm((DIM, DIM)), bproj=nrm((1, DIM)),
            g2=jnp.ones((1, DIM), jnp.float32), b2=jnp.zeros((1, DIM), jnp.float32),
            w1=nrm((DIM, HIDDEN)), b1f=nrm((1, HIDDEN)),
            w2=nrm((HIDDEN, DIM)), b2f=nrm((1, DIM)),
        ))
    conv_w = nrm((DIM, DIM, 3, 3))           # torch layout (Cout, Cin, kh, kw)
    conv_b = nrm((DIM,))
    return blocks, conv_w, conv_b


def build_constants(B, conv_w, conv_b):
    H, W = INPUT_RES
    shift = WINDOW_SIZE // 2
    p0, p0i = make_window_perm_matrices(B, H, W, WINDOW_SIZE, 0)
    p1, p1i = make_window_perm_matrices(B, H, W, WINDOW_SIZE, shift)
    mask_b = make_attn_mask_broadcast(B, H, W, WINDOW_SIZE, shift)
    smats = make_conv_shift_matrices(B, H, W)
    # per-tap conv weights (9, Cin, Cout) matching shift-matrix tap order
    conv_wt = jnp.transpose(conv_w, (2, 3, 1, 0)).reshape(9, DIM, DIM)
    return dict(p0=jnp.asarray(p0), p0i=jnp.asarray(p0i),
                p1=jnp.asarray(p1), p1i=jnp.asarray(p1i),
                mask_b=jnp.asarray(mask_b), smats=jnp.asarray(smats),
                conv_wt=conv_wt, conv_b=conv_b.reshape(1, DIM))


# ------------------------------ main ------------------------------------------
if __name__ == "__main__":
    key = jax.random.PRNGKey(0)
    kx, kp = jax.random.split(key)
    x = jax.random.normal(kx, (BATCH, L_TOK, DIM), jnp.float32)

    blocks, conv_w, conv_b = init_params(kp)
    consts = build_constants(BATCH, conv_w, conv_b)

    out = rstb_forward_jit(x, consts, blocks)
    out = jax.block_until_ready(out)
    assert out.shape == x.shape and out.dtype == jnp.float32
    print("KERNEL_OK")
</pallas_src>

<mosaic_0001>
module attributes {stable_mosaic.version = 11 : i64} {
  func.func @_rstb_kernel(%arg0: memref<128x32xf32, #tpu.memory_space<vmem>>, %arg1: memref<8x16x16xf32, #tpu.memory_space<vmem>>, %arg2: memref<128x128xf32, #tpu.memory_space<vmem>>, %arg3: memref<128x128xf32, #tpu.memory_space<vmem>>, %arg4: memref<128x128xf32, #tpu.memory_space<vmem>>, %arg5: memref<128x128xf32, #tpu.memory_space<vmem>>, %arg6: memref<9x128x128xf32, #tpu.memory_space<vmem>>, %arg7: memref<9x32x32xf32, #tpu.memory_space<vmem>>, %arg8: memref<1x32xf32, #tpu.memory_space<vmem>>, %arg9: memref<1x32xf32, #tpu.memory_space<vmem>>, %arg10: memref<1x32xf32, #tpu.memory_space<vmem>>, %arg11: memref<32x96xf32, #tpu.memory_space<vmem>>, %arg12: memref<1x96xf32, #tpu.memory_space<vmem>>, %arg13: memref<2x16x16xf32, #tpu.memory_space<vmem>>, %arg14: memref<32x32xf32, #tpu.memory_space<vmem>>, %arg15: memref<1x32xf32, #tpu.memory_space<vmem>>, %arg16: memref<1x32xf32, #tpu.memory_space<vmem>>, %arg17: memref<1x32xf32, #tpu.memory_space<vmem>>, %arg18: memref<32x128xf32, #tpu.memory_space<vmem>>, %arg19: memref<1x128xf32, #tpu.memory_space<vmem>>, %arg20: memref<128x32xf32, #tpu.memory_space<vmem>>, %arg21: memref<1x32xf32, #tpu.memory_space<vmem>>, %arg22: memref<1x32xf32, #tpu.memory_space<vmem>>, %arg23: memref<1x32xf32, #tpu.memory_space<vmem>>, %arg24: memref<32x96xf32, #tpu.memory_space<vmem>>, %arg25: memref<1x96xf32, #tpu.memory_space<vmem>>, %arg26: memref<2x16x16xf32, #tpu.memory_space<vmem>>, %arg27: memref<32x32xf32, #tpu.memory_space<vmem>>, %arg28: memref<1x32xf32, #tpu.memory_space<vmem>>, %arg29: memref<1x32xf32, #tpu.memory_space<vmem>>, %arg30: memref<1x32xf32, #tpu.memory_space<vmem>>, %arg31: memref<32x128xf32, #tpu.memory_space<vmem>>, %arg32: memref<1x128xf32, #tpu.memory_space<vmem>>, %arg33: memref<128x32xf32, #tpu.memory_space<vmem>>, %arg34: memref<1x32xf32, #tpu.memory_space<vmem>>, %arg35: memref<128x32xf32, #tpu.memory_space<vmem>>) attributes {dimension_semantics = [], scalar_prefetch = 0 : i64, scratch_operands = 0 : i64, tpu.core_type = #tpu.core_type<tc>} {
    %c0 = arith.constant 0 : index
    %c0_0 = arith.constant 0 : index
    %0 = vector.load %arg0[%c0, %c0_0] : memref<128x32xf32, #tpu.memory_space<vmem>>, vector<128x32xf32>
    %c0_1 = arith.constant 0 : index
    %c0_2 = arith.constant 0 : index
    %c0_3 = arith.constant 0 : index
    %1 = vector.load %arg1[%c0_1, %c0_2, %c0_3] : memref<8x16x16xf32, #tpu.memory_space<vmem>>, vector<8x16x16xf32>
    %c0_4 = arith.constant 0 : index
    %c0_5 = arith.constant 0 : index
    %2 = vector.load %arg9[%c0_4, %c0_5] : memref<1x32xf32, #tpu.memory_space<vmem>>, vector<1x32xf32>
    %c0_6 = arith.constant 0 : index
    %c0_7 = arith.constant 0 : index
    %3 = vector.load %arg10[%c0_6, %c0_7] : memref<1x32xf32, #tpu.memory_space<vmem>>, vector<1x32xf32>
    %c0_8 = arith.constant 0 : index
    %c0_9 = arith.constant 0 : index
    %4 = vector.load %arg11[%c0_8, %c0_9] : memref<32x96xf32, #tpu.memory_space<vmem>>, vector<32x96xf32>
    %c0_10 = arith.constant 0 : index
    %c0_11 = arith.constant 0 : index
    %5 = vector.load %arg12[%c0_10, %c0_11] : memref<1x96xf32, #tpu.memory_space<vmem>>, vector<1x96xf32>
    %c0_12 = arith.constant 0 : index
    %c0_13 = arith.constant 0 : index
    %c0_14 = arith.constant 0 : index
    %6 = vector.load %arg13[%c0_12, %c0_13, %c0_14] : memref<2x16x16xf32, #tpu.memory_space<vmem>>, vector<2x16x16xf32>
    %c0_15 = arith.constant 0 : index
    %c0_16 = arith.constant 0 : index
    %7 = vector.load %arg14[%c0_15, %c0_16] : memref<32x32xf32, #tpu.memory_space<vmem>>, vector<32x32xf32>
    %c0_17 = arith.constant 0 : index
    %c0_18 = arith.constant 0 : index
    %8 = vector.load %arg15[%c0_17, %c0_18] : memref<1x32xf32, #tpu.memory_space<vmem>>, vector<1x32xf32>
    %c0_19 = arith.constant 0 : index
    %c0_20 = arith.constant 0 : index
    %9 = vector.load %arg16[%c0_19, %c0_20] : memref<1x32xf32, #tpu.memory_space<vmem>>, vector<1x32xf32>
    %c0_21 = arith.constant 0 : index
    %c0_22 = arith.constant 0 : index
    %10 = vector.load %arg17[%c0_21, %c0_22] : memref<1x32xf32, #tpu.memory_space<vmem>>, vector<1x32xf32>
    %c0_23 = arith.constant 0 : index
    %c0_24 = arith.constant 0 : index
    %11 = vector.load %arg18[%c0_23, %c0_24] : memref<32x128xf32, #tpu.memory_space<vmem>>, vector<32x128xf32>
    %c0_25 = arith.constant 0 : index
    %c0_26 = arith.constant 0 : index
    %12 = vector.load %arg19[%c0_25, %c0_26] : memref<1x128xf32, #tpu.memory_space<vmem>>, vector<1x128xf32>
    %c0_27 = arith.constant 0 : index
    %c0_28 = arith.constant 0 : index
    %13 = vector.load %arg20[%c0_27, %c0_28] : memref<128x32xf32, #tpu.memory_space<vmem>>, vector<128x32xf32>
    %c0_29 = arith.constant 0 : index
    %c0_30 = arith.constant 0 : index
    %14 = vector.load %arg21[%c0_29, %c0_30] : memref<1x32xf32, #tpu.memory_space<vmem>>, vector<1x32xf32>
    %c0_31 = arith.constant 0 : index
    %c0_32 = arith.constant 0 : index
    %15 = vector.load %arg2[%c0_31, %c0_32] : memref<128x128xf32, #tpu.memory_space<vmem>>, vector<128x128xf32>
    %c0_33 = arith.constant 0 : index
    %c0_34 = arith.constant 0 : index
    %16 = vector.load %arg3[%c0_33, %c0_34] : memref<128x128xf32, #tpu.memory_space<vmem>>, vector<128x128xf32>
    %cst = arith.constant dense<0.000000e+00> : vector<128xf32>
    %17 = vector.multi_reduction <add>, %0, %cst [1] : vector<128x32xf32> to vector<128xf32>
    %18 = vector.shape_cast %17 : vector<128xf32> to vector<128x1xf32>
    %cst_35 = arith.constant 3.200000e+01 : f32
    %19 = vector.broadcast %cst_35 : f32 to vector<128x1xf32>
    %20 = arith.divf %18, %19 : vector<128x1xf32>
    %21 = vector.broadcast %20 : vector<128x1xf32> to vector<128x32xf32>
    %22 = arith.subf %0, %21 : vector<128x32xf32>
    %23 = arith.mulf %22, %22 : vector<128x32xf32>
    %cst_36 = arith.constant dense<0.000000e+00> : vector<128xf32>
    %24 = vector.multi_reduction <add>, %23, %cst_36 [1] : vector<128x32xf32> to vector<128xf32>
    %25 = vector.shape_cast %24 : vector<128xf32> to vector<128x1xf32>
    %cst_37 = arith.constant 3.200000e+01 : f32
    %26 = vector.broadcast %cst_37 : f32 to vector<128x1xf32>
    %27 = arith.divf %25, %26 : vector<128x1xf32>
    %28 = vector.broadcast %20 : vector<128x1xf32> to vector<128x32xf32>
    %29 = arith.subf %0, %28 : vector<128x32xf32>
    %cst_38 = arith.constant 9.99999974E-6 : f32
    %30 = vector.broadcast %cst_38 : f32 to vector<128x1xf32>
    %31 = arith.addf %27, %30 : vector<128x1xf32>
    %32 = math.rsqrt %31 : vector<128x1xf32>
    %33 = vector.broadcast %32 : vector<128x1xf32> to vector<128x32xf32>
    %34 = arith.mulf %29, %33 : vector<128x32xf32>
    %35 = vector.broadcast %2 : vector<1x32xf32> to vector<128x32xf32>
    %36 = arith.mulf %34, %35 : vector<128x32xf32>
    %37 = vector.broadcast %3 : vector<1x32xf32> to vector<128x32xf32>
    %38 = arith.addf %36, %37 : vector<128x32xf32>
    %cst_39 = arith.constant dense<0.000000e+00> : vector<128x32xf32>
    %39 = tpu.matmul %15, %38, %cst_39 {dimension_numbers = #tpu.dot_dimension_numbers<[1], [0], [0], [1], [0, 0, 1, 1], [], []>} : vector<128x128xf32>, vector<128x32xf32>, vector<128x32xf32> -> vector<128x32xf32>
    %cst_40 = arith.constant dense<0.000000e+00> : vector<128x96xf32>
    %40 = tpu.matmul %39, %4, %cst_40 {dimension_numbers = #tpu.dot_dimension_numbers<[1], [0], [0], [1], [0, 0, 1, 1], [], []>} : vector<128x32xf32>, vector<32x96xf32>, vector<128x96xf32> -> vector<128x96xf32>
    %41 = vector.broadcast %5 : vector<1x96xf32> to vector<128x96xf32>
    %42 = arith.addf %40, %41 : vector<128x96xf32>
    %43 = vector.extract_strided_slice %42 {offsets = [0, 0], sizes = [128, 16], strides = [1, 1]} : vector<128x96xf32> to vector<128x16xf32>
    %44 = vector.shape_cast %43 : vector<128x16xf32> to vector<8x16x16xf32>
    %cst_41 = arith.constant 2.500000e-01 : f32
    %45 = vector.broadcast %cst_41 : f32 to vector<8x16x16xf32>
    %46 = arith.mulf %44, %45 : vector<8x16x16xf32>
    %47 = vector.extract_strided_slice %42 {offsets = [0, 32], sizes = [128, 16], strides = [1, 1]} : vector<128x96xf32> to vector<128x16xf32>
    %48 = vector.shape_cast %47 : vector<128x16xf32> to vector<8x16x16xf32>
    %49 = vector.extract_strided_slice %42 {offsets = [0, 64], sizes = [128, 16], strides = [1, 1]} : vector<128x96xf32> to vector<128x16xf32>
    %50 = vector.shape_cast %49 : vector<128x16xf32> to vector<8x16x16xf32>
    "tpu.trace_start"() <{level = 10 : i32, message = "bnd,bmd->bnm"}> : () -> ()
    %cst_42 = arith.constant dense<0.000000e+00> : vector<8x16x16xf32>
    %51 = tpu.matmul %46, %48, %cst_42 {dimension_numbers = #tpu.dot_dimension_numbers<[2], [2], [1], [1], [0, 0, 0, 1, 1, 1], [0], [0]>} : vector<8x16x16xf32>, vector<8x16x16xf32>, vector<8x16x16xf32> -> vector<8x16x16xf32>
    "tpu.trace_stop"() : () -> ()
    %52 = vector.extract_strided_slice %6 {offsets = [0, 0, 0], sizes = [1, 16, 16], strides = [1, 1, 1]} : vector<2x16x16xf32> to vector<1x16x16xf32>
    %53 = vector.shape_cast %52 : vector<1x16x16xf32> to vector<16x16xf32>
    %54 = vector.shape_cast %53 : vector<16x16xf32> to vector<1x16x16xf32>
    %55 = vector.broadcast %54 : vector<1x16x16xf32> to vector<8x16x16xf32>
    %56 = arith.addf %51, %55 : vector<8x16x16xf32>
    %cst_43 = arith.constant dense<0xFF800000> : vector<8x16xf32>
    %57 = vector.multi_reduction <maximumf>, %56, %cst_43 [2] : vector<8x16x16xf32> to vector<8x16xf32>
    %cst_44 = arith.constant 0xFF800000 : f32
    %58 = vector.broadcast %cst_44 : f32 to vector<8x16xf32>
    %59 = arith.maximumf %58, %57 : vector<8x16xf32>
    %60 = vector.shape_cast %59 : vector<8x16xf32> to vector<8x16x1xf32>
    %61 = vector.broadcast %60 : vector<8x16x1xf32> to vector<8x16x16xf32>
    %62 = arith.subf %56, %61 : vector<8x16x16xf32>
    %63 = math.exp %62 : vector<8x16x16xf32>
    %cst_45 = arith.constant dense<0.000000e+00> : vector<8x16xf32>
    %64 = vector.multi_reduction <add>, %63, %cst_45 [2] : vector<8x16x16xf32> to vector<8x16xf32>
    %65 = vector.shape_cast %64 : vector<8x16xf32> to vector<8x16x1xf32>
    %66 = vector.broadcast %65 : vector<8x16x1xf32> to vector<8x16x16xf32>
    %67 = arith.divf %63, %66 : vector<8x16x16xf32>
    "tpu.trace_start"() <{level = 10 : i32, message = "bnm,bmd->bnd"}> : () -> ()
    %cst_46 = arith.constant dense<0.000000e+00> : vector<8x16x16xf32>
    %68 = tpu.matmul %67, %50, %cst_46 {dimension_numbers = #tpu.dot_dimension_numbers<[2], [1], [1], [2], [0, 0, 0, 1, 1, 2], [0], [0]>} : vector<8x16x16xf32>, vector<8x16x16xf32>, vector<8x16x16xf32> -> vector<8x16x16xf32>
    "tpu.trace_stop"() : () -> ()
    %69 = vector.shape_cast %68 : vector<8x16x16xf32> to vector<128x16xf32>
    %70 = vector.extract_strided_slice %7 {offsets = [0, 0], sizes = [16, 32], strides = [1, 1]} : vector<32x32xf32> to vector<16x32xf32>
    %cst_47 = arith.constant dense<0.000000e+00> : vector<128x32xf32>
    %71 = tpu.matmul %69, %70, %cst_47 {dimension_numbers = #tpu.dot_dimension_numbers<[1], [0], [0], [1], [0, 0, 1, 1], [], []>} : vector<128x16xf32>, vector<16x32xf32>, vector<128x32xf32> -> vector<128x32xf32>
    %72 = vector.extract_strided_slice %42 {offsets = [0, 16], sizes = [128, 16], strides = [1, 1]} : vector<128x96xf32> to vector<128x16xf32>
    %73 = vector.shape_cast %72 : vector<128x16xf32> to vector<8x16x16xf32>
    %cst_48 = arith.constant 2.500000e-01 : f32
    %74 = vector.broadcast %cst_48 : f32 to vector<8x16x16xf32>
    %75 = arith.mulf %73, %74 : vector<8x16x16xf32>
    %76 = vector.extract_strided_slice %42 {offsets = [0, 48], sizes = [128, 16], strides = [1, 1]} : vector<128x96xf32> to vector<128x16xf32>
    %77 = vector.shape_cast %76 : vector<128x16xf32> to vector<8x16x16xf32>
    %78 = vector.extract_strided_slice %42 {offsets = [0, 80], sizes = [128, 16], strides = [1, 1]} : vector<128x96xf32> to vector<128x16xf32>
    %79 = vector.shape_cast %78 : vector<128x16xf32> to vector<8x16x16xf32>
    "tpu.trace_start"() <{level = 10 : i32, message = "bnd,bmd->bnm"}> : () -> ()
    %cst_49 = arith.constant dense<0.000000e+00> : vector<8x16x16xf32>
    %80 = tpu.matmul %75, %77, %cst_49 {dimension_numbers = #tpu.dot_dimension_numbers<[2], [2], [1], [1], [0, 0, 0, 1, 1, 1], [0], [0]>} : vector<8x16x16xf32>, vector<8x16x16xf32>, vector<8x16x16xf32> -> vector<8x16x16xf32>
    "tpu.trace_stop"() : () -> ()
    %81 = vector.extract_strided_slice %6 {offsets = [1, 0, 0], sizes = [1, 16, 16], strides = [1, 1, 1]} : vector<2x16x16xf32> to vector<1x16x16xf32>
    %82 = vector.shape_cast %81 : vector<1x16x16xf32> to vector<16x16xf32>
    %83 = vector.shape_cast %82 : vector<16x16xf32> to vector<1x16x16xf32>
    %84 = vector.broadcast %83 : vector<1x16x16xf32> to vector<8x16x16xf32>
    %85 = arith.addf %80, %84 : vector<8x16x16xf32>
    %cst_50 = arith.constant dense<0xFF800000> : vector<8x16xf32>
    %86 = vector.multi_reduction <maximumf>, %85, %cst_50 [2] : vector<8x16x16xf32> to vector<8x16xf32>
    %cst_51 = arith.constant 0xFF800000 : f32
    %87 = vector.broadcast %cst_51 : f32 to vector<8x16xf32>
    %88 = arith.maximumf %87, %86 : vector<8x16xf32>
    %89 = vector.shape_cast %88 : vector<8x16xf32> to vector<8x16x1xf32>
    %90 = vector.broadcast %89 : vector<8x16x1xf32> to vector<8x16x16xf32>
    %91 = arith.subf %85, %90 : vector<8x16x16xf32>
    %92 = math.exp %91 : vector<8x16x16xf32>
    %cst_52 = arith.constant dense<0.000000e+00> : vector<8x16xf32>
    %93 = vector.multi_reduction <add>, %92, %cst_52 [2] : vector<8x16x16xf32> to vector<8x16xf32>
    %94 = vector.shape_cast %93 : vector<8x16xf32> to vector<8x16x1xf32>
    %95 = vector.broadcast %94 : vector<8x16x1xf32> to vector<8x16x16xf32>
    %96 = arith.divf %92, %95 : vector<8x16x16xf32>
    "tpu.trace_start"() <{level = 10 : i32, message = "bnm,bmd->bnd"}> : () -> ()
    %cst_53 = arith.constant dense<0.000000e+00> : vector<8x16x16xf32>
    %97 = tpu.matmul %96, %79, %cst_53 {dimension_numbers = #tpu.dot_dimension_numbers<[2], [1], [1], [2], [0, 0, 0, 1, 1, 2], [0], [0]>} : vector<8x16x16xf32>, vector<8x16x16xf32>, vector<8x16x16xf32> -> vector<8x16x16xf32>
    "tpu.trace_stop"() : () -> ()
    %98 = vector.shape_cast %97 : vector<8x16x16xf32> to vector<128x16xf32>
    %99 = vector.extract_strided_slice %7 {offsets = [16, 0], sizes = [16, 32], strides = [1, 1]} : vector<32x32xf32> to vector<16x32xf32>
    %cst_54 = arith.constant dense<0.000000e+00> : vector<128x32xf32>
    %100 = tpu.matmul %98, %99, %cst_54 {dimension_numbers = #tpu.dot_dimension_numbers<[1], [0], [0], [1], [0, 0, 1, 1], [], []>} : vector<128x16xf32>, vector<16x32xf32>, vector<128x32xf32> -> vector<128x32xf32>
    %101 = arith.addf %71, %100 : vector<128x32xf32>
    %102 = vector.broadcast %8 : vector<1x32xf32> to vector<128x32xf32>
    %103 = arith.addf %101, %102 : vector<128x32xf32>
    %cst_55 = arith.constant dense<0.000000e+00> : vector<128x32xf32>
    %104 = tpu.matmul %16, %103, %cst_55 {dimension_numbers = #tpu.dot_dimension_numbers<[1], [0], [0], [1], [0, 0, 1, 1], [], []>} : vector<128x128xf32>, vector<128x32xf32>, vector<128x32xf32> -> vector<128x32xf32>
    %105 = arith.addf %0, %104 : vector<128x32xf32>
    %cst_56 = arith.constant dense<0.000000e+00> : vector<128xf32>
    %106 = vector.multi_reduction <add>, %105, %cst_56 [1] : vector<128x32xf32> to vector<128xf32>
    %107 = vector.shape_cast %106 : vector<128xf32> to vector<128x1xf32>
    %cst_57 = arith.constant 3.200000e+01 : f32
    %108 = vector.broadcast %cst_57 : f32 to vector<128x1xf32>
    %109 = arith.divf %107, %108 : vector<128x1xf32>
    %110 = vector.broadcast %109 : vector<128x1xf32> to vector<128x32xf32>
    %111 = arith.subf %105, %110 : vector<128x32xf32>
    %112 = arith.mulf %111, %111 : vector<128x32xf32>
    %cst_58 = arith.constant dense<0.000000e+00> : vector<128xf32>
    %113 = vector.multi_reduction <add>, %112, %cst_58 [1] : vector<128x32xf32> to vector<128xf32>
    %114 = vector.shape_cast %113 : vector<128xf32> to vector<128x1xf32>
    %cst_59 = arith.constant 3.200000e+01 : f32
    %115 = vector.broadcast %cst_59 : f32 to vector<128x1xf32>
    %116 = arith.divf %114, %115 : vector<128x1xf32>
    %117 = vector.broadcast %109 : vector<128x1xf32> to vector<128x32xf32>
    %118 = arith.subf %105, %117 : vector<128x32xf32>
    %cst_60 = arith.constant 9.99999974E-6 : f32
    %119 = vector.broadcast %cst_60 : f32 to vector<128x1xf32>
    %120 = arith.addf %116, %119 : vector<128x1xf32>
    %121 = math.rsqrt %120 : vector<128x1xf32>
    %122 = vector.broadcast %121 : vector<128x1xf32> to vector<128x32xf32>
    %123 = arith.mulf %118, %122 : vector<128x32xf32>
    %124 = vector.broadcast %9 : vector<1x32xf32> to vector<128x32xf32>
    %125 = arith.mulf %123, %124 : vector<128x32xf32>
    %126 = vector.broadcast %10 : vector<1x32xf32> to vector<128x32xf32>
    %127 = arith.addf %125, %126 : vector<128x32xf32>
    %cst_61 = arith.constant dense<0.000000e+00> : vector<128x128xf32>
    %128 = tpu.matmul %127, %11, %cst_61 {dimension_numbers = #tpu.dot_dimension_numbers<[1], [0], [0], [1], [0, 0, 1, 1], [], []>} : vector<128x32xf32>, vector<32x128xf32>, vector<128x128xf32> -> vector<128x128xf32>
    %129 = vector.broadcast %12 : vector<1x128xf32> to vector<128x128xf32>
    %130 = arith.addf %128, %129 : vector<128x128xf32>
    %cst_62 = arith.constant 0.707106769 : f32
    %131 = vector.broadcast %cst_62 : f32 to vector<128x128xf32>
    %132 = arith.mulf %130, %131 : vector<128x128xf32>
    %133 = math.absf %132 : vector<128x128xf32>
    %cst_63 = arith.constant 0.327591091 : f32
    %134 = vector.broadcast %cst_63 : f32 to vector<128x128xf32>
    %135 = arith.mulf %134, %133 : vector<128x128xf32>
    %cst_64 = arith.constant 1.000000e+00 : f32
    %136 = vector.broadcast %cst_64 : f32 to vector<128x128xf32>
    %137 = arith.addf %136, %135 : vector<128x128xf32>
    %cst_65 = arith.constant 1.000000e+00 : f32
    %138 = vector.broadcast %cst_65 : f32 to vector<128x128xf32>
    %139 = arith.divf %138, %137 : vector<128x128xf32>
    %cst_66 = arith.constant 1.06140542 : f32
    %140 = vector.broadcast %cst_66 : f32 to vector<128x128xf32>
    %141 = arith.mulf %140, %139 : vector<128x128xf32>
    %cst_67 = arith.constant -1.45315206 : f32
    %142 = vector.broadcast %cst_67 : f32 to vector<128x128xf32>
    %143 = arith.addf %141, %142 : vector<128x128xf32>
    %144 = arith.mulf %143, %139 : vector<128x128xf32>
    %cst_68 = arith.constant 1.42141378 : f32
    %145 = vector.broadcast %cst_68 : f32 to vector<128x128xf32>
    %146 = arith.addf %144, %145 : vector<128x128xf32>
    %147 = arith.mulf %146, %139 : vector<128x128xf32>
    %cst_69 = arith.constant -0.284496725 : f32
    %148 = vector.broadcast %cst_69 : f32 to vector<128x128xf32>
    %149 = arith.addf %147, %148 : vector<128x128xf32>
    %150 = arith.mulf %149, %139 : vector<128x128xf32>
    %cst_70 = arith.constant 0.254829586 : f32
    %151 = vector.broadcast %cst_70 : f32 to vector<128x128xf32>
    %152 = arith.addf %150, %151 : vector<128x128xf32>
    %153 = arith.mulf %152, %139 : vector<128x128xf32>
    %cst_71 = arith.constant 0.000000e+00 : f32
    %154 = vector.broadcast %cst_71 : f32 to vector<128x128xf32>
    %155 = arith.subf %154, %133 : vector<128x128xf32>
    %156 = arith.mulf %155, %133 : vector<128x128xf32>
    %157 = math.exp %156 : vector<128x128xf32>
    %158 = arith.mulf %153, %157 : vector<128x128xf32>
    %cst_72 = arith.constant 1.000000e+00 : f32
    %159 = vector.broadcast %cst_72 : f32 to vector<128x128xf32>
    %160 = arith.subf %159, %158 : vector<128x128xf32>
    %cst_73 = arith.constant 0.000000e+00 : f32
    %161 = vector.broadcast %cst_73 : f32 to vector<128x128xf32>
    %162 = arith.cmpf oge, %132, %161 : vector<128x128xf32>
    %cst_74 = arith.constant 0.000000e+00 : f32
    %163 = vector.broadcast %cst_74 : f32 to vector<128x128xf32>
    %164 = arith.subf %163, %160 : vector<128x128xf32>
    %165 = arith.select %162, %160, %164 : vector<128x128xi1>, vector<128x128xf32>
    %cst_75 = arith.constant 5.000000e-01 : f32
    %166 = vector.broadcast %cst_75 : f32 to vector<128x128xf32>
    %167 = arith.mulf %166, %130 : vector<128x128xf32>
    %cst_76 = arith.constant 1.000000e+00 : f32
    %168 = vector.broadcast %cst_76 : f32 to vector<128x128xf32>
    %169 = arith.addf %168, %165 : vector<128x128xf32>
    %170 = arith.mulf %167, %169 : vector<128x128xf32>
    %cst_77 = arith.constant dense<0.000000e+00> : vector<128x32xf32>
    %171 = tpu.matmul %170, %13, %cst_77 {dimension_numbers = #tpu.dot_dimension_numbers<[1], [0], [0], [1], [0, 0, 1, 1], [], []>} : vector<128x128xf32>, vector<128x32xf32>, vector<128x32xf32> -> vector<128x32xf32>
    %172 = arith.addf %105, %171 : vector<128x32xf32>
    %173 = vector.broadcast %14 : vector<1x32xf32> to vector<128x32xf32>
    %174 = arith.addf %172, %173 : vector<128x32xf32>
    %c0_78 = arith.constant 0 : index
    %c0_79 = arith.constant 0 : index
    %175 = vector.load %arg22[%c0_78, %c0_79] : memref<1x32xf32, #tpu.memory_space<vmem>>, vector<1x32xf32>
    %c0_80 = arith.constant 0 : index
    %c0_81 = arith.constant 0 : index
    %176 = vector.load %arg23[%c0_80, %c0_81] : memref<1x32xf32, #tpu.memory_space<vmem>>, vector<1x32xf32>
    %c0_82 = arith.constant 0 : index
    %c0_83 = arith.constant 0 : index
    %177 = vector.load %arg24[%c0_82, %c0_83] : memref<32x96xf32, #tpu.memory_space<vmem>>, vector<32x96xf32>
    %c0_84 = arith.constant 0 : index
    %c0_85 = arith.constant 0 : index
    %178 = vector.load %arg25[%c0_84, %c0_85] : memref<1x96xf32, #tpu.memory_space<vmem>>, vector<1x96xf32>
    %c0_86 = arith.constant 0 : index
    %c0_87 = arith.constant 0 : index
    %c0_88 = arith.constant 0 : index
    %179 = vector.load %arg26[%c0_86, %c0_87, %c0_88] : memref<2x16x16xf32, #tpu.memory_space<vmem>>, vector<2x16x16xf32>
    %c0_89 = arith.constant 0 : index
    %c0_90 = arith.constant 0 : index
    %180 = vector.load %arg27[%c0_89, %c0_90] : memref<32x32xf32, #tpu.memory_space<vmem>>, vector<32x32xf32>
    %c0_91 = arith.constant 0 : index
    %c0_92 = arith.constant 0 : index
    %181 = vector.load %arg28[%c0_91, %c0_92] : memref<1x32xf32, #tpu.memory_space<vmem>>, vector<1x32xf32>
    %c0_93 = arith.constant 0 : index
    %c0_94 = arith.constant 0 : index
    %182 = vector.load %arg29[%c0_93, %c0_94] : memref<1x32xf32, #tpu.memory_space<vmem>>, vector<1x32xf32>
    %c0_95 = arith.constant 0 : index
    %c0_96 = arith.constant 0 : index
    %183 = vector.load %arg30[%c0_95, %c0_96] : memref<1x32xf32, #tpu.memory_space<vmem>>, vector<1x32xf32>
    %c0_97 = arith.constant 0 : index
    %c0_98 = arith.constant 0 : index
    %184 = vector.load %arg31[%c0_97, %c0_98] : memref<32x128xf32, #tpu.memory_space<vmem>>, vector<32x128xf32>
    %c0_99 = arith.constant 0 : index
    %c0_100 = arith.constant 0 : index
    %185 = vector.load %arg32[%c0_99, %c0_100] : memref<1x128xf32, #tpu.memory_space<vmem>>, vector<1x128xf32>
    %c0_101 = arith.constant 0 : index
    %c0_102 = arith.constant 0 : index
    %186 = vector.load %arg33[%c0_101, %c0_102] : memref<128x32xf32, #tpu.memory_space<vmem>>, vector<128x32xf32>
    %c0_103 = arith.constant 0 : index
    %c0_104 = arith.constant 0 : index
    %187 = vector.load %arg34[%c0_103, %c0_104] : memref<1x32xf32, #tpu.memory_space<vmem>>, vector<1x32xf32>
    %c0_105 = arith.constant 0 : index
    %c0_106 = arith.constant 0 : index
    %188 = vector.load %arg4[%c0_105, %c0_106] : memref<128x128xf32, #tpu.memory_space<vmem>>, vector<128x128xf32>
    %c0_107 = arith.constant 0 : index
    %c0_108 = arith.constant 0 : index
    %189 = vector.load %arg5[%c0_107, %c0_108] : memref<128x128xf32, #tpu.memory_space<vmem>>, vector<128x128xf32>
    %cst_109 = arith.constant dense<0.000000e+00> : vector<128xf32>
    %190 = vector.multi_reduction <add>, %174, %cst_109 [1] : vector<128x32xf32> to vector<128xf32>
    %191 = vector.shape_cast %190 : vector<128xf32> to vector<128x1xf32>
    %cst_110 = arith.constant 3.200000e+01 : f32
    %192 = vector.broadcast %cst_110 : f32 to vector<128x1xf32>
    %193 = arith.divf %191, %192 : vector<128x1xf32>
    %194 = vector.broadcast %193 : vector<128x1xf32> to vector<128x32xf32>
    %195 = arith.subf %174, %194 : vector<128x32xf32>
    %196 = arith.mulf %195, %195 : vector<128x32xf32>
    %cst_111 = arith.constant dense<0.000000e+00> : vector<128xf32>
    %197 = vector.multi_reduction <add>, %196, %cst_111 [1] : vector<128x32xf32> to vector<128xf32>
    %198 = vector.shape_cast %197 : vector<128xf32> to vector<128x1xf32>
    %cst_112 = arith.constant 3.200000e+01 : f32
    %199 = vector.broadcast %cst_112 : f32 to vector<128x1xf32>
    %200 = arith.divf %198, %199 : vector<128x1xf32>
    %201 = vector.broadcast %193 : vector<128x1xf32> to vector<128x32xf32>
    %202 = arith.subf %174, %201 : vector<128x32xf32>
    %cst_113 = arith.constant 9.99999974E-6 : f32
    %203 = vector.broadcast %cst_113 : f32 to vector<128x1xf32>
    %204 = arith.addf %200, %203 : vector<128x1xf32>
    %205 = math.rsqrt %204 : vector<128x1xf32>
    %206 = vector.broadcast %205 : vector<128x1xf32> to vector<128x32xf32>
    %207 = arith.mulf %202, %206 : vector<128x32xf32>
    %208 = vector.broadcast %175 : vector<1x32xf32> to vector<128x32xf32>
    %209 = arith.mulf %207, %208 : vector<128x32xf32>
    %210 = vector.broadcast %176 : vector<1x32xf32> to vector<128x32xf32>
    %211 = arith.addf %209, %210 : vector<128x32xf32>
    %cst_114 = arith.constant dense<0.000000e+00> : vector<128x32xf32>
    %212 = tpu.matmul %188, %211, %cst_114 {dimension_numbers = #tpu.dot_dimension_numbers<[1], [0], [0], [1], [0, 0, 1, 1], [], []>} : vector<128x128xf32>, vector<128x32xf32>, vector<128x32xf32> -> vector<128x32xf32>
    %cst_115 = arith.constant dense<0.000000e+00> : vector<128x96xf32>
    %213 = tpu.matmul %212, %177, %cst_115 {dimension_numbers = #tpu.dot_dimension_numbers<[1], [0], [0], [1], [0, 0, 1, 1], [], []>} : vector<128x32xf32>, vector<32x96xf32>, vector<128x96xf32> -> vector<128x96xf32>
    %214 = vector.broadcast %178 : vector<1x96xf32> to vector<128x96xf32>
    %215 = arith.addf %213, %214 : vector<128x96xf32>
    %216 = vector.extract_strided_slice %215 {offsets = [0, 0], sizes = [128, 16], strides = [1, 1]} : vector<128x96xf32> to vector<128x16xf32>
    %217 = vector.shape_cast %216 : vector<128x16xf32> to vector<8x16x16xf32>
    %cst_116 = arith.constant 2.500000e-01 : f32
    %218 = vector.broadcast %cst_116 : f32 to vector<8x16x16xf32>
    %219 = arith.mulf %217, %218 : vector<8x16x16xf32>
    %220 = vector.extract_strided_slice %215 {offsets = [0, 32], sizes = [128, 16], strides = [1, 1]} : vector<128x96xf32> to vector<128x16xf32>
    %221 = vector.shape_cast %220 : vector<128x16xf32> to vector<8x16x16xf32>
    %222 = vector.extract_strided_slice %215 {offsets = [0, 64], sizes = [128, 16], strides = [1, 1]} : vector<128x96xf32> to vector<128x16xf32>
    %223 = vector.shape_cast %222 : vector<128x16xf32> to vector<8x16x16xf32>
    "tpu.trace_start"() <{level = 10 : i32, message = "bnd,bmd->bnm"}> : () -> ()
    %cst_117 = arith.constant dense<0.000000e+00> : vector<8x16x16xf32>
    %224 = tpu.matmul %219, %221, %cst_117 {dimension_numbers = #tpu.dot_dimension_numbers<[2], [2], [1], [1], [0, 0, 0, 1, 1, 1], [0], [0]>} : vector<8x16x16xf32>, vector<8x16x16xf32>, vector<8x16x16xf32> -> vector<8x16x16xf32>
    "tpu.trace_stop"() : () -> ()
    %225 = vector.extract_strided_slice %179 {offsets = [0, 0, 0], sizes = [1, 16, 16], strides = [1, 1, 1]} : vector<2x16x16xf32> to vector<1x16x16xf32>
    %226 = vector.shape_cast %225 : vector<1x16x16xf32> to vector<16x16xf32>
    %227 = vector.shape_cast %226 : vector<16x16xf32> to vector<1x16x16xf32>
    %228 = vector.broadcast %227 : vector<1x16x16xf32> to vector<8x16x16xf32>
    %229 = arith.addf %224, %228 : vector<8x16x16xf32>
    %230 = arith.addf %229, %1 : vector<8x16x16xf32>
    %cst_118 = arith.constant dense<0xFF800000> : vector<8x16xf32>
    %231 = vector.multi_reduction <maximumf>, %230, %cst_118 [2] : vector<8x16x16xf32> to vector<8x16xf32>
    %cst_119 = arith.constant 0xFF800000 : f32
    %232 = vector.broadcast %cst_119 : f32 to vector<8x16xf32>
    %233 = arith.maximumf %232, %231 : vector<8x16xf32>
    %234 = vector.shape_cast %233 : vector<8x16xf32> to vector<8x16x1xf32>
    %235 = vector.broadcast %234 : vector<8x16x1xf32> to vector<8x16x16xf32>
    %236 = arith.subf %230, %235 : vector<8x16x16xf32>
    %237 = math.exp %236 : vector<8x16x16xf32>
    %cst_120 = arith.constant dense<0.000000e+00> : vector<8x16xf32>
    %238 = vector.multi_reduction <add>, %237, %cst_120 [2] : vector<8x16x16xf32> to vector<8x16xf32>
    %239 = vector.shape_cast %238 : vector<8x16xf32> to vector<8x16x1xf32>
    %240 = vector.broadcast %239 : vector<8x16x1xf32> to vector<8x16x16xf32>
    %241 = arith.divf %237, %240 : vector<8x16x16xf32>
    "tpu.trace_start"() <{level = 10 : i32, message = "bnm,bmd->bnd"}> : () -> ()
    %cst_121 = arith.constant dense<0.000000e+00> : vector<8x16x16xf32>
    %242 = tpu.matmul %241, %223, %cst_121 {dimension_numbers = #tpu.dot_dimension_numbers<[2], [1], [1], [2], [0, 0, 0, 1, 1, 2], [0], [0]>} : vector<8x16x16xf32>, vector<8x16x16xf32>, vector<8x16x16xf32> -> vector<8x16x16xf32>
    "tpu.trace_stop"() : () -> ()
    %243 = vector.shape_cast %242 : vector<8x16x16xf32> to vector<128x16xf32>
    %244 = vector.extract_strided_slice %180 {offsets = [0, 0], sizes = [16, 32], strides = [1, 1]} : vector<32x32xf32> to vector<16x32xf32>
    %cst_122 = arith.constant dense<0.000000e+00> : vector<128x32xf32>
    %245 = tpu.matmul %243, %244, %cst_122 {dimension_numbers = #tpu.dot_dimension_numbers<[1], [0], [0], [1], [0, 0, 1, 1], [], []>} : vector<128x16xf32>, vector<16x32xf32>, vector<128x32xf32> -> vector<128x32xf32>
    %246 = vector.extract_strided_slice %215 {offsets = [0, 16], sizes = [128, 16], strides = [1, 1]} : vector<128x96xf32> to vector<128x16xf32>
    %247 = vector.shape_cast %246 : vector<128x16xf32> to vector<8x16x16xf32>
    %cst_123 = arith.constant 2.500000e-01 : f32
    %248 = vector.broadcast %cst_123 : f32 to vector<8x16x16xf32>
    %249 = arith.mulf %247, %248 : vector<8x16x16xf32>
    %250 = vector.extract_strided_slice %215 {offsets = [0, 48], sizes = [128, 16], strides = [1, 1]} : vector<128x96xf32> to vector<128x16xf32>
    %251 = vector.shape_cast %250 : vector<128x16xf32> to vector<8x16x16xf32>
    %252 = vector.extract_strided_slice %215 {offsets = [0, 80], sizes = [128, 16], strides = [1, 1]} : vector<128x96xf32> to vector<128x16xf32>
    %253 = vector.shape_cast %252 : vector<128x16xf32> to vector<8x16x16xf32>
    "tpu.trace_start"() <{level = 10 : i32, message = "bnd,bmd->bnm"}> : () -> ()
    %cst_124 = arith.constant dense<0.000000e+00> : vector<8x16x16xf32>
    %254 = tpu.matmul %249, %251, %cst_124 {dimension_numbers = #tpu.dot_dimension_numbers<[2], [2], [1], [1], [0, 0, 0, 1, 1, 1], [0], [0]>} : vector<8x16x16xf32>, vector<8x16x16xf32>, vector<8x16x16xf32> -> vector<8x16x16xf32>
    "tpu.trace_stop"() : () -> ()
    %255 = vector.extract_strided_slice %179 {offsets = [1, 0, 0], sizes = [1, 16, 16], strides = [1, 1, 1]} : vector<2x16x16xf32> to vector<1x16x16xf32>
    %256 = vector.shape_cast %255 : vector<1x16x16xf32> to vector<16x16xf32>
    %257 = vector.shape_cast %256 : vector<16x16xf32> to vector<1x16x16xf32>
    %258 = vector.broadcast %257 : vector<1x16x16xf32> to vector<8x16x16xf32>
    %259 = arith.addf %254, %258 : vector<8x16x16xf32>
    %260 = arith.addf %259, %1 : vector<8x16x16xf32>
    %cst_125 = arith.constant dense<0xFF800000> : vector<8x16xf32>
    %261 = vector.multi_reduction <maximumf>, %260, %cst_125 [2] : vector<8x16x16xf32> to vector<8x16xf32>
    %cst_126 = arith.constant 0xFF800000 : f32
    %262 = vector.broadcast %cst_126 : f32 to vector<8x16xf32>
    %263 = arith.maximumf %262, %261 : vector<8x16xf32>
    %264 = vector.shape_cast %263 : vector<8x16xf32> to vector<8x16x1xf32>
    %265 = vector.broadcast %264 : vector<8x16x1xf32> to vector<8x16x16xf32>
    %266 = arith.subf %260, %265 : vector<8x16x16xf32>
    %267 = math.exp %266 : vector<8x16x16xf32>
    %cst_127 = arith.constant dense<0.000000e+00> : vector<8x16xf32>
    %268 = vector.multi_reduction <add>, %267, %cst_127 [2] : vector<8x16x16xf32> to vector<8x16xf32>
    %269 = vector.shape_cast %268 : vector<8x16xf32> to vector<8x16x1xf32>
    %270 = vector.broadcast %269 : vector<8x16x1xf32> to vector<8x16x16xf32>
    %271 = arith.divf %267, %270 : vector<8x16x16xf32>
    "tpu.trace_start"() <{level = 10 : i32, message = "bnm,bmd->bnd"}> : () -> ()
    %cst_128 = arith.constant dense<0.000000e+00> : vector<8x16x16xf32>
    %272 = tpu.matmul %271, %253, %cst_128 {dimension_numbers = #tpu.dot_dimension_numbers<[2], [1], [1], [2], [0, 0, 0, 1, 1, 2], [0], [0]>} : vector<8x16x16xf32>, vector<8x16x16xf32>, vector<8x16x16xf32> -> vector<8x16x16xf32>
    "tpu.trace_stop"() : () -> ()
    %273 = vector.shape_cast %272 : vector<8x16x16xf32> to vector<128x16xf32>
    %274 = vector.extract_strided_slice %180 {offsets = [16, 0], sizes = [16, 32], strides = [1, 1]} : vector<32x32xf32> to vector<16x32xf32>
    %cst_129 = arith.constant dense<0.000000e+00> : vector<128x32xf32>
    %275 = tpu.matmul %273, %274, %cst_129 {dimension_numbers = #tpu.dot_dimension_numbers<[1], [0], [0], [1], [0, 0, 1, 1], [], []>} : vector<128x16xf32>, vector<16x32xf32>, vector<128x32xf32> -> vector<128x32xf32>
    %276 = arith.addf %245, %275 : vector<128x32xf32>
    %277 = vector.broadcast %181 : vector<1x32xf32> to vector<128x32xf32>
    %278 = arith.addf %276, %277 : vector<128x32xf32>
    %cst_130 = arith.constant dense<0.000000e+00> : vector<128x32xf32>
    %279 = tpu.matmul %189, %278, %cst_130 {dimension_numbers = #tpu.dot_dimension_numbers<[1], [0], [0], [1], [0, 0, 1, 1], [], []>} : vector<128x128xf32>, vector<128x32xf32>, vector<128x32xf32> -> vector<128x32xf32>
    %280 = arith.addf %174, %279 : vector<128x32xf32>
    %cst_131 = arith.constant dense<0.000000e+00> : vector<128xf32>
    %281 = vector.multi_reduction <add>, %280, %cst_131 [1] : vector<128x32xf32> to vector<128xf32>
    %282 = vector.shape_cast %281 : vector<128xf32> to vector<128x1xf32>
    %cst_132 = arith.constant 3.200000e+01 : f32
    %283 = vector.broadcast %cst_132 : f32 to vector<128x1xf32>
    %284 = arith.divf %282, %283 : vector<128x1xf32>
    %285 = vector.broadcast %284 : vector<128x1xf32> to vector<128x32xf32>
    %286 = arith.subf %280, %285 : vector<128x32xf32>
    %287 = arith.mulf %286, %286 : vector<128x32xf32>
    %cst_133 = arith.constant dense<0.000000e+00> : vector<128xf32>
    %288 = vector.multi_reduction <add>, %287, %cst_133 [1] : vector<128x32xf32> to vector<128xf32>
    %289 = vector.shape_cast %288 : vector<128xf32> to vector<128x1xf32>
    %cst_134 = arith.constant 3.200000e+01 : f32
    %290 = vector.broadcast %cst_134 : f32 to vector<128x1xf32>
    %291 = arith.divf %289, %290 : vector<128x1xf32>
    %292 = vector.broadcast %284 : vector<128x1xf32> to vector<128x32xf32>
    %293 = arith.subf %280, %292 : vector<128x32xf32>
    %cst_135 = arith.constant 9.99999974E-6 : f32
    %294 = vector.broadcast %cst_135 : f32 to vector<128x1xf32>
    %295 = arith.addf %291, %294 : vector<128x1xf32>
    %296 = math.rsqrt %295 : vector<128x1xf32>
    %297 = vector.broadcast %296 : vector<128x1xf32> to vector<128x32xf32>
    %298 = arith.mulf %293, %297 : vector<128x32xf32>
    %299 = vector.broadcast %182 : vector<1x32xf32> to vector<128x32xf32>
    %300 = arith.mulf %298, %299 : vector<128x32xf32>
    %301 = vector.broadcast %183 : vector<1x32xf32> to vector<128x32xf32>
    %302 = arith.addf %300, %301 : vector<128x32xf32>
    %cst_136 = arith.constant dense<0.000000e+00> : vector<128x128xf32>
    %303 = tpu.matmul %302, %184, %cst_136 {dimension_numbers = #tpu.dot_dimension_numbers<[1], [0], [0], [1], [0, 0, 1, 1], [], []>} : vector<128x32xf32>, vector<32x128xf32>, vector<128x128xf32> -> vector<128x128xf32>
    %304 = vector.broadcast %185 : vector<1x128xf32> to vector<128x128xf32>
    %305 = arith.addf %303, %304 : vector<128x128xf32>
    %cst_137 = arith.constant 0.707106769 : f32
    %306 = vector.broadcast %cst_137 : f32 to vector<128x128xf32>
    %307 = arith.mulf %305, %306 : vector<128x128xf32>
    %308 = math.absf %307 : vector<128x128xf32>
    %cst_138 = arith.constant 0.327591091 : f32
    %309 = vector.broadcast %cst_138 : f32 to vector<128x128xf32>
    %310 = arith.mulf %309, %308 : vector<128x128xf32>
    %cst_139 = arith.constant 1.000000e+00 : f32
    %311 = vector.broadcast %cst_139 : f32 to vector<128x128xf32>
    %312 = arith.addf %311, %310 : vector<128x128xf32>
    %cst_140 = arith.constant 1.000000e+00 : f32
    %313 = vector.broadcast %cst_140 : f32 to vector<128x128xf32>
    %314 = arith.divf %313, %312 : vector<128x128xf32>
    %cst_141 = arith.constant 1.06140542 : f32
    %315 = vector.broadcast %cst_141 : f32 to vector<128x128xf32>
    %316 = arith.mulf %315, %314 : vector<128x128xf32>
    %cst_142 = arith.constant -1.45315206 : f32
    %317 = vector.broadcast %cst_142 : f32 to vector<128x128xf32>
    %318 = arith.addf %316, %317 : vector<128x128xf32>
    %319 = arith.mulf %318, %314 : vector<128x128xf32>
    %cst_143 = arith.constant 1.42141378 : f32
    %320 = vector.broadcast %cst_143 : f32 to vector<128x128xf32>
    %321 = arith.addf %319, %320 : vector<128x128xf32>
    %322 = arith.mulf %321, %314 : vector<128x128xf32>
    %cst_144 = arith.constant -0.284496725 : f32
    %323 = vector.broadcast %cst_144 : f32 to vector<128x128xf32>
    %324 = arith.addf %322, %323 : vector<128x128xf32>
    %325 = arith.mulf %324, %314 : vector<128x128xf32>
    %cst_145 = arith.constant 0.254829586 : f32
    %326 = vector.broadcast %cst_145 : f32 to vector<128x128xf32>
    %327 = arith.addf %325, %326 : vector<128x128xf32>
    %328 = arith.mulf %327, %314 : vector<128x128xf32>
    %cst_146 = arith.constant 0.000000e+00 : f32
    %329 = vector.broadcast %cst_146 : f32 to vector<128x128xf32>
    %330 = arith.subf %329, %308 : vector<128x128xf32>
    %331 = arith.mulf %330, %308 : vector<128x128xf32>
    %332 = math.exp %331 : vector<128x128xf32>
    %333 = arith.mulf %328, %332 : vector<128x128xf32>
    %cst_147 = arith.constant 1.000000e+00 : f32
    %334 = vector.broadcast %cst_147 : f32 to vector<128x128xf32>
    %335 = arith.subf %334, %333 : vector<128x128xf32>
    %cst_148 = arith.constant 0.000000e+00 : f32
    %336 = vector.broadcast %cst_148 : f32 to vector<128x128xf32>
    %337 = arith.cmpf oge, %307, %336 : vector<128x128xf32>
    %cst_149 = arith.constant 0.000000e+00 : f32
    %338 = vector.broadcast %cst_149 : f32 to vector<128x128xf32>
    %339 = arith.subf %338, %335 : vector<128x128xf32>
    %340 = arith.select %337, %335, %339 : vector<128x128xi1>, vector<128x128xf32>
    %cst_150 = arith.constant 5.000000e-01 : f32
    %341 = vector.broadcast %cst_150 : f32 to vector<128x128xf32>
    %342 = arith.mulf %341, %305 : vector<128x128xf32>
    %cst_151 = arith.constant 1.000000e+00 : f32
    %343 = vector.broadcast %cst_151 : f32 to vector<128x128xf32>
    %344 = arith.addf %343, %340 : vector<128x128xf32>
    %345 = arith.mulf %342, %344 : vector<128x128xf32>
    %cst_152 = arith.constant dense<0.000000e+00> : vector<128x32xf32>
    %346 = tpu.matmul %345, %186, %cst_152 {dimension_numbers = #tpu.dot_dimension_numbers<[1], [0], [0], [1], [0, 0, 1, 1], [], []>} : vector<128x128xf32>, vector<128x32xf32>, vector<128x32xf32> -> vector<128x32xf32>
    %347 = arith.addf %280, %346 : vector<128x32xf32>
    %348 = vector.broadcast %187 : vector<1x32xf32> to vector<128x32xf32>
    %349 = arith.addf %347, %348 : vector<128x32xf32>
    %c0_153 = arith.constant 0 : index
    %c0_154 = arith.constant 0 : index
    %350 = vector.load %arg8[%c0_153, %c0_154] : memref<1x32xf32, #tpu.memory_space<vmem>>, vector<1x32xf32>
    %351 = vector.broadcast %350 : vector<1x32xf32> to vector<128x32xf32>
    %352 = arith.addf %0, %351 : vector<128x32xf32>
    %c0_155 = arith.constant 0 : index
    %c0_156 = arith.constant 0 : index
    %c0_157 = arith.constant 0 : index
    %353 = vector.load %arg7[%c0_155, %c0_156, %c0_157] : memref<9x32x32xf32, #tpu.memory_space<vmem>>, vector<1x32x32xf32>
    %354 = vector.shape_cast %353 : vector<1x32x32xf32> to vector<32x32xf32>
    %cst_158 = arith.constant dense<0.000000e+00> : vector<128x32xf32>
    %355 = tpu.matmul %349, %354, %cst_158 {dimension_numbers = #tpu.dot_dimension_numbers<[1], [0], [0], [1], [0, 0, 1, 1], [], []>} : vector<128x32xf32>, vector<32x32xf32>, vector<128x32xf32> -> vector<128x32xf32>
    %c0_159 = arith.constant 0 : index
    %c0_160 = arith.constant 0 : index
    %c0_161 = arith.constant 0 : index
    %356 = vector.load %arg6[%c0_159, %c0_160, %c0_161] : memref<9x128x128xf32, #tpu.memory_space<vmem>>, vector<1x128x128xf32>
    %357 = vector.shape_cast %356 : vector<1x128x128xf32> to vector<128x128xf32>
    %cst_162 = arith.constant dense<0.000000e+00> : vector<128x32xf32>
    %358 = tpu.matmul %357, %355, %cst_162 {dimension_numbers = #tpu.dot_dimension_numbers<[1], [0], [0], [1], [0, 0, 1, 1], [], []>} : vector<128x128xf32>, vector<128x32xf32>, vector<128x32xf32> -> vector<128x32xf32>
    %359 = arith.addf %352, %358 : vector<128x32xf32>
    %c1 = arith.constant 1 : index
    %c0_163 = arith.constant 0 : index
    %c0_164 = arith.constant 0 : index
    %360 = vector.load %arg7[%c1, %c0_163, %c0_164] : memref<9x32x32xf32, #tpu.memory_space<vmem>>, vector<1x32x32xf32>
    %361 = vector.shape_cast %360 : vector<1x32x32xf32> to vector<32x32xf32>
    %cst_165 = arith.constant dense<0.000000e+00> : vector<128x32xf32>
    %362 = tpu.matmul %349, %361, %cst_165 {dimension_numbers = #tpu.dot_dimension_numbers<[1], [0], [0], [1], [0, 0, 1, 1], [], []>} : vector<128x32xf32>, vector<32x32xf32>, vector<128x32xf32> -> vector<128x32xf32>
    %c1_166 = arith.constant 1 : index
    %c0_167 = arith.constant 0 : index
    %c0_168 = arith.constant 0 : index
    %363 = vector.load %arg6[%c1_166, %c0_167, %c0_168] : memref<9x128x128xf32, #tpu.memory_space<vmem>>, vector<1x128x128xf32>
    %364 = vector.shape_cast %363 : vector<1x128x128xf32> to vector<128x128xf32>
    %cst_169 = arith.constant dense<0.000000e+00> : vector<128x32xf32>
    %365 = tpu.matmul %364, %362, %cst_169 {dimension_numbers = #tpu.dot_dimension_numbers<[1], [0], [0], [1], [0, 0, 1, 1], [], []>} : vector<128x128xf32>, vector<128x32xf32>, vector<128x32xf32> -> vector<128x32xf32>
    %366 = arith.addf %359, %365 : vector<128x32xf32>
    %c2 = arith.constant 2 : index
    %c0_170 = arith.constant 0 : index
    %c0_171 = arith.constant 0 : index
    %367 = vector.load %arg7[%c2, %c0_170, %c0_171] : memref<9x32x32xf32, #tpu.memory_space<vmem>>, vector<1x32x32xf32>
    %368 = vector.shape_cast %367 : vector<1x32x32xf32> to vector<32x32xf32>
    %cst_172 = arith.constant dense<0.000000e+00> : vector<128x32xf32>
    %369 = tpu.matmul %349, %368, %cst_172 {dimension_numbers = #tpu.dot_dimension_numbers<[1], [0], [0], [1], [0, 0, 1, 1], [], []>} : vector<128x32xf32>, vector<32x32xf32>, vector<128x32xf32> -> vector<128x32xf32>
    %c2_173 = arith.constant 2 : index
    %c0_174 = arith.constant 0 : index
    %c0_175 = arith.constant 0 : index
    %370 = vector.load %arg6[%c2_173, %c0_174, %c0_175] : memref<9x128x128xf32, #tpu.memory_space<vmem>>, vector<1x128x128xf32>
    %371 = vector.shape_cast %370 : vector<1x128x128xf32> to vector<128x128xf32>
    %cst_176 = arith.constant dense<0.000000e+00> : vector<128x32xf32>
    %372 = tpu.matmul %371, %369, %cst_176 {dimension_numbers = #tpu.dot_dimension_numbers<[1], [0], [0], [1], [0, 0, 1, 1], [], []>} : vector<128x128xf32>, vector<128x32xf32>, vector<128x32xf32> -> vector<128x32xf32>
    %373 = arith.addf %366, %372 : vector<128x32xf32>
    %c3 = arith.constant 3 : index
    %c0_177 = arith.constant 0 : index
    %c0_178 = arith.constant 0 : index
    %374 = vector.load %arg7[%c3, %c0_177, %c0_178] : memref<9x32x32xf32, #tpu.memory_space<vmem>>, vector<1x32x32xf32>
    %375 = vector.shape_cast %374 : vector<1x32x32xf32> to vector<32x32xf32>
    %cst_179 = arith.constant dense<0.000000e+00> : vector<128x32xf32>
    %376 = tpu.matmul %349, %375, %cst_179 {dimension_numbers = #tpu.dot_dimension_numbers<[1], [0], [0], [1], [0, 0, 1, 1], [], []>} : vector<128x32xf32>, vector<32x32xf32>, vector<128x32xf32> -> vector<128x32xf32>
    %c3_180 = arith.constant 3 : index
    %c0_181 = arith.constant 0 : index
    %c0_182 = arith.constant 0 : index
    %377 = vector.load %arg6[%c3_180, %c0_181, %c0_182] : memref<9x128x128xf32, #tpu.memory_space<vmem>>, vector<1x128x128xf32>
    %378 = vector.shape_cast %377 : vector<1x128x128xf32> to vector<128x128xf32>
    %cst_183 = arith.constant dense<0.000000e+00> : vector<128x32xf32>
    %379 = tpu.matmul %378, %376, %cst_183 {dimension_numbers = #tpu.dot_dimension_numbers<[1], [0], [0], [1], [0, 0, 1, 1], [], []>} : vector<128x128xf32>, vector<128x32xf32>, vector<128x32xf32> -> vector<128x32xf32>
    %380 = arith.addf %373, %379 : vector<128x32xf32>
    %c4 = arith.constant 4 : index
    %c0_184 = arith.constant 0 : index
    %c0_185 = arith.constant 0 : index
    %381 = vector.load %arg7[%c4, %c0_184, %c0_185] : memref<9x32x32xf32, #tpu.memory_space<vmem>>, vector<1x32x32xf32>
    %382 = vector.shape_cast %381 : vector<1x32x32xf32> to vector<32x32xf32>
    %cst_186 = arith.constant dense<0.000000e+00> : vector<128x32xf32>
    %383 = tpu.matmul %349, %382, %cst_186 {dimension_numbers = #tpu.dot_dimension_numbers<[1], [0], [0], [1], [0, 0, 1, 1], [], []>} : vector<128x32xf32>, vector<32x32xf32>, vector<128x32xf32> -> vector<128x32xf32>
    %c4_187 = arith.constant 4 : index
    %c0_188 = arith.constant 0 : index
    %c0_189 = arith.constant 0 : index
    %384 = vector.load %arg6[%c4_187, %c0_188, %c0_189] : memref<9x128x128xf32, #tpu.memory_space<vmem>>, vector<1x128x128xf32>
    %385 = vector.shape_cast %384 : vector<1x128x128xf32> to vector<128x128xf32>
    %cst_190 = arith.constant dense<0.000000e+00> : vector<128x32xf32>
    %386 = tpu.matmul %385, %383, %cst_190 {dimension_numbers = #tpu.dot_dimension_numbers<[1], [0], [0], [1], [0, 0, 1, 1], [], []>} : vector<128x128xf32>, vector<128x32xf32>, vector<128x32xf32> -> vector<128x32xf32>
    %387 = arith.addf %380, %386 : vector<128x32xf32>
    %c5 = arith.constant 5 : index
    %c0_191 = arith.constant 0 : index
    %c0_192 = arith.constant 0 : index
    %388 = vector.load %arg7[%c5, %c0_191, %c0_192] : memref<9x32x32xf32, #tpu.memory_space<vmem>>, vector<1x32x32xf32>
    %389 = vector.shape_cast %388 : vector<1x32x32xf32> to vector<32x32xf32>
    %cst_193 = arith.constant dense<0.000000e+00> : vector<128x32xf32>
    %390 = tpu.matmul %349, %389, %cst_193 {dimension_numbers = #tpu.dot_dimension_numbers<[1], [0], [0], [1], [0, 0, 1, 1], [], []>} : vector<128x32xf32>, vector<32x32xf32>, vector<128x32xf32> -> vector<128x32xf32>
    %c5_194 = arith.constant 5 : index
    %c0_195 = arith.constant 0 : index
    %c0_196 = arith.constant 0 : index
    %391 = vector.load %arg6[%c5_194, %c0_195, %c0_196] : memref<9x128x128xf32, #tpu.memory_space<vmem>>, vector<1x128x128xf32>
    %392 = vector.shape_cast %391 : vector<1x128x128xf32> to vector<128x128xf32>
    %cst_197 = arith.constant dense<0.000000e+00> : vector<128x32xf32>
    %393 = tpu.matmul %392, %390, %cst_197 {dimension_numbers = #tpu.dot_dimension_numbers<[1], [0], [0], [1], [0, 0, 1, 1], [], []>} : vector<128x128xf32>, vector<128x32xf32>, vector<128x32xf32> -> vector<128x32xf32>
    %394 = arith.addf %387, %393 : vector<128x32xf32>
    %c6 = arith.constant 6 : index
    %c0_198 = arith.constant 0 : index
    %c0_199 = arith.constant 0 : index
    %395 = vector.load %arg7[%c6, %c0_198, %c0_199] : memref<9x32x32xf32, #tpu.memory_space<vmem>>, vector<1x32x32xf32>
    %396 = vector.shape_cast %395 : vector<1x32x32xf32> to vector<32x32xf32>
    %cst_200 = arith.constant dense<0.000000e+00> : vector<128x32xf32>
    %397 = tpu.matmul %349, %396, %cst_200 {dimension_numbers = #tpu.dot_dimension_numbers<[1], [0], [0], [1], [0, 0, 1, 1], [], []>} : vector<128x32xf32>, vector<32x32xf32>, vector<128x32xf32> -> vector<128x32xf32>
    %c6_201 = arith.constant 6 : index
    %c0_202 = arith.constant 0 : index
    %c0_203 = arith.constant 0 : index
    %398 = vector.load %arg6[%c6_201, %c0_202, %c0_203] : memref<9x128x128xf32, #tpu.memory_space<vmem>>, vector<1x128x128xf32>
    %399 = vector.shape_cast %398 : vector<1x128x128xf32> to vector<128x128xf32>
    %cst_204 = arith.constant dense<0.000000e+00> : vector<128x32xf32>
    %400 = tpu.matmul %399, %397, %cst_204 {dimension_numbers = #tpu.dot_dimension_numbers<[1], [0], [0], [1], [0, 0, 1, 1], [], []>} : vector<128x128xf32>, vector<128x32xf32>, vector<128x32xf32> -> vector<128x32xf32>
    %401 = arith.addf %394, %400 : vector<128x32xf32>
    %c7 = arith.constant 7 : index
    %c0_205 = arith.constant 0 : index
    %c0_206 = arith.constant 0 : index
    %402 = vector.load %arg7[%c7, %c0_205, %c0_206] : memref<9x32x32xf32, #tpu.memory_space<vmem>>, vector<1x32x32xf32>
    %403 = vector.shape_cast %402 : vector<1x32x32xf32> to vector<32x32xf32>
    %cst_207 = arith.constant dense<0.000000e+00> : vector<128x32xf32>
    %404 = tpu.matmul %349, %403, %cst_207 {dimension_numbers = #tpu.dot_dimension_numbers<[1], [0], [0], [1], [0, 0, 1, 1], [], []>} : vector<128x32xf32>, vector<32x32xf32>, vector<128x32xf32> -> vector<128x32xf32>
    %c7_208 = arith.constant 7 : index
    %c0_209 = arith.constant 0 : index
    %c0_210 = arith.constant 0 : index
    %405 = vector.load %arg6[%c7_208, %c0_209, %c0_210] : memref<9x128x128xf32, #tpu.memory_space<vmem>>, vector<1x128x128xf32>
    %406 = vector.shape_cast %405 : vector<1x128x128xf32> to vector<128x128xf32>
    %cst_211 = arith.constant dense<0.000000e+00> : vector<128x32xf32>
    %407 = tpu.matmul %406, %404, %cst_211 {dimension_numbers = #tpu.dot_dimension_numbers<[1], [0], [0], [1], [0, 0, 1, 1], [], []>} : vector<128x128xf32>, vector<128x32xf32>, vector<128x32xf32> -> vector<128x32xf32>
    %408 = arith.addf %401, %407 : vector<128x32xf32>
    %c8 = arith.constant 8 : index
    %c0_212 = arith.constant 0 : index
    %c0_213 = arith.constant 0 : index
    %409 = vector.load %arg7[%c8, %c0_212, %c0_213] : memref<9x32x32xf32, #tpu.memory_space<vmem>>, vector<1x32x32xf32>
    %410 = vector.shape_cast %409 : vector<1x32x32xf32> to vector<32x32xf32>
    %cst_214 = arith.constant dense<0.000000e+00> : vector<128x32xf32>
    %411 = tpu.matmul %349, %410, %cst_214 {dimension_numbers = #tpu.dot_dimension_numbers<[1], [0], [0], [1], [0, 0, 1, 1], [], []>} : vector<128x32xf32>, vector<32x32xf32>, vector<128x32xf32> -> vector<128x32xf32>
    %c8_215 = arith.constant 8 : index
    %c0_216 = arith.constant 0 : index
    %c0_217 = arith.constant 0 : index
    %412 = vector.load %arg6[%c8_215, %c0_216, %c0_217] : memref<9x128x128xf32, #tpu.memory_space<vmem>>, vector<1x128x128xf32>
    %413 = vector.shape_cast %412 : vector<1x128x128xf32> to vector<128x128xf32>
    %cst_218 = arith.constant dense<0.000000e+00> : vector<128x32xf32>
    %414 = tpu.matmul %413, %411, %cst_218 {dimension_numbers = #tpu.dot_dimension_numbers<[1], [0], [0], [1], [0, 0, 1, 1], [], []>} : vector<128x128xf32>, vector<128x32xf32>, vector<128x32xf32> -> vector<128x32xf32>
    %415 = arith.addf %408, %414 : vector<128x32xf32>
    %c0_219 = arith.constant 0 : index
    %c0_220 = arith.constant 0 : index
    %416 = vector.load %arg35[%c0_219, %c0_220] : memref<128x32xf32, #tpu.memory_space<vmem>>, vector<128x32xf32>
    tpu.vector_store %arg35[%c0_219, %c0_220], %415 {strides = array<i32>} : memref<128x32xf32, #tpu.memory_space<vmem>>, vector<128x32xf32>,
    return
  }
}

</mosaic_0001>

<llo_original>
// kernel: rstb_forward.1
$region0: #{rstb_forward.1}
  #allocation0 [shape = 'u32[]', space=smem, size = 0x4, offset = 0x4, fixed_abs, tag = 'smem constant byte address 0x4 - core index']
  #allocation1 [shape = 'u32[72,128]{1,0:T(1,128)}', space=vmem, size = 0x9000, scoped, tag = 'internal scratch']
  %s0 = inlined_call_operand.smem [shape: u32[36], index: -1, kind: input, shape index: {}]
  %s1 = sld [smem:[%s0]]
  %s2 = scalar_lea.smem %s0, 1
  %s3 = sld [smem:[%s2]]
  %s4 = scalar_lea.smem %s0, 2
  %s5 = sld [smem:[%s4]]
  %s6 = scalar_lea.smem %s0, 3
  %s7 = sld [smem:[%s6]]
  %s8 = scalar_lea.smem %s0, 4
  %s9 = sld [smem:[%s8]]
  %s10 = scalar_lea.smem %s0, 5
  %s11 = sld [smem:[%s10]]
  %s12 = scalar_lea.smem %s0, 6
  %s13 = sld [smem:[%s12]]
  %s14 = scalar_lea.smem %s0, 7
  %s15 = sld [smem:[%s14]]
  %s16 = scalar_lea.smem %s0, 8
  %s17 = sld [smem:[%s16]]
  %s18 = scalar_lea.smem %s0, 9
  %s19 = sld [smem:[%s18]]
  %s20 = scalar_lea.smem %s0, 10
  %s21 = sld [smem:[%s20]]
  %s22 = scalar_lea.smem %s0, 11
  %s23 = sld [smem:[%s22]]
  %s24 = scalar_lea.smem %s0, 12
  %s25 = sld [smem:[%s24]]
  %s26 = scalar_lea.smem %s0, 13
  %s27 = sld [smem:[%s26]]
  %s28 = scalar_lea.smem %s0, 14
  %s29 = sld [smem:[%s28]]
  %s30 = scalar_lea.smem %s0, 15
  %s31 = sld [smem:[%s30]]
  %s32 = scalar_lea.smem %s0, 16
  %s33 = sld [smem:[%s32]]
  %s34 = scalar_lea.smem %s0, 17
  %s35 = sld [smem:[%s34]]
  %s36 = scalar_lea.smem %s0, 18
  %s37 = sld [smem:[%s36]]
  %s38 = scalar_lea.smem %s0, 19
  %s39 = sld [smem:[%s38]]
  %s40 = scalar_lea.smem %s0, 20
  %s41 = sld [smem:[%s40]]
  %s42 = scalar_lea.smem %s0, 21
  %s43 = sld [smem:[%s42]]
  %s44 = scalar_lea.smem %s0, 22
  %s45 = sld [smem:[%s44]]
  %s46 = scalar_lea.smem %s0, 23
  %s47 = sld [smem:[%s46]]
  %s48 = scalar_lea.smem %s0, 24
  %s49 = sld [smem:[%s48]]
  %s50 = scalar_lea.smem %s0, 25
  %s51 = sld [smem:[%s50]]
  %s52 = scalar_lea.smem %s0, 26
  %s53 = sld [smem:[%s52]]
  %s54 = scalar_lea.smem %s0, 27
  %s55 = sld [smem:[%s54]]
  %s56 = scalar_lea.smem %s0, 28
  %s57 = sld [smem:[%s56]]
  %s58 = scalar_lea.smem %s0, 29
  %s59 = sld [smem:[%s58]]
  %s60 = scalar_lea.smem %s0, 30
  %s61 = sld [smem:[%s60]]
  %s62 = scalar_lea.smem %s0, 31
  %s63 = sld [smem:[%s62]]
  %s64 = scalar_lea.smem %s0, 32
  %s65 = sld [smem:[%s64]]
  %s66 = scalar_lea.smem %s0, 33
  %s67 = sld [smem:[%s66]]
  %s68 = scalar_lea.smem %s0, 34
  %s69 = sld [smem:[%s68]]
  %s70 = scalar_lea.smem %s0, 35
  %s71 = sld [smem:[%s70]]
  %s72 = sld [smem:[#allocation0]]
  $region206: #{rstb_forward.1} parent=0
    _
  %s74 = ssub.s32 1, %s72
  %s75 = scalar_select 0, %s74, %s72
  $region1: #{rstb_forward.1} parent=0
    #allocation2 [shape = 'u8[65536]{0}', space=vmem, size = 0x10000, scoped, tag = 'input window, operand 2, single buffered']
    #allocation3 [shape = 's32[1]{0}', space=sflag, size = 0x4, scoped, tag = 'scoped memory for rstb_forward.1']
    #allocation4 [shape = 'u8[65536]{0}', space=vmem, size = 0x10000, scoped, tag = 'input window, operand 3, single buffered']
    #allocation5 [shape = 's32[1]{0}', space=sflag, size = 0x4, scoped, tag = 'scoped memory for rstb_forward.1']
    #allocation6 [shape = 'u8[65536]{0}', space=vmem, size = 0x10000, scoped, tag = 'input window, operand 4, single buffered']
    #allocation7 [shape = 'u8[65536]{0}', space=vmem, size = 0x10000, scoped, tag = 'input window, operand 5, single buffered']
    #allocation8 [shape = 's32[1]{0}', space=sflag, size = 0x4, scoped, tag = 'scoped memory for rstb_forward.1']
    #allocation9 [shape = 'u8[589824]{0}', space=vmem, size = 0x90000, scoped, tag = 'input window, operand 6, single buffered']
    #allocation10 [shape = 'u8[512]{0}', space=vmem, size = 0x400, scoped, tag = 'input window, operand 8, single buffered']
    #allocation11 [shape = 's32[1]{0}', space=sflag, size = 0x4, scoped, tag = 'scoped memory for rstb_forward.1']
    #allocation12 [shape = 'u8[16384]{0}', space=vmem, size = 0x4000, scoped, tag = 'input window, operand 13, single buffered']
    #allocation13 [shape = 'u8[16384]{0}', space=vmem, size = 0x4000, scoped, tag = 'input window, operand 14, single buffered']
    #allocation14 [shape = 's32[1]{0}', space=sflag, size = 0x4, scoped, tag = 'scoped memory for rstb_forward.1']
    #allocation15 [shape = 'u8[16384]{0}', space=vmem, size = 0x4000, scoped, tag = 'input window, operand 18, single buffered']
    #allocation16 [shape = 'u8[512]{0}', space=vmem, size = 0x400, scoped, tag = 'input window, operand 19, single buffered']
    #allocation17 [shape = 's32[1]{0}', space=sflag, size = 0x4, scoped, tag = 'scoped memory for rstb_forward.1']
    #allocation18 [shape = 'u8[16384]{0}', space=vmem, size = 0x4000, scoped, tag = 'input window, operand 24, single buffered']
    #allocation19 [shape = 'u8[16384]{0}', space=vmem, size = 0x4000, scoped, tag = 'input window, operand 26, single buffered']
    #allocation20 [shape = 's32[1]{0}', space=sflag, size = 0x4, scoped, tag = 'scoped memory for rstb_forward.1']
    #allocation21 [shape = 'u8[16384]{0}', space=vmem, size = 0x4000, scoped, tag = 'input window, operand 27, single buffered']
    #allocation22 [shape = 'u8[16384]{0}', space=vmem, size = 0x4000, scoped, tag = 'input window, operand 31, single buffered']
    #allocation23 [shape = 's32[1]{0}', space=sflag, size = 0x4, scoped, tag = 'scoped memory for rstb_forward.1']
    %76 = vsyncpa [#allocation3], 0
    %77 = vsyncpa [#allocation5], 0
    %78 = vsyncpa [#allocation8], 0
    %79 = vsyncpa [#allocation11], 0
    %80 = vsyncpa [#allocation14], 0
    %81 = vsyncpa [#allocation17], 0
    %82 = vsyncpa [#allocation20], 0
    %83 = vsyncpa [#allocation23], 0
    // Predicated region
    $region2: #{rstb_forward.1} parent=1 // pred_check
      _
    $region3: #{rstb_forward.1} parent=1 // pred_check_branch
      %85 = sbr.rel (0) target = $region5
    $region4: #{rstb_forward.1} parent=1 // pred_region
      _
    $region5: #{rstb_forward.1} parent=1 // pred_fallthru
      _
    // Predicated region
    $region6: #{rstb_forward.1} parent=1 // pred_check
      _
    $region7: #{rstb_forward.1} parent=1 // pred_check_branch
      %87 = sbr.rel (0) target = $region9
    $region8: #{rstb_forward.1} parent=1 // pred_region
      _
    $region9: #{rstb_forward.1} parent=1 // pred_fallthru
      _
    // Predicated region
    $region10: #{rstb_forward.1} parent=1 // pred_check
      _
    $region11: #{rstb_forward.1} parent=1 // pred_check_branch
      %89 = sbr.rel (0) target = $region13
    $region12: #{rstb_forward.1} parent=1 // pred_region
      %91 = vsyncadd [#allocation3], 0
      %s92 = sshll.u32 %s5, 4
      %s93 = int_to_ptr.hbm [resolvable:$true] %s92
      %s94 = sshll.u32 [#allocation2], 4
      %s95 = int_to_ptr.vmem [resolvable:$true] %s94
      %100 = dma.hbm_to_vmem [thread:$0]  %s93, 2048, %s95, [#allocation3], 128, 128, 8
    $region13: #{rstb_forward.1} parent=1 // pred_fallthru
      _
    // Predicated region
    $region14: #{rstb_forward.1} parent=1 // pred_check
      _
    $region15: #{rstb_forward.1} parent=1 // pred_check_branch
      %102 = sbr.rel (0) target = $region17
    $region16: #{rstb_forward.1} parent=1 // pred_region
      %104 = vsyncadd [#allocation5], 0
      %s105 = sshll.u32 %s7, 4
      %s106 = int_to_ptr.hbm [resolvable:$true] %s105
      %s107 = sshll.u32 [#allocation4], 4
      %s108 = int_to_ptr.vmem [resolvable:$true] %s107
      %113 = dma.hbm_to_vmem [thread:$0]  %s106, 2048, %s108, [#allocation5], 128, 128, 8
    $region17: #{rstb_forward.1} parent=1 // pred_fallthru
      _
    // Predicated region
    $region18: #{rstb_forward.1} parent=1 // pred_check
      _
    $region19: #{rstb_forward.1} parent=1 // pred_check_branch
      %115 = sbr.rel (0) target = $region21
    $region20: #{rstb_forward.1} parent=1 // pred_region
      %117 = vsyncadd [#allocation5], 0
      %s118 = sshll.u32 %s9, 4
      %s119 = int_to_ptr.hbm [resolvable:$true] %s118
      %s120 = sshll.u32 [#allocation6], 4
      %s121 = int_to_ptr.vmem [resolvable:$true] %s120
      %126 = dma.hbm_to_vmem [thread:$0]  %s119, 2048, %s121, [#allocation5], 128, 128, 8
    $region21: #{rstb_forward.1} parent=1 // pred_fallthru
      _
    // Predicated region
    $region22: #{rstb_forward.1} parent=1 // pred_check
      _
    $region23: #{rstb_forward.1} parent=1 // pred_check_branch
      %128 = sbr.rel (0) target = $region25
    $region24: #{rstb_forward.1} parent=1 // pred_region
      %130 = vsyncadd [#allocation8], 0
      %s131 = sshll.u32 %s11, 4
      %s132 = int_to_ptr.hbm [resolvable:$true] %s131
      %s133 = sshll.u32 [#allocation7], 4
      %s134 = int_to_ptr.vmem [resolvable:$true] %s133
      %139 = dma.hbm_to_vmem [thread:$0]  %s132, 2048, %s134, [#allocation8], 128, 128, 8
    $region25: #{rstb_forward.1} parent=1 // pred_fallthru
      _
    // Predicated region
    $region26: #{rstb_forward.1} parent=1 // pred_check
      _
    $region27: #{rstb_forward.1} parent=1 // pred_check_branch
      %141 = sbr.rel (0) target = $region29
    $region28: #{rstb_forward.1} parent=1 // pred_region
      %143 = vsyncadd [#allocation8], 0
      %s144 = sshll.u32 %s13, 4
      %s145 = int_to_ptr.hbm [resolvable:$true] %s144
      %s146 = sshll.u32 [#allocation9], 4
      %s147 = int_to_ptr.vmem [resolvable:$true] %s146
      %152 = dma.hbm_to_vmem [thread:$0]  %s145, 18432, %s147, [#allocation8], 128, 128, 8
    $region29: #{rstb_forward.1} parent=1 // pred_fallthru
      _
    // Predicated region
    $region30: #{rstb_forward.1} parent=1 // pred_check
      _
    $region31: #{rstb_forward.1} parent=1 // pred_check_branch
      %154 = sbr.rel (0) target = $region33
    $region32: #{rstb_forward.1} parent=1 // pred_region
      _
    $region33: #{rstb_forward.1} parent=1 // pred_fallthru
      _
    // Predicated region
    $region34: #{rstb_forward.1} parent=1 // pred_check
      _
    $region35: #{rstb_forward.1} parent=1 // pred_check_branch
      %156 = sbr.rel (0) target = $region37
    $region36: #{rstb_forward.1} parent=1 // pred_region
      %158 = vsyncadd [#allocation11], 0
      %s160 = sshll.u32 %s17, 4
      %s161 = int_to_ptr.hbm [resolvable:$true] %s160
      %s162 = sshll.u32 [#allocation10], 4
      %s163 = int_to_ptr.vmem [resolvable:$true] %s162
      %165 = dma.hbm_to_vmem [thread:$0]  %s161, 16, %s163, [#allocation11]
    $region37: #{rstb_forward.1} parent=1 // pred_fallthru
      _
    // Predicated region
    $region38: #{rstb_forward.1} parent=1 // pred_check
      _
    $region39: #{rstb_forward.1} parent=1 // pred_check_branch
      %167 = sbr.rel (0) target = $region41
    $region40: #{rstb_forward.1} parent=1 // pred_region
      _
    $region41: #{rstb_forward.1} parent=1 // pred_fallthru
      _
    // Predicated region
    $region42: #{rstb_forward.1} parent=1 // pred_check
      _
    $region43: #{rstb_forward.1} parent=1 // pred_check_branch
      %169 = sbr.rel (0) target = $region45
    $region44: #{rstb_forward.1} parent=1 // pred_region
      _
    $region45: #{rstb_forward.1} parent=1 // pred_fallthru
      _
    // Predicated region
    $region46: #{rstb_forward.1} parent=1 // pred_check
      _
    $region47: #{rstb_forward.1} parent=1 // pred_check_branch
      %171 = sbr.rel (0) target = $region49
    $region48: #{rstb_forward.1} parent=1 // pred_region
      _
    $region49: #{rstb_forward.1} parent=1 // pred_fallthru
      _
    // Predicated region
    $region50: #{rstb_forward.1} parent=1 // pred_check
      _
    $region51: #{rstb_forward.1} parent=1 // pred_check_branch
      %173 = sbr.rel (0) target = $region53
    $region52: #{rstb_forward.1} parent=1 // pred_region
      _
    $region53: #{rstb_forward.1} parent=1 // pred_fallthru
      _
    // Predicated region
    $region54: #{rstb_forward.1} parent=1 // pred_check
      _
    $region55: #{rstb_forward.1} parent=1 // pred_check_branch
      %175 = sbr.rel (0) target = $region57
    $region56: #{rstb_forward.1} parent=1 // pred_region
      %177 = vsyncadd [#allocation11], 0
      %s178 = sshll.u32 %s27, 4
      %s179 = int_to_ptr.hbm [resolvable:$true] %s178
      %s180 = sshll.u32 [#allocation12], 4
      %s181 = int_to_ptr.vmem [resolvable:$true] %s180
      %186 = dma.hbm_to_vmem [thread:$0]  %s179, 512, %s181, [#allocation11], 128, 128, 8
    $region57: #{rstb_forward.1} parent=1 // pred_fallthru
      _
    // Predicated region
    $region58: #{rstb_forward.1} parent=1 // pred_check
      _
    $region59: #{rstb_forward.1} parent=1 // pred_check_branch
      %188 = sbr.rel (0) target = $region61
    $region60: #{rstb_forward.1} parent=1 // pred_region
      %190 = vsyncadd [#allocation14], 0
      %s191 = sshll.u32 %s29, 4
      %s192 = int_to_ptr.hbm [resolvable:$true] %s191
      %s193 = sshll.u32 [#allocation13], 4
      %s194 = int_to_ptr.vmem [resolvable:$true] %s193
      %199 = dma.hbm_to_vmem [thread:$0]  %s192, 512, %s194, [#allocation14], 128, 128, 8
    $region61: #{rstb_forward.1} parent=1 // pred_fallthru
      _
    // Predicated region
    $region62: #{rstb_forward.1} parent=1 // pred_check
      _
    $region63: #{rstb_forward.1} parent=1 // pred_check_branch
      %201 = sbr.rel (0) target = $region65
    $region64: #{rstb_forward.1} parent=1 // pred_region
      _
    $region65: #{rstb_forward.1} parent=1 // pred_fallthru
      _
    // Predicated region
    $region66: #{rstb_forward.1} parent=1 // pred_check
      _
    $region67: #{rstb_forward.1} parent=1 // pred_check_branch
      %203 = sbr.rel (0) target = $region69
    $region68: #{rstb_forward.1} parent=1 // pred_region
      _
    $region69: #{rstb_forward.1} parent=1 // pred_fallthru
      _
    // Predicated region
    $region70: #{rstb_forward.1} parent=1 // pred_check
      _
    $region71: #{rstb_forward.1} parent=1 // pred_check_branch
      %205 = sbr.rel (0) target = $region73
    $region72: #{rstb_forward.1} parent=1 // pred_region
      _
    $region73: #{rstb_forward.1} parent=1 // pred_fallthru
      _
    // Predicated region
    $region74: #{rstb_forward.1} parent=1 // pred_check
      _
    $region75: #{rstb_forward.1} parent=1 // pred_check_branch
      %207 = sbr.rel (0) target = $region77
    $region76: #{rstb_forward.1} parent=1 // pred_region
      %209 = vsyncadd [#allocation14], 0
      %s210 = sshll.u32 %s37, 4
      %s211 = int_to_ptr.hbm [resolvable:$true] %s210
      %s212 = sshll.u32 [#allocation15], 4
      %s213 = int_to_ptr.vmem [resolvable:$true] %s212
      %218 = dma.hbm_to_vmem [thread:$0]  %s211, 512, %s213, [#allocation14], 128, 128, 8
    $region77: #{rstb_forward.1} parent=1 // pred_fallthru
      _
    // Predicated region
    $region78: #{rstb_forward.1} parent=1 // pred_check
      _
    $region79: #{rstb_forward.1} parent=1 // pred_check_branch
      %220 = sbr.rel (0) target = $region81
    $region80: #{rstb_forward.1} parent=1 // pred_region
      %222 = vsyncadd [#allocation17], 0
      %s224 = sshll.u32 %s39, 4
      %s225 = int_to_ptr.hbm [resolvable:$true] %s224
      %s226 = sshll.u32 [#allocation16], 4
      %s227 = int_to_ptr.vmem [resolvable:$true] %s226
      %229 = dma.hbm_to_vmem [thread:$0]  %s225, 16, %s227, [#allocation17]
    $region81: #{rstb_forward.1} parent=1 // pred_fallthru
      _
    // Predicated region
    $region82: #{rstb_forward.1} parent=1 // pred_check
      _
    $region83: #{rstb_forward.1} parent=1 // pred_check_branch
      %231 = sbr.rel (0) target = $region85
    $region84: #{rstb_forward.1} parent=1 // pred_region
      _
    $region85: #{rstb_forward.1} parent=1 // pred_fallthru
      _
    // Predicated region
    $region86: #{rstb_forward.1} parent=1 // pred_check
      _
    $region87: #{rstb_forward.1} parent=1 // pred_check_branch
      %233 = sbr.rel (0) target = $region89
    $region88: #{rstb_forward.1} parent=1 // pred_region
      _
    $region89: #{rstb_forward.1} parent=1 // pred_fallthru
      _
    // Predicated region
    $region90: #{rstb_forward.1} parent=1 // pred_check
      _
    $region91: #{rstb_forward.1} parent=1 // pred_check_branch
      %235 = sbr.rel (0) target = $region93
    $region92: #{rstb_forward.1} parent=1 // pred_region
      _
    $region93: #{rstb_forward.1} parent=1 // pred_fallthru
      _
    // Predicated region
    $region94: #{rstb_forward.1} parent=1 // pred_check
      _
    $region95: #{rstb_forward.1} parent=1 // pred_check_branch
      %237 = sbr.rel (0) target = $region97
    $region96: #{rstb_forward.1} parent=1 // pred_region
      _
    $region97: #{rstb_forward.1} parent=1 // pred_fallthru
      _
    // Predicated region
    $region98: #{rstb_forward.1} parent=1 // pred_check
      _
    $region99: #{rstb_forward.1} parent=1 // pred_check_branch
      %239 = sbr.rel (0) target = $region101
    $region100: #{rstb_forward.1} parent=1 // pred_region
      %241 = vsyncadd [#allocation17], 0
      %s242 = sshll.u32 %s49, 4
      %s243 = int_to_ptr.hbm [resolvable:$true] %s242
      %s244 = sshll.u32 [#allocation18], 4
      %s245 = int_to_ptr.vmem [resolvable:$true] %s244
      %250 = dma.hbm_to_vmem [thread:$0]  %s243, 512, %s245, [#allocation17], 128, 128, 8
    $region101: #{rstb_forward.1} parent=1 // pred_fallthru
      _
    // Predicated region
    $region102: #{rstb_forward.1} parent=1 // pred_check
      _
    $region103: #{rstb_forward.1} parent=1 // pred_check_branch
      %252 = sbr.rel (0) target = $region105
    $region104: #{rstb_forward.1} parent=1 // pred_region
      _
    $region105: #{rstb_forward.1} parent=1 // pred_fallthru
      _
    // Predicated region
    $region106: #{rstb_forward.1} parent=1 // pred_check
      _
    $region107: #{rstb_forward.1} parent=1 // pred_check_branch
      %254 = sbr.rel (0) target = $region109
    $region108: #{rstb_forward.1} parent=1 // pred_region
      %256 = vsyncadd [#allocation20], 0
      %s257 = sshll.u32 %s53, 4
      %s258 = int_to_ptr.hbm [resolvable:$true] %s257
      %s259 = sshll.u32 [#allocation19], 4
      %s260 = int_to_ptr.vmem [resolvable:$true] %s259
      %265 = dma.hbm_to_vmem [thread:$0]  %s258, 512, %s260, [#allocation20], 128, 128, 8
    $region109: #{rstb_forward.1} parent=1 // pred_fallthru
      _
    // Predicated region
    $region110: #{rstb_forward.1} parent=1 // pred_check
      _
    $region111: #{rstb_forward.1} parent=1 // pred_check_branch
      %267 = sbr.rel (0) target = $region113
    $region112: #{rstb_forward.1} parent=1 // pred_region
      %269 = vsyncadd [#allocation20], 0
      %s270 = sshll.u32 %s55, 4
      %s271 = int_to_ptr.hbm [resolvable:$true] %s270
      %s272 = sshll.u32 [#allocation21], 4
      %s273 = int_to_ptr.vmem [resolvable:$true] %s272
      %278 = dma.hbm_to_vmem [thread:$0]  %s271, 512, %s273, [#allocation20], 128, 128, 8
    $region113: #{rstb_forward.1} parent=1 // pred_fallthru
      _
    // Predicated region
    $region114: #{rstb_forward.1} parent=1 // pred_check
      _
    $region115: #{rstb_forward.1} parent=1 // pred_check_branch
      %280 = sbr.rel (0) target = $region117
    $region116: #{rstb_forward.1} parent=1 // pred_region
      _
    $region117: #{rstb_forward.1} parent=1 // pred_fallthru
      _
    // Predicated region
    $region118: #{rstb_forward.1} parent=1 // pred_check
      _
    $region119: #{rstb_forward.1} parent=1 // pred_check_branch
      %282 = sbr.rel (0) target = $region121
    $region120: #{rstb_forward.1} parent=1 // pred_region
      _
    $region121: #{rstb_forward.1} parent=1 // pred_fallthru
      _
    // Predicated region
    $region122: #{rstb_forward.1} parent=1 // pred_check
      _
    $region123: #{rstb_forward.1} parent=1 // pred_check_branch
      %284 = sbr.rel (0) target = $region125
    $region124: #{rstb_forward.1} parent=1 // pred_region
      _
    $region125: #{rstb_forward.1} parent=1 // pred_fallthru
      _
    // Predicated region
    $region126: #{rstb_forward.1} parent=1 // pred_check
      _
    $region127: #{rstb_forward.1} parent=1 // pred_check_branch
      %286 = sbr.rel (0) target = $region129
    $region128: #{rstb_forward.1} parent=1 // pred_region
      %288 = vsyncadd [#allocation23], 0
      %s289 = sshll.u32 %s63, 4
      %s290 = int_to_ptr.hbm [resolvable:$true] %s289
      %s291 = sshll.u32 [#allocation22], 4
      %s292 = int_to_ptr.vmem [resolvable:$true] %s291
      %297 = dma.hbm_to_vmem [thread:$0]  %s290, 512, %s292, [#allocation23], 128, 128, 8
    $region129: #{rstb_forward.1} parent=1 // pred_fallthru
      _
    // Predicated region
    $region130: #{rstb_forward.1} parent=1 // pred_check
      _
    $region131: #{rstb_forward.1} parent=1 // pred_check_branch
      %299 = sbr.rel (0) target = $region133
    $region132: #{rstb_forward.1} parent=1 // pred_region
      _
    $region133: #{rstb_forward.1} parent=1 // pred_fallthru
      _
    // Predicated region
    $region134: #{rstb_forward.1} parent=1 // pred_check
      _
    $region135: #{rstb_forward.1} parent=1 // pred_check_branch
      %301 = sbr.rel (0) target = $region137
    $region136: #{rstb_forward.1} parent=1 // pred_region
      _
    $region137: #{rstb_forward.1} parent=1 // pred_fallthru
      _
    // Predicated region
    $region138: #{rstb_forward.1} parent=1 // pred_check
      _
    $region139: #{rstb_forward.1} parent=1 // pred_check_branch
      %303 = sbr.rel (0) target = $region141
    $region140: #{rstb_forward.1} parent=1 // pred_region
      _
    $region141: #{rstb_forward.1} parent=1 // pred_fallthru
      _
    // Predicated region
    $region142: #{rstb_forward.1} parent=1 // pred_check
      _
    $region143: #{rstb_forward.1} parent=1 // pred_check_branch
      %305 = sbr.rel (0) target = $region145
    $region144: #{rstb_forward.1} parent=1 // pred_region
      %307 = dma.done [#allocation3], 2048
    $region145: #{rstb_forward.1} parent=1 // pred_fallthru
      _
    // Predicated region
    $region146: #{rstb_forward.1} parent=1 // pred_check
      _
    $region147: #{rstb_forward.1} parent=1 // pred_check_branch
      %309 = sbr.rel (0) target = $region149
    $region148: #{rstb_forward.1} parent=1 // pred_region
      %311 = dma.done [#allocation5], 2048
    $region149: #{rstb_forward.1} parent=1 // pred_fallthru
      _
    // Predicated region
    $region150: #{rstb_forward.1} parent=1 // pred_check
      _
    $region151: #{rstb_forward.1} parent=1 // pred_check_branch
      %313 = sbr.rel (0) target = $region153
    $region152: #{rstb_forward.1} parent=1 // pred_region
      %315 = dma.done [#allocation5], 2048
    $region153: #{rstb_forward.1} parent=1 // pred_fallthru
      _
    // Predicated region
    $region154: #{rstb_forward.1} parent=1 // pred_check
      _
    $region155: #{rstb_forward.1} parent=1 // pred_check_branch
      %317 = sbr.rel (0) target = $region157
    $region156: #{rstb_forward.1} parent=1 // pred_region
      %319 = dma.done [#allocation8], 2048
    $region157: #{rstb_forward.1} parent=1 // pred_fallthru
      _
    // Predicated region
    $region158: #{rstb_forward.1} parent=1 // pred_check
      _
    $region159: #{rstb_forward.1} parent=1 // pred_check_branch
      %321 = sbr.rel (0) target = $region161
    $region160: #{rstb_forward.1} parent=1 // pred_region
      %323 = dma.done [#allocation8], 18432
    $region161: #{rstb_forward.1} parent=1 // pred_fallthru
      _
    // Predicated region
    $region162: #{rstb_forward.1} parent=1 // pred_check
      _
    $region163: #{rstb_forward.1} parent=1 // pred_check_branch
      %325 = sbr.rel (0) target = $region165
    $region164: #{rstb_forward.1} parent=1 // pred_region
      %327 = dma.done [#allocation11], 16
    $region165: #{rstb_forward.1} parent=1 // pred_fallthru
      _
    // Predicated region
    $region166: #{rstb_forward.1} parent=1 // pred_check
      _
    $region167: #{rstb_forward.1} parent=1 // pred_check_branch
      %329 = sbr.rel (0) target = $region169
    $region168: #{rstb_forward.1} parent=1 // pred_region
      %331 = dma.done [#allocation11], 512
    $region169: #{rstb_forward.1} parent=1 // pred_fallthru
      _
    // Predicated region
    $region170: #{rstb_forward.1} parent=1 // pred_check
      _
    $region171: #{rstb_forward.1} parent=1 // pred_check_branch
      %333 = sbr.rel (0) target = $region173
    $region172: #{rstb_forward.1} parent=1 // pred_region
      %335 = dma.done [#allocation14], 512
    $region173: #{rstb_forward.1} parent=1 // pred_fallthru
      _
    // Predicated region
    $region174: #{rstb_forward.1} parent=1 // pred_check
      _
    $region175: #{rstb_forward.1} parent=1 // pred_check_branch
      %337 = sbr.rel (0) target = $region177
    $region176: #{rstb_forward.1} parent=1 // pred_region
      %339 = dma.done [#allocation14], 512
    $region177: #{rstb_forward.1} parent=1 // pred_fallthru
      _
    // Predicated region
    $region178: #{rstb_forward.1} parent=1 // pred_check
      _
    $region179: #{rstb_forward.1} parent=1 // pred_check_branch
      %341 = sbr.rel (0) target = $region181
    $region180: #{rstb_forward.1} parent=1 // pred_region
      %343 = dma.done [#allocation17], 16
    $region181: #{rstb_forward.1} parent=1 // pred_fallthru
      _
    // Predicated region
    $region182: #{rstb_forward.1} parent=1 // pred_check
      _
    $region183: #{rstb_forward.1} parent=1 // pred_check_branch
      %345 = sbr.rel (0) target = $region185
    $region184: #{rstb_forward.1} parent=1 // pred_region
      %347 = dma.done [#allocation17], 512
    $region185: #{rstb_forward.1} parent=1 // pred_fallthru
      _
    // Predicated region
    $region186: #{rstb_forward.1} parent=1 // pred_check
      _
    $region187: #{rstb_forward.1} parent=1 // pred_check_branch
      %349 = sbr.rel (0) target = $region189
    $region188: #{rstb_forward.1} parent=1 // pred_region
      %351 = dma.done [#allocation20], 512
    $region189: #{rstb_forward.1} parent=1 // pred_fallthru
      _
    // Predicated region
    $region190: #{rstb_forward.1} parent=1 // pred_check
      _
    $region191: #{rstb_forward.1} parent=1 // pred_check_branch
      %353 = sbr.rel (0) target = $region193
    $region192: #{rstb_forward.1} parent=1 // pred_region
      %355 = dma.done [#allocation20], 512
    $region193: #{rstb_forward.1} parent=1 // pred_fallthru
      _
    // Predicated region
    $region194: #{rstb_forward.1} parent=1 // pred_check
      _
    $region195: #{rstb_forward.1} parent=1 // pred_check_branch
      %357 = sbr.rel (0) target = $region197
    $region196: #{rstb_forward.1} parent=1 // pred_region
      %359 = dma.done [#allocation23], 512
    $region197: #{rstb_forward.1} parent=1 // pred_fallthru
      _
    %v360 = vld [vmem:[%s1] sm:$0xff]
    %v361 = vld [vmem:[%s1 + $0x8] sm:$0xff]
    %v362 = vld [vmem:[%s1 + $0x10] sm:$0xff]
    %v363 = vld [vmem:[%s1 + $0x18] sm:$0xff]
    %v364 = vld [vmem:[%s1 + $0x20] sm:$0xff]
    %v365 = vld [vmem:[%s1 + $0x28] sm:$0xff]
    %v366 = vld [vmem:[%s1 + $0x30] sm:$0xff]
    %v367 = vld [vmem:[%s1 + $0x38] sm:$0xff]
    %v368 = vld [vmem:[%s1 + $0x40] sm:$0xff]
    %v369 = vld [vmem:[%s1 + $0x48] sm:$0xff]
    %v370 = vld [vmem:[%s1 + $0x50] sm:$0xff]
    %v371 = vld [vmem:[%s1 + $0x58] sm:$0xff]
    %v372 = vld [vmem:[%s1 + $0x60] sm:$0xff]
    %v373 = vld [vmem:[%s1 + $0x68] sm:$0xff]
    %v374 = vld [vmem:[%s1 + $0x70] sm:$0xff]
    %v375 = vld [vmem:[%s1 + $0x78] sm:$0xff]
    %v376 = vld [vmem:[%s3] sm:$0xff]
    %v377 = vld [vmem:[%s3 + $0x8] sm:$0xff]
    %v378 = vld [vmem:[%s3 + $0x10] sm:$0xff]
    %v379 = vld [vmem:[%s3 + $0x18] sm:$0xff]
    %v380 = vld [vmem:[%s3 + $0x20] sm:$0xff]
    %v381 = vld [vmem:[%s3 + $0x28] sm:$0xff]
    %v382 = vld [vmem:[%s3 + $0x30] sm:$0xff]
    %v383 = vld [vmem:[%s3 + $0x38] sm:$0xff]
    %v384 = vld [vmem:[%s3 + $0x40] sm:$0xff]
    %v385 = vld [vmem:[%s3 + $0x48] sm:$0xff]
    %v386 = vld [vmem:[%s3 + $0x50] sm:$0xff]
    %v387 = vld [vmem:[%s3 + $0x58] sm:$0xff]
    %v388 = vld [vmem:[%s3 + $0x60] sm:$0xff]
    %v389 = vld [vmem:[%s3 + $0x68] sm:$0xff]
    %v390 = vld [vmem:[%s3 + $0x70] sm:$0xff]
    %v391 = vld [vmem:[%s3 + $0x78] sm:$0xff]
    %v392 = vld [vmem:[%s19] sm:$0x1]
    %v393 = vld [vmem:[%s21] sm:$0x1]
    %v394 = vld [vmem:[%s23] sm:$0xff]
    %v395 = vld [vmem:[%s23 + $0x8] sm:$0xff]
    %v396 = vld [vmem:[%s23 + $0x10] sm:$0xff]
    %v397 = vld [vmem:[%s23 + $0x18] sm:$0xff]
    %v398 = vld [vmem:[%s25] sm:$0x1]
    %v399 = vld [vmem:[#allocation12] sm:$0xff]
    %v400 = vld [vmem:[#allocation12 + $0x8] sm:$0xff]
    %v401 = vld [vmem:[#allocation12 + $0x10] sm:$0xff]
    %v402 = vld [vmem:[#allocation12 + $0x18] sm:$0xff]
    %v403 = vld [vmem:[#allocation13] sm:$0xff]
    %v404 = vld [vmem:[#allocation13 + $0x8] sm:$0xff]
    %v405 = vld [vmem:[#allocation13 + $0x10] sm:$0xff]
    %v406 = vld [vmem:[#allocation13 + $0x18] sm:$0xff]
    %v407 = vld [vmem:[%s31] sm:$0x1]
    %v408 = vld [vmem:[%s33] sm:$0x1]
    %v409 = vld [vmem:[%s35] sm:$0x1]
    %v410 = vld [vmem:[#allocation15] sm:$0xff]
    %v411 = vld [vmem:[#allocation15 + $0x8] sm:$0xff]
    %v412 = vld [vmem:[#allocation15 + $0x10] sm:$0xff]
    %v413 = vld [vmem:[#allocation15 + $0x18] sm:$0xff]
    %v414 = vld [vmem:[#allocation16] sm:$0x1]
    %v415 = vld [vmem:[%s41] sm:$0xff]
    %v416 = vld [vmem:[%s41 + $0x8] sm:$0xff]
    %v417 = vld [vmem:[%s41 + $0x10] sm:$0xff]
    %v418 = vld [vmem:[%s41 + $0x18] sm:$0xff]
    %v419 = vld [vmem:[%s41 + $0x20] sm:$0xff]
    %v420 = vld [vmem:[%s41 + $0x28] sm:$0xff]
    %v421 = vld [vmem:[%s41 + $0x30] sm:$0xff]
    %v422 = vld [vmem:[%s41 + $0x38] sm:$0xff]
    %v423 = vld [vmem:[%s41 + $0x40] sm:$0xff]
    %v424 = vld [vmem:[%s41 + $0x48] sm:$0xff]
    %v425 = vld [vmem:[%s41 + $0x50] sm:$0xff]
    %v426 = vld [vmem:[%s41 + $0x58] sm:$0xff]
    %v427 = vld [vmem:[%s41 + $0x60] sm:$0xff]
    %v428 = vld [vmem:[%s41 + $0x68] sm:$0xff]
    %v429 = vld [vmem:[%s41 + $0x70] sm:$0xff]
    %v430 = vld [vmem:[%s41 + $0x78] sm:$0xff]
    %v431 = vld [vmem:[%s43] sm:$0x1]
    %v432 = vld [vmem:[#allocation2] sm:$0xff]
    %v433 = vld [vmem:[#allocation2 + $0x8] sm:$0xff]
    %v434 = vld [vmem:[#allocation2 + $0x10] sm:$0xff]
    %v435 = vld [vmem:[#allocation2 + $0x18] sm:$0xff]
    %v436 = vld [vmem:[#allocation2 + $0x20] sm:$0xff]
    %v437 = vld [vmem:[#allocation2 + $0x28] sm:$0xff]
    %v438 = vld [vmem:[#allocation2 + $0x30] sm:$0xff]
    %v439 = vld [vmem:[#allocation2 + $0x38] sm:$0xff]
    %v440 = vld [vmem:[#allocation2 + $0x40] sm:$0xff]
    %v441 = vld [vmem:[#allocation2 + $0x48] sm:$0xff]
    %v442 = vld [vmem:[#allocation2 + $0x50] sm:$0xff]
    %v443 = vld [vmem:[#allocation2 + $0x58] sm:$0xff]
    %v444 = vld [vmem:[#allocation2 + $0x60] sm:$0xff]
    %v445 = vld [vmem:[#allocation2 + $0x68] sm:$0xff]
    %v446 = vld [vmem:[#allocation2 + $0x70] sm:$0xff]
    %v447 = vld [vmem:[#allocation2 + $0x78] sm:$0xff]
    %v448 = vld [vmem:[#allocation4] sm:$0xff]
    %v449 = vld [vmem:[#allocation4 + $0x8] sm:$0xff]
    %v450 = vld [vmem:[#allocation4 + $0x10] sm:$0xff]
    %v451 = vld [vmem:[#allocation4 + $0x18] sm:$0xff]
    %v452 = vld [vmem:[#allocation4 + $0x20] sm:$0xff]
    %v453 = vld [vmem:[#allocation4 + $0x28] sm:$0xff]
    %v454 = vld [vmem:[#allocation4 + $0x30] sm:$0xff]
    %v455 = vld [vmem:[#allocation4 + $0x38] sm:$0xff]
    %v456 = vld [vmem:[#allocation4 + $0x40] sm:$0xff]
    %v457 = vld [vmem:[#allocation4 + $0x48] sm:$0xff]
    %v458 = vld [vmem:[#allocation4 + $0x50] sm:$0xff]
    %v459 = vld [vmem:[#allocation4 + $0x58] sm:$0xff]
    %v460 = vld [vmem:[#allocation4 + $0x60] sm:$0xff]
    %v461 = vld [vmem:[#allocation4 + $0x68] sm:$0xff]
    %v462 = vld [vmem:[#allocation4 + $0x70] sm:$0xff]
    %v463 = vld [vmem:[#allocation4 + $0x78] sm:$0xff]
    %vm464 = vcmask 261120
    %v465 = vsel %vm464, %v360, 0.0
    %466 = vadd.xlane.f32.xlu0 %v465
    %v467 = vpop.xlane.xlu0 %466
    %v468 = vsel %vm464, %v361, 0.0
    %469 = vadd.xlane.f32.xlu0 %v468
    %v470 = vpop.xlane.xlu0 %469
    %v471 = vsel %vm464, %v362, 0.0
    %472 = vadd.xlane.f32.xlu0 %v471
    %v473 = vpop.xlane.xlu0 %472
    %v474 = vsel %vm464, %v363, 0.0
    %475 = vadd.xlane.f32.xlu0 %v474
    %v476 = vpop.xlane.xlu0 %475
    %v477 = vsel %vm464, %v364, 0.0
    %478 = vadd.xlane.f32.xlu0 %v477
    %v479 = vpop.xlane.xlu0 %478
    %v480 = vsel %vm464, %v365, 0.0
    %481 = vadd.xlane.f32.xlu0 %v480
    %v482 = vpop.xlane.xlu0 %481
    %v483 = vsel %vm464, %v366, 0.0
    %484 = vadd.xlane.f32.xlu0 %v483
    %v485 = vpop.xlane.xlu0 %484
    %v486 = vsel %vm464, %v367, 0.0
    %487 = vadd.xlane.f32.xlu0 %v486
    %v488 = vpop.xlane.xlu0 %487
    %v489 = vsel %vm464, %v368, 0.0
    %490 = vadd.xlane.f32.xlu0 %v489
    %v491 = vpop.xlane.xlu0 %490
    %v492 = vsel %vm464, %v369, 0.0
    %493 = vadd.xlane.f32.xlu0 %v492
    %v494 = vpop.xlane.xlu0 %493
    %v495 = vsel %vm464, %v370, 0.0
    %496 = vadd.xlane.f32.xlu0 %v495
    %v497 = vpop.xlane.xlu0 %496
    %v498 = vsel %vm464, %v371, 0.0
    %499 = vadd.xlane.f32.xlu0 %v498
    %v500 = vpop.xlane.xlu0 %499
    %v501 = vsel %vm464, %v372, 0.0
    %502 = vadd.xlane.f32.xlu0 %v501
    %v503 = vpop.xlane.xlu0 %502
    %v504 = vsel %vm464, %v373, 0.0
    %505 = vadd.xlane.f32.xlu0 %v504
    %v506 = vpop.xlane.xlu0 %505
    %v507 = vsel %vm464, %v374, 0.0
    %508 = vadd.xlane.f32.xlu0 %v507
    %v509 = vpop.xlane.xlu0 %508
    %v510 = vsel %vm464, %v375, 0.0
    %511 = vadd.xlane.f32.xlu0 %v510
    %v512 = vpop.xlane.xlu0 %511
    %v513 = vrcp.pop 32.0
    %v514 = vmul.f32 32.0, %v513
    %v515 = vsub.f32 1.0, %v514
    %v516 = vmul.f32 %v513, %v515
    %v517 = vadd.f32 %v513, %v516
    %vm518 = vweird.f32 %v513
    %v519 = vsel %vm518, %v513, %v517
    %v520 = vmul.f32 %v467, %v519
    %v521 = vmul.f32 %v470, %v519
    %v522 = vmul.f32 %v473, %v519
    %v523 = vmul.f32 %v476, %v519
    %v524 = vmul.f32 %v479, %v519
    %v525 = vmul.f32 %v482, %v519
    %v526 = vmul.f32 %v485, %v519
    %v527 = vmul.f32 %v488, %v519
    %v528 = vmul.f32 %v491, %v519
    %v529 = vmul.f32 %v494, %v519
    %v530 = vmul.f32 %v497, %v519
    %v531 = vmul.f32 %v500, %v519
    %v532 = vmul.f32 %v503, %v519
    %v533 = vmul.f32 %v506, %v519
    %v534 = vmul.f32 %v509, %v519
    %v535 = vmul.f32 %v512, %v519
    %v536 = vsub.f32 %v360, %v520
    %v537 = vsub.f32 %v361, %v521
    %v538 = vsub.f32 %v362, %v522
    %v539 = vsub.f32 %v363, %v523
    %v540 = vsub.f32 %v364, %v524
    %v541 = vsub.f32 %v365, %v525
    %v542 = vsub.f32 %v366, %v526
    %v543 = vsub.f32 %v367, %v527
    %v544 = vsub.f32 %v368, %v528
    %v545 = vsub.f32 %v369, %v529
    %v546 = vsub.f32 %v370, %v530
    %v547 = vsub.f32 %v371, %v531
    %v548 = vsub.f32 %v372, %v532
    %v549 = vsub.f32 %v373, %v533
    %v550 = vsub.f32 %v374, %v534
    %v551 = vsub.f32 %v375, %v535
    %v552 = vmul.f32 %v536, %v536
    %v553 = vmul.f32 %v537, %v537
    %v554 = vmul.f32 %v538, %v538
    %v555 = vmul.f32 %v539, %v539
    %v556 = vmul.f32 %v540, %v540
    %v557 = vmul.f32 %v541, %v541
    %v558 = vmul.f32 %v542, %v542
    %v559 = vmul.f32 %v543, %v543
    %v560 = vmul.f32 %v544, %v544
    %v561 = vmul.f32 %v545, %v545
    %v562 = vmul.f32 %v546, %v546
    %v563 = vmul.f32 %v547, %v547
    %v564 = vmul.f32 %v548, %v548
    %v565 = vmul.f32 %v549, %v549
    %v566 = vmul.f32 %v550, %v550
    %v567 = vmul.f32 %v551, %v551
    %v568 = vsel %vm464, %v552, 0.0
    %569 = vadd.xlane.f32.xlu0 %v568
    %v570 = vpop.xlane.xlu0 %569
    %v571 = vsel %vm464, %v553, 0.0
    %572 = vadd.xlane.f32.xlu0 %v571
    %v573 = vpop.xlane.xlu0 %572
    %v574 = vsel %vm464, %v554, 0.0
    %575 = vadd.xlane.f32.xlu0 %v574
    %v576 = vpop.xlane.xlu0 %575
    %v577 = vsel %vm464, %v555, 0.0
    %578 = vadd.xlane.f32.xlu0 %v577
    %v579 = vpop.xlane.xlu0 %578
    %v580 = vsel %vm464, %v556, 0.0
    %581 = vadd.xlane.f32.xlu0 %v580
    %v582 = vpop.xlane.xlu0 %581
    %v583 = vsel %vm464, %v557, 0.0
    %584 = vadd.xlane.f32.xlu0 %v583
    %v585 = vpop.xlane.xlu0 %584
    %v586 = vsel %vm464, %v558, 0.0
    %587 = vadd.xlane.f32.xlu0 %v586
    %v588 = vpop.xlane.xlu0 %587
    %v589 = vsel %vm464, %v559, 0.0
    %590 = vadd.xlane.f32.xlu0 %v589
    %v591 = vpop.xlane.xlu0 %590
    %v592 = vsel %vm464, %v560, 0.0
    %593 = vadd.xlane.f32.xlu0 %v592
    %v594 = vpop.xlane.xlu0 %593
    %v595 = vsel %vm464, %v561, 0.0
    %596 = vadd.xlane.f32.xlu0 %v595
    %v597 = vpop.xlane.xlu0 %596
    %v598 = vsel %vm464, %v562, 0.0
    %599 = vadd.xlane.f32.xlu0 %v598
    %v600 = vpop.xlane.xlu0 %599
    %v601 = vsel %vm464, %v563, 0.0
    %602 = vadd.xlane.f32.xlu0 %v601
    %v603 = vpop.xlane.xlu0 %602
    %v604 = vsel %vm464, %v564, 0.0
    %605 = vadd.xlane.f32.xlu0 %v604
    %v606 = vpop.xlane.xlu0 %605
    %v607 = vsel %vm464, %v565, 0.0
    %608 = vadd.xlane.f32.xlu0 %v607
    %v609 = vpop.xlane.xlu0 %608
    %v610 = vsel %vm464, %v566, 0.0
    %611 = vadd.xlane.f32.xlu0 %v610
    %v612 = vpop.xlane.xlu0 %611
    %v613 = vsel %vm464, %v567, 0.0
    %614 = vadd.xlane.f32.xlu0 %v613
    %v615 = vpop.xlane.xlu0 %614
    %v616 = vmul.f32 %v570, %v519
    %v617 = vmul.f32 %v573, %v519
    %v618 = vmul.f32 %v576, %v519
    %v619 = vmul.f32 %v579, %v519
    %v620 = vmul.f32 %v582, %v519
    %v621 = vmul.f32 %v585, %v519
    %v622 = vmul.f32 %v588, %v519
    %v623 = vmul.f32 %v591, %v519
    %v624 = vmul.f32 %v594, %v519
    %v625 = vmul.f32 %v597, %v519
    %v626 = vmul.f32 %v600, %v519
    %v627 = vmul.f32 %v603, %v519
    %v628 = vmul.f32 %v606, %v519
    %v629 = vmul.f32 %v609, %v519
    %v630 = vmul.f32 %v612, %v519
    %v631 = vmul.f32 %v615, %v519
    %v632 = vadd.f32 %v616, 1e-05
    %v633 = vadd.f32 %v617, 1e-05
    %v634 = vadd.f32 %v618, 1e-05
    %v635 = vadd.f32 %v619, 1e-05
    %v636 = vadd.f32 %v620, 1e-05
    %v637 = vadd.f32 %v621, 1e-05
    %v638 = vadd.f32 %v622, 1e-05
    %v639 = vadd.f32 %v623, 1e-05
    %v640 = vadd.f32 %v624, 1e-05
    %v641 = vadd.f32 %v625, 1e-05
    %v642 = vadd.f32 %v626, 1e-05
    %v643 = vadd.f32 %v627, 1e-05
    %v644 = vadd.f32 %v628, 1e-05
    %v645 = vadd.f32 %v629, 1e-05
    %v646 = vadd.f32 %v630, 1e-05
    %v647 = vadd.f32 %v631, 1e-05
    %v648 = vrsqrt.pop %v632
    %v649 = vmul.f32 %v648, %v632
    %v650 = vmul.f32 %v649, %v648
    %v651 = vmul.f32 0.5, %v650
    %v652 = vsub.f32 1.5, %v651
    %v653 = vmul.f32 %v648, %v652
    %vm654 = vweird.f32 %v632
    %vm655 = vweird.f32 %v648
    %vm656 = vmor %vm654, %vm655
    %v657 = vsel %vm656, %v648, %v653
    %v658 = vrsqrt.pop %v633
    %v659 = vmul.f32 %v658, %v633
    %v660 = vmul.f32 %v659, %v658
    %v661 = vmul.f32 0.5, %v660
    %v662 = vsub.f32 1.5, %v661
    %v663 = vmul.f32 %v658, %v662
    %vm664 = vweird.f32 %v633
    %vm665 = vweird.f32 %v658
    %vm666 = vmor %vm664, %vm665
    %v667 = vsel %vm666, %v658, %v663
    %v668 = vrsqrt.pop %v634
    %v669 = vmul.f32 %v668, %v634
    %v670 = vmul.f32 %v669, %v668
    %v671 = vmul.f32 0.5, %v670
    %v672 = vsub.f32 1.5, %v671
    %v673 = vmul.f32 %v668, %v672
    %vm674 = vweird.f32 %v634
    %vm675 = vweird.f32 %v668
    %vm676 = vmor %vm674, %vm675
    %v677 = vsel %vm676, %v668, %v673
    %v678 = vrsqrt.pop %v635
    %v679 = vmul.f32 %v678, %v635
    %v680 = vmul.f32 %v679, %v678
    %v681 = vmul.f32 0.5, %v680
    %v682 = vsub.f32 1.5, %v681
    %v683 = vmul.f32 %v678, %v682
    %vm684 = vweird.f32 %v635
    %vm685 = vweird.f32 %v678
    %vm686 = vmor %vm684, %vm685
    %v687 = vsel %vm686, %v678, %v683
    %v688 = vrsqrt.pop %v636
    %v689 = vmul.f32 %v688, %v636
    %v690 = vmul.f32 %v689, %v688
    %v691 = vmul.f32 0.5, %v690
    %v692 = vsub.f32 1.5, %v691
    %v693 = vmul.f32 %v688, %v692
    %vm694 = vweird.f32 %v636
    %vm695 = vweird.f32 %v688
    %vm696 = vmor %vm694, %vm695
    %v697 = vsel %vm696, %v688, %v693
    %v698 = vrsqrt.pop %v637
    %v699 = vmul.f32 %v698, %v637
    %v700 = vmul.f32 %v699, %v698
    %v701 = vmul.f32 0.5, %v700
    %v702 = vsub.f32 1.5, %v701
    %v703 = vmul.f32 %v698, %v702
    %vm704 = vweird.f32 %v637
    %vm705 = vweird.f32 %v698
    %vm706 = vmor %vm704, %vm705
    %v707 = vsel %vm706, %v698, %v703
    %v708 = vrsqrt.pop %v638
    %v709 = vmul.f32 %v708, %v638
    %v710 = vmul.f32 %v709, %v708
    %v711 = vmul.f32 0.5, %v710
    %v712 = vsub.f32 1.5, %v711
    %v713 = vmul.f32 %v708, %v712
    %vm714 = vweird.f32 %v638
    %vm715 = vweird.f32 %v708
    %vm716 = vmor %vm714, %vm715
    %v717 = vsel %vm716, %v708, %v713
    %v718 = vrsqrt.pop %v639
    %v719 = vmul.f32 %v718, %v639
    %v720 = vmul.f32 %v719, %v718
    %v721 = vmul.f32 0.5, %v720
    %v722 = vsub.f32 1.5, %v721
    %v723 = vmul.f32 %v718, %v722
    %vm724 = vweird.f32 %v639
    %vm725 = vweird.f32 %v718
    %vm726 = vmor %vm724, %vm725
    %v727 = vsel %vm726, %v718, %v723
    %v728 = vrsqrt.pop %v640
    %v729 = vmul.f32 %v728, %v640
    %v730 = vmul.f32 %v729, %v728
    %v731 = vmul.f32 0.5, %v730
    %v732 = vsub.f32 1.5, %v731
    %v733 = vmul.f32 %v728, %v732
    %vm734 = vweird.f32 %v640
    %vm735 = vweird.f32 %v728
    %vm736 = vmor %vm734, %vm735
    %v737 = vsel %vm736, %v728, %v733
    %v738 = vrsqrt.pop %v641
    %v739 = vmul.f32 %v738, %v641
    %v740 = vmul.f32 %v739, %v738
    %v741 = vmul.f32 0.5, %v740
    %v742 = vsub.f32 1.5, %v741
    %v743 = vmul.f32 %v738, %v742
    %vm744 = vweird.f32 %v641
    %vm745 = vweird.f32 %v738
    %vm746 = vmor %vm744, %vm745
    %v747 = vsel %vm746, %v738, %v743
    %v748 = vrsqrt.pop %v642
    %v749 = vmul.f32 %v748, %v642
    %v750 = vmul.f32 %v749, %v748
    %v751 = vmul.f32 0.5, %v750
    %v752 = vsub.f32 1.5, %v751
    %v753 = vmul.f32 %v748, %v752
    %vm754 = vweird.f32 %v642
    %vm755 = vweird.f32 %v748
    %vm756 = vmor %vm754, %vm755
    %v757 = vsel %vm756, %v748, %v753
    %v758 = vrsqrt.pop %v643
    %v759 = vmul.f32 %v758, %v643
    %v760 = vmul.f32 %v759, %v758
    %v761 = vmul.f32 0.5, %v760
    %v762 = vsub.f32 1.5, %v761
    %v763 = vmul.f32 %v758, %v762
    %vm764 = vweird.f32 %v643
    %vm765 = vweird.f32 %v758
    %vm766 = vmor %vm764, %vm765
    %v767 = vsel %vm766, %v758, %v763
    %v768 = vrsqrt.pop %v644
    %v769 = vmul.f32 %v768, %v644
    %v770 = vmul.f32 %v769, %v768
    %v771 = vmul.f32 0.5, %v770
    %v772 = vsub.f32 1.5, %v771
    %v773 = vmul.f32 %v768, %v772
    %vm774 = vweird.f32 %v644
    %vm775 = vweird.f32 %v768
    %vm776 = vmor %vm774, %vm775
    %v777 = vsel %vm776, %v768, %v773
    %v778 = vrsqrt.pop %v645
    %v779 = vmul.f32 %v778, %v645
    %v780 = vmul.f32 %v779, %v778
    %v781 = vmul.f32 0.5, %v780
    %v782 = vsub.f32 1.5, %v781
    %v783 = vmul.f32 %v778, %v782
    %vm784 = vweird.f32 %v645
    %vm785 = vweird.f32 %v778
    %vm786 = vmor %vm784, %vm785
    %v787 = vsel %vm786, %v778, %v783
    %v788 = vrsqrt.pop %v646
    %v789 = vmul.f32 %v788, %v646
    %v790 = vmul.f32 %v789, %v788
    %v791 = vmul.f32 0.5, %v790
    %v792 = vsub.f32 1.5, %v791
    %v793 = vmul.f32 %v788, %v792
    %vm794 = vweird.f32 %v646
    %vm795 = vweird.f32 %v788
    %vm796 = vmor %vm794, %vm795
    %v797 = vsel %vm796, %v788, %v793
    %v798 = vrsqrt.pop %v647
    %v799 = vmul.f32 %v798, %v647
    %v800 = vmul.f32 %v799, %v798
    %v801 = vmul.f32 0.5, %v800
    %v802 = vsub.f32 1.5, %v801
    %v803 = vmul.f32 %v798, %v802
    %vm804 = vweird.f32 %v647
    %vm805 = vweird.f32 %v798
    %vm806 = vmor %vm804, %vm805
    %v807 = vsel %vm806, %v798, %v803
    %v808 = vmul.f32 %v536, %v657
    %v809 = vmul.f32 %v537, %v667
    %v810 = vmul.f32 %v538, %v677
    %v811 = vmul.f32 %v539, %v687
    %v812 = vmul.f32 %v540, %v697
    %v813 = vmul.f32 %v541, %v707
    %v814 = vmul.f32 %v542, %v717
    %v815 = vmul.f32 %v543, %v727
    %v816 = vmul.f32 %v544, %v737
    %v817 = vmul.f32 %v545, %v747
    %v818 = vmul.f32 %v546, %v757
    %v819 = vmul.f32 %v547, %v767
    %v820 = vmul.f32 %v548, %v777
    %v821 = vmul.f32 %v549, %v787
    %v822 = vmul.f32 %v550, %v797
    %v823 = vmul.f32 %v551, %v807
    %v825 = vperm.slane %v392, 0
    %v827 = vmul.f32 %v808, %v825
    %v828 = vmul.f32 %v809, %v825
    %v829 = vmul.f32 %v810, %v825
    %v830 = vmul.f32 %v811, %v825
    %v831 = vmul.f32 %v812, %v825
    %v832 = vmul.f32 %v813, %v825
    %v833 = vmul.f32 %v814, %v825
    %v834 = vmul.f32 %v815, %v825
    %v835 = vmul.f32 %v816, %v825
    %v836 = vmul.f32 %v817, %v825
    %v837 = vmul.f32 %v818, %v825
    %v838 = vmul.f32 %v819, %v825
    %v839 = vmul.f32 %v820, %v825
    %v840 = vmul.f32 %v821, %v825
    %v841 = vmul.f32 %v822, %v825
    %v842 = vmul.f32 %v823, %v825
    %v844 = vperm.slane %v393, 0
    %v846 = vadd.f32 %v827, %v844
    %v847 = vadd.f32 %v828, %v844
    %v848 = vadd.f32 %v829, %v844
    %v849 = vadd.f32 %v830, %v844
    %v850 = vadd.f32 %v831, %v844
    %v851 = vadd.f32 %v832, %v844
    %v852 = vadd.f32 %v833, %v844
    %v853 = vadd.f32 %v834, %v844
    %v854 = vadd.f32 %v835, %v844
    %v855 = vadd.f32 %v836, %v844
    %v856 = vadd.f32 %v837, %v844
    %v857 = vadd.f32 %v838, %v844
    %v858 = vadd.f32 %v839, %v844
    %v859 = vadd.f32 %v840, %v844
    %v860 = vadd.f32 %v841, %v844
    %v861 = vadd.f32 %v842, %v844
    %862 = vmatpush.msra.mxu0 %v861
    %863 = vmatpush.msra.mxu0 %v860
    %864 = vmatpush.msra.mxu0 %v859
    %865 = vmatpush.msra.mxu0 %v858
    %866 = vmatpush.msra.mxu0 %v857
    %867 = vmatpush.msra.mxu0 %v856
    %868 = vmatpush.msra.mxu0 %v855
    %869 = vmatpush.msra.mxu0 %v854
    %870 = vmatpush.msra.mxu0 %v853
    %871 = vmatpush.msra.mxu0 %v852
    %872 = vmatpush.msra.mxu0 %v851
    %873 = vmatpush.msra.mxu0 %v850
    %874 = vmatpush.msra.mxu0 %v849
    %875 = vmatpush.msra.mxu0 %v848
    %876 = vmatpush.msra.mxu0 %v847
    %877 = vmatpush.msra.mxu0 %v846
    %878 = vmatmul.f32.gmra.mxu0 %v432
    %v879 = vpop.f32.mrf.mxu0
    %v880 = vadd.f32 0.0, %v879
    %881 = vmatmul.f32.gmra.mxu0 %v433
    %v882 = vpop.f32.mrf.mxu0
    %v883 = vadd.f32 0.0, %v882
    %884 = vmatmul.f32.gmra.mxu0 %v434
    %v885 = vpop.f32.mrf.mxu0
    %v886 = vadd.f32 0.0, %v885
    %887 = vmatmul.f32.gmra.mxu0 %v435
    %v888 = vpop.f32.mrf.mxu0
    %v889 = vadd.f32 0.0, %v888
    %890 = vmatmul.f32.gmra.mxu0 %v436
    %v891 = vpop.f32.mrf.mxu0
    %v892 = vadd.f32 0.0, %v891
    %893 = vmatmul.f32.gmra.mxu0 %v437
    %v894 = vpop.f32.mrf.mxu0
    %v895 = vadd.f32 0.0, %v894
    %896 = vmatmul.f32.gmra.mxu0 %v438
    %v897 = vpop.f32.mrf.mxu0
    %v898 = vadd.f32 0.0, %v897
    %899 = vmatmul.f32.gmra.mxu0 %v439
    %v900 = vpop.f32.mrf.mxu0
    %v901 = vadd.f32 0.0, %v900
    %902 = vmatmul.f32.gmra.mxu0 %v440
    %v903 = vpop.f32.mrf.mxu0
    %v904 = vadd.f32 0.0, %v903
    %905 = vmatmul.f32.gmra.mxu0 %v441
    %v906 = vpop.f32.mrf.mxu0
    %v907 = vadd.f32 0.0, %v906
    %908 = vmatmul.f32.gmra.mxu0 %v442
    %v909 = vpop.f32.mrf.mxu0
    %v910 = vadd.f32 0.0, %v909
    %911 = vmatmul.f32.gmra.mxu0 %v443
    %v912 = vpop.f32.mrf.mxu0
    %v913 = vadd.f32 0.0, %v912
    %914 = vmatmul.f32.gmra.mxu0 %v444
    %v915 = vpop.f32.mrf.mxu0
    %v916 = vadd.f32 0.0, %v915
    %917 = vmatmul.f32.gmra.mxu0 %v445
    %v918 = vpop.f32.mrf.mxu0
    %v919 = vadd.f32 0.0, %v918
    %920 = vmatmul.f32.gmra.mxu0 %v446
    %v921 = vpop.f32.mrf.mxu0
    %v922 = vadd.f32 0.0, %v921
    %923 = vmatmul.f32.gmra.mxu0 %v447
    %v924 = vpop.f32.mrf.mxu0
    %v925 = vadd.f32 0.0, %v924
    %926 = vdwg.mxu0
    %v928 = vperm.slane %v398, 0
    %v931 = vsel %vm464, %v880, 0
    %v934 = vsel %vm464, %v883, 0
    %v937 = vsel %vm464, %v886, 0
    %v940 = vsel %vm464, %v889, 0
    %v943 = vsel %vm464, %v892, 0
    %v946 = vsel %vm464, %v895, 0
    %v949 = vsel %vm464, %v898, 0
    %v952 = vsel %vm464, %v901, 0
    %v955 = vsel %vm464, %v904, 0
    %v958 = vsel %vm464, %v907, 0
    %v961 = vsel %vm464, %v910, 0
    %v964 = vsel %vm464, %v913, 0
    %v967 = vsel %vm464, %v916, 0
    %v970 = vsel %vm464, %v919, 0
    %v973 = vsel %vm464, %v922, 0
    %v976 = vsel %vm464, %v925, 0
    %978 = vmatpush.msra.mxu0 0.0
    %979 = vmatpush.msra.mxu0 0.0
    %980 = vmatpush.msra.mxu0 0.0
    %981 = vmatpush.msra.mxu0 0.0
    %982 = vmatpush.msra.mxu0 0.0
    %983 = vmatpush.msra.mxu0 0.0
    %984 = vmatpush.msra.mxu0 0.0
    %985 = vmatpush.msra.mxu0 0.0
    %986 = vmatpush.msra.mxu0 0.0
    %987 = vmatpush.msra.mxu0 0.0
    %988 = vmatpush.msra.mxu0 0.0
    %989 = vmatpush.msra.mxu0 0.0
    %990 = vmatpush.msra.mxu0 %v397
    %991 = vmatpush.msra.mxu0 %v396
    %992 = vmatpush.msra.mxu0 %v395
    %993 = vmatpush.msra.mxu0 %v394
    %994 = vmatmul.f32.gmra.mxu0 %v931
    %v995 = vpop.f32.mrf.mxu0
    %v996 = vadd.f32 %v928, %v995
    %997 = vmatmul.f32.gmra.mxu0 %v934
    %v998 = vpop.f32.mrf.mxu0
    %v999 = vadd.f32 %v928, %v998
    %1000 = vmatmul.f32.gmra.mxu0 %v937
    %v1001 = vpop.f32.mrf.mxu0
    %v1002 = vadd.f32 %v928, %v1001
    %1003 = vmatmul.f32.gmra.mxu0 %v940
    %v1004 = vpop.f32.mrf.mxu0
    %v1005 = vadd.f32 %v928, %v1004
    %1006 = vmatmul.f32.gmra.mxu0 %v943
    %v1007 = vpop.f32.mrf.mxu0
    %v1008 = vadd.f32 %v928, %v1007
    %1009 = vmatmul.f32.gmra.mxu0 %v946
    %v1010 = vpop.f32.mrf.mxu0
    %v1011 = vadd.f32 %v928, %v1010
    %1012 = vmatmul.f32.gmra.mxu0 %v949
    %v1013 = vpop.f32.mrf.mxu0
    %v1014 = vadd.f32 %v928, %v1013
    %1015 = vmatmul.f32.gmra.mxu0 %v952
    %v1016 = vpop.f32.mrf.mxu0
    %v1017 = vadd.f32 %v928, %v1016
    %1018 = vmatmul.f32.gmra.mxu0 %v955
    %v1019 = vpop.f32.mrf.mxu0
    %v1020 = vadd.f32 %v928, %v1019
    %1021 = vmatmul.f32.gmra.mxu0 %v958
    %v1022 = vpop.f32.mrf.mxu0
    %v1023 = vadd.f32 %v928, %v1022
    %1024 = vmatmul.f32.gmra.mxu0 %v961
    %v1025 = vpop.f32.mrf.mxu0
    %v1026 = vadd.f32 %v928, %v1025
    %1027 = vmatmul.f32.gmra.mxu0 %v964
    %v1028 = vpop.f32.mrf.mxu0
    %v1029 = vadd.f32 %v928, %v1028
    %1030 = vmatmul.f32.gmra.mxu0 %v967
    %v1031 = vpop.f32.mrf.mxu0
    %v1032 = vadd.f32 %v928, %v1031
    %1033 = vmatmul.f32.gmra.mxu0 %v970
    %v1034 = vpop.f32.mrf.mxu0
    %v1035 = vadd.f32 %v928, %v1034
    %1036 = vmatmul.f32.gmra.mxu0 %v973
    %v1037 = vpop.f32.mrf.mxu0
    %v1038 = vadd.f32 %v928, %v1037
    %1039 = vmatmul.f32.gmra.mxu0 %v976
    %v1040 = vpop.f32.mrf.mxu0
    %v1041 = vadd.f32 %v928, %v1040
    %1042 = vdwg.mxu0
    %v1043 = vmul.f32 %v996, 0.25
    %v1044 = vmul.f32 %v999, 0.25
    %v1045 = vmul.f32 %v1002, 0.25
    %v1046 = vmul.f32 %v1005, 0.25
    %v1047 = vmul.f32 %v1008, 0.25
    %v1048 = vmul.f32 %v1011, 0.25
    %v1049 = vmul.f32 %v1014, 0.25
    %v1050 = vmul.f32 %v1017, 0.25
    %v1051 = vmul.f32 %v1020, 0.25
    %v1052 = vmul.f32 %v1023, 0.25
    %v1053 = vmul.f32 %v1026, 0.25
    %v1054 = vmul.f32 %v1029, 0.25
    %v1055 = vmul.f32 %v1032, 0.25
    %v1056 = vmul.f32 %v1035, 0.25
    %v1057 = vmul.f32 %v1038, 0.25
    %v1058 = vmul.f32 %v1041, 0.25
    %1061 = vrot.lane.b32.xlu0 %v996, 96
    %v1062 = vpop.permute.xlu0 %1061
    %1063 = vrot.lane.b32.xlu0 %v999, 96
    %v1064 = vpop.permute.xlu0 %1063
    %vm1065 = vcmask 130048
    %v1067 = vsel %vm1065, %v1043, 0
    %v1070 = vsel %vm1065, %v1044, 0
    %v1072 = vsel %vm1065, %v1062, 0
    %v1074 = vsel %vm1065, %v1064, 0
    %1076 = vmatpush.xpose.msra.mxu0 0.0
    %1077 = vmatpush.xpose.msra.mxu0 0.0
    %1078 = vmatpush.xpose.msra.mxu0 0.0
    %1079 = vmatpush.xpose.msra.mxu0 0.0
    %1080 = vmatpush.xpose.msra.mxu0 0.0
    %1081 = vmatpush.xpose.msra.mxu0 0.0
    %1082 = vmatpush.xpose.msra.mxu0 0.0
    %1083 = vmatpush.xpose.msra.mxu0 0.0
    %1084 = vmatpush.xpose.msra.mxu0 0.0
    %1085 = vmatpush.xpose.msra.mxu0 0.0
    %1086 = vmatpush.xpose.msra.mxu0 0.0
    %1087 = vmatpush.xpose.msra.mxu0 0.0
    %1088 = vmatpush.xpose.msra.mxu0 0.0
    %1089 = vmatpush.xpose.msra.mxu0 0.0
    %1090 = vmatpush.xpose.msra.mxu0 %v1074
    %1091 = vmatpush.xpose.msra.mxu0 %v1072
    %1092 = vmatmul.f32.gmra.mxu0 %v1067
    %v1093 = vpop.f32.mrf.mxu0
    %v1094 = vadd.f32 %v399, %v1093
    %1095 = vmatmul.f32.gmra.mxu0 %v1070
    %v1096 = vpop.f32.mrf.mxu0
    %v1097 = vadd.f32 %v400, %v1096
    %1098 = vdwg.mxu0
    %1101 = vrot.lane.b32.xlu0 %v1002, 96
    %v1102 = vpop.permute.xlu0 %1101
    %1103 = vrot.lane.b32.xlu0 %v1005, 96
    %v1104 = vpop.permute.xlu0 %1103
    %v1106 = vsel %vm1065, %v1045, 0
    %v1109 = vsel %vm1065, %v1046, 0
    %v1111 = vsel %vm1065, %v1102, 0
    %v1113 = vsel %vm1065, %v1104, 0
    %1115 = vmatpush.xpose.msra.mxu0 0.0
    %1116 = vmatpush.xpose.msra.mxu0 0.0
    %1117 = vmatpush.xpose.msra.mxu0 0.0
    %1118 = vmatpush.xpose.msra.mxu0 0.0
    %1119 = vmatpush.xpose.msra.mxu0 0.0
    %1120 = vmatpush.xpose.msra.mxu0 0.0
    %1121 = vmatpush.xpose.msra.mxu0 0.0
    %1122 = vmatpush.xpose.msra.mxu0 0.0
    %1123 = vmatpush.xpose.msra.mxu0 0.0
    %1124 = vmatpush.xpose.msra.mxu0 0.0
    %1125 = vmatpush.xpose.msra.mxu0 0.0
    %1126 = vmatpush.xpose.msra.mxu0 0.0
    %1127 = vmatpush.xpose.msra.mxu0 0.0
    %1128 = vmatpush.xpose.msra.mxu0 0.0
    %1129 = vmatpush.xpose.msra.mxu0 %v1113
    %1130 = vmatpush.xpose.msra.mxu0 %v1111
    %1131 = vmatmul.f32.gmra.mxu0 %v1106
    %v1132 = vpop.f32.mrf.mxu0
    %v1133 = vadd.f32 %v399, %v1132
    %1134 = vmatmul.f32.gmra.mxu0 %v1109
    %v1135 = vpop.f32.mrf.mxu0
    %v1136 = vadd.f32 %v400, %v1135
    %1137 = vdwg.mxu0
    %1140 = vrot.lane.b32.xlu0 %v1008, 96
    %v1141 = vpop.permute.xlu0 %1140
    %1142 = vrot.lane.b32.xlu0 %v1011, 96
    %v1143 = vpop.permute.xlu0 %1142
    %v1145 = vsel %vm1065, %v1047, 0
    %v1148 = vsel %vm1065, %v1048, 0
    %v1150 = vsel %vm1065, %v1141, 0
    %v1152 = vsel %vm1065, %v1143, 0
    %1154 = vmatpush.xpose.msra.mxu0 0.0
    %1155 = vmatpush.xpose.msra.mxu0 0.0
    %1156 = vmatpush.xpose.msra.mxu0 0.0
    %1157 = vmatpush.xpose.msra.mxu0 0.0
    %1158 = vmatpush.xpose.msra.mxu0 0.0
    %1159 = vmatpush.xpose.msra.mxu0 0.0
    %1160 = vmatpush.xpose.msra.mxu0 0.0
    %1161 = vmatpush.xpose.msra.mxu0 0.0
    %1162 = vmatpush.xpose.msra.mxu0 0.0
    %1163 = vmatpush.xpose.msra.mxu0 0.0
    %1164 = vmatpush.xpose.msra.mxu0 0.0
    %1165 = vmatpush.xpose.msra.mxu0 0.0
    %1166 = vmatpush.xpose.msra.mxu0 0.0
    %1167 = vmatpush.xpose.msra.mxu0 0.0
    %1168 = vmatpush.xpose.msra.mxu0 %v1152
    %1169 = vmatpush.xpose.msra.mxu0 %v1150
    %1170 = vmatmul.f32.gmra.mxu0 %v1145
    %v1171 = vpop.f32.mrf.mxu0
    %v1172 = vadd.f32 %v399, %v1171
    %1173 = vmatmul.f32.gmra.mxu0 %v1148
    %v1174 = vpop.f32.mrf.mxu0
    %v1175 = vadd.f32 %v400, %v1174
    %1176 = vdwg.mxu0
    %1179 = vrot.lane.b32.xlu0 %v1014, 96
    %v1180 = vpop.permute.xlu0 %1179
    %1181 = vrot.lane.b32.xlu0 %v1017, 96
    %v1182 = vpop.permute.xlu0 %1181
    %v1184 = vsel %vm1065, %v1049, 0
    %v1187 = vsel %vm1065, %v1050, 0
    %v1189 = vsel %vm1065, %v1180, 0
    %v1191 = vsel %vm1065, %v1182, 0
    %1193 = vmatpush.xpose.msra.mxu0 0.0
    %1194 = vmatpush.xpose.msra.mxu0 0.0
    %1195 = vmatpush.xpose.msra.mxu0 0.0
    %1196 = vmatpush.xpose.msra.mxu0 0.0
    %1197 = vmatpush.xpose.msra.mxu0 0.0
    %1198 = vmatpush.xpose.msra.mxu0 0.0
    %1199 = vmatpush.xpose.msra.mxu0 0.0
    %1200 = vmatpush.xpose.msra.mxu0 0.0
    %1201 = vmatpush.xpose.msra.mxu0 0.0
    %1202 = vmatpush.xpose.msra.mxu0 0.0
    %1203 = vmatpush.xpose.msra.mxu0 0.0
    %1204 = vmatpush.xpose.msra.mxu0 0.0
    %1205 = vmatpush.xpose.msra.mxu0 0.0
    %1206 = vmatpush.xpose.msra.mxu0 0.0
    %1207 = vmatpush.xpose.msra.mxu0 %v1191
    %1208 = vmatpush.xpose.msra.mxu0 %v1189
    %1209 = vmatmul.f32.gmra.mxu0 %v1184
    %v1210 = vpop.f32.mrf.mxu0
    %v1211 = vadd.f32 %v399, %v1210
    %1212 = vmatmul.f32.gmra.mxu0 %v1187
    %v1213 = vpop.f32.mrf.mxu0
    %v1214 = vadd.f32 %v400, %v1213
    %1215 = vdwg.mxu0
    %1218 = vrot.lane.b32.xlu0 %v1020, 96
    %v1219 = vpop.permute.xlu0 %1218
    %1220 = vrot.lane.b32.xlu0 %v1023, 96
    %v1221 = vpop.permute.xlu0 %1220
    %v1223 = vsel %vm1065, %v1051, 0
    %v1226 = vsel %vm1065, %v1052, 0
    %v1228 = vsel %vm1065, %v1219, 0
    %v1230 = vsel %vm1065, %v1221, 0
    %1232 = vmatpush.xpose.msra.mxu0 0.0
    %1233 = vmatpush.xpose.msra.mxu0 0.0
    %1234 = vmatpush.xpose.msra.mxu0 0.0
    %1235 = vmatpush.xpose.msra.mxu0 0.0
    %1236 = vmatpush.xpose.msra.mxu0 0.0
    %1237 = vmatpush.xpose.msra.mxu0 0.0
    %1238 = vmatpush.xpose.msra.mxu0 0.0
    %1239 = vmatpush.xpose.msra.mxu0 0.0
    %1240 = vmatpush.xpose.msra.mxu0 0.0
    %1241 = vmatpush.xpose.msra.mxu0 0.0
    %1242 = vmatpush.xpose.msra.mxu0 0.0
    %1243 = vmatpush.xpose.msra.mxu0 0.0
    %1244 = vmatpush.xpose.msra.mxu0 0.0
    %1245 = vmatpush.xpose.msra.mxu0 0.0
    %1246 = vmatpush.xpose.msra.mxu0 %v1230
    %1247 = vmatpush.xpose.msra.mxu0 %v1228
    %1248 = vmatmul.f32.gmra.mxu0 %v1223
    %v1249 = vpop.f32.mrf.mxu0
    %v1250 = vadd.f32 %v399, %v1249
    %1251 = vmatmul.f32.gmra.mxu0 %v1226
    %v1252 = vpop.f32.mrf.mxu0
    %v1253 = vadd.f32 %v400, %v1252
    %1254 = vdwg.mxu0
    %1257 = vrot.lane.b32.xlu0 %v1026, 96
    %v1258 = vpop.permute.xlu0 %1257
    %1259 = vrot.lane.b32.xlu0 %v1029, 96
    %v1260 = vpop.permute.xlu0 %1259
    %v1262 = vsel %vm1065, %v1053, 0
    %v1265 = vsel %vm1065, %v1054, 0
    %v1267 = vsel %vm1065, %v1258, 0
    %v1269 = vsel %vm1065, %v1260, 0
    %1271 = vmatpush.xpose.msra.mxu0 0.0
    %1272 = vmatpush.xpose.msra.mxu0 0.0
    %1273 = vmatpush.xpose.msra.mxu0 0.0
    %1274 = vmatpush.xpose.msra.mxu0 0.0
    %1275 = vmatpush.xpose.msra.mxu0 0.0
    %1276 = vmatpush.xpose.msra.mxu0 0.0
    %1277 = vmatpush.xpose.msra.mxu0 0.0
    %1278 = vmatpush.xpose.msra.mxu0 0.0
    %1279 = vmatpush.xpose.msra.mxu0 0.0
    %1280 = vmatpush.xpose.msra.mxu0 0.0
    %1281 = vmatpush.xpose.msra.mxu0 0.0
    %1282 = vmatpush.xpose.msra.mxu0 0.0
    %1283 = vmatpush.xpose.msra.mxu0 0.0
    %1284 = vmatpush.xpose.msra.mxu0 0.0
    %1285 = vmatpush.xpose.msra.mxu0 %v1269
    %1286 = vmatpush.xpose.msra.mxu0 %v1267
    %1287 = vmatmul.f32.gmra.mxu0 %v1262
    %v1288 = vpop.f32.mrf.mxu0
    %v1289 = vadd.f32 %v399, %v1288
    %1290 = vmatmul.f32.gmra.mxu0 %v1265
    %v1291 = vpop.f32.mrf.mxu0
    %v1292 = vadd.f32 %v400, %v1291
    %1293 = vdwg.mxu0
    %1296 = vrot.lane.b32.xlu0 %v1032, 96
    %v1297 = vpop.permute.xlu0 %1296
    %1298 = vrot.lane.b32.xlu0 %v1035, 96
    %v1299 = vpop.permute.xlu0 %1298
    %v1301 = vsel %vm1065, %v1055, 0
    %v1304 = vsel %vm1065, %v1056, 0
    %v1306 = vsel %vm1065, %v1297, 0
    %v1308 = vsel %vm1065, %v1299, 0
    %1310 = vmatpush.xpose.msra.mxu0 0.0
    %1311 = vmatpush.xpose.msra.mxu0 0.0
    %1312 = vmatpush.xpose.msra.mxu0 0.0
    %1313 = vmatpush.xpose.msra.mxu0 0.0
    %1314 = vmatpush.xpose.msra.mxu0 0.0
    %1315 = vmatpush.xpose.msra.mxu0 0.0
    %1316 = vmatpush.xpose.msra.mxu0 0.0
    %1317 = vmatpush.xpose.msra.mxu0 0.0
    %1318 = vmatpush.xpose.msra.mxu0 0.0
    %1319 = vmatpush.xpose.msra.mxu0 0.0
    %1320 = vmatpush.xpose.msra.mxu0 0.0
    %1321 = vmatpush.xpose.msra.mxu0 0.0
    %1322 = vmatpush.xpose.msra.mxu0 0.0
    %1323 = vmatpush.xpose.msra.mxu0 0.0
    %1324 = vmatpush.xpose.msra.mxu0 %v1308
    %1325 = vmatpush.xpose.msra.mxu0 %v1306
    %1326 = vmatmul.f32.gmra.mxu0 %v1301
    %v1327 = vpop.f32.mrf.mxu0
    %v1328 = vadd.f32 %v399, %v1327
    %1329 = vmatmul.f32.gmra.mxu0 %v1304
    %v1330 = vpop.f32.mrf.mxu0
    %v1331 = vadd.f32 %v400, %v1330
    %1332 = vdwg.mxu0
    %1335 = vrot.lane.b32.xlu0 %v1038, 96
    %v1336 = vpop.permute.xlu0 %1335
    %1337 = vrot.lane.b32.xlu0 %v1041, 96
    %v1338 = vpop.permute.xlu0 %1337
    %v1340 = vsel %vm1065, %v1057, 0
    %v1343 = vsel %vm1065, %v1058, 0
    %v1345 = vsel %vm1065, %v1336, 0
    %v1347 = vsel %vm1065, %v1338, 0
    %1349 = vmatpush.xpose.msra.mxu0 0.0
    %1350 = vmatpush.xpose.msra.mxu0 0.0
    %1351 = vmatpush.xpose.msra.mxu0 0.0
    %1352 = vmatpush.xpose.msra.mxu0 0.0
    %1353 = vmatpush.xpose.msra.mxu0 0.0
    %1354 = vmatpush.xpose.msra.mxu0 0.0
    %1355 = vmatpush.xpose.msra.mxu0 0.0
    %1356 = vmatpush.xpose.msra.mxu0 0.0
    %1357 = vmatpush.xpose.msra.mxu0 0.0
    %1358 = vmatpush.xpose.msra.mxu0 0.0
    %1359 = vmatpush.xpose.msra.mxu0 0.0
    %1360 = vmatpush.xpose.msra.mxu0 0.0
    %1361 = vmatpush.xpose.msra.mxu0 0.0
    %1362 = vmatpush.xpose.msra.mxu0 0.0
    %1363 = vmatpush.xpose.msra.mxu0 %v1347
    %1364 = vmatpush.xpose.msra.mxu0 %v1345
    %1365 = vmatmul.f32.gmra.mxu0 %v1340
    %v1366 = vpop.f32.mrf.mxu0
    %v1367 = vadd.f32 %v399, %v1366
    %1368 = vmatmul.f32.gmra.mxu0 %v1343
    %v1369 = vpop.f32.mrf.mxu0
    %v1370 = vadd.f32 %v400, %v1369
    %1371 = vdwg.mxu0
    %v1372 = vsel %vm1065, %v1094, -inf
    %1373 = vmax.xlane.f32.xlu0 %v1372
    %v1374 = vpop.xlane.xlu0 %1373
    %v1375 = vsel %vm1065, %v1097, -inf
    %1376 = vmax.xlane.f32.xlu0 %v1375
    %v1377 = vpop.xlane.xlu0 %1376
    %v1378 = vsel %vm1065, %v1133, -inf
    %1379 = vmax.xlane.f32.xlu0 %v1378
    %v1380 = vpop.xlane.xlu0 %1379
    %v1381 = vsel %vm1065, %v1136, -inf
    %1382 = vmax.xlane.f32.xlu0 %v1381
    %v1383 = vpop.xlane.xlu0 %1382
    %v1384 = vsel %vm1065, %v1172, -inf
    %1385 = vmax.xlane.f32.xlu0 %v1384
    %v1386 = vpop.xlane.xlu0 %1385
    %v1387 = vsel %vm1065, %v1175, -inf
    %1388 = vmax.xlane.f32.xlu0 %v1387
    %v1389 = vpop.xlane.xlu0 %1388
    %v1390 = vsel %vm1065, %v1211, -inf
    %1391 = vmax.xlane.f32.xlu0 %v1390
    %v1392 = vpop.xlane.xlu0 %1391
    %v1393 = vsel %vm1065, %v1214, -inf
    %1394 = vmax.xlane.f32.xlu0 %v1393
    %v1395 = vpop.xlane.xlu0 %1394
    %v1396 = vsel %vm1065, %v1250, -inf
    %1397 = vmax.xlane.f32.xlu0 %v1396
    %v1398 = vpop.xlane.xlu0 %1397
    %v1399 = vsel %vm1065, %v1253, -inf
    %1400 = vmax.xlane.f32.xlu0 %v1399
    %v1401 = vpop.xlane.xlu0 %1400
    %v1402 = vsel %vm1065, %v1289, -inf
    %1403 = vmax.xlane.f32.xlu0 %v1402
    %v1404 = vpop.xlane.xlu0 %1403
    %v1405 = vsel %vm1065, %v1292, -inf
    %1406 = vmax.xlane.f32.xlu0 %v1405
    %v1407 = vpop.xlane.xlu0 %1406
    %v1408 = vsel %vm1065, %v1328, -inf
    %1409 = vmax.xlane.f32.xlu0 %v1408
    %v1410 = vpop.xlane.xlu0 %1409
    %v1411 = vsel %vm1065, %v1331, -inf
    %1412 = vmax.xlane.f32.xlu0 %v1411
    %v1413 = vpop.xlane.xlu0 %1412
    %v1414 = vsel %vm1065, %v1367, -inf
    %1415 = vmax.xlane.f32.xlu0 %v1414
    %v1416 = vpop.xlane.xlu0 %1415
    %v1417 = vsel %vm1065, %v1370, -inf
    %1418 = vmax.xlane.f32.xlu0 %v1417
    %v1419 = vpop.xlane.xlu0 %1418
    %v1420 = vsub.f32 %v1094, %v1374
    %v1421 = vsub.f32 %v1097, %v1377
    %v1422 = vsub.f32 %v1133, %v1380
    %v1423 = vsub.f32 %v1136, %v1383
    %v1424 = vsub.f32 %v1172, %v1386
    %v1425 = vsub.f32 %v1175, %v1389
    %v1426 = vsub.f32 %v1211, %v1392
    %v1427 = vsub.f32 %v1214, %v1395
    %v1428 = vsub.f32 %v1250, %v1398
    %v1429 = vsub.f32 %v1253, %v1401
    %v1430 = vsub.f32 %v1289, %v1404
    %v1431 = vsub.f32 %v1292, %v1407
    %v1432 = vsub.f32 %v1328, %v1410
    %v1433 = vsub.f32 %v1331, %v1413
    %v1434 = vsub.f32 %v1367, %v1416
    %v1435 = vsub.f32 %v1370, %v1419
    %v1436 = vmul.f32 %v1420, 1.442695
    %v1437 = vpow.pop %v1436
    %v1438 = vmul.f32 %v1421, 1.442695
    %v1439 = vpow.pop %v1438
    %v1440 = vmul.f32 %v1422, 1.442695
    %v1441 = vpow.pop %v1440
    %v1442 = vmul.f32 %v1423, 1.442695
    %v1443 = vpow.pop %v1442
    %v1444 = vmul.f32 %v1424, 1.442695
    %v1445 = vpow.pop %v1444
    %v1446 = vmul.f32 %v1425, 1.442695
    %v1447 = vpow.pop %v1446
    %v1448 = vmul.f32 %v1426, 1.442695
    %v1449 = vpow.pop %v1448
    %v1450 = vmul.f32 %v1427, 1.442695
    %v1451 = vpow.pop %v1450
    %v1452 = vmul.f32 %v1428, 1.442695
    %v1453 = vpow.pop %v1452
    %v1454 = vmul.f32 %v1429, 1.442695
    %v1455 = vpow.pop %v1454
    %v1456 = vmul.f32 %v1430, 1.442695
    %v1457 = vpow.pop %v1456
    %v1458 = vmul.f32 %v1431, 1.442695
    %v1459 = vpow.pop %v1458
    %v1460 = vmul.f32 %v1432, 1.442695
    %v1461 = vpow.pop %v1460
    %v1462 = vmul.f32 %v1433, 1.442695
    %v1463 = vpow.pop %v1462
    %v1464 = vmul.f32 %v1434, 1.442695
    %v1465 = vpow.pop %v1464
    %v1466 = vmul.f32 %v1435, 1.442695
    %v1467 = vpow.pop %v1466
    %v1468 = vsel %vm1065, %v1437, 0.0
    %1469 = vadd.xlane.f32.xlu0 %v1468
    %v1470 = vpop.xlane.xlu0 %1469
    %v1471 = vsel %vm1065, %v1439, 0.0
    %1472 = vadd.xlane.f32.xlu0 %v1471
    %v1473 = vpop.xlane.xlu0 %1472
    %v1474 = vsel %vm1065, %v1441, 0.0
    %1475 = vadd.xlane.f32.xlu0 %v1474
    %v1476 = vpop.xlane.xlu0 %1475
    %v1477 = vsel %vm1065, %v1443, 0.0
    %1478 = vadd.xlane.f32.xlu0 %v1477
    %v1479 = vpop.xlane.xlu0 %1478
    %v1480 = vsel %vm1065, %v1445, 0.0
    %1481 = vadd.xlane.f32.xlu0 %v1480
    %v1482 = vpop.xlane.xlu0 %1481
    %v1483 = vsel %vm1065, %v1447, 0.0
    %1484 = vadd.xlane.f32.xlu0 %v1483
    %v1485 = vpop.xlane.xlu0 %1484
    %v1486 = vsel %vm1065, %v1449, 0.0
    %1487 = vadd.xlane.f32.xlu0 %v1486
    %v1488 = vpop.xlane.xlu0 %1487
    %v1489 = vsel %vm1065, %v1451, 0.0
    %1490 = vadd.xlane.f32.xlu0 %v1489
    %v1491 = vpop.xlane.xlu0 %1490
    %v1492 = vsel %vm1065, %v1453, 0.0
    %1493 = vadd.xlane.f32.xlu0 %v1492
    %v1494 = vpop.xlane.xlu0 %1493
    %v1495 = vsel %vm1065, %v1455, 0.0
    %1496 = vadd.xlane.f32.xlu0 %v1495
    %v1497 = vpop.xlane.xlu0 %1496
    %v1498 = vsel %vm1065, %v1457, 0.0
    %1499 = vadd.xlane.f32.xlu0 %v1498
    %v1500 = vpop.xlane.xlu0 %1499
    %v1501 = vsel %vm1065, %v1459, 0.0
    %1502 = vadd.xlane.f32.xlu0 %v1501
    %v1503 = vpop.xlane.xlu0 %1502
    %v1504 = vsel %vm1065, %v1461, 0.0
    %1505 = vadd.xlane.f32.xlu0 %v1504
    %v1506 = vpop.xlane.xlu0 %1505
    %v1507 = vsel %vm1065, %v1463, 0.0
    %1508 = vadd.xlane.f32.xlu0 %v1507
    %v1509 = vpop.xlane.xlu0 %1508
    %v1510 = vsel %vm1065, %v1465, 0.0
    %1511 = vadd.xlane.f32.xlu0 %v1510
    %v1512 = vpop.xlane.xlu0 %1511
    %v1513 = vsel %vm1065, %v1467, 0.0
    %1514 = vadd.xlane.f32.xlu0 %v1513
    %v1515 = vpop.xlane.xlu0 %1514
    %v1516 = vrcp.pop %v1470
    %v1517 = vmul.f32 %v1470, %v1516
    %v1518 = vsub.f32 1.0, %v1517
    %v1519 = vmul.f32 %v1516, %v1518
    %v1520 = vadd.f32 %v1516, %v1519
    %vm1521 = vweird.f32 %v1470
    %vm1522 = vweird.f32 %v1516
    %vm1523 = vmor %vm1521, %vm1522
    %v1524 = vsel %vm1523, %v1516, %v1520
    %v1525 = vand.u32 2147483647, %v1470
    %vm1526 = vcmp.eq.f32.partialorder %v1525, 8.507059e+37
    %v1527 = vand.u32 %v1470, 2147483648
    %v1528 = vor.u32 1.1754944e-38, %v1527
    %v1529 = vsel %vm1526, %v1528, %v1524
    %v1530 = vmul.f32 %v1437, %v1529
    %v1531 = vrcp.pop %v1473
    %v1532 = vmul.f32 %v1473, %v1531
    %v1533 = vsub.f32 1.0, %v1532
    %v1534 = vmul.f32 %v1531, %v1533
    %v1535 = vadd.f32 %v1531, %v1534
    %vm1536 = vweird.f32 %v1473
    %vm1537 = vweird.f32 %v1531
    %vm1538 = vmor %vm1536, %vm1537
    %v1539 = vsel %vm1538, %v1531, %v1535
    %v1540 = vand.u32 2147483647, %v1473
    %vm1541 = vcmp.eq.f32.partialorder %v1540, 8.507059e+37
    %v1542 = vand.u32 %v1473, 2147483648
    %v1543 = vor.u32 1.1754944e-38, %v1542
    %v1544 = vsel %vm1541, %v1543, %v1539
    %v1545 = vmul.f32 %v1439, %v1544
    %v1546 = vrcp.pop %v1476
    %v1547 = vmul.f32 %v1476, %v1546
    %v1548 = vsub.f32 1.0, %v1547
    %v1549 = vmul.f32 %v1546, %v1548
    %v1550 = vadd.f32 %v1546, %v1549
    %vm1551 = vweird.f32 %v1476
    %vm1552 = vweird.f32 %v1546
    %vm1553 = vmor %vm1551, %vm1552
    %v1554 = vsel %vm1553, %v1546, %v1550
    %v1555 = vand.u32 2147483647, %v1476
    %vm1556 = vcmp.eq.f32.partialorder %v1555, 8.507059e+37
    %v1557 = vand.u32 %v1476, 2147483648
    %v1558 = vor.u32 1.1754944e-38, %v1557
    %v1559 = vsel %vm1556, %v1558, %v1554
    %v1560 = vmul.f32 %v1441, %v1559
    %v1561 = vrcp.pop %v1479
    %v1562 = vmul.f32 %v1479, %v1561
    %v1563 = vsub.f32 1.0, %v1562
    %v1564 = vmul.f32 %v1561, %v1563
    %v1565 = vadd.f32 %v1561, %v1564
    %vm1566 = vweird.f32 %v1479
    %vm1567 = vweird.f32 %v1561
    %vm1568 = vmor %vm1566, %vm1567
    %v1569 = vsel %vm1568, %v1561, %v1565
    %v1570 = vand.u32 2147483647, %v1479
    %vm1571 = vcmp.eq.f32.partialorder %v1570, 8.507059e+37
    %v1572 = vand.u32 %v1479, 2147483648
    %v1573 = vor.u32 1.1754944e-38, %v1572
    %v1574 = vsel %vm1571, %v1573, %v1569
    %v1575 = vmul.f32 %v1443, %v1574
    %v1576 = vrcp.pop %v1482
    %v1577 = vmul.f32 %v1482, %v1576
    %v1578 = vsub.f32 1.0, %v1577
    %v1579 = vmul.f32 %v1576, %v1578
    %v1580 = vadd.f32 %v1576, %v1579
    %vm1581 = vweird.f32 %v1482
    %vm1582 = vweird.f32 %v1576
    %vm1583 = vmor %vm1581, %vm1582
    %v1584 = vsel %vm1583, %v1576, %v1580
    %v1585 = vand.u32 2147483647, %v1482
    %vm1586 = vcmp.eq.f32.partialorder %v1585, 8.507059e+37
    %v1587 = vand.u32 %v1482, 2147483648
    %v1588 = vor.u32 1.1754944e-38, %v1587
    %v1589 = vsel %vm1586, %v1588, %v1584
    %v1590 = vmul.f32 %v1445, %v1589
    %v1591 = vrcp.pop %v1485
    %v1592 = vmul.f32 %v1485, %v1591
    %v1593 = vsub.f32 1.0, %v1592
    %v1594 = vmul.f32 %v1591, %v1593
    %v1595 = vadd.f32 %v1591, %v1594
    %vm1596 = vweird.f32 %v1485
    %vm1597 = vweird.f32 %v1591
    %vm1598 = vmor %vm1596, %vm1597
    %v1599 = vsel %vm1598, %v1591, %v1595
    %v1600 = vand.u32 2147483647, %v1485
    %vm1601 = vcmp.eq.f32.partialorder %v1600, 8.507059e+37
    %v1602 = vand.u32 %v1485, 2147483648
    %v1603 = vor.u32 1.1754944e-38, %v1602
    %v1604 = vsel %vm1601, %v1603, %v1599
    %v1605 = vmul.f32 %v1447, %v1604
    %v1606 = vrcp.pop %v1488
    %v1607 = vmul.f32 %v1488, %v1606
    %v1608 = vsub.f32 1.0, %v1607
    %v1609 = vmul.f32 %v1606, %v1608
    %v1610 = vadd.f32 %v1606, %v1609
    %vm1611 = vweird.f32 %v1488
    %vm1612 = vweird.f32 %v1606
    %vm1613 = vmor %vm1611, %vm1612
    %v1614 = vsel %vm1613, %v1606, %v1610
    %v1615 = vand.u32 2147483647, %v1488
    %vm1616 = vcmp.eq.f32.partialorder %v1615, 8.507059e+37
    %v1617 = vand.u32 %v1488, 2147483648
    %v1618 = vor.u32 1.1754944e-38, %v1617
    %v1619 = vsel %vm1616, %v1618, %v1614
    %v1620 = vmul.f32 %v1449, %v1619
    %v1621 = vrcp.pop %v1491
    %v1622 = vmul.f32 %v1491, %v1621
    %v1623 = vsub.f32 1.0, %v1622
    %v1624 = vmul.f32 %v1621, %v1623
    %v1625 = vadd.f32 %v1621, %v1624
    %vm1626 = vweird.f32 %v1491
    %vm1627 = vweird.f32 %v1621
    %vm1628 = vmor %vm1626, %vm1627
    %v1629 = vsel %vm1628, %v1621, %v1625
    %v1630 = vand.u32 2147483647, %v1491
    %vm1631 = vcmp.eq.f32.partialorder %v1630, 8.507059e+37
    %v1632 = vand.u32 %v1491, 2147483648
    %v1633 = vor.u32 1.1754944e-38, %v1632
    %v1634 = vsel %vm1631, %v1633, %v1629
    %v1635 = vmul.f32 %v1451, %v1634
    %v1636 = vrcp.pop %v1494
    %v1637 = vmul.f32 %v1494, %v1636
    %v1638 = vsub.f32 1.0, %v1637
    %v1639 = vmul.f32 %v1636, %v1638
    %v1640 = vadd.f32 %v1636, %v1639
    %vm1641 = vweird.f32 %v1494
    %vm1642 = vweird.f32 %v1636
    %vm1643 = vmor %vm1641, %vm1642
    %v1644 = vsel %vm1643, %v1636, %v1640
    %v1645 = vand.u32 2147483647, %v1494
    %vm1646 = vcmp.eq.f32.partialorder %v1645, 8.507059e+37
    %v1647 = vand.u32 %v1494, 2147483648
    %v1648 = vor.u32 1.1754944e-38, %v1647
    %v1649 = vsel %vm1646, %v1648, %v1644
    %v1650 = vmul.f32 %v1453, %v1649
    %v1651 = vrcp.pop %v1497
    %v1652 = vmul.f32 %v1497, %v1651
    %v1653 = vsub.f32 1.0, %v1652
    %v1654 = vmul.f32 %v1651, %v1653
    %v1655 = vadd.f32 %v1651, %v1654
    %vm1656 = vweird.f32 %v1497
    %vm1657 = vweird.f32 %v1651
    %vm1658 = vmor %vm1656, %vm1657
    %v1659 = vsel %vm1658, %v1651, %v1655
    %v1660 = vand.u32 2147483647, %v1497
    %vm1661 = vcmp.eq.f32.partialorder %v1660, 8.507059e+37
    %v1662 = vand.u32 %v1497, 2147483648
    %v1663 = vor.u32 1.1754944e-38, %v1662
    %v1664 = vsel %vm1661, %v1663, %v1659
    %v1665 = vmul.f32 %v1455, %v1664
    %v1666 = vrcp.pop %v1500
    %v1667 = vmul.f32 %v1500, %v1666
    %v1668 = vsub.f32 1.0, %v1667
    %v1669 = vmul.f32 %v1666, %v1668
    %v1670 = vadd.f32 %v1666, %v1669
    %vm1671 = vweird.f32 %v1500
    %vm1672 = vweird.f32 %v1666
    %vm1673 = vmor %vm1671, %vm1672
    %v1674 = vsel %vm1673, %v1666, %v1670
    %v1675 = vand.u32 2147483647, %v1500
    %vm1676 = vcmp.eq.f32.partialorder %v1675, 8.507059e+37
    %v1677 = vand.u32 %v1500, 2147483648
    %v1678 = vor.u32 1.1754944e-38, %v1677
    %v1679 = vsel %vm1676, %v1678, %v1674
    %v1680 = vmul.f32 %v1457, %v1679
    %v1681 = vrcp.pop %v1503
    %v1682 = vmul.f32 %v1503, %v1681
    %v1683 = vsub.f32 1.0, %v1682
    %v1684 = vmul.f32 %v1681, %v1683
    %v1685 = vadd.f32 %v1681, %v1684
    %vm1686 = vweird.f32 %v1503
    %vm1687 = vweird.f32 %v1681
    %vm1688 = vmor %vm1686, %vm1687
    %v1689 = vsel %vm1688, %v1681, %v1685
    %v1690 = vand.u32 2147483647, %v1503
    %vm1691 = vcmp.eq.f32.partialorder %v1690, 8.507059e+37
    %v1692 = vand.u32 %v1503, 2147483648
    %v1693 = vor.u32 1.1754944e-38, %v1692
    %v1694 = vsel %vm1691, %v1693, %v1689
    %v1695 = vmul.f32 %v1459, %v1694
    %v1696 = vrcp.pop %v1506
    %v1697 = vmul.f32 %v1506, %v1696
    %v1698 = vsub.f32 1.0, %v1697
    %v1699 = vmul.f32 %v1696, %v1698
    %v1700 = vadd.f32 %v1696, %v1699
    %vm1701 = vweird.f32 %v1506
    %vm1702 = vweird.f32 %v1696
    %vm1703 = vmor %vm1701, %vm1702
    %v1704 = vsel %vm1703, %v1696, %v1700
    %v1705 = vand.u32 2147483647, %v1506
    %vm1706 = vcmp.eq.f32.partialorder %v1705, 8.507059e+37
    %v1707 = vand.u32 %v1506, 2147483648
    %v1708 = vor.u32 1.1754944e-38, %v1707
    %v1709 = vsel %vm1706, %v1708, %v1704
    %v1710 = vmul.f32 %v1461, %v1709
    %v1711 = vrcp.pop %v1509
    %v1712 = vmul.f32 %v1509, %v1711
    %v1713 = vsub.f32 1.0, %v1712
    %v1714 = vmul.f32 %v1711, %v1713
    %v1715 = vadd.f32 %v1711, %v1714
    %vm1716 = vweird.f32 %v1509
    %vm1717 = vweird.f32 %v1711
    %vm1718 = vmor %vm1716, %vm1717
    %v1719 = vsel %vm1718, %v1711, %v1715
    %v1720 = vand.u32 2147483647, %v1509
    %vm1721 = vcmp.eq.f32.partialorder %v1720, 8.507059e+37
    %v1722 = vand.u32 %v1509, 2147483648
    %v1723 = vor.u32 1.1754944e-38, %v1722
    %v1724 = vsel %vm1721, %v1723, %v1719
    %v1725 = vmul.f32 %v1463, %v1724
    %v1726 = vrcp.pop %v1512
    %v1727 = vmul.f32 %v1512, %v1726
    %v1728 = vsub.f32 1.0, %v1727
    %v1729 = vmul.f32 %v1726, %v1728
    %v1730 = vadd.f32 %v1726, %v1729
    %vm1731 = vweird.f32 %v1512
    %vm1732 = vweird.f32 %v1726
    %vm1733 = vmor %vm1731, %vm1732
    %v1734 = vsel %vm1733, %v1726, %v1730
    %v1735 = vand.u32 2147483647, %v1512
    %vm1736 = vcmp.eq.f32.partialorder %v1735, 8.507059e+37
    %v1737 = vand.u32 %v1512, 2147483648
    %v1738 = vor.u32 1.1754944e-38, %v1737
    %v1739 = vsel %vm1736, %v1738, %v1734
    %v1740 = vmul.f32 %v1465, %v1739
    %v1741 = vrcp.pop %v1515
    %v1742 = vmul.f32 %v1515, %v1741
    %v1743 = vsub.f32 1.0, %v1742
    %v1744 = vmul.f32 %v1741, %v1743
    %v1745 = vadd.f32 %v1741, %v1744
    %vm1746 = vweird.f32 %v1515
    %vm1747 = vweird.f32 %v1741
    %vm1748 = vmor %vm1746, %vm1747
    %v1749 = vsel %vm1748, %v1741, %v1745
    %v1750 = vand.u32 2147483647, %v1515
    %vm1751 = vcmp.eq.f32.partialorder %v1750, 8.507059e+37
    %v1752 = vand.u32 %v1515, 2147483648
    %v1753 = vor.u32 1.1754944e-38, %v1752
    %v1754 = vsel %vm1751, %v1753, %v1749
    %v1755 = vmul.f32 %v1467, %v1754
    %1756 = vrot.lane.b32.xlu0 %v996, 64
    %v1757 = vpop.permute.xlu0 %1756
    %1758 = vrot.lane.b32.xlu0 %v999, 64
    %v1759 = vpop.permute.xlu0 %1758
    %v1763 = vsel %vm1065, %v1530, 0
    %v1766 = vsel %vm1065, %v1545, 0
    %1768 = vmatpush.msra.mxu0 0.0
    %1769 = vmatpush.msra.mxu0 0.0
    %1770 = vmatpush.msra.mxu0 0.0
    %1771 = vmatpush.msra.mxu0 0.0
    %1772 = vmatpush.msra.mxu0 0.0
    %1773 = vmatpush.msra.mxu0 0.0
    %1774 = vmatpush.msra.mxu0 0.0
    %1775 = vmatpush.msra.mxu0 0.0
    %1776 = vmatpush.msra.mxu0 0.0
    %1777 = vmatpush.msra.mxu0 0.0
    %1778 = vmatpush.msra.mxu0 0.0
    %1779 = vmatpush.msra.mxu0 0.0
    %1780 = vmatpush.msra.mxu0 0.0
    %1781 = vmatpush.msra.mxu0 0.0
    %1782 = vmatpush.msra.mxu0 %v1759
    %1783 = vmatpush.msra.mxu0 %v1757
    %1784 = vmatmul.f32.gmra.mxu0 %v1763
    %v1785 = vpop.f32.mrf.mxu0
    %v1786 = vadd.f32 0.0, %v1785
    %1787 = vmatmul.f32.gmra.mxu0 %v1766
    %v1788 = vpop.f32.mrf.mxu0
    %v1789 = vadd.f32 0.0, %v1788
    %1790 = vdwg.mxu0
    %1791 = vrot.lane.b32.xlu0 %v1002, 64
    %v1792 = vpop.permute.xlu0 %1791
    %1793 = vrot.lane.b32.xlu0 %v1005, 64
    %v1794 = vpop.permute.xlu0 %1793
    %v1798 = vsel %vm1065, %v1560, 0
    %v1801 = vsel %vm1065, %v1575, 0
    %1803 = vmatpush.msra.mxu0 0.0
    %1804 = vmatpush.msra.mxu0 0.0
    %1805 = vmatpush.msra.mxu0 0.0
    %1806 = vmatpush.msra.mxu0 0.0
    %1807 = vmatpush.msra.mxu0 0.0
    %1808 = vmatpush.msra.mxu0 0.0
    %1809 = vmatpush.msra.mxu0 0.0
    %1810 = vmatpush.msra.mxu0 0.0
    %1811 = vmatpush.msra.mxu0 0.0
    %1812 = vmatpush.msra.mxu0 0.0
    %1813 = vmatpush.msra.mxu0 0.0
    %1814 = vmatpush.msra.mxu0 0.0
    %1815 = vmatpush.msra.mxu0 0.0
    %1816 = vmatpush.msra.mxu0 0.0
    %1817 = vmatpush.msra.mxu0 %v1794
    %1818 = vmatpush.msra.mxu0 %v1792
    %1819 = vmatmul.f32.gmra.mxu0 %v1798
    %v1820 = vpop.f32.mrf.mxu0
    %v1821 = vadd.f32 0.0, %v1820
    %1822 = vmatmul.f32.gmra.mxu0 %v1801
    %v1823 = vpop.f32.mrf.mxu0
    %v1824 = vadd.f32 0.0, %v1823
    %1825 = vdwg.mxu0
    %1826 = vrot.lane.b32.xlu0 %v1008, 64
    %v1827 = vpop.permute.xlu0 %1826
    %1828 = vrot.lane.b32.xlu0 %v1011, 64
    %v1829 = vpop.permute.xlu0 %1828
    %v1833 = vsel %vm1065, %v1590, 0
    %v1836 = vsel %vm1065, %v1605, 0
    %1838 = vmatpush.msra.mxu0 0.0
    %1839 = vmatpush.msra.mxu0 0.0
    %1840 = vmatpush.msra.mxu0 0.0
    %1841 = vmatpush.msra.mxu0 0.0
    %1842 = vmatpush.msra.mxu0 0.0
    %1843 = vmatpush.msra.mxu0 0.0
    %1844 = vmatpush.msra.mxu0 0.0
    %1845 = vmatpush.msra.mxu0 0.0
    %1846 = vmatpush.msra.mxu0 0.0
    %1847 = vmatpush.msra.mxu0 0.0
    %1848 = vmatpush.msra.mxu0 0.0
    %1849 = vmatpush.msra.mxu0 0.0
    %1850 = vmatpush.msra.mxu0 0.0
    %1851 = vmatpush.msra.mxu0 0.0
    %1852 = vmatpush.msra.mxu0 %v1829
    %1853 = vmatpush.msra.mxu0 %v1827
    %1854 = vmatmul.f32.gmra.mxu0 %v1833
    %v1855 = vpop.f32.mrf.mxu0
    %v1856 = vadd.f32 0.0, %v1855
    %1857 = vmatmul.f32.gmra.mxu0 %v1836
    %v1858 = vpop.f32.mrf.mxu0
    %v1859 = vadd.f32 0.0, %v1858
    %1860 = vdwg.mxu0
    %1861 = vrot.lane.b32.xlu0 %v1014, 64
    %v1862 = vpop.permute.xlu0 %1861
    %1863 = vrot.lane.b32.xlu0 %v1017, 64
    %v1864 = vpop.permute.xlu0 %1863
    %v1868 = vsel %vm1065, %v1620, 0
    %v1871 = vsel %vm1065, %v1635, 0
    %1873 = vmatpush.msra.mxu0 0.0
    %1874 = vmatpush.msra.mxu0 0.0
    %1875 = vmatpush.msra.mxu0 0.0
    %1876 = vmatpush.msra.mxu0 0.0
    %1877 = vmatpush.msra.mxu0 0.0
    %1878 = vmatpush.msra.mxu0 0.0
    %1879 = vmatpush.msra.mxu0 0.0
    %1880 = vmatpush.msra.mxu0 0.0
    %1881 = vmatpush.msra.mxu0 0.0
    %1882 = vmatpush.msra.mxu0 0.0
    %1883 = vmatpush.msra.mxu0 0.0
    %1884 = vmatpush.msra.mxu0 0.0
    %1885 = vmatpush.msra.mxu0 0.0
    %1886 = vmatpush.msra.mxu0 0.0
    %1887 = vmatpush.msra.mxu0 %v1864
    %1888 = vmatpush.msra.mxu0 %v1862
    %1889 = vmatmul.f32.gmra.mxu0 %v1868
    %v1890 = vpop.f32.mrf.mxu0
    %v1891 = vadd.f32 0.0, %v1890
    %1892 = vmatmul.f32.gmra.mxu0 %v1871
    %v1893 = vpop.f32.mrf.mxu0
    %v1894 = vadd.f32 0.0, %v1893
    %1895 = vdwg.mxu0
    %1896 = vrot.lane.b32.xlu0 %v1020, 64
    %v1897 = vpop.permute.xlu0 %1896
    %1898 = vrot.lane.b32.xlu0 %v1023, 64
    %v1899 = vpop.permute.xlu0 %1898
    %v1903 = vsel %vm1065, %v1650, 0
    %v1906 = vsel %vm1065, %v1665, 0
    %1908 = vmatpush.msra.mxu0 0.0
    %1909 = vmatpush.msra.mxu0 0.0
    %1910 = vmatpush.msra.mxu0 0.0
    %1911 = vmatpush.msra.mxu0 0.0
    %1912 = vmatpush.msra.mxu0 0.0
    %1913 = vmatpush.msra.mxu0 0.0
    %1914 = vmatpush.msra.mxu0 0.0
    %1915 = vmatpush.msra.mxu0 0.0
    %1916 = vmatpush.msra.mxu0 0.0
    %1917 = vmatpush.msra.mxu0 0.0
    %1918 = vmatpush.msra.mxu0 0.0
    %1919 = vmatpush.msra.mxu0 0.0
    %1920 = vmatpush.msra.mxu0 0.0
    %1921 = vmatpush.msra.mxu0 0.0
    %1922 = vmatpush.msra.mxu0 %v1899
    %1923 = vmatpush.msra.mxu0 %v1897
    %1924 = vmatmul.f32.gmra.mxu0 %v1903
    %v1925 = vpop.f32.mrf.mxu0
    %v1926 = vadd.f32 0.0, %v1925
    %1927 = vmatmul.f32.gmra.mxu0 %v1906
    %v1928 = vpop.f32.mrf.mxu0
    %v1929 = vadd.f32 0.0, %v1928
    %1930 = vdwg.mxu0
    %1931 = vrot.lane.b32.xlu0 %v1026, 64
    %v1932 = vpop.permute.xlu0 %1931
    %1933 = vrot.lane.b32.xlu0 %v1029, 64
    %v1934 = vpop.permute.xlu0 %1933
    %v1938 = vsel %vm1065, %v1680, 0
    %v1941 = vsel %vm1065, %v1695, 0
    %1943 = vmatpush.msra.mxu0 0.0
    %1944 = vmatpush.msra.mxu0 0.0
    %1945 = vmatpush.msra.mxu0 0.0
    %1946 = vmatpush.msra.mxu0 0.0
    %1947 = vmatpush.msra.mxu0 0.0
    %1948 = vmatpush.msra.mxu0 0.0
    %1949 = vmatpush.msra.mxu0 0.0
    %1950 = vmatpush.msra.mxu0 0.0
    %1951 = vmatpush.msra.mxu0 0.0
    %1952 = vmatpush.msra.mxu0 0.0
    %1953 = vmatpush.msra.mxu0 0.0
    %1954 = vmatpush.msra.mxu0 0.0
    %1955 = vmatpush.msra.mxu0 0.0
    %1956 = vmatpush.msra.mxu0 0.0
    %1957 = vmatpush.msra.mxu0 %v1934
    %1958 = vmatpush.msra.mxu0 %v1932
    %1959 = vmatmul.f32.gmra.mxu0 %v1938
    %v1960 = vpop.f32.mrf.mxu0
    %v1961 = vadd.f32 0.0, %v1960
    %1962 = vmatmul.f32.gmra.mxu0 %v1941
    %v1963 = vpop.f32.mrf.mxu0
    %v1964 = vadd.f32 0.0, %v1963
    %1965 = vdwg.mxu0
    %1966 = vrot.lane.b32.xlu0 %v1032, 64
    %v1967 = vpop.permute.xlu0 %1966
    %1968 = vrot.lane.b32.xlu0 %v1035, 64
    %v1969 = vpop.permute.xlu0 %1968
    %v1973 = vsel %vm1065, %v1710, 0
    %v1976 = vsel %vm1065, %v1725, 0
    %1978 = vmatpush.msra.mxu0 0.0
    %1979 = vmatpush.msra.mxu0 0.0
    %1980 = vmatpush.msra.mxu0 0.0
    %1981 = vmatpush.msra.mxu0 0.0
    %1982 = vmatpush.msra.mxu0 0.0
    %1983 = vmatpush.msra.mxu0 0.0
    %1984 = vmatpush.msra.mxu0 0.0
    %1985 = vmatpush.msra.mxu0 0.0
    %1986 = vmatpush.msra.mxu0 0.0
    %1987 = vmatpush.msra.mxu0 0.0
    %1988 = vmatpush.msra.mxu0 0.0
    %1989 = vmatpush.msra.mxu0 0.0
    %1990 = vmatpush.msra.mxu0 0.0
    %1991 = vmatpush.msra.mxu0 0.0
    %1992 = vmatpush.msra.mxu0 %v1969
    %1993 = vmatpush.msra.mxu0 %v1967
    %1994 = vmatmul.f32.gmra.mxu0 %v1973
    %v1995 = vpop.f32.mrf.mxu0
    %v1996 = vadd.f32 0.0, %v1995
    %1997 = vmatmul.f32.gmra.mxu0 %v1976
    %v1998 = vpop.f32.mrf.mxu0
    %v1999 = vadd.f32 0.0, %v1998
    %2000 = vdwg.mxu0
    %2001 = vrot.lane.b32.xlu0 %v1038, 64
    %v2002 = vpop.permute.xlu0 %2001
    %2003 = vrot.lane.b32.xlu0 %v1041, 64
    %v2004 = vpop.permute.xlu0 %2003
    %v2008 = vsel %vm1065, %v1740, 0
    %v2011 = vsel %vm1065, %v1755, 0
    %2013 = vmatpush.msra.mxu0 0.0
    %2014 = vmatpush.msra.mxu0 0.0
    %2015 = vmatpush.msra.mxu0 0.0
    %2016 = vmatpush.msra.mxu0 0.0
    %2017 = vmatpush.msra.mxu0 0.0
    %2018 = vmatpush.msra.mxu0 0.0
    %2019 = vmatpush.msra.mxu0 0.0
    %2020 = vmatpush.msra.mxu0 0.0
    %2021 = vmatpush.msra.mxu0 0.0
    %2022 = vmatpush.msra.mxu0 0.0
    %2023 = vmatpush.msra.mxu0 0.0
    %2024 = vmatpush.msra.mxu0 0.0
    %2025 = vmatpush.msra.mxu0 0.0
    %2026 = vmatpush.msra.mxu0 0.0
    %2027 = vmatpush.msra.mxu0 %v2004
    %2028 = vmatpush.msra.mxu0 %v2002
    %2029 = vmatmul.f32.gmra.mxu0 %v2008
    %v2030 = vpop.f32.mrf.mxu0
    %v2031 = vadd.f32 0.0, %v2030
    %2032 = vmatmul.f32.gmra.mxu0 %v2011
    %v2033 = vpop.f32.mrf.mxu0
    %v2034 = vadd.f32 0.0, %v2033
    %2035 = vdwg.mxu0
    %2036 = vrot.lane.b32.xlu0 %v1043, 112
    %v2037 = vpop.permute.xlu0 %2036
    %2038 = vrot.lane.b32.xlu0 %v1044, 112
    %v2039 = vpop.permute.xlu0 %2038
    %2040 = vrot.lane.b32.xlu0 %v996, 80
    %v2041 = vpop.permute.xlu0 %2040
    %2042 = vrot.lane.b32.xlu0 %v999, 80
    %v2043 = vpop.permute.xlu0 %2042
    %v2044 = vsel %vm1065, %v2037, 0
    %v2046 = vsel %vm1065, %v2039, 0
    %v2048 = vsel %vm1065, %v2041, 0
    %v2050 = vsel %vm1065, %v2043, 0
    %2052 = vmatpush.xpose.msra.mxu0 0.0
    %2053 = vmatpush.xpose.msra.mxu0 0.0
    %2054 = vmatpush.xpose.msra.mxu0 0.0
    %2055 = vmatpush.xpose.msra.mxu0 0.0
    %2056 = vmatpush.xpose.msra.mxu0 0.0
    %2057 = vmatpush.xpose.msra.mxu0 0.0
    %2058 = vmatpush.xpose.msra.mxu0 0.0
    %2059 = vmatpush.xpose.msra.mxu0 0.0
    %2060 = vmatpush.xpose.msra.mxu0 0.0
    %2061 = vmatpush.xpose.msra.mxu0 0.0
    %2062 = vmatpush.xpose.msra.mxu0 0.0
    %2063 = vmatpush.xpose.msra.mxu0 0.0
    %2064 = vmatpush.xpose.msra.mxu0 0.0
    %2065 = vmatpush.xpose.msra.mxu0 0.0
    %2066 = vmatpush.xpose.msra.mxu0 %v2050
    %2067 = vmatpush.xpose.msra.mxu0 %v2048
    %2068 = vmatmul.f32.gmra.mxu0 %v2044
    %v2069 = vpop.f32.mrf.mxu0
    %v2070 = vadd.f32 %v401, %v2069
    %2071 = vmatmul.f32.gmra.mxu0 %v2046
    %v2072 = vpop.f32.mrf.mxu0
    %v2073 = vadd.f32 %v402, %v2072
    %2074 = vdwg.mxu0
    %2075 = vrot.lane.b32.xlu0 %v1045, 112
    %v2076 = vpop.permute.xlu0 %2075
    %2077 = vrot.lane.b32.xlu0 %v1046, 112
    %v2078 = vpop.permute.xlu0 %2077
    %2079 = vrot.lane.b32.xlu0 %v1002, 80
    %v2080 = vpop.permute.xlu0 %2079
    %2081 = vrot.lane.b32.xlu0 %v1005, 80
    %v2082 = vpop.permute.xlu0 %2081
    %v2083 = vsel %vm1065, %v2076, 0
    %v2085 = vsel %vm1065, %v2078, 0
    %v2087 = vsel %vm1065, %v2080, 0
    %v2089 = vsel %vm1065, %v2082, 0
    %2091 = vmatpush.xpose.msra.mxu0 0.0
    %2092 = vmatpush.xpose.msra.mxu0 0.0
    %2093 = vmatpush.xpose.msra.mxu0 0.0
    %2094 = vmatpush.xpose.msra.mxu0 0.0
    %2095 = vmatpush.xpose.msra.mxu0 0.0
    %2096 = vmatpush.xpose.msra.mxu0 0.0
    %2097 = vmatpush.xpose.msra.mxu0 0.0
    %2098 = vmatpush.xpose.msra.mxu0 0.0
    %2099 = vmatpush.xpose.msra.mxu0 0.0
    %2100 = vmatpush.xpose.msra.mxu0 0.0
    %2101 = vmatpush.xpose.msra.mxu0 0.0
    %2102 = vmatpush.xpose.msra.mxu0 0.0
    %2103 = vmatpush.xpose.msra.mxu0 0.0
    %2104 = vmatpush.xpose.msra.mxu0 0.0
    %2105 = vmatpush.xpose.msra.mxu0 %v2089
    %2106 = vmatpush.xpose.msra.mxu0 %v2087
    %2107 = vmatmul.f32.gmra.mxu0 %v2083
    %v2108 = vpop.f32.mrf.mxu0
    %v2109 = vadd.f32 %v401, %v2108
    %2110 = vmatmul.f32.gmra.mxu0 %v2085
    %v2111 = vpop.f32.mrf.mxu0
    %v2112 = vadd.f32 %v402, %v2111
    %2113 = vdwg.mxu0
    %2114 = vrot.lane.b32.xlu0 %v1047, 112
    %v2115 = vpop.permute.xlu0 %2114
    %2116 = vrot.lane.b32.xlu0 %v1048, 112
    %v2117 = vpop.permute.xlu0 %2116
    %2118 = vrot.lane.b32.xlu0 %v1008, 80
    %v2119 = vpop.permute.xlu0 %2118
    %2120 = vrot.lane.b32.xlu0 %v1011, 80
    %v2121 = vpop.permute.xlu0 %2120
    %v2122 = vsel %vm1065, %v2115, 0
    %v2124 = vsel %vm1065, %v2117, 0
    %v2126 = vsel %vm1065, %v2119, 0
    %v2128 = vsel %vm1065, %v2121, 0
    %2130 = vmatpush.xpose.msra.mxu0 0.0
    %2131 = vmatpush.xpose.msra.mxu0 0.0
    %2132 = vmatpush.xpose.msra.mxu0 0.0
    %2133 = vmatpush.xpose.msra.mxu0 0.0
    %2134 = vmatpush.xpose.msra.mxu0 0.0
    %2135 = vmatpush.xpose.msra.mxu0 0.0
    %2136 = vmatpush.xpose.msra.mxu0 0.0
    %2137 = vmatpush.xpose.msra.mxu0 0.0
    %2138 = vmatpush.xpose.msra.mxu0 0.0
    %2139 = vmatpush.xpose.msra.mxu0 0.0
    %2140 = vmatpush.xpose.msra.mxu0 0.0
    %2141 = vmatpush.xpose.msra.mxu0 0.0
    %2142 = vmatpush.xpose.msra.mxu0 0.0
    %2143 = vmatpush.xpose.msra.mxu0 0.0
    %2144 = vmatpush.xpose.msra.mxu0 %v2128
    %2145 = vmatpush.xpose.msra.mxu0 %v2126
    %2146 = vmatmul.f32.gmra.mxu0 %v2122
    %v2147 = vpop.f32.mrf.mxu0
    %v2148 = vadd.f32 %v401, %v2147
    %2149 = vmatmul.f32.gmra.mxu0 %v2124
    %v2150 = vpop.f32.mrf.mxu0
    %v2151 = vadd.f32 %v402, %v2150
    %2152 = vdwg.mxu0
    %2153 = vrot.lane.b32.xlu0 %v1049, 112
    %v2154 = vpop.permute.xlu0 %2153
    %2155 = vrot.lane.b32.xlu0 %v1050, 112
    %v2156 = vpop.permute.xlu0 %2155
    %2157 = vrot.lane.b32.xlu0 %v1014, 80
    %v2158 = vpop.permute.xlu0 %2157
    %2159 = vrot.lane.b32.xlu0 %v1017, 80
    %v2160 = vpop.permute.xlu0 %2159
    %v2161 = vsel %vm1065, %v2154, 0
    %v2163 = vsel %vm1065, %v2156, 0
    %v2165 = vsel %vm1065, %v2158, 0
    %v2167 = vsel %vm1065, %v2160, 0
    %2169 = vmatpush.xpose.msra.mxu0 0.0
    %2170 = vmatpush.xpose.msra.mxu0 0.0
    %2171 = vmatpush.xpose.msra.mxu0 0.0
    %2172 = vmatpush.xpose.msra.mxu0 0.0
    %2173 = vmatpush.xpose.msra.mxu0 0.0
    %2174 = vmatpush.xpose.msra.mxu0 0.0
    %2175 = vmatpush.xpose.msra.mxu0 0.0
    %2176 = vmatpush.xpose.msra.mxu0 0.0
    %2177 = vmatpush.xpose.msra.mxu0 0.0
    %2178 = vmatpush.xpose.msra.mxu0 0.0
    %2179 = vmatpush.xpose.msra.mxu0 0.0
    %2180 = vmatpush.xpose.msra.mxu0 0.0
    %2181 = vmatpush.xpose.msra.mxu0 0.0
    %2182 = vmatpush.xpose.msra.mxu0 0.0
    %2183 = vmatpush.xpose.msra.mxu0 %v2167
    %2184 = vmatpush.xpose.msra.mxu0 %v2165
    %2185 = vmatmul.f32.gmra.mxu0 %v2161
    %v2186 = vpop.f32.mrf.mxu0
    %v2187 = vadd.f32 %v401, %v2186
    %2188 = vmatmul.f32.gmra.mxu0 %v2163
    %v2189 = vpop.f32.mrf.mxu0
    %v2190 = vadd.f32 %v402, %v2189
    %2191 = vdwg.mxu0
    %2192 = vrot.lane.b32.xlu0 %v1051, 112
    %v2193 = vpop.permute.xlu0 %2192
    %2194 = vrot.lane.b32.xlu0 %v1052, 112
    %v2195 = vpop.permute.xlu0 %2194
    %2196 = vrot.lane.b32.xlu0 %v1020, 80
    %v2197 = vpop.permute.xlu0 %2196
    %2198 = vrot.lane.b32.xlu0 %v1023, 80
    %v2199 = vpop.permute.xlu0 %2198
    %v2200 = vsel %vm1065, %v2193, 0
    %v2202 = vsel %vm1065, %v2195, 0
    %v2204 = vsel %vm1065, %v2197, 0
    %v2206 = vsel %vm1065, %v2199, 0
    %2208 = vmatpush.xpose.msra.mxu0 0.0
    %2209 = vmatpush.xpose.msra.mxu0 0.0
    %2210 = vmatpush.xpose.msra.mxu0 0.0
    %2211 = vmatpush.xpose.msra.mxu0 0.0
    %2212 = vmatpush.xpose.msra.mxu0 0.0
    %2213 = vmatpush.xpose.msra.mxu0 0.0
    %2214 = vmatpush.xpose.msra.mxu0 0.0
    %2215 = vmatpush.xpose.msra.mxu0 0.0
    %2216 = vmatpush.xpose.msra.mxu0 0.0
    %2217 = vmatpush.xpose.msra.mxu0 0.0
    %2218 = vmatpush.xpose.msra.mxu0 0.0
    %2219 = vmatpush.xpose.msra.mxu0 0.0
    %2220 = vmatpush.xpose.msra.mxu0 0.0
    %2221 = vmatpush.xpose.msra.mxu0 0.0
    %2222 = vmatpush.xpose.msra.mxu0 %v2206
    %2223 = vmatpush.xpose.msra.mxu0 %v2204
    %2224 = vmatmul.f32.gmra.mxu0 %v2200
    %v2225 = vpop.f32.mrf.mxu0
    %v2226 = vadd.f32 %v401, %v2225
    %2227 = vmatmul.f32.gmra.mxu0 %v2202
    %v2228 = vpop.f32.mrf.mxu0
    %v2229 = vadd.f32 %v402, %v2228
    %2230 = vdwg.mxu0
    %2231 = vrot.lane.b32.xlu0 %v1053, 112
    %v2232 = vpop.permute.xlu0 %2231
    %2233 = vrot.lane.b32.xlu0 %v1054, 112
    %v2234 = vpop.permute.xlu0 %2233
    %2235 = vrot.lane.b32.xlu0 %v1026, 80
    %v2236 = vpop.permute.xlu0 %2235
    %2237 = vrot.lane.b32.xlu0 %v1029, 80
    %v2238 = vpop.permute.xlu0 %2237
    %v2239 = vsel %vm1065, %v2232, 0
    %v2241 = vsel %vm1065, %v2234, 0
    %v2243 = vsel %vm1065, %v2236, 0
    %v2245 = vsel %vm1065, %v2238, 0
    %2247 = vmatpush.xpose.msra.mxu0 0.0
    %2248 = vmatpush.xpose.msra.mxu0 0.0
    %2249 = vmatpush.xpose.msra.mxu0 0.0
    %2250 = vmatpush.xpose.msra.mxu0 0.0
    %2251 = vmatpush.xpose.msra.mxu0 0.0
    %2252 = vmatpush.xpose.msra.mxu0 0.0
    %2253 = vmatpush.xpose.msra.mxu0 0.0
    %2254 = vmatpush.xpose.msra.mxu0 0.0
    %2255 = vmatpush.xpose.msra.mxu0 0.0
    %2256 = vmatpush.xpose.msra.mxu0 0.0
    %2257 = vmatpush.xpose.msra.mxu0 0.0
    %2258 = vmatpush.xpose.msra.mxu0 0.0
    %2259 = vmatpush.xpose.msra.mxu0 0.0
    %2260 = vmatpush.xpose.msra.mxu0 0.0
    %2261 = vmatpush.xpose.msra.mxu0 %v2245
    %2262 = vmatpush.xpose.msra.mxu0 %v2243
    %2263 = vmatmul.f32.gmra.mxu0 %v2239
    %v2264 = vpop.f32.mrf.mxu0
    %v2265 = vadd.f32 %v401, %v2264
    %2266 = vmatmul.f32.gmra.mxu0 %v2241
    %v2267 = vpop.f32.mrf.mxu0
    %v2268 = vadd.f32 %v402, %v2267
    %2269 = vdwg.mxu0
    %2270 = vrot.lane.b32.xlu0 %v1055, 112
    %v2271 = vpop.permute.xlu0 %2270
    %2272 = vrot.lane.b32.xlu0 %v1056, 112
    %v2273 = vpop.permute.xlu0 %2272
    %2274 = vrot.lane.b32.xlu0 %v1032, 80
    %v2275 = vpop.permute.xlu0 %2274
    %2276 = vrot.lane.b32.xlu0 %v1035, 80
    %v2277 = vpop.permute.xlu0 %2276
    %v2278 = vsel %vm1065, %v2271, 0
    %v2280 = vsel %vm1065, %v2273, 0
    %v2282 = vsel %vm1065, %v2275, 0
    %v2284 = vsel %vm1065, %v2277, 0
    %2286 = vmatpush.xpose.msra.mxu0 0.0
    %2287 = vmatpush.xpose.msra.mxu0 0.0
    %2288 = vmatpush.xpose.msra.mxu0 0.0
    %2289 = vmatpush.xpose.msra.mxu0 0.0
    %2290 = vmatpush.xpose.msra.mxu0 0.0
    %2291 = vmatpush.xpose.msra.mxu0 0.0
    %2292 = vmatpush.xpose.msra.mxu0 0.0
    %2293 = vmatpush.xpose.msra.mxu0 0.0
    %2294 = vmatpush.xpose.msra.mxu0 0.0
    %2295 = vmatpush.xpose.msra.mxu0 0.0
    %2296 = vmatpush.xpose.msra.mxu0 0.0
    %2297 = vmatpush.xpose.msra.mxu0 0.0
    %2298 = vmatpush.xpose.msra.mxu0 0.0
    %2299 = vmatpush.xpose.msra.mxu0 0.0
    %2300 = vmatpush.xpose.msra.mxu0 %v2284
    %2301 = vmatpush.xpose.msra.mxu0 %v2282
    %2302 = vmatmul.f32.gmra.mxu0 %v2278
    %v2303 = vpop.f32.mrf.mxu0
    %v2304 = vadd.f32 %v401, %v2303
    %2305 = vmatmul.f32.gmra.mxu0 %v2280
    %v2306 = vpop.f32.mrf.mxu0
    %v2307 = vadd.f32 %v402, %v2306
    %2308 = vdwg.mxu0
    %2309 = vrot.lane.b32.xlu0 %v1057, 112
    %v2310 = vpop.permute.xlu0 %2309
    %2311 = vrot.lane.b32.xlu0 %v1058, 112
    %v2312 = vpop.permute.xlu0 %2311
    %2313 = vrot.lane.b32.xlu0 %v1038, 80
    %v2314 = vpop.permute.xlu0 %2313
    %2315 = vrot.lane.b32.xlu0 %v1041, 80
    %v2316 = vpop.permute.xlu0 %2315
    %v2317 = vsel %vm1065, %v2310, 0
    %v2319 = vsel %vm1065, %v2312, 0
    %v2321 = vsel %vm1065, %v2314, 0
    %v2323 = vsel %vm1065, %v2316, 0
    %2325 = vmatpush.xpose.msra.mxu0 0.0
    %2326 = vmatpush.xpose.msra.mxu0 0.0
    %2327 = vmatpush.xpose.msra.mxu0 0.0
    %2328 = vmatpush.xpose.msra.mxu0 0.0
    %2329 = vmatpush.xpose.msra.mxu0 0.0
    %2330 = vmatpush.xpose.msra.mxu0 0.0
    %2331 = vmatpush.xpose.msra.mxu0 0.0
    %2332 = vmatpush.xpose.msra.mxu0 0.0
    %2333 = vmatpush.xpose.msra.mxu0 0.0
    %2334 = vmatpush.xpose.msra.mxu0 0.0
    %2335 = vmatpush.xpose.msra.mxu0 0.0
    %2336 = vmatpush.xpose.msra.mxu0 0.0
    %2337 = vmatpush.xpose.msra.mxu0 0.0
    %2338 = vmatpush.xpose.msra.mxu0 0.0
    %2339 = vmatpush.xpose.msra.mxu0 %v2323
    %2340 = vmatpush.xpose.msra.mxu0 %v2321
    %2341 = vmatmul.f32.gmra.mxu0 %v2317
    %v2342 = vpop.f32.mrf.mxu0
    %v2343 = vadd.f32 %v401, %v2342
    %2344 = vmatmul.f32.gmra.mxu0 %v2319
    %v2345 = vpop.f32.mrf.mxu0
    %v2346 = vadd.f32 %v402, %v2345
    %2347 = vdwg.mxu0
    %v2348 = vsel %vm1065, %v2070, -inf
    %2349 = vmax.xlane.f32.xlu0 %v2348
    %v2350 = vpop.xlane.xlu0 %2349
    %v2351 = vsel %vm1065, %v2073, -inf
    %2352 = vmax.xlane.f32.xlu0 %v2351
    %v2353 = vpop.xlane.xlu0 %2352
    %v2354 = vsel %vm1065, %v2109, -inf
    %2355 = vmax.xlane.f32.xlu0 %v2354
    %v2356 = vpop.xlane.xlu0 %2355
    %v2357 = vsel %vm1065, %v2112, -inf
    %2358 = vmax.xlane.f32.xlu0 %v2357
    %v2359 = vpop.xlane.xlu0 %2358
    %v2360 = vsel %vm1065, %v2148, -inf
    %2361 = vmax.xlane.f32.xlu0 %v2360
    %v2362 = vpop.xlane.xlu0 %2361
    %v2363 = vsel %vm1065, %v2151, -inf
    %2364 = vmax.xlane.f32.xlu0 %v2363
    %v2365 = vpop.xlane.xlu0 %2364
    %v2366 = vsel %vm1065, %v2187, -inf
    %2367 = vmax.xlane.f32.xlu0 %v2366
    %v2368 = vpop.xlane.xlu0 %2367
    %v2369 = vsel %vm1065, %v2190, -inf
    %2370 = vmax.xlane.f32.xlu0 %v2369
    %v2371 = vpop.xlane.xlu0 %2370
    %v2372 = vsel %vm1065, %v2226, -inf
    %2373 = vmax.xlane.f32.xlu0 %v2372
    %v2374 = vpop.xlane.xlu0 %2373
    %v2375 = vsel %vm1065, %v2229, -inf
    %2376 = vmax.xlane.f32.xlu0 %v2375
    %v2377 = vpop.xlane.xlu0 %2376
    %v2378 = vsel %vm1065, %v2265, -inf
    %2379 = vmax.xlane.f32.xlu0 %v2378
    %v2380 = vpop.xlane.xlu0 %2379
    %v2381 = vsel %vm1065, %v2268, -inf
    %2382 = vmax.xlane.f32.xlu0 %v2381
    %v2383 = vpop.xlane.xlu0 %2382
    %v2384 = vsel %vm1065, %v2304, -inf
    %2385 = vmax.xlane.f32.xlu0 %v2384
    %v2386 = vpop.xlane.xlu0 %2385
    %v2387 = vsel %vm1065, %v2307, -inf
    %2388 = vmax.xlane.f32.xlu0 %v2387
    %v2389 = vpop.xlane.xlu0 %2388
    %v2390 = vsel %vm1065, %v2343, -inf
    %2391 = vmax.xlane.f32.xlu0 %v2390
    %v2392 = vpop.xlane.xlu0 %2391
    %v2393 = vsel %vm1065, %v2346, -inf
    %2394 = vmax.xlane.f32.xlu0 %v2393
    %v2395 = vpop.xlane.xlu0 %2394
    %v2396 = vsub.f32 %v2070, %v2350
    %v2397 = vsub.f32 %v2073, %v2353
    %v2398 = vsub.f32 %v2109, %v2356
    %v2399 = vsub.f32 %v2112, %v2359
    %v2400 = vsub.f32 %v2148, %v2362
    %v2401 = vsub.f32 %v2151, %v2365
    %v2402 = vsub.f32 %v2187, %v2368
    %v2403 = vsub.f32 %v2190, %v2371
    %v2404 = vsub.f32 %v2226, %v2374
    %v2405 = vsub.f32 %v2229, %v2377
    %v2406 = vsub.f32 %v2265, %v2380
    %v2407 = vsub.f32 %v2268, %v2383
    %v2408 = vsub.f32 %v2304, %v2386
    %v2409 = vsub.f32 %v2307, %v2389
    %v2410 = vsub.f32 %v2343, %v2392
    %v2411 = vsub.f32 %v2346, %v2395
    %v2412 = vmul.f32 %v2396, 1.442695
    %v2413 = vpow.pop %v2412
    %v2414 = vmul.f32 %v2397, 1.442695
    %v2415 = vpow.pop %v2414
    %v2416 = vmul.f32 %v2398, 1.442695
    %v2417 = vpow.pop %v2416
    %v2418 = vmul.f32 %v2399, 1.442695
    %v2419 = vpow.pop %v2418
    %v2420 = vmul.f32 %v2400, 1.442695
    %v2421 = vpow.pop %v2420
    %v2422 = vmul.f32 %v2401, 1.442695
    %v2423 = vpow.pop %v2422
    %v2424 = vmul.f32 %v2402, 1.442695
    %v2425 = vpow.pop %v2424
    %v2426 = vmul.f32 %v2403, 1.442695
    %v2427 = vpow.pop %v2426
    %v2428 = vmul.f32 %v2404, 1.442695
    %v2429 = vpow.pop %v2428
    %v2430 = vmul.f32 %v2405, 1.442695
    %v2431 = vpow.pop %v2430
    %v2432 = vmul.f32 %v2406, 1.442695
    %v2433 = vpow.pop %v2432
    %v2434 = vmul.f32 %v2407, 1.442695
    %v2435 = vpow.pop %v2434
    %v2436 = vmul.f32 %v2408, 1.442695
    %v2437 = vpow.pop %v2436
    %v2438 = vmul.f32 %v2409, 1.442695
    %v2439 = vpow.pop %v2438
    %v2440 = vmul.f32 %v2410, 1.442695
    %v2441 = vpow.pop %v2440
    %v2442 = vmul.f32 %v2411, 1.442695
    %v2443 = vpow.pop %v2442
    %v2444 = vsel %vm1065, %v2413, 0.0
    %2445 = vadd.xlane.f32.xlu0 %v2444
    %v2446 = vpop.xlane.xlu0 %2445
    %v2447 = vsel %vm1065, %v2415, 0.0
    %2448 = vadd.xlane.f32.xlu0 %v2447
    %v2449 = vpop.xlane.xlu0 %2448
    %v2450 = vsel %vm1065, %v2417, 0.0
    %2451 = vadd.xlane.f32.xlu0 %v2450
    %v2452 = vpop.xlane.xlu0 %2451
    %v2453 = vsel %vm1065, %v2419, 0.0
    %2454 = vadd.xlane.f32.xlu0 %v2453
    %v2455 = vpop.xlane.xlu0 %2454
    %v2456 = vsel %vm1065, %v2421, 0.0
    %2457 = vadd.xlane.f32.xlu0 %v2456
    %v2458 = vpop.xlane.xlu0 %2457
    %v2459 = vsel %vm1065, %v2423, 0.0
    %2460 = vadd.xlane.f32.xlu0 %v2459
    %v2461 = vpop.xlane.xlu0 %2460
    %v2462 = vsel %vm1065, %v2425, 0.0
    %2463 = vadd.xlane.f32.xlu0 %v2462
    %v2464 = vpop.xlane.xlu0 %2463
    %v2465 = vsel %vm1065, %v2427, 0.0
    %2466 = vadd.xlane.f32.xlu0 %v2465
    %v2467 = vpop.xlane.xlu0 %2466
    %v2468 = vsel %vm1065, %v2429, 0.0
    %2469 = vadd.xlane.f32.xlu0 %v2468
    %v2470 = vpop.xlane.xlu0 %2469
    %v2471 = vsel %vm1065, %v2431, 0.0
    %2472 = vadd.xlane.f32.xlu0 %v2471
    %v2473 = vpop.xlane.xlu0 %2472
    %v2474 = vsel %vm1065, %v2433, 0.0
    %2475 = vadd.xlane.f32.xlu0 %v2474
    %v2476 = vpop.xlane.xlu0 %2475
    %v2477 = vsel %vm1065, %v2435, 0.0
    %2478 = vadd.xlane.f32.xlu0 %v2477
    %v2479 = vpop.xlane.xlu0 %2478
    %v2480 = vsel %vm1065, %v2437, 0.0
    %2481 = vadd.xlane.f32.xlu0 %v2480
    %v2482 = vpop.xlane.xlu0 %2481
    %v2483 = vsel %vm1065, %v2439, 0.0
    %2484 = vadd.xlane.f32.xlu0 %v2483
    %v2485 = vpop.xlane.xlu0 %2484
    %v2486 = vsel %vm1065, %v2441, 0.0
    %2487 = vadd.xlane.f32.xlu0 %v2486
    %v2488 = vpop.xlane.xlu0 %2487
    %v2489 = vsel %vm1065, %v2443, 0.0
    %2490 = vadd.xlane.f32.xlu0 %v2489
    %v2491 = vpop.xlane.xlu0 %2490
    %v2492 = vrcp.pop %v2446
    %v2493 = vmul.f32 %v2446, %v2492
    %v2494 = vsub.f32 1.0, %v2493
    %v2495 = vmul.f32 %v2492, %v2494
    %v2496 = vadd.f32 %v2492, %v2495
    %vm2497 = vweird.f32 %v2446
    %vm2498 = vweird.f32 %v2492
    %vm2499 = vmor %vm2497, %vm2498
    %v2500 = vsel %vm2499, %v2492, %v2496
    %v2501 = vand.u32 2147483647, %v2446
    %vm2502 = vcmp.eq.f32.partialorder %v2501, 8.507059e+37
    %v2503 = vand.u32 %v2446, 2147483648
    %v2504 = vor.u32 1.1754944e-38, %v2503
    %v2505 = vsel %vm2502, %v2504, %v2500
    %v2506 = vmul.f32 %v2413, %v2505
    %v2507 = vrcp.pop %v2449
    %v2508 = vmul.f32 %v2449, %v2507
    %v2509 = vsub.f32 1.0, %v2508
    %v2510 = vmul.f32 %v2507, %v2509
    %v2511 = vadd.f32 %v2507, %v2510
    %vm2512 = vweird.f32 %v2449
    %vm2513 = vweird.f32 %v2507
    %vm2514 = vmor %vm2512, %vm2513
    %v2515 = vsel %vm2514, %v2507, %v2511
    %v2516 = vand.u32 2147483647, %v2449
    %vm2517 = vcmp.eq.f32.partialorder %v2516, 8.507059e+37
    %v2518 = vand.u32 %v2449, 2147483648
    %v2519 = vor.u32 1.1754944e-38, %v2518
    %v2520 = vsel %vm2517, %v2519, %v2515
    %v2521 = vmul.f32 %v2415, %v2520
    %v2522 = vrcp.pop %v2452
    %v2523 = vmul.f32 %v2452, %v2522
    %v2524 = vsub.f32 1.0, %v2523
    %v2525 = vmul.f32 %v2522, %v2524
    %v2526 = vadd.f32 %v2522, %v2525
    %vm2527 = vweird.f32 %v2452
    %vm2528 = vweird.f32 %v2522
    %vm2529 = vmor %vm2527, %vm2528
    %v2530 = vsel %vm2529, %v2522, %v2526
    %v2531 = vand.u32 2147483647, %v2452
    %vm2532 = vcmp.eq.f32.partialorder %v2531, 8.507059e+37
    %v2533 = vand.u32 %v2452, 2147483648
    %v2534 = vor.u32 1.1754944e-38, %v2533
    %v2535 = vsel %vm2532, %v2534, %v2530
    %v2536 = vmul.f32 %v2417, %v2535
    %v2537 = vrcp.pop %v2455
    %v2538 = vmul.f32 %v2455, %v2537
    %v2539 = vsub.f32 1.0, %v2538
    %v2540 = vmul.f32 %v2537, %v2539
    %v2541 = vadd.f32 %v2537, %v2540
    %vm2542 = vweird.f32 %v2455
    %vm2543 = vweird.f32 %v2537
    %vm2544 = vmor %vm2542, %vm2543
    %v2545 = vsel %vm2544, %v2537, %v2541
    %v2546 = vand.u32 2147483647, %v2455
    %vm2547 = vcmp.eq.f32.partialorder %v2546, 8.507059e+37
    %v2548 = vand.u32 %v2455, 2147483648
    %v2549 = vor.u32 1.1754944e-38, %v2548
    %v2550 = vsel %vm2547, %v2549, %v2545
    %v2551 = vmul.f32 %v2419, %v2550
    %v2552 = vrcp.pop %v2458
    %v2553 = vmul.f32 %v2458, %v2552
    %v2554 = vsub.f32 1.0, %v2553
    %v2555 = vmul.f32 %v2552, %v2554
    %v2556 = vadd.f32 %v2552, %v2555
    %vm2557 = vweird.f32 %v2458
    %vm2558 = vweird.f32 %v2552
    %vm2559 = vmor %vm2557, %vm2558
    %v2560 = vsel %vm2559, %v2552, %v2556
    %v2561 = vand.u32 2147483647, %v2458
    %vm2562 = vcmp.eq.f32.partialorder %v2561, 8.507059e+37
    %v2563 = vand.u32 %v2458, 2147483648
    %v2564 = vor.u32 1.1754944e-38, %v2563
    %v2565 = vsel %vm2562, %v2564, %v2560
    %v2566 = vmul.f32 %v2421, %v2565
    %v2567 = vrcp.pop %v2461
    %v2568 = vmul.f32 %v2461, %v2567
    %v2569 = vsub.f32 1.0, %v2568
    %v2570 = vmul.f32 %v2567, %v2569
    %v2571 = vadd.f32 %v2567, %v2570
    %vm2572 = vweird.f32 %v2461
    %vm2573 = vweird.f32 %v2567
    %vm2574 = vmor %vm2572, %vm2573
    %v2575 = vsel %vm2574, %v2567, %v2571
    %v2576 = vand.u32 2147483647, %v2461
    %vm2577 = vcmp.eq.f32.partialorder %v2576, 8.507059e+37
    %v2578 = vand.u32 %v2461, 2147483648
    %v2579 = vor.u32 1.1754944e-38, %v2578
    %v2580 = vsel %vm2577, %v2579, %v2575
    %v2581 = vmul.f32 %v2423, %v2580
    %v2582 = vrcp.pop %v2464
    %v2583 = vmul.f32 %v2464, %v2582
    %v2584 = vsub.f32 1.0, %v2583
    %v2585 = vmul.f32 %v2582, %v2584
    %v2586 = vadd.f32 %v2582, %v2585
    %vm2587 = vweird.f32 %v2464
    %vm2588 = vweird.f32 %v2582
    %vm2589 = vmor %vm2587, %vm2588
    %v2590 = vsel %vm2589, %v2582, %v2586
    %v2591 = vand.u32 2147483647, %v2464
    %vm2592 = vcmp.eq.f32.partialorder %v2591, 8.507059e+37
    %v2593 = vand.u32 %v2464, 2147483648
    %v2594 = vor.u32 1.1754944e-38, %v2593
    %v2595 = vsel %vm2592, %v2594, %v2590
    %v2596 = vmul.f32 %v2425, %v2595
    %v2597 = vrcp.pop %v2467
    %v2598 = vmul.f32 %v2467, %v2597
    %v2599 = vsub.f32 1.0, %v2598
    %v2600 = vmul.f32 %v2597, %v2599
    %v2601 = vadd.f32 %v2597, %v2600
    %vm2602 = vweird.f32 %v2467
    %vm2603 = vweird.f32 %v2597
    %vm2604 = vmor %vm2602, %vm2603
    %v2605 = vsel %vm2604, %v2597, %v2601
    %v2606 = vand.u32 2147483647, %v2467
    %vm2607 = vcmp.eq.f32.partialorder %v2606, 8.507059e+37
    %v2608 = vand.u32 %v2467, 2147483648
    %v2609 = vor.u32 1.1754944e-38, %v2608
    %v2610 = vsel %vm2607, %v2609, %v2605
    %v2611 = vmul.f32 %v2427, %v2610
    %v2612 = vrcp.pop %v2470
    %v2613 = vmul.f32 %v2470, %v2612
    %v2614 = vsub.f32 1.0, %v2613
    %v2615 = vmul.f32 %v2612, %v2614
    %v2616 = vadd.f32 %v2612, %v2615
    %vm2617 = vweird.f32 %v2470
    %vm2618 = vweird.f32 %v2612
    %vm2619 = vmor %vm2617, %vm2618
    %v2620 = vsel %vm2619, %v2612, %v2616
    %v2621 = vand.u32 2147483647, %v2470
    %vm2622 = vcmp.eq.f32.partialorder %v2621, 8.507059e+37
    %v2623 = vand.u32 %v2470, 2147483648
    %v2624 = vor.u32 1.1754944e-38, %v2623
    %v2625 = vsel %vm2622, %v2624, %v2620
    %v2626 = vmul.f32 %v2429, %v2625
    %v2627 = vrcp.pop %v2473
    %v2628 = vmul.f32 %v2473, %v2627
    %v2629 = vsub.f32 1.0, %v2628
    %v2630 = vmul.f32 %v2627, %v2629
    %v2631 = vadd.f32 %v2627, %v2630
    %vm2632 = vweird.f32 %v2473
    %vm2633 = vweird.f32 %v2627
    %vm2634 = vmor %vm2632, %vm2633
    %v2635 = vsel %vm2634, %v2627, %v2631
    %v2636 = vand.u32 2147483647, %v2473
    %vm2637 = vcmp.eq.f32.partialorder %v2636, 8.507059e+37
    %v2638 = vand.u32 %v2473, 2147483648
    %v2639 = vor.u32 1.1754944e-38, %v2638
    %v2640 = vsel %vm2637, %v2639, %v2635
    %v2641 = vmul.f32 %v2431, %v2640
    %v2642 = vrcp.pop %v2476
    %v2643 = vmul.f32 %v2476, %v2642
    %v2644 = vsub.f32 1.0, %v2643
    %v2645 = vmul.f32 %v2642, %v2644
    %v2646 = vadd.f32 %v2642, %v2645
    %vm2647 = vweird.f32 %v2476
    %vm2648 = vweird.f32 %v2642
    %vm2649 = vmor %vm2647, %vm2648
    %v2650 = vsel %vm2649, %v2642, %v2646
    %v2651 = vand.u32 2147483647, %v2476
    %vm2652 = vcmp.eq.f32.partialorder %v2651, 8.507059e+37
    %v2653 = vand.u32 %v2476, 2147483648
    %v2654 = vor.u32 1.1754944e-38, %v2653
    %v2655 = vsel %vm2652, %v2654, %v2650
    %v2656 = vmul.f32 %v2433, %v2655
    %v2657 = vrcp.pop %v2479
    %v2658 = vmul.f32 %v2479, %v2657
    %v2659 = vsub.f32 1.0, %v2658
    %v2660 = vmul.f32 %v2657, %v2659
    %v2661 = vadd.f32 %v2657, %v2660
    %vm2662 = vweird.f32 %v2479
    %vm2663 = vweird.f32 %v2657
    %vm2664 = vmor %vm2662, %vm2663
    %v2665 = vsel %vm2664, %v2657, %v2661
    %v2666 = vand.u32 2147483647, %v2479
    %vm2667 = vcmp.eq.f32.partialorder %v2666, 8.507059e+37
    %v2668 = vand.u32 %v2479, 2147483648
    %v2669 = vor.u32 1.1754944e-38, %v2668
    %v2670 = vsel %vm2667, %v2669, %v2665
    %v2671 = vmul.f32 %v2435, %v2670
    %v2672 = vrcp.pop %v2482
    %v2673 = vmul.f32 %v2482, %v2672
    %v2674 = vsub.f32 1.0, %v2673
    %v2675 = vmul.f32 %v2672, %v2674
    %v2676 = vadd.f32 %v2672, %v2675
    %vm2677 = vweird.f32 %v2482
    %vm2678 = vweird.f32 %v2672
    %vm2679 = vmor %vm2677, %vm2678
    %v2680 = vsel %vm2679, %v2672, %v2676
    %v2681 = vand.u32 2147483647, %v2482
    %vm2682 = vcmp.eq.f32.partialorder %v2681, 8.507059e+37
    %v2683 = vand.u32 %v2482, 2147483648
    %v2684 = vor.u32 1.1754944e-38, %v2683
    %v2685 = vsel %vm2682, %v2684, %v2680
    %v2686 = vmul.f32 %v2437, %v2685
    %v2687 = vrcp.pop %v2485
    %v2688 = vmul.f32 %v2485, %v2687
    %v2689 = vsub.f32 1.0, %v2688
    %v2690 = vmul.f32 %v2687, %v2689
    %v2691 = vadd.f32 %v2687, %v2690
    %vm2692 = vweird.f32 %v2485
    %vm2693 = vweird.f32 %v2687
    %vm2694 = vmor %vm2692, %vm2693
    %v2695 = vsel %vm2694, %v2687, %v2691
    %v2696 = vand.u32 2147483647, %v2485
    %vm2697 = vcmp.eq.f32.partialorder %v2696, 8.507059e+37
    %v2698 = vand.u32 %v2485, 2147483648
    %v2699 = vor.u32 1.1754944e-38, %v2698
    %v2700 = vsel %vm2697, %v2699, %v2695
    %v2701 = vmul.f32 %v2439, %v2700
    %v2702 = vrcp.pop %v2488
    %v2703 = vmul.f32 %v2488, %v2702
    %v2704 = vsub.f32 1.0, %v2703
    %v2705 = vmul.f32 %v2702, %v2704
    %v2706 = vadd.f32 %v2702, %v2705
    %vm2707 = vweird.f32 %v2488
    %vm2708 = vweird.f32 %v2702
    %vm2709 = vmor %vm2707, %vm2708
    %v2710 = vsel %vm2709, %v2702, %v2706
    %v2711 = vand.u32 2147483647, %v2488
    %vm2712 = vcmp.eq.f32.partialorder %v2711, 8.507059e+37
    %v2713 = vand.u32 %v2488, 2147483648
    %v2714 = vor.u32 1.1754944e-38, %v2713
    %v2715 = vsel %vm2712, %v2714, %v2710
    %v2716 = vmul.f32 %v2441, %v2715
    %v2717 = vrcp.pop %v2491
    %v2718 = vmul.f32 %v2491, %v2717
    %v2719 = vsub.f32 1.0, %v2718
    %v2720 = vmul.f32 %v2717, %v2719
    %v2721 = vadd.f32 %v2717, %v2720
    %vm2722 = vweird.f32 %v2491
    %vm2723 = vweird.f32 %v2717
    %vm2724 = vmor %vm2722, %vm2723
    %v2725 = vsel %vm2724, %v2717, %v2721
    %v2726 = vand.u32 2147483647, %v2491
    %vm2727 = vcmp.eq.f32.partialorder %v2726, 8.507059e+37
    %v2728 = vand.u32 %v2491, 2147483648
    %v2729 = vor.u32 1.1754944e-38, %v2728
    %v2730 = vsel %vm2727, %v2729, %v2725
    %v2731 = vmul.f32 %v2443, %v2730
    %2732 = vrot.lane.b32.xlu0 %v996, 48
    %v2733 = vpop.permute.xlu0 %2732
    %2734 = vrot.lane.b32.xlu0 %v999, 48
    %v2735 = vpop.permute.xlu0 %2734
    %v2739 = vsel %vm1065, %v2506, 0
    %v2742 = vsel %vm1065, %v2521, 0
    %2744 = vmatpush.msra.mxu0 0.0
    %2745 = vmatpush.msra.mxu0 0.0
    %2746 = vmatpush.msra.mxu0 0.0
    %2747 = vmatpush.msra.mxu0 0.0
    %2748 = vmatpush.msra.mxu0 0.0
    %2749 = vmatpush.msra.mxu0 0.0
    %2750 = vmatpush.msra.mxu0 0.0
    %2751 = vmatpush.msra.mxu0 0.0
    %2752 = vmatpush.msra.mxu0 0.0
    %2753 = vmatpush.msra.mxu0 0.0
    %2754 = vmatpush.msra.mxu0 0.0
    %2755 = vmatpush.msra.mxu0 0.0
    %2756 = vmatpush.msra.mxu0 0.0
    %2757 = vmatpush.msra.mxu0 0.0
    %2758 = vmatpush.msra.mxu0 %v2735
    %2759 = vmatpush.msra.mxu0 %v2733
    %2760 = vmatmul.f32.gmra.mxu0 %v2739
    %v2761 = vpop.f32.mrf.mxu0
    %v2762 = vadd.f32 0.0, %v2761
    %2763 = vmatmul.f32.gmra.mxu0 %v2742
    %v2764 = vpop.f32.mrf.mxu0
    %v2765 = vadd.f32 0.0, %v2764
    %2766 = vdwg.mxu0
    %2767 = vrot.lane.b32.xlu0 %v1002, 48
    %v2768 = vpop.permute.xlu0 %2767
    %2769 = vrot.lane.b32.xlu0 %v1005, 48
    %v2770 = vpop.permute.xlu0 %2769
    %v2774 = vsel %vm1065, %v2536, 0
    %v2777 = vsel %vm1065, %v2551, 0
    %2779 = vmatpush.msra.mxu0 0.0
    %2780 = vmatpush.msra.mxu0 0.0
    %2781 = vmatpush.msra.mxu0 0.0
    %2782 = vmatpush.msra.mxu0 0.0
    %2783 = vmatpush.msra.mxu0 0.0
    %2784 = vmatpush.msra.mxu0 0.0
    %2785 = vmatpush.msra.mxu0 0.0
    %2786 = vmatpush.msra.mxu0 0.0
    %2787 = vmatpush.msra.mxu0 0.0
    %2788 = vmatpush.msra.mxu0 0.0
    %2789 = vmatpush.msra.mxu0 0.0
    %2790 = vmatpush.msra.mxu0 0.0
    %2791 = vmatpush.msra.mxu0 0.0
    %2792 = vmatpush.msra.mxu0 0.0
    %2793 = vmatpush.msra.mxu0 %v2770
    %2794 = vmatpush.msra.mxu0 %v2768
    %2795 = vmatmul.f32.gmra.mxu0 %v2774
    %v2796 = vpop.f32.mrf.mxu0
    %v2797 = vadd.f32 0.0, %v2796
    %2798 = vmatmul.f32.gmra.mxu0 %v2777
    %v2799 = vpop.f32.mrf.mxu0
    %v2800 = vadd.f32 0.0, %v2799
    %2801 = vdwg.mxu0
    %2802 = vrot.lane.b32.xlu0 %v1008, 48
    %v2803 = vpop.permute.xlu0 %2802
    %2804 = vrot.lane.b32.xlu0 %v1011, 48
    %v2805 = vpop.permute.xlu0 %2804
    %v2809 = vsel %vm1065, %v2566, 0
    %v2812 = vsel %vm1065, %v2581, 0
    %2814 = vmatpush.msra.mxu0 0.0
    %2815 = vmatpush.msra.mxu0 0.0
    %2816 = vmatpush.msra.mxu0 0.0
    %2817 = vmatpush.msra.mxu0 0.0
    %2818 = vmatpush.msra.mxu0 0.0
    %2819 = vmatpush.msra.mxu0 0.0
    %2820 = vmatpush.msra.mxu0 0.0
    %2821 = vmatpush.msra.mxu0 0.0
    %2822 = vmatpush.msra.mxu0 0.0
    %2823 = vmatpush.msra.mxu0 0.0
    %2824 = vmatpush.msra.mxu0 0.0
    %2825 = vmatpush.msra.mxu0 0.0
    %2826 = vmatpush.msra.mxu0 0.0
    %2827 = vmatpush.msra.mxu0 0.0
    %2828 = vmatpush.msra.mxu0 %v2805
    %2829 = vmatpush.msra.mxu0 %v2803
    %2830 = vmatmul.f32.gmra.mxu0 %v2809
    %v2831 = vpop.f32.mrf.mxu0
    %v2832 = vadd.f32 0.0, %v2831
    %2833 = vmatmul.f32.gmra.mxu0 %v2812
    %v2834 = vpop.f32.mrf.mxu0
    %v2835 = vadd.f32 0.0, %v2834
    %2836 = vdwg.mxu0
    %2837 = vrot.lane.b32.xlu0 %v1014, 48
    %v2838 = vpop.permute.xlu0 %2837
    %2839 = vrot.lane.b32.xlu0 %v1017, 48
    %v2840 = vpop.permute.xlu0 %2839
    %v2844 = vsel %vm1065, %v2596, 0
    %v2847 = vsel %vm1065, %v2611, 0
    %2849 = vmatpush.msra.mxu0 0.0
    %2850 = vmatpush.msra.mxu0 0.0
    %2851 = vmatpush.msra.mxu0 0.0
    %2852 = vmatpush.msra.mxu0 0.0
    %2853 = vmatpush.msra.mxu0 0.0
    %2854 = vmatpush.msra.mxu0 0.0
    %2855 = vmatpush.msra.mxu0 0.0
    %2856 = vmatpush.msra.mxu0 0.0
    %2857 = vmatpush.msra.mxu0 0.0
    %2858 = vmatpush.msra.mxu0 0.0
    %2859 = vmatpush.msra.mxu0 0.0
    %2860 = vmatpush.msra.mxu0 0.0
    %2861 = vmatpush.msra.mxu0 0.0
    %2862 = vmatpush.msra.mxu0 0.0
    %2863 = vmatpush.msra.mxu0 %v2840
    %2864 = vmatpush.msra.mxu0 %v2838
    %2865 = vmatmul.f32.gmra.mxu0 %v2844
    %v2866 = vpop.f32.mrf.mxu0
    %v2867 = vadd.f32 0.0, %v2866
    %2868 = vmatmul.f32.gmra.mxu0 %v2847
    %v2869 = vpop.f32.mrf.mxu0
    %v2870 = vadd.f32 0.0, %v2869
    %2871 = vdwg.mxu0
    %2872 = vrot.lane.b32.xlu0 %v1020, 48
    %v2873 = vpop.permute.xlu0 %2872
    %2874 = vrot.lane.b32.xlu0 %v1023, 48
    %v2875 = vpop.permute.xlu0 %2874
    %v2879 = vsel %vm1065, %v2626, 0
    %v2882 = vsel %vm1065, %v2641, 0
    %2884 = vmatpush.msra.mxu0 0.0
    %2885 = vmatpush.msra.mxu0 0.0
    %2886 = vmatpush.msra.mxu0 0.0
    %2887 = vmatpush.msra.mxu0 0.0
    %2888 = vmatpush.msra.mxu0 0.0
    %2889 = vmatpush.msra.mxu0 0.0
    %2890 = vmatpush.msra.mxu0 0.0
    %2891 = vmatpush.msra.mxu0 0.0
    %2892 = vmatpush.msra.mxu0 0.0
    %2893 = vmatpush.msra.mxu0 0.0
    %2894 = vmatpush.msra.mxu0 0.0
    %2895 = vmatpush.msra.mxu0 0.0
    %2896 = vmatpush.msra.mxu0 0.0
    %2897 = vmatpush.msra.mxu0 0.0
    %2898 = vmatpush.msra.mxu0 %v2875
    %2899 = vmatpush.msra.mxu0 %v2873
    %2900 = vmatmul.f32.gmra.mxu0 %v2879
    %v2901 = vpop.f32.mrf.mxu0
    %v2902 = vadd.f32 0.0, %v2901
    %2903 = vmatmul.f32.gmra.mxu0 %v2882
    %v2904 = vpop.f32.mrf.mxu0
    %v2905 = vadd.f32 0.0, %v2904
    %2906 = vdwg.mxu0
    %2907 = vrot.lane.b32.xlu0 %v1026, 48
    %v2908 = vpop.permute.xlu0 %2907
    %2909 = vrot.lane.b32.xlu0 %v1029, 48
    %v2910 = vpop.permute.xlu0 %2909
    %v2914 = vsel %vm1065, %v2656, 0
    %v2917 = vsel %vm1065, %v2671, 0
    %2919 = vmatpush.msra.mxu0 0.0
    %2920 = vmatpush.msra.mxu0 0.0
    %2921 = vmatpush.msra.mxu0 0.0
    %2922 = vmatpush.msra.mxu0 0.0
    %2923 = vmatpush.msra.mxu0 0.0
    %2924 = vmatpush.msra.mxu0 0.0
    %2925 = vmatpush.msra.mxu0 0.0
    %2926 = vmatpush.msra.mxu0 0.0
    %2927 = vmatpush.msra.mxu0 0.0
    %2928 = vmatpush.msra.mxu0 0.0
    %2929 = vmatpush.msra.mxu0 0.0
    %2930 = vmatpush.msra.mxu0 0.0
    %2931 = vmatpush.msra.mxu0 0.0
    %2932 = vmatpush.msra.mxu0 0.0
    %2933 = vmatpush.msra.mxu0 %v2910
    %2934 = vmatpush.msra.mxu0 %v2908
    %2935 = vmatmul.f32.gmra.mxu0 %v2914
    %v2936 = vpop.f32.mrf.mxu0
    %v2937 = vadd.f32 0.0, %v2936
    %2938 = vmatmul.f32.gmra.mxu0 %v2917
    %v2939 = vpop.f32.mrf.mxu0
    %v2940 = vadd.f32 0.0, %v2939
    %2941 = vdwg.mxu0
    %2942 = vrot.lane.b32.xlu0 %v1032, 48
    %v2943 = vpop.permute.xlu0 %2942
    %2944 = vrot.lane.b32.xlu0 %v1035, 48
    %v2945 = vpop.permute.xlu0 %2944
    %v2949 = vsel %vm1065, %v2686, 0
    %v2952 = vsel %vm1065, %v2701, 0
    %2954 = vmatpush.msra.mxu0 0.0
    %2955 = vmatpush.msra.mxu0 0.0
    %2956 = vmatpush.msra.mxu0 0.0
    %2957 = vmatpush.msra.mxu0 0.0
    %2958 = vmatpush.msra.mxu0 0.0
    %2959 = vmatpush.msra.mxu0 0.0
    %2960 = vmatpush.msra.mxu0 0.0
    %2961 = vmatpush.msra.mxu0 0.0
    %2962 = vmatpush.msra.mxu0 0.0
    %2963 = vmatpush.msra.mxu0 0.0
    %2964 = vmatpush.msra.mxu0 0.0
    %2965 = vmatpush.msra.mxu0 0.0
    %2966 = vmatpush.msra.mxu0 0.0
    %2967 = vmatpush.msra.mxu0 0.0
    %2968 = vmatpush.msra.mxu0 %v2945
    %2969 = vmatpush.msra.mxu0 %v2943
    %2970 = vmatmul.f32.gmra.mxu0 %v2949
    %v2971 = vpop.f32.mrf.mxu0
    %v2972 = vadd.f32 0.0, %v2971
    %2973 = vmatmul.f32.gmra.mxu0 %v2952
    %v2974 = vpop.f32.mrf.mxu0
    %v2975 = vadd.f32 0.0, %v2974
    %2976 = vdwg.mxu0
    %2977 = vrot.lane.b32.xlu0 %v1038, 48
    %v2978 = vpop.permute.xlu0 %2977
    %2979 = vrot.lane.b32.xlu0 %v1041, 48
    %v2980 = vpop.permute.xlu0 %2979
    %v2984 = vsel %vm1065, %v2716, 0
    %v2987 = vsel %vm1065, %v2731, 0
    %2989 = vmatpush.msra.mxu0 0.0
    %2990 = vmatpush.msra.mxu0 0.0
    %2991 = vmatpush.msra.mxu0 0.0
    %2992 = vmatpush.msra.mxu0 0.0
    %2993 = vmatpush.msra.mxu0 0.0
    %2994 = vmatpush.msra.mxu0 0.0
    %2995 = vmatpush.msra.mxu0 0.0
    %2996 = vmatpush.msra.mxu0 0.0
    %2997 = vmatpush.msra.mxu0 0.0
    %2998 = vmatpush.msra.mxu0 0.0
    %2999 = vmatpush.msra.mxu0 0.0
    %3000 = vmatpush.msra.mxu0 0.0
    %3001 = vmatpush.msra.mxu0 0.0
    %3002 = vmatpush.msra.mxu0 0.0
    %3003 = vmatpush.msra.mxu0 %v2980
    %3004 = vmatpush.msra.mxu0 %v2978
    %3005 = vmatmul.f32.gmra.mxu0 %v2984
    %v3006 = vpop.f32.mrf.mxu0
    %v3007 = vadd.f32 0.0, %v3006
    %3008 = vmatmul.f32.gmra.mxu0 %v2987
    %v3009 = vpop.f32.mrf.mxu0
    %v3010 = vadd.f32 0.0, %v3009
    %3011 = vdwg.mxu0
    %v3013 = vsel %vm1065, %v2762, 0
    %v3016 = vsel %vm1065, %v2765, 0
    %v3019 = vsel %vm1065, %v2797, 0
    %v3022 = vsel %vm1065, %v2800, 0
    %v3025 = vsel %vm1065, %v2832, 0
    %v3028 = vsel %vm1065, %v2835, 0
    %v3031 = vsel %vm1065, %v2867, 0
    %v3034 = vsel %vm1065, %v2870, 0
    %v3037 = vsel %vm1065, %v2902, 0
    %v3040 = vsel %vm1065, %v2905, 0
    %v3043 = vsel %vm1065, %v2937, 0
    %v3046 = vsel %vm1065, %v2940, 0
    %v3049 = vsel %vm1065, %v2972, 0
    %v3052 = vsel %vm1065, %v2975, 0
    %v3055 = vsel %vm1065, %v3007, 0
    %v3058 = vsel %vm1065, %v3010, 0
    %3060 = vmatpush.msra.mxu0 0.0
    %3061 = vmatpush.msra.mxu0 0.0
    %3062 = vmatpush.msra.mxu0 0.0
    %3063 = vmatpush.msra.mxu0 0.0
    %3064 = vmatpush.msra.mxu0 0.0
    %3065 = vmatpush.msra.mxu0 0.0
    %3066 = vmatpush.msra.mxu0 0.0
    %3067 = vmatpush.msra.mxu0 0.0
    %3068 = vmatpush.msra.mxu0 0.0
    %3069 = vmatpush.msra.mxu0 0.0
    %3070 = vmatpush.msra.mxu0 0.0
    %3071 = vmatpush.msra.mxu0 0.0
    %3072 = vmatpush.msra.mxu0 0.0
    %3073 = vmatpush.msra.mxu0 0.0
    %3074 = vmatpush.msra.mxu0 %v406
    %3075 = vmatpush.msra.mxu0 %v405
    %3076 = vmatmul.f32.gmra.mxu0 %v3013
    %v3077 = vpop.f32.mrf.mxu0
    %v3078 = vadd.f32 0.0, %v3077
    %3079 = vmatmul.f32.gmra.mxu0 %v3016
    %v3080 = vpop.f32.mrf.mxu0
    %v3081 = vadd.f32 0.0, %v3080
    %3082 = vmatmul.f32.gmra.mxu0 %v3019
    %v3083 = vpop.f32.mrf.mxu0
    %v3084 = vadd.f32 0.0, %v3083
    %3085 = vmatmul.f32.gmra.mxu0 %v3022
    %v3086 = vpop.f32.mrf.mxu0
    %v3087 = vadd.f32 0.0, %v3086
    %3088 = vmatmul.f32.gmra.mxu0 %v3025
    %v3089 = vpop.f32.mrf.mxu0
    %v3090 = vadd.f32 0.0, %v3089
    %3091 = vmatmul.f32.gmra.mxu0 %v3028
    %v3092 = vpop.f32.mrf.mxu0
    %v3093 = vadd.f32 0.0, %v3092
    %3094 = vmatmul.f32.gmra.mxu0 %v3031
    %v3095 = vpop.f32.mrf.mxu0
    %v3096 = vadd.f32 0.0, %v3095
    %3097 = vmatmul.f32.gmra.mxu0 %v3034
    %v3098 = vpop.f32.mrf.mxu0
    %v3099 = vadd.f32 0.0, %v3098
    %3100 = vmatmul.f32.gmra.mxu0 %v3037
    %v3101 = vpop.f32.mrf.mxu0
    %v3102 = vadd.f32 0.0, %v3101
    %3103 = vmatmul.f32.gmra.mxu0 %v3040
    %v3104 = vpop.f32.mrf.mxu0
    %v3105 = vadd.f32 0.0, %v3104
    %3106 = vmatmul.f32.gmra.mxu0 %v3043
    %v3107 = vpop.f32.mrf.mxu0
    %v3108 = vadd.f32 0.0, %v3107
    %3109 = vmatmul.f32.gmra.mxu0 %v3046
    %v3110 = vpop.f32.mrf.mxu0
    %v3111 = vadd.f32 0.0, %v3110
    %3112 = vmatmul.f32.gmra.mxu0 %v3049
    %v3113 = vpop.f32.mrf.mxu0
    %v3114 = vadd.f32 0.0, %v3113
    %3115 = vmatmul.f32.gmra.mxu0 %v3052
    %v3116 = vpop.f32.mrf.mxu0
    %v3117 = vadd.f32 0.0, %v3116
    %3118 = vmatmul.f32.gmra.mxu0 %v3055
    %v3119 = vpop.f32.mrf.mxu0
    %v3120 = vadd.f32 0.0, %v3119
    %3121 = vmatmul.f32.gmra.mxu0 %v3058
    %v3122 = vpop.f32.mrf.mxu0
    %v3123 = vadd.f32 0.0, %v3122
    %3124 = vdwg.mxu0
    %v3126 = vsel %vm1065, %v1786, 0
    %v3129 = vsel %vm1065, %v1789, 0
    %v3132 = vsel %vm1065, %v1821, 0
    %v3135 = vsel %vm1065, %v1824, 0
    %v3138 = vsel %vm1065, %v1856, 0
    %v3141 = vsel %vm1065, %v1859, 0
    %v3144 = vsel %vm1065, %v1891, 0
    %v3147 = vsel %vm1065, %v1894, 0
    %v3150 = vsel %vm1065, %v1926, 0
    %v3153 = vsel %vm1065, %v1929, 0
    %v3156 = vsel %vm1065, %v1961, 0
    %v3159 = vsel %vm1065, %v1964, 0
    %v3162 = vsel %vm1065, %v1996, 0
    %v3165 = vsel %vm1065, %v1999, 0
    %v3168 = vsel %vm1065, %v2031, 0
    %v3171 = vsel %vm1065, %v2034, 0
    %3173 = vmatpush.msra.mxu0 0.0
    %3174 = vmatpush.msra.mxu0 0.0
    %3175 = vmatpush.msra.mxu0 0.0
    %3176 = vmatpush.msra.mxu0 0.0
    %3177 = vmatpush.msra.mxu0 0.0
    %3178 = vmatpush.msra.mxu0 0.0
    %3179 = vmatpush.msra.mxu0 0.0
    %3180 = vmatpush.msra.mxu0 0.0
    %3181 = vmatpush.msra.mxu0 0.0
    %3182 = vmatpush.msra.mxu0 0.0
    %3183 = vmatpush.msra.mxu0 0.0
    %3184 = vmatpush.msra.mxu0 0.0
    %3185 = vmatpush.msra.mxu0 0.0
    %3186 = vmatpush.msra.mxu0 0.0
    %3187 = vmatpush.msra.mxu0 %v404
    %3188 = vmatpush.msra.mxu0 %v403
    %3189 = vmatmul.f32.gmra.mxu0 %v3126
    %v3190 = vpop.f32.mrf.mxu0
    %v3191 = vadd.f32 %v3078, %v3190
    %3192 = vmatmul.f32.gmra.mxu0 %v3129
    %v3193 = vpop.f32.mrf.mxu0
    %v3194 = vadd.f32 %v3081, %v3193
    %3195 = vmatmul.f32.gmra.mxu0 %v3132
    %v3196 = vpop.f32.mrf.mxu0
    %v3197 = vadd.f32 %v3084, %v3196
    %3198 = vmatmul.f32.gmra.mxu0 %v3135
    %v3199 = vpop.f32.mrf.mxu0
    %v3200 = vadd.f32 %v3087, %v3199
    %3201 = vmatmul.f32.gmra.mxu0 %v3138
    %v3202 = vpop.f32.mrf.mxu0
    %v3203 = vadd.f32 %v3090, %v3202
    %3204 = vmatmul.f32.gmra.mxu0 %v3141
    %v3205 = vpop.f32.mrf.mxu0
    %v3206 = vadd.f32 %v3093, %v3205
    %3207 = vmatmul.f32.gmra.mxu0 %v3144
    %v3208 = vpop.f32.mrf.mxu0
    %v3209 = vadd.f32 %v3096, %v3208
    %3210 = vmatmul.f32.gmra.mxu0 %v3147
    %v3211 = vpop.f32.mrf.mxu0
    %v3212 = vadd.f32 %v3099, %v3211
    %3213 = vmatmul.f32.gmra.mxu0 %v3150
    %v3214 = vpop.f32.mrf.mxu0
    %v3215 = vadd.f32 %v3102, %v3214
    %3216 = vmatmul.f32.gmra.mxu0 %v3153
    %v3217 = vpop.f32.mrf.mxu0
    %v3218 = vadd.f32 %v3105, %v3217
    %3219 = vmatmul.f32.gmra.mxu0 %v3156
    %v3220 = vpop.f32.mrf.mxu0
    %v3221 = vadd.f32 %v3108, %v3220
    %3222 = vmatmul.f32.gmra.mxu0 %v3159
    %v3223 = vpop.f32.mrf.mxu0
    %v3224 = vadd.f32 %v3111, %v3223
    %3225 = vmatmul.f32.gmra.mxu0 %v3162
    %v3226 = vpop.f32.mrf.mxu0
    %v3227 = vadd.f32 %v3114, %v3226
    %3228 = vmatmul.f32.gmra.mxu0 %v3165
    %v3229 = vpop.f32.mrf.mxu0
    %v3230 = vadd.f32 %v3117, %v3229
    %3231 = vmatmul.f32.gmra.mxu0 %v3168
    %v3232 = vpop.f32.mrf.mxu0
    %v3233 = vadd.f32 %v3120, %v3232
    %3234 = vmatmul.f32.gmra.mxu0 %v3171
    %v3235 = vpop.f32.mrf.mxu0
    %v3236 = vadd.f32 %v3123, %v3235
    %3237 = vdwg.mxu0
    %v3239 = vperm.slane %v407, 0
    %v3241 = vadd.f32 %v3191, %v3239
    %v3242 = vadd.f32 %v3194, %v3239
    %v3243 = vadd.f32 %v3197, %v3239
    %v3244 = vadd.f32 %v3200, %v3239
    %v3245 = vadd.f32 %v3203, %v3239
    %v3246 = vadd.f32 %v3206, %v3239
    %v3247 = vadd.f32 %v3209, %v3239
    %v3248 = vadd.f32 %v3212, %v3239
    %v3249 = vadd.f32 %v3215, %v3239
    %v3250 = vadd.f32 %v3218, %v3239
    %v3251 = vadd.f32 %v3221, %v3239
    %v3252 = vadd.f32 %v3224, %v3239
    %v3253 = vadd.f32 %v3227, %v3239
    %v3254 = vadd.f32 %v3230, %v3239
    %v3255 = vadd.f32 %v3233, %v3239
    %v3256 = vadd.f32 %v3236, %v3239
    %3257 = vmatpush.msra.mxu0 %v3256
    %3258 = vmatpush.msra.mxu0 %v3255
    %3259 = vmatpush.msra.mxu0 %v3254
    %3260 = vmatpush.msra.mxu0 %v3253
    %3261 = vmatpush.msra.mxu0 %v3252
    %3262 = vmatpush.msra.mxu0 %v3251
    %3263 = vmatpush.msra.mxu0 %v3250
    %3264 = vmatpush.msra.mxu0 %v3249
    %3265 = vmatpush.msra.mxu0 %v3248
    %3266 = vmatpush.msra.mxu0 %v3247
    %3267 = vmatpush.msra.mxu0 %v3246
    %3268 = vmatpush.msra.mxu0 %v3245
    %3269 = vmatpush.msra.mxu0 %v3244
    %3270 = vmatpush.msra.mxu0 %v3243
    %3271 = vmatpush.msra.mxu0 %v3242
    %3272 = vmatpush.msra.mxu0 %v3241
    %3273 = vmatmul.f32.gmra.mxu0 %v448
    %v3274 = vpop.f32.mrf.mxu0
    %v3275 = vadd.f32 0.0, %v3274
    %3276 = vmatmul.f32.gmra.mxu0 %v449
    %v3277 = vpop.f32.mrf.mxu0
    %v3278 = vadd.f32 0.0, %v3277
    %3279 = vmatmul.f32.gmra.mxu0 %v450
    %v3280 = vpop.f32.mrf.mxu0
    %v3281 = vadd.f32 0.0, %v3280
    %3282 = vmatmul.f32.gmra.mxu0 %v451
    %v3283 = vpop.f32.mrf.mxu0
    %v3284 = vadd.f32 0.0, %v3283
    %3285 = vmatmul.f32.gmra.mxu0 %v452
    %v3286 = vpop.f32.mrf.mxu0
    %v3287 = vadd.f32 0.0, %v3286
    %3288 = vmatmul.f32.gmra.mxu0 %v453
    %v3289 = vpop.f32.mrf.mxu0
    %v3290 = vadd.f32 0.0, %v3289
    %3291 = vmatmul.f32.gmra.mxu0 %v454
    %v3292 = vpop.f32.mrf.mxu0
    %v3293 = vadd.f32 0.0, %v3292
    %3294 = vmatmul.f32.gmra.mxu0 %v455
    %v3295 = vpop.f32.mrf.mxu0
    %v3296 = vadd.f32 0.0, %v3295
    %3297 = vmatmul.f32.gmra.mxu0 %v456
    %v3298 = vpop.f32.mrf.mxu0
    %v3299 = vadd.f32 0.0, %v3298
    %3300 = vmatmul.f32.gmra.mxu0 %v457
    %v3301 = vpop.f32.mrf.mxu0
    %v3302 = vadd.f32 0.0, %v3301
    %3303 = vmatmul.f32.gmra.mxu0 %v458
    %v3304 = vpop.f32.mrf.mxu0
    %v3305 = vadd.f32 0.0, %v3304
    %3306 = vmatmul.f32.gmra.mxu0 %v459
    %v3307 = vpop.f32.mrf.mxu0
    %v3308 = vadd.f32 0.0, %v3307
    %3309 = vmatmul.f32.gmra.mxu0 %v460
    %v3310 = vpop.f32.mrf.mxu0
    %v3311 = vadd.f32 0.0, %v3310
    %3312 = vmatmul.f32.gmra.mxu0 %v461
    %v3313 = vpop.f32.mrf.mxu0
    %v3314 = vadd.f32 0.0, %v3313
    %3315 = vmatmul.f32.gmra.mxu0 %v462
    %v3316 = vpop.f32.mrf.mxu0
    %v3317 = vadd.f32 0.0, %v3316
    %3318 = vmatmul.f32.gmra.mxu0 %v463
    %v3319 = vpop.f32.mrf.mxu0
    %v3320 = vadd.f32 0.0, %v3319
    %3321 = vdwg.mxu0
    %v3322 = vadd.f32 %v360, %v3275
    %v3323 = vadd.f32 %v361, %v3278
    %v3324 = vadd.f32 %v362, %v3281
    %v3325 = vadd.f32 %v363, %v3284
    %v3326 = vadd.f32 %v364, %v3287
    %v3327 = vadd.f32 %v365, %v3290
    %v3328 = vadd.f32 %v366, %v3293
    %v3329 = vadd.f32 %v367, %v3296
    %v3330 = vadd.f32 %v368, %v3299
    %v3331 = vadd.f32 %v369, %v3302
    %v3332 = vadd.f32 %v370, %v3305
    %v3333 = vadd.f32 %v371, %v3308
    %v3334 = vadd.f32 %v372, %v3311
    %v3335 = vadd.f32 %v373, %v3314
    %v3336 = vadd.f32 %v374, %v3317
    %v3337 = vadd.f32 %v375, %v3320
    %v3338 = vsel %vm464, %v3322, 0.0
    %3339 = vadd.xlane.f32.xlu0 %v3338
    %v3340 = vpop.xlane.xlu0 %3339
    %v3341 = vsel %vm464, %v3323, 0.0
    %3342 = vadd.xlane.f32.xlu0 %v3341
    %v3343 = vpop.xlane.xlu0 %3342
    %v3344 = vsel %vm464, %v3324, 0.0
    %3345 = vadd.xlane.f32.xlu0 %v3344
    %v3346 = vpop.xlane.xlu0 %3345
    %v3347 = vsel %vm464, %v3325, 0.0
    %3348 = vadd.xlane.f32.xlu0 %v3347
    %v3349 = vpop.xlane.xlu0 %3348
    %v3350 = vsel %vm464, %v3326, 0.0
    %3351 = vadd.xlane.f32.xlu0 %v3350
    %v3352 = vpop.xlane.xlu0 %3351
    %v3353 = vsel %vm464, %v3327, 0.0
    %3354 = vadd.xlane.f32.xlu0 %v3353
    %v3355 = vpop.xlane.xlu0 %3354
    %v3356 = vsel %vm464, %v3328, 0.0
    %3357 = vadd.xlane.f32.xlu0 %v3356
    %v3358 = vpop.xlane.xlu0 %3357
    %v3359 = vsel %vm464, %v3329, 0.0
    %3360 = vadd.xlane.f32.xlu0 %v3359
    %v3361 = vpop.xlane.xlu0 %3360
    %v3362 = vsel %vm464, %v3330, 0.0
    %3363 = vadd.xlane.f32.xlu0 %v3362
    %v3364 = vpop.xlane.xlu0 %3363
    %v3365 = vsel %vm464, %v3331, 0.0
    %3366 = vadd.xlane.f32.xlu0 %v3365
    %v3367 = vpop.xlane.xlu0 %3366
    %v3368 = vsel %vm464, %v3332, 0.0
    %3369 = vadd.xlane.f32.xlu0 %v3368
    %v3370 = vpop.xlane.xlu0 %3369
    %v3371 = vsel %vm464, %v3333, 0.0
    %3372 = vadd.xlane.f32.xlu0 %v3371
    %v3373 = vpop.xlane.xlu0 %3372
    %v3374 = vsel %vm464, %v3334, 0.0
    %3375 = vadd.xlane.f32.xlu0 %v3374
    %v3376 = vpop.xlane.xlu0 %3375
    %v3377 = vsel %vm464, %v3335, 0.0
    %3378 = vadd.xlane.f32.xlu0 %v3377
    %v3379 = vpop.xlane.xlu0 %3378
    %v3380 = vsel %vm464, %v3336, 0.0
    %3381 = vadd.xlane.f32.xlu0 %v3380
    %v3382 = vpop.xlane.xlu0 %3381
    %v3383 = vsel %vm464, %v3337, 0.0
    %3384 = vadd.xlane.f32.xlu0 %v3383
    %v3385 = vpop.xlane.xlu0 %3384
    %v3386 = vmul.f32 %v3340, %v519
    %v3387 = vmul.f32 %v3343, %v519
    %v3388 = vmul.f32 %v3346, %v519
    %v3389 = vmul.f32 %v3349, %v519
    %v3390 = vmul.f32 %v3352, %v519
    %v3391 = vmul.f32 %v3355, %v519
    %v3392 = vmul.f32 %v3358, %v519
    %v3393 = vmul.f32 %v3361, %v519
    %v3394 = vmul.f32 %v3364, %v519
    %v3395 = vmul.f32 %v3367, %v519
    %v3396 = vmul.f32 %v3370, %v519
    %v3397 = vmul.f32 %v3373, %v519
    %v3398 = vmul.f32 %v3376, %v519
    %v3399 = vmul.f32 %v3379, %v519
    %v3400 = vmul.f32 %v3382, %v519
    %v3401 = vmul.f32 %v3385, %v519
    %v3402 = vsub.f32 %v3322, %v3386
    %v3403 = vsub.f32 %v3323, %v3387
    %v3404 = vsub.f32 %v3324, %v3388
    %v3405 = vsub.f32 %v3325, %v3389
    %v3406 = vsub.f32 %v3326, %v3390
    %v3407 = vsub.f32 %v3327, %v3391
    %v3408 = vsub.f32 %v3328, %v3392
    %v3409 = vsub.f32 %v3329, %v3393
    %v3410 = vsub.f32 %v3330, %v3394
    %v3411 = vsub.f32 %v3331, %v3395
    %v3412 = vsub.f32 %v3332, %v3396
    %v3413 = vsub.f32 %v3333, %v3397
    %v3414 = vsub.f32 %v3334, %v3398
    %v3415 = vsub.f32 %v3335, %v3399
    %v3416 = vsub.f32 %v3336, %v3400
    %v3417 = vsub.f32 %v3337, %v3401
    %v3418 = vmul.f32 %v3402, %v3402
    %v3419 = vmul.f32 %v3403, %v3403
    %v3420 = vmul.f32 %v3404, %v3404
    %v3421 = vmul.f32 %v3405, %v3405
    %v3422 = vmul.f32 %v3406, %v3406
    %v3423 = vmul.f32 %v3407, %v3407
    %v3424 = vmul.f32 %v3408, %v3408
    %v3425 = vmul.f32 %v3409, %v3409
    %v3426 = vmul.f32 %v3410, %v3410
    %v3427 = vmul.f32 %v3411, %v3411
    %v3428 = vmul.f32 %v3412, %v3412
    %v3429 = vmul.f32 %v3413, %v3413
    %v3430 = vmul.f32 %v3414, %v3414
    %v3431 = vmul.f32 %v3415, %v3415
    %v3432 = vmul.f32 %v3416, %v3416
    %v3433 = vmul.f32 %v3417, %v3417
    %v3434 = vsel %vm464, %v3418, 0.0
    %3435 = vadd.xlane.f32.xlu0 %v3434
    %v3436 = vpop.xlane.xlu0 %3435
    %v3437 = vsel %vm464, %v3419, 0.0
    %3438 = vadd.xlane.f32.xlu0 %v3437
    %v3439 = vpop.xlane.xlu0 %3438
    %v3440 = vsel %vm464, %v3420, 0.0
    %3441 = vadd.xlane.f32.xlu0 %v3440
    %v3442 = vpop.xlane.xlu0 %3441
    %v3443 = vsel %vm464, %v3421, 0.0
    %3444 = vadd.xlane.f32.xlu0 %v3443
    %v3445 = vpop.xlane.xlu0 %3444
    %v3446 = vsel %vm464, %v3422, 0.0
    %3447 = vadd.xlane.f32.xlu0 %v3446
    %v3448 = vpop.xlane.xlu0 %3447
    %v3449 = vsel %vm464, %v3423, 0.0
    %3450 = vadd.xlane.f32.xlu0 %v3449
    %v3451 = vpop.xlane.xlu0 %3450
    %v3452 = vsel %vm464, %v3424, 0.0
    %3453 = vadd.xlane.f32.xlu0 %v3452
    %v3454 = vpop.xlane.xlu0 %3453
    %v3455 = vsel %vm464, %v3425, 0.0
    %3456 = vadd.xlane.f32.xlu0 %v3455
    %v3457 = vpop.xlane.xlu0 %3456
    %v3458 = vsel %vm464, %v3426, 0.0
    %3459 = vadd.xlane.f32.xlu0 %v3458
    %v3460 = vpop.xlane.xlu0 %3459
    %v3461 = vsel %vm464, %v3427, 0.0
    %3462 = vadd.xlane.f32.xlu0 %v3461
    %v3463 = vpop.xlane.xlu0 %3462
    %v3464 = vsel %vm464, %v3428, 0.0
    %3465 = vadd.xlane.f32.xlu0 %v3464
    %v3466 = vpop.xlane.xlu0 %3465
    %v3467 = vsel %vm464, %v3429, 0.0
    %3468 = vadd.xlane.f32.xlu0 %v3467
    %v3469 = vpop.xlane.xlu0 %3468
    %v3470 = vsel %vm464, %v3430, 0.0
    %3471 = vadd.xlane.f32.xlu0 %v3470
    %v3472 = vpop.xlane.xlu0 %3471
    %v3473 = vsel %vm464, %v3431, 0.0
    %3474 = vadd.xlane.f32.xlu0 %v3473
    %v3475 = vpop.xlane.xlu0 %3474
    %v3476 = vsel %vm464, %v3432, 0.0
    %3477 = vadd.xlane.f32.xlu0 %v3476
    %v3478 = vpop.xlane.xlu0 %3477
    %v3479 = vsel %vm464, %v3433, 0.0
    %3480 = vadd.xlane.f32.xlu0 %v3479
    %v3481 = vpop.xlane.xlu0 %3480
    %v3482 = vmul.f32 %v3436, %v519
    %v3483 = vmul.f32 %v3439, %v519
    %v3484 = vmul.f32 %v3442, %v519
    %v3485 = vmul.f32 %v3445, %v519
    %v3486 = vmul.f32 %v3448, %v519
    %v3487 = vmul.f32 %v3451, %v519
    %v3488 = vmul.f32 %v3454, %v519
    %v3489 = vmul.f32 %v3457, %v519
    %v3490 = vmul.f32 %v3460, %v519
    %v3491 = vmul.f32 %v3463, %v519
    %v3492 = vmul.f32 %v3466, %v519
    %v3493 = vmul.f32 %v3469, %v519
    %v3494 = vmul.f32 %v3472, %v519
    %v3495 = vmul.f32 %v3475, %v519
    %v3496 = vmul.f32 %v3478, %v519
    %v3497 = vmul.f32 %v3481, %v519
    %v3498 = vadd.f32 %v3482, 1e-05
    %v3499 = vadd.f32 %v3483, 1e-05
    %v3500 = vadd.f32 %v3484, 1e-05
    %v3501 = vadd.f32 %v3485, 1e-05
    %v3502 = vadd.f32 %v3486, 1e-05
    %v3503 = vadd.f32 %v3487, 1e-05
    %v3504 = vadd.f32 %v3488, 1e-05
    %v3505 = vadd.f32 %v3489, 1e-05
    %v3506 = vadd.f32 %v3490, 1e-05
    %v3507 = vadd.f32 %v3491, 1e-05
    %v3508 = vadd.f32 %v3492, 1e-05
    %v3509 = vadd.f32 %v3493, 1e-05
    %v3510 = vadd.f32 %v3494, 1e-05
    %v3511 = vadd.f32 %v3495, 1e-05
    %v3512 = vadd.f32 %v3496, 1e-05
    %v3513 = vadd.f32 %v3497, 1e-05
    %v3514 = vrsqrt.pop %v3498
    %v3515 = vmul.f32 %v3514, %v3498
    %v3516 = vmul.f32 %v3515, %v3514
    %v3517 = vmul.f32 0.5, %v3516
    %v3518 = vsub.f32 1.5, %v3517
    %v3519 = vmul.f32 %v3514, %v3518
    %vm3520 = vweird.f32 %v3498
    %vm3521 = vweird.f32 %v3514
    %vm3522 = vmor %vm3520, %vm3521
    %v3523 = vsel %vm3522, %v3514, %v3519
    %v3524 = vrsqrt.pop %v3499
    %v3525 = vmul.f32 %v3524, %v3499
    %v3526 = vmul.f32 %v3525, %v3524
    %v3527 = vmul.f32 0.5, %v3526
    %v3528 = vsub.f32 1.5, %v3527
    %v3529 = vmul.f32 %v3524, %v3528
    %vm3530 = vweird.f32 %v3499
    %vm3531 = vweird.f32 %v3524
    %vm3532 = vmor %vm3530, %vm3531
    %v3533 = vsel %vm3532, %v3524, %v3529
    %v3534 = vrsqrt.pop %v3500
    %v3535 = vmul.f32 %v3534, %v3500
    %v3536 = vmul.f32 %v3535, %v3534
    %v3537 = vmul.f32 0.5, %v3536
    %v3538 = vsub.f32 1.5, %v3537
    %v3539 = vmul.f32 %v3534, %v3538
    %vm3540 = vweird.f32 %v3500
    %vm3541 = vweird.f32 %v3534
    %vm3542 = vmor %vm3540, %vm3541
    %v3543 = vsel %vm3542, %v3534, %v3539
    %v3544 = vrsqrt.pop %v3501
    %v3545 = vmul.f32 %v3544, %v3501
    %v3546 = vmul.f32 %v3545, %v3544
    %v3547 = vmul.f32 0.5, %v3546
    %v3548 = vsub.f32 1.5, %v3547
    %v3549 = vmul.f32 %v3544, %v3548
    %vm3550 = vweird.f32 %v3501
    %vm3551 = vweird.f32 %v3544
    %vm3552 = vmor %vm3550, %vm3551
    %v3553 = vsel %vm3552, %v3544, %v3549
    %v3554 = vrsqrt.pop %v3502
    %v3555 = vmul.f32 %v3554, %v3502
    %v3556 = vmul.f32 %v3555, %v3554
    %v3557 = vmul.f32 0.5, %v3556
    %v3558 = vsub.f32 1.5, %v3557
    %v3559 = vmul.f32 %v3554, %v3558
    %vm3560 = vweird.f32 %v3502
    %vm3561 = vweird.f32 %v3554
    %vm3562 = vmor %vm3560, %vm3561
    %v3563 = vsel %vm3562, %v3554, %v3559
    %v3564 = vrsqrt.pop %v3503
    %v3565 = vmul.f32 %v3564, %v3503
    %v3566 = vmul.f32 %v3565, %v3564
    %v3567 = vmul.f32 0.5, %v3566
    %v3568 = vsub.f32 1.5, %v3567
    %v3569 = vmul.f32 %v3564, %v3568
    %vm3570 = vweird.f32 %v3503
    %vm3571 = vweird.f32 %v3564
    %vm3572 = vmor %vm3570, %vm3571
    %v3573 = vsel %vm3572, %v3564, %v3569
    %v3574 = vrsqrt.pop %v3504
    %v3575 = vmul.f32 %v3574, %v3504
    %v3576 = vmul.f32 %v3575, %v3574
    %v3577 = vmul.f32 0.5, %v3576
    %v3578 = vsub.f32 1.5, %v3577
    %v3579 = vmul.f32 %v3574, %v3578
    %vm3580 = vweird.f32 %v3504
    %vm3581 = vweird.f32 %v3574
    %vm3582 = vmor %vm3580, %vm3581
    %v3583 = vsel %vm3582, %v3574, %v3579
    %v3584 = vrsqrt.pop %v3505
    %v3585 = vmul.f32 %v3584, %v3505
    %v3586 = vmul.f32 %v3585, %v3584
    %v3587 = vmul.f32 0.5, %v3586
    %v3588 = vsub.f32 1.5, %v3587
    %v3589 = vmul.f32 %v3584, %v3588
    %vm3590 = vweird.f32 %v3505
    %vm3591 = vweird.f32 %v3584
    %vm3592 = vmor %vm3590, %vm3591
    %v3593 = vsel %vm3592, %v3584, %v3589
    %v3594 = vrsqrt.pop %v3506
    %v3595 = vmul.f32 %v3594, %v3506
    %v3596 = vmul.f32 %v3595, %v3594
    %v3597 = vmul.f32 0.5, %v3596
    %v3598 = vsub.f32 1.5, %v3597
    %v3599 = vmul.f32 %v3594, %v3598
    %vm3600 = vweird.f32 %v3506
    %vm3601 = vweird.f32 %v3594
    %vm3602 = vmor %vm3600, %vm3601
    %v3603 = vsel %vm3602, %v3594, %v3599
    %v3604 = vrsqrt.pop %v3507
    %v3605 = vmul.f32 %v3604, %v3507
    %v3606 = vmul.f32 %v3605, %v3604
    %v3607 = vmul.f32 0.5, %v3606
    %v3608 = vsub.f32 1.5, %v3607
    %v3609 = vmul.f32 %v3604, %v3608
    %vm3610 = vweird.f32 %v3507
    %vm3611 = vweird.f32 %v3604
    %vm3612 = vmor %vm3610, %vm3611
    %v3613 = vsel %vm3612, %v3604, %v3609
    %v3614 = vrsqrt.pop %v3508
    %v3615 = vmul.f32 %v3614, %v3508
    %v3616 = vmul.f32 %v3615, %v3614
    %v3617 = vmul.f32 0.5, %v3616
    %v3618 = vsub.f32 1.5, %v3617
    %v3619 = vmul.f32 %v3614, %v3618
    %vm3620 = vweird.f32 %v3508
    %vm3621 = vweird.f32 %v3614
    %vm3622 = vmor %vm3620, %vm3621
    %v3623 = vsel %vm3622, %v3614, %v3619
    %v3624 = vrsqrt.pop %v3509
    %v3625 = vmul.f32 %v3624, %v3509
    %v3626 = vmul.f32 %v3625, %v3624
    %v3627 = vmul.f32 0.5, %v3626
    %v3628 = vsub.f32 1.5, %v3627
    %v3629 = vmul.f32 %v3624, %v3628
    %vm3630 = vweird.f32 %v3509
    %vm3631 = vweird.f32 %v3624
    %vm3632 = vmor %vm3630, %vm3631
    %v3633 = vsel %vm3632, %v3624, %v3629
    %v3634 = vrsqrt.pop %v3510
    %v3635 = vmul.f32 %v3634, %v3510
    %v3636 = vmul.f32 %v3635, %v3634
    %v3637 = vmul.f32 0.5, %v3636
    %v3638 = vsub.f32 1.5, %v3637
    %v3639 = vmul.f32 %v3634, %v3638
    %vm3640 = vweird.f32 %v3510
    %vm3641 = vweird.f32 %v3634
    %vm3642 = vmor %vm3640, %vm3641
    %v3643 = vsel %vm3642, %v3634, %v3639
    %v3644 = vrsqrt.pop %v3511
    %v3645 = vmul.f32 %v3644, %v3511
    %v3646 = vmul.f32 %v3645, %v3644
    %v3647 = vmul.f32 0.5, %v3646
    %v3648 = vsub.f32 1.5, %v3647
    %v3649 = vmul.f32 %v3644, %v3648
    %vm3650 = vweird.f32 %v3511
    %vm3651 = vweird.f32 %v3644
    %vm3652 = vmor %vm3650, %vm3651
    %v3653 = vsel %vm3652, %v3644, %v3649
    %v3654 = vrsqrt.pop %v3512
    %v3655 = vmul.f32 %v3654, %v3512
    %v3656 = vmul.f32 %v3655, %v3654
    %v3657 = vmul.f32 0.5, %v3656
    %v3658 = vsub.f32 1.5, %v3657
    %v3659 = vmul.f32 %v3654, %v3658
    %vm3660 = vweird.f32 %v3512
    %vm3661 = vweird.f32 %v3654
    %vm3662 = vmor %vm3660, %vm3661
    %v3663 = vsel %vm3662, %v3654, %v3659
    %v3664 = vrsqrt.pop %v3513
    %v3665 = vmul.f32 %v3664, %v3513
    %v3666 = vmul.f32 %v3665, %v3664
    %v3667 = vmul.f32 0.5, %v3666
    %v3668 = vsub.f32 1.5, %v3667
    %v3669 = vmul.f32 %v3664, %v3668
    %vm3670 = vweird.f32 %v3513
    %vm3671 = vweird.f32 %v3664
    %vm3672 = vmor %vm3670, %vm3671
    %v3673 = vsel %vm3672, %v3664, %v3669
    %v3674 = vmul.f32 %v3402, %v3523
    %v3675 = vmul.f32 %v3403, %v3533
    %v3676 = vmul.f32 %v3404, %v3543
    %v3677 = vmul.f32 %v3405, %v3553
    %v3678 = vmul.f32 %v3406, %v3563
    %v3679 = vmul.f32 %v3407, %v3573
    %v3680 = vmul.f32 %v3408, %v3583
    %v3681 = vmul.f32 %v3409, %v3593
    %v3682 = vmul.f32 %v3410, %v3603
    %v3683 = vmul.f32 %v3411, %v3613
    %v3684 = vmul.f32 %v3412, %v3623
    %v3685 = vmul.f32 %v3413, %v3633
    %v3686 = vmul.f32 %v3414, %v3643
    %v3687 = vmul.f32 %v3415, %v3653
    %v3688 = vmul.f32 %v3416, %v3663
    %v3689 = vmul.f32 %v3417, %v3673
    %v3691 = vperm.slane %v408, 0
    %v3693 = vmul.f32 %v3674, %v3691
    %v3694 = vmul.f32 %v3675, %v3691
    %v3695 = vmul.f32 %v3676, %v3691
    %v3696 = vmul.f32 %v3677, %v3691
    %v3697 = vmul.f32 %v3678, %v3691
    %v3698 = vmul.f32 %v3679, %v3691
    %v3699 = vmul.f32 %v3680, %v3691
    %v3700 = vmul.f32 %v3681, %v3691
    %v3701 = vmul.f32 %v3682, %v3691
    %v3702 = vmul.f32 %v3683, %v3691
    %v3703 = vmul.f32 %v3684, %v3691
    %v3704 = vmul.f32 %v3685, %v3691
    %v3705 = vmul.f32 %v3686, %v3691
    %v3706 = vmul.f32 %v3687, %v3691
    %v3707 = vmul.f32 %v3688, %v3691
    %v3708 = vmul.f32 %v3689, %v3691
    %v3710 = vperm.slane %v409, 0
    %v3712 = vadd.f32 %v3693, %v3710
    %v3713 = vadd.f32 %v3694, %v3710
    %v3714 = vadd.f32 %v3695, %v3710
    %v3715 = vadd.f32 %v3696, %v3710
    %v3716 = vadd.f32 %v3697, %v3710
    %v3717 = vadd.f32 %v3698, %v3710
    %v3718 = vadd.f32 %v3699, %v3710
    %v3719 = vadd.f32 %v3700, %v3710
    %v3720 = vadd.f32 %v3701, %v3710
    %v3721 = vadd.f32 %v3702, %v3710
    %v3722 = vadd.f32 %v3703, %v3710
    %v3723 = vadd.f32 %v3704, %v3710
    %v3724 = vadd.f32 %v3705, %v3710
    %v3725 = vadd.f32 %v3706, %v3710
    %v3726 = vadd.f32 %v3707, %v3710
    %v3727 = vadd.f32 %v3708, %v3710
    %v3729 = vperm.slane %v414, 0
    %v3732 = vsel %vm464, %v3712, 0
    %v3735 = vsel %vm464, %v3713, 0
    %v3738 = vsel %vm464, %v3714, 0
    %v3741 = vsel %vm464, %v3715, 0
    %v3744 = vsel %vm464, %v3716, 0
    %v3747 = vsel %vm464, %v3717, 0
    %v3750 = vsel %vm464, %v3718, 0
    %v3753 = vsel %vm464, %v3719, 0
    %v3756 = vsel %vm464, %v3720, 0
    %v3759 = vsel %vm464, %v3721, 0
    %v3762 = vsel %vm464, %v3722, 0
    %v3765 = vsel %vm464, %v3723, 0
    %v3768 = vsel %vm464, %v3724, 0
    %v3771 = vsel %vm464, %v3725, 0
    %v3774 = vsel %vm464, %v3726, 0
    %v3777 = vsel %vm464, %v3727, 0
    %3779 = vmatpush.msra.mxu0 0.0
    %3780 = vmatpush.msra.mxu0 0.0
    %3781 = vmatpush.msra.mxu0 0.0
    %3782 = vmatpush.msra.mxu0 0.0
    %3783 = vmatpush.msra.mxu0 0.0
    %3784 = vmatpush.msra.mxu0 0.0
    %3785 = vmatpush.msra.mxu0 0.0
    %3786 = vmatpush.msra.mxu0 0.0
    %3787 = vmatpush.msra.mxu0 0.0
    %3788 = vmatpush.msra.mxu0 0.0
    %3789 = vmatpush.msra.mxu0 0.0
    %3790 = vmatpush.msra.mxu0 0.0
    %3791 = vmatpush.msra.mxu0 %v413
    %3792 = vmatpush.msra.mxu0 %v412
    %3793 = vmatpush.msra.mxu0 %v411
    %3794 = vmatpush.msra.mxu0 %v410
    %3795 = vmatmul.f32.gmra.mxu0 %v3732
    %v3796 = vpop.f32.mrf.mxu0
    %v3797 = vadd.f32 %v3729, %v3796
    %3798 = vmatmul.f32.gmra.mxu0 %v3735
    %v3799 = vpop.f32.mrf.mxu0
    %v3800 = vadd.f32 %v3729, %v3799
    %3801 = vmatmul.f32.gmra.mxu0 %v3738
    %v3802 = vpop.f32.mrf.mxu0
    %v3803 = vadd.f32 %v3729, %v3802
    %3804 = vmatmul.f32.gmra.mxu0 %v3741
    %v3805 = vpop.f32.mrf.mxu0
    %v3806 = vadd.f32 %v3729, %v3805
    %3807 = vmatmul.f32.gmra.mxu0 %v3744
    %v3808 = vpop.f32.mrf.mxu0
    %v3809 = vadd.f32 %v3729, %v3808
    %3810 = vmatmul.f32.gmra.mxu0 %v3747
    %v3811 = vpop.f32.mrf.mxu0
    %v3812 = vadd.f32 %v3729, %v3811
    %3813 = vmatmul.f32.gmra.mxu0 %v3750
    %v3814 = vpop.f32.mrf.mxu0
    %v3815 = vadd.f32 %v3729, %v3814
    %3816 = vmatmul.f32.gmra.mxu0 %v3753
    %v3817 = vpop.f32.mrf.mxu0
    %v3818 = vadd.f32 %v3729, %v3817
    %3819 = vmatmul.f32.gmra.mxu0 %v3756
    %v3820 = vpop.f32.mrf.mxu0
    %v3821 = vadd.f32 %v3729, %v3820
    %3822 = vmatmul.f32.gmra.mxu0 %v3759
    %v3823 = vpop.f32.mrf.mxu0
    %v3824 = vadd.f32 %v3729, %v3823
    %3825 = vmatmul.f32.gmra.mxu0 %v3762
    %v3826 = vpop.f32.mrf.mxu0
    %v3827 = vadd.f32 %v3729, %v3826
    %3828 = vmatmul.f32.gmra.mxu0 %v3765
    %v3829 = vpop.f32.mrf.mxu0
    %v3830 = vadd.f32 %v3729, %v3829
    %3831 = vmatmul.f32.gmra.mxu0 %v3768
    %v3832 = vpop.f32.mrf.mxu0
    %v3833 = vadd.f32 %v3729, %v3832
    %3834 = vmatmul.f32.gmra.mxu0 %v3771
    %v3835 = vpop.f32.mrf.mxu0
    %v3836 = vadd.f32 %v3729, %v3835
    %3837 = vmatmul.f32.gmra.mxu0 %v3774
    %v3838 = vpop.f32.mrf.mxu0
    %v3839 = vadd.f32 %v3729, %v3838
    %3840 = vmatmul.f32.gmra.mxu0 %v3777
    %v3841 = vpop.f32.mrf.mxu0
    %v3842 = vadd.f32 %v3729, %v3841
    %3843 = vdwg.mxu0
    %v3844 = vmul.f32 %v3797, 0.70710677
    %v3845 = vmul.f32 %v3800, 0.70710677
    %v3846 = vmul.f32 %v3803, 0.70710677
    %v3847 = vmul.f32 %v3806, 0.70710677
    %v3848 = vmul.f32 %v3809, 0.70710677
    %v3849 = vmul.f32 %v3812, 0.70710677
    %v3850 = vmul.f32 %v3815, 0.70710677
    %v3851 = vmul.f32 %v3818, 0.70710677
    %v3852 = vmul.f32 %v3821, 0.70710677
    %v3853 = vmul.f32 %v3824, 0.70710677
    %v3854 = vmul.f32 %v3827, 0.70710677
    %v3855 = vmul.f32 %v3830, 0.70710677
    %v3856 = vmul.f32 %v3833, 0.70710677
    %v3857 = vmul.f32 %v3836, 0.70710677
    %v3858 = vmul.f32 %v3839, 0.70710677
    %v3859 = vmul.f32 %v3842, 0.70710677
    %v3860 = vand.u32 2147483647, %v3844
    %v3861 = vand.u32 2147483647, %v3845
    %v3862 = vand.u32 2147483647, %v3846
    %v3863 = vand.u32 2147483647, %v3847
    %v3864 = vand.u32 2147483647, %v3848
    %v3865 = vand.u32 2147483647, %v3849
    %v3866 = vand.u32 2147483647, %v3850
    %v3867 = vand.u32 2147483647, %v3851
    %v3868 = vand.u32 2147483647, %v3852
    %v3869 = vand.u32 2147483647, %v3853
    %v3870 = vand.u32 2147483647, %v3854
    %v3871 = vand.u32 2147483647, %v3855
    %v3872 = vand.u32 2147483647, %v3856
    %v3873 = vand.u32 2147483647, %v3857
    %v3874 = vand.u32 2147483647, %v3858
    %v3875 = vand.u32 2147483647, %v3859
    %v3876 = vmul.f32 %v3860, 0.3275911
    %v3877 = vmul.f32 %v3861, 0.3275911
    %v3878 = vmul.f32 %v3862, 0.3275911
    %v3879 = vmul.f32 %v3863, 0.3275911
    %v3880 = vmul.f32 %v3864, 0.3275911
    %v3881 = vmul.f32 %v3865, 0.3275911
    %v3882 = vmul.f32 %v3866, 0.3275911
    %v3883 = vmul.f32 %v3867, 0.3275911
    %v3884 = vmul.f32 %v3868, 0.3275911
    %v3885 = vmul.f32 %v3869, 0.3275911
    %v3886 = vmul.f32 %v3870, 0.3275911
    %v3887 = vmul.f32 %v3871, 0.3275911
    %v3888 = vmul.f32 %v3872, 0.3275911
    %v3889 = vmul.f32 %v3873, 0.3275911
    %v3890 = vmul.f32 %v3874, 0.3275911
    %v3891 = vmul.f32 %v3875, 0.3275911
    %v3892 = vadd.f32 %v3876, 1.0
    %v3893 = vadd.f32 %v3877, 1.0
    %v3894 = vadd.f32 %v3878, 1.0
    %v3895 = vadd.f32 %v3879, 1.0
    %v3896 = vadd.f32 %v3880, 1.0
    %v3897 = vadd.f32 %v3881, 1.0
    %v3898 = vadd.f32 %v3882, 1.0
    %v3899 = vadd.f32 %v3883, 1.0
    %v3900 = vadd.f32 %v3884, 1.0
    %v3901 = vadd.f32 %v3885, 1.0
    %v3902 = vadd.f32 %v3886, 1.0
    %v3903 = vadd.f32 %v3887, 1.0
    %v3904 = vadd.f32 %v3888, 1.0
    %v3905 = vadd.f32 %v3889, 1.0
    %v3906 = vadd.f32 %v3890, 1.0
    %v3907 = vadd.f32 %v3891, 1.0
    %v3908 = vrcp.pop %v3892
    %v3909 = vmul.f32 %v3892, %v3908
    %v3910 = vsub.f32 1.0, %v3909
    %v3911 = vmul.f32 %v3908, %v3910
    %v3912 = vadd.f32 %v3908, %v3911
    %vm3913 = vweird.f32 %v3892
    %vm3914 = vweird.f32 %v3908
    %vm3915 = vmor %vm3913, %vm3914
    %v3916 = vsel %vm3915, %v3908, %v3912
    %v3917 = vand.u32 2147483647, %v3892
    %vm3918 = vcmp.eq.f32.partialorder %v3917, 8.507059e+37
    %v3919 = vand.u32 %v3892, 2147483648
    %v3920 = vor.u32 1.1754944e-38, %v3919
    %v3921 = vsel %vm3918, %v3920, %v3916
    %v3922 = vmul.f32 1.0, %v3921
    %v3923 = vrcp.pop %v3893
    %v3924 = vmul.f32 %v3893, %v3923
    %v3925 = vsub.f32 1.0, %v3924
    %v3926 = vmul.f32 %v3923, %v3925
    %v3927 = vadd.f32 %v3923, %v3926
    %vm3928 = vweird.f32 %v3893
    %vm3929 = vweird.f32 %v3923
    %vm3930 = vmor %vm3928, %vm3929
    %v3931 = vsel %vm3930, %v3923, %v3927
    %v3932 = vand.u32 2147483647, %v3893
    %vm3933 = vcmp.eq.f32.partialorder %v3932, 8.507059e+37
    %v3934 = vand.u32 %v3893, 2147483648
    %v3935 = vor.u32 1.1754944e-38, %v3934
    %v3936 = vsel %vm3933, %v3935, %v3931
    %v3937 = vmul.f32 1.0, %v3936
    %v3938 = vrcp.pop %v3894
    %v3939 = vmul.f32 %v3894, %v3938
    %v3940 = vsub.f32 1.0, %v3939
    %v3941 = vmul.f32 %v3938, %v3940
    %v3942 = vadd.f32 %v3938, %v3941
    %vm3943 = vweird.f32 %v3894
    %vm3944 = vweird.f32 %v3938
    %vm3945 = vmor %vm3943, %vm3944
    %v3946 = vsel %vm3945, %v3938, %v3942
    %v3947 = vand.u32 2147483647, %v3894
    %vm3948 = vcmp.eq.f32.partialorder %v3947, 8.507059e+37
    %v3949 = vand.u32 %v3894, 2147483648
    %v3950 = vor.u32 1.1754944e-38, %v3949
    %v3951 = vsel %vm3948, %v3950, %v3946
    %v3952 = vmul.f32 1.0, %v3951
    %v3953 = vrcp.pop %v3895
    %v3954 = vmul.f32 %v3895, %v3953
    %v3955 = vsub.f32 1.0, %v3954
    %v3956 = vmul.f32 %v3953, %v3955
    %v3957 = vadd.f32 %v3953, %v3956
    %vm3958 = vweird.f32 %v3895
    %vm3959 = vweird.f32 %v3953
    %vm3960 = vmor %vm3958, %vm3959
    %v3961 = vsel %vm3960, %v3953, %v3957
    %v3962 = vand.u32 2147483647, %v3895
    %vm3963 = vcmp.eq.f32.partialorder %v3962, 8.507059e+37
    %v3964 = vand.u32 %v3895, 2147483648
    %v3965 = vor.u32 1.1754944e-38, %v3964
    %v3966 = vsel %vm3963, %v3965, %v3961
    %v3967 = vmul.f32 1.0, %v3966
    %v3968 = vrcp.pop %v3896
    %v3969 = vmul.f32 %v3896, %v3968
    %v3970 = vsub.f32 1.0, %v3969
    %v3971 = vmul.f32 %v3968, %v3970
    %v3972 = vadd.f32 %v3968, %v3971
    %vm3973 = vweird.f32 %v3896
    %vm3974 = vweird.f32 %v3968
    %vm3975 = vmor %vm3973, %vm3974
    %v3976 = vsel %vm3975, %v3968, %v3972
    %v3977 = vand.u32 2147483647, %v3896
    %vm3978 = vcmp.eq.f32.partialorder %v3977, 8.507059e+37
    %v3979 = vand.u32 %v3896, 2147483648
    %v3980 = vor.u32 1.1754944e-38, %v3979
    %v3981 = vsel %vm3978, %v3980, %v3976
    %v3982 = vmul.f32 1.0, %v3981
    %v3983 = vrcp.pop %v3897
    %v3984 = vmul.f32 %v3897, %v3983
    %v3985 = vsub.f32 1.0, %v3984
    %v3986 = vmul.f32 %v3983, %v3985
    %v3987 = vadd.f32 %v3983, %v3986
    %vm3988 = vweird.f32 %v3897
    %vm3989 = vweird.f32 %v3983
    %vm3990 = vmor %vm3988, %vm3989
    %v3991 = vsel %vm3990, %v3983, %v3987
    %v3992 = vand.u32 2147483647, %v3897
    %vm3993 = vcmp.eq.f32.partialorder %v3992, 8.507059e+37
    %v3994 = vand.u32 %v3897, 2147483648
    %v3995 = vor.u32 1.1754944e-38, %v3994
    %v3996 = vsel %vm3993, %v3995, %v3991
    %v3997 = vmul.f32 1.0, %v3996
    %v3998 = vrcp.pop %v3898
    %v3999 = vmul.f32 %v3898, %v3998
    %v4000 = vsub.f32 1.0, %v3999
    %v4001 = vmul.f32 %v3998, %v4000
    %v4002 = vadd.f32 %v3998, %v4001
    %vm4003 = vweird.f32 %v3898
    %vm4004 = vweird.f32 %v3998
    %vm4005 = vmor %vm4003, %vm4004
    %v4006 = vsel %vm4005, %v3998, %v4002
    %v4007 = vand.u32 2147483647, %v3898
    %vm4008 = vcmp.eq.f32.partialorder %v4007, 8.507059e+37
    %v4009 = vand.u32 %v3898, 2147483648
    %v4010 = vor.u32 1.1754944e-38, %v4009
    %v4011 = vsel %vm4008, %v4010, %v4006
    %v4012 = vmul.f32 1.0, %v4011
    %v4013 = vrcp.pop %v3899
    %v4014 = vmul.f32 %v3899, %v4013
    %v4015 = vsub.f32 1.0, %v4014
    %v4016 = vmul.f32 %v4013, %v4015
    %v4017 = vadd.f32 %v4013, %v4016
    %vm4018 = vweird.f32 %v3899
    %vm4019 = vweird.f32 %v4013
    %vm4020 = vmor %vm4018, %vm4019
    %v4021 = vsel %vm4020, %v4013, %v4017
    %v4022 = vand.u32 2147483647, %v3899
    %vm4023 = vcmp.eq.f32.partialorder %v4022, 8.507059e+37
    %v4024 = vand.u32 %v3899, 2147483648
    %v4025 = vor.u32 1.1754944e-38, %v4024
    %v4026 = vsel %vm4023, %v4025, %v4021
    %v4027 = vmul.f32 1.0, %v4026
    %v4028 = vrcp.pop %v3900
    %v4029 = vmul.f32 %v3900, %v4028
    %v4030 = vsub.f32 1.0, %v4029
    %v4031 = vmul.f32 %v4028, %v4030
    %v4032 = vadd.f32 %v4028, %v4031
    %vm4033 = vweird.f32 %v3900
    %vm4034 = vweird.f32 %v4028
    %vm4035 = vmor %vm4033, %vm4034
    %v4036 = vsel %vm4035, %v4028, %v4032
    %v4037 = vand.u32 2147483647, %v3900
    %vm4038 = vcmp.eq.f32.partialorder %v4037, 8.507059e+37
    %v4039 = vand.u32 %v3900, 2147483648
    %v4040 = vor.u32 1.1754944e-38, %v4039
    %v4041 = vsel %vm4038, %v4040, %v4036
    %v4042 = vmul.f32 1.0, %v4041
    %v4043 = vrcp.pop %v3901
    %v4044 = vmul.f32 %v3901, %v4043
    %v4045 = vsub.f32 1.0, %v4044
    %v4046 = vmul.f32 %v4043, %v4045
    %v4047 = vadd.f32 %v4043, %v4046
    %vm4048 = vweird.f32 %v3901
    %vm4049 = vweird.f32 %v4043
    %vm4050 = vmor %vm4048, %vm4049
    %v4051 = vsel %vm4050, %v4043, %v4047
    %v4052 = vand.u32 2147483647, %v3901
    %vm4053 = vcmp.eq.f32.partialorder %v4052, 8.507059e+37
    %v4054 = vand.u32 %v3901, 2147483648
    %v4055 = vor.u32 1.1754944e-38, %v4054
    %v4056 = vsel %vm4053, %v4055, %v4051
    %v4057 = vmul.f32 1.0, %v4056
    %v4058 = vrcp.pop %v3902
    %v4059 = vmul.f32 %v3902, %v4058
    %v4060 = vsub.f32 1.0, %v4059
    %v4061 = vmul.f32 %v4058, %v4060
    %v4062 = vadd.f32 %v4058, %v4061
    %vm4063 = vweird.f32 %v3902
    %vm4064 = vweird.f32 %v4058
    %vm4065 = vmor %vm4063, %vm4064
    %v4066 = vsel %vm4065, %v4058, %v4062
    %v4067 = vand.u32 2147483647, %v3902
    %vm4068 = vcmp.eq.f32.partialorder %v4067, 8.507059e+37
    %v4069 = vand.u32 %v3902, 2147483648
    %v4070 = vor.u32 1.1754944e-38, %v4069
    %v4071 = vsel %vm4068, %v4070, %v4066
    %v4072 = vmul.f32 1.0, %v4071
    %v4073 = vrcp.pop %v3903
    %v4074 = vmul.f32 %v3903, %v4073
    %v4075 = vsub.f32 1.0, %v4074
    %v4076 = vmul.f32 %v4073, %v4075
    %v4077 = vadd.f32 %v4073, %v4076
    %vm4078 = vweird.f32 %v3903
    %vm4079 = vweird.f32 %v4073
    %vm4080 = vmor %vm4078, %vm4079
    %v4081 = vsel %vm4080, %v4073, %v4077
    %v4082 = vand.u32 2147483647, %v3903
    %vm4083 = vcmp.eq.f32.partialorder %v4082, 8.507059e+37
    %v4084 = vand.u32 %v3903, 2147483648
    %v4085 = vor.u32 1.1754944e-38, %v4084
    %v4086 = vsel %vm4083, %v4085, %v4081
    %v4087 = vmul.f32 1.0, %v4086
    %v4088 = vrcp.pop %v3904
    %v4089 = vmul.f32 %v3904, %v4088
    %v4090 = vsub.f32 1.0, %v4089
    %v4091 = vmul.f32 %v4088, %v4090
    %v4092 = vadd.f32 %v4088, %v4091
    %vm4093 = vweird.f32 %v3904
    %vm4094 = vweird.f32 %v4088
    %vm4095 = vmor %vm4093, %vm4094
    %v4096 = vsel %vm4095, %v4088, %v4092
    %v4097 = vand.u32 2147483647, %v3904
    %vm4098 = vcmp.eq.f32.partialorder %v4097, 8.507059e+37
    %v4099 = vand.u32 %v3904, 2147483648
    %v4100 = vor.u32 1.1754944e-38, %v4099
    %v4101 = vsel %vm4098, %v4100, %v4096
    %v4102 = vmul.f32 1.0, %v4101
    %v4103 = vrcp.pop %v3905
    %v4104 = vmul.f32 %v3905, %v4103
    %v4105 = vsub.f32 1.0, %v4104
    %v4106 = vmul.f32 %v4103, %v4105
    %v4107 = vadd.f32 %v4103, %v4106
    %vm4108 = vweird.f32 %v3905
    %vm4109 = vweird.f32 %v4103
    %vm4110 = vmor %vm4108, %vm4109
    %v4111 = vsel %vm4110, %v4103, %v4107
    %v4112 = vand.u32 2147483647, %v3905
    %vm4113 = vcmp.eq.f32.partialorder %v4112, 8.507059e+37
    %v4114 = vand.u32 %v3905, 2147483648
    %v4115 = vor.u32 1.1754944e-38, %v4114
    %v4116 = vsel %vm4113, %v4115, %v4111
    %v4117 = vmul.f32 1.0, %v4116
    %v4118 = vrcp.pop %v3906
    %v4119 = vmul.f32 %v3906, %v4118
    %v4120 = vsub.f32 1.0, %v4119
    %v4121 = vmul.f32 %v4118, %v4120
    %v4122 = vadd.f32 %v4118, %v4121
    %vm4123 = vweird.f32 %v3906
    %vm4124 = vweird.f32 %v4118
    %vm4125 = vmor %vm4123, %vm4124
    %v4126 = vsel %vm4125, %v4118, %v4122
    %v4127 = vand.u32 2147483647, %v3906
    %vm4128 = vcmp.eq.f32.partialorder %v4127, 8.507059e+37
    %v4129 = vand.u32 %v3906, 2147483648
    %v4130 = vor.u32 1.1754944e-38, %v4129
    %v4131 = vsel %vm4128, %v4130, %v4126
    %v4132 = vmul.f32 1.0, %v4131
    %v4133 = vrcp.pop %v3907
    %v4134 = vmul.f32 %v3907, %v4133
    %v4135 = vsub.f32 1.0, %v4134
    %v4136 = vmul.f32 %v4133, %v4135
    %v4137 = vadd.f32 %v4133, %v4136
    %vm4138 = vweird.f32 %v3907
    %vm4139 = vweird.f32 %v4133
    %vm4140 = vmor %vm4138, %vm4139
    %v4141 = vsel %vm4140, %v4133, %v4137
    %v4142 = vand.u32 2147483647, %v3907
    %vm4143 = vcmp.eq.f32.partialorder %v4142, 8.507059e+37
    %v4144 = vand.u32 %v3907, 2147483648
    %v4145 = vor.u32 1.1754944e-38, %v4144
    %v4146 = vsel %vm4143, %v4145, %v4141
    %v4147 = vmul.f32 1.0, %v4146
    %v4148 = vmul.f32 %v3922, 1.0614054
    %v4149 = vmul.f32 %v3937, 1.0614054
    %v4150 = vmul.f32 %v3952, 1.0614054
    %v4151 = vmul.f32 %v3967, 1.0614054
    %v4152 = vmul.f32 %v3982, 1.0614054
    %v4153 = vmul.f32 %v3997, 1.0614054
    %v4154 = vmul.f32 %v4012, 1.0614054
    %v4155 = vmul.f32 %v4027, 1.0614054
    %v4156 = vmul.f32 %v4042, 1.0614054
    %v4157 = vmul.f32 %v4057, 1.0614054
    %v4158 = vmul.f32 %v4072, 1.0614054
    %v4159 = vmul.f32 %v4087, 1.0614054
    %v4160 = vmul.f32 %v4102, 1.0614054
    %v4161 = vmul.f32 %v4117, 1.0614054
    %v4162 = vmul.f32 %v4132, 1.0614054
    %v4163 = vmul.f32 %v4147, 1.0614054
    %v4164 = vadd.f32 %v4148, -1.4531521
    %v4165 = vadd.f32 %v4149, -1.4531521
    %v4166 = vadd.f32 %v4150, -1.4531521
    %v4167 = vadd.f32 %v4151, -1.4531521
    %v4168 = vadd.f32 %v4152, -1.4531521
    %v4169 = vadd.f32 %v4153, -1.4531521
    %v4170 = vadd.f32 %v4154, -1.4531521
    %v4171 = vadd.f32 %v4155, -1.4531521
    %v4172 = vadd.f32 %v4156, -1.4531521
    %v4173 = vadd.f32 %v4157, -1.4531521
    %v4174 = vadd.f32 %v4158, -1.4531521
    %v4175 = vadd.f32 %v4159, -1.4531521
    %v4176 = vadd.f32 %v4160, -1.4531521
    %v4177 = vadd.f32 %v4161, -1.4531521
    %v4178 = vadd.f32 %v4162, -1.4531521
    %v4179 = vadd.f32 %v4163, -1.4531521
    %v4180 = vmul.f32 %v4164, %v3922
    %v4181 = vmul.f32 %v4165, %v3937
    %v4182 = vmul.f32 %v4166, %v3952
    %v4183 = vmul.f32 %v4167, %v3967
    %v4184 = vmul.f32 %v4168, %v3982
    %v4185 = vmul.f32 %v4169, %v3997
    %v4186 = vmul.f32 %v4170, %v4012
    %v4187 = vmul.f32 %v4171, %v4027
    %v4188 = vmul.f32 %v4172, %v4042
    %v4189 = vmul.f32 %v4173, %v4057
    %v4190 = vmul.f32 %v4174, %v4072
    %v4191 = vmul.f32 %v4175, %v4087
    %v4192 = vmul.f32 %v4176, %v4102
    %v4193 = vmul.f32 %v4177, %v4117
    %v4194 = vmul.f32 %v4178, %v4132
    %v4195 = vmul.f32 %v4179, %v4147
    %v4196 = vadd.f32 %v4180, 1.4214138
    %v4197 = vadd.f32 %v4181, 1.4214138
    %v4198 = vadd.f32 %v4182, 1.4214138
    %v4199 = vadd.f32 %v4183, 1.4214138
    %v4200 = vadd.f32 %v4184, 1.4214138
    %v4201 = vadd.f32 %v4185, 1.4214138
    %v4202 = vadd.f32 %v4186, 1.4214138
    %v4203 = vadd.f32 %v4187, 1.4214138
    %v4204 = vadd.f32 %v4188, 1.4214138
    %v4205 = vadd.f32 %v4189, 1.4214138
    %v4206 = vadd.f32 %v4190, 1.4214138
    %v4207 = vadd.f32 %v4191, 1.4214138
    %v4208 = vadd.f32 %v4192, 1.4214138
    %v4209 = vadd.f32 %v4193, 1.4214138
    %v4210 = vadd.f32 %v4194, 1.4214138
    %v4211 = vadd.f32 %v4195, 1.4214138
    %v4212 = vmul.f32 %v4196, %v3922
    %v4213 = vmul.f32 %v4197, %v3937
    %v4214 = vmul.f32 %v4198, %v3952
    %v4215 = vmul.f32 %v4199, %v3967
    %v4216 = vmul.f32 %v4200, %v3982
    %v4217 = vmul.f32 %v4201, %v3997
    %v4218 = vmul.f32 %v4202, %v4012
    %v4219 = vmul.f32 %v4203, %v4027
    %v4220 = vmul.f32 %v4204, %v4042
    %v4221 = vmul.f32 %v4205, %v4057
    %v4222 = vmul.f32 %v4206, %v4072
    %v4223 = vmul.f32 %v4207, %v4087
    %v4224 = vmul.f32 %v4208, %v4102
    %v4225 = vmul.f32 %v4209, %v4117
    %v4226 = vmul.f32 %v4210, %v4132
    %v4227 = vmul.f32 %v4211, %v4147
    %v4228 = vadd.f32 %v4212, -0.28449672
    %v4229 = vadd.f32 %v4213, -0.28449672
    %v4230 = vadd.f32 %v4214, -0.28449672
    %v4231 = vadd.f32 %v4215, -0.28449672
    %v4232 = vadd.f32 %v4216, -0.28449672
    %v4233 = vadd.f32 %v4217, -0.28449672
    %v4234 = vadd.f32 %v4218, -0.28449672
    %v4235 = vadd.f32 %v4219, -0.28449672
    %v4236 = vadd.f32 %v4220, -0.28449672
    %v4237 = vadd.f32 %v4221, -0.28449672
    %v4238 = vadd.f32 %v4222, -0.28449672
    %v4239 = vadd.f32 %v4223, -0.28449672
    %v4240 = vadd.f32 %v4224, -0.28449672
    %v4241 = vadd.f32 %v4225, -0.28449672
    %v4242 = vadd.f32 %v4226, -0.28449672
    %v4243 = vadd.f32 %v4227, -0.28449672
    %v4244 = vmul.f32 %v4228, %v3922
    %v4245 = vmul.f32 %v4229, %v3937
    %v4246 = vmul.f32 %v4230, %v3952
    %v4247 = vmul.f32 %v4231, %v3967
    %v4248 = vmul.f32 %v4232, %v3982
    %v4249 = vmul.f32 %v4233, %v3997
    %v4250 = vmul.f32 %v4234, %v4012
    %v4251 = vmul.f32 %v4235, %v4027
    %v4252 = vmul.f32 %v4236, %v4042
    %v4253 = vmul.f32 %v4237, %v4057
    %v4254 = vmul.f32 %v4238, %v4072
    %v4255 = vmul.f32 %v4239, %v4087
    %v4256 = vmul.f32 %v4240, %v4102
    %v4257 = vmul.f32 %v4241, %v4117
    %v4258 = vmul.f32 %v4242, %v4132
    %v4259 = vmul.f32 %v4243, %v4147
    %v4260 = vadd.f32 %v4244, 0.2548296
    %v4261 = vadd.f32 %v4245, 0.2548296
    %v4262 = vadd.f32 %v4246, 0.2548296
    %v4263 = vadd.f32 %v4247, 0.2548296
    %v4264 = vadd.f32 %v4248, 0.2548296
    %v4265 = vadd.f32 %v4249, 0.2548296
    %v4266 = vadd.f32 %v4250, 0.2548296
    %v4267 = vadd.f32 %v4251, 0.2548296
    %v4268 = vadd.f32 %v4252, 0.2548296
    %v4269 = vadd.f32 %v4253, 0.2548296
    %v4270 = vadd.f32 %v4254, 0.2548296
    %v4271 = vadd.f32 %v4255, 0.2548296
    %v4272 = vadd.f32 %v4256, 0.2548296
    %v4273 = vadd.f32 %v4257, 0.2548296
    %v4274 = vadd.f32 %v4258, 0.2548296
    %v4275 = vadd.f32 %v4259, 0.2548296
    %v4276 = vmul.f32 %v4260, %v3922
    %v4277 = vmul.f32 %v4261, %v3937
    %v4278 = vmul.f32 %v4262, %v3952
    %v4279 = vmul.f32 %v4263, %v3967
    %v4280 = vmul.f32 %v4264, %v3982
    %v4281 = vmul.f32 %v4265, %v3997
    %v4282 = vmul.f32 %v4266, %v4012
    %v4283 = vmul.f32 %v4267, %v4027
    %v4284 = vmul.f32 %v4268, %v4042
    %v4285 = vmul.f32 %v4269, %v4057
    %v4286 = vmul.f32 %v4270, %v4072
    %v4287 = vmul.f32 %v4271, %v4087
    %v4288 = vmul.f32 %v4272, %v4102
    %v4289 = vmul.f32 %v4273, %v4117
    %v4290 = vmul.f32 %v4274, %v4132
    %v4291 = vmul.f32 %v4275, %v4147
    %v4292 = vsub.f32 0.0, %v3860
    %v4293 = vsub.f32 0.0, %v3861
    %v4294 = vsub.f32 0.0, %v3862
    %v4295 = vsub.f32 0.0, %v3863
    %v4296 = vsub.f32 0.0, %v3864
    %v4297 = vsub.f32 0.0, %v3865
    %v4298 = vsub.f32 0.0, %v3866
    %v4299 = vsub.f32 0.0, %v3867
    %v4300 = vsub.f32 0.0, %v3868
    %v4301 = vsub.f32 0.0, %v3869
    %v4302 = vsub.f32 0.0, %v3870
    %v4303 = vsub.f32 0.0, %v3871
    %v4304 = vsub.f32 0.0, %v3872
    %v4305 = vsub.f32 0.0, %v3873
    %v4306 = vsub.f32 0.0, %v3874
    %v4307 = vsub.f32 0.0, %v3875
    %v4308 = vmul.f32 %v4292, %v3860
    %v4309 = vmul.f32 %v4293, %v3861
    %v4310 = vmul.f32 %v4294, %v3862
    %v4311 = vmul.f32 %v4295, %v3863
    %v4312 = vmul.f32 %v4296, %v3864
    %v4313 = vmul.f32 %v4297, %v3865
    %v4314 = vmul.f32 %v4298, %v3866
    %v4315 = vmul.f32 %v4299, %v3867
    %v4316 = vmul.f32 %v4300, %v3868
    %v4317 = vmul.f32 %v4301, %v3869
    %v4318 = vmul.f32 %v4302, %v3870
    %v4319 = vmul.f32 %v4303, %v3871
    %v4320 = vmul.f32 %v4304, %v3872
    %v4321 = vmul.f32 %v4305, %v3873
    %v4322 = vmul.f32 %v4306, %v3874
    %v4323 = vmul.f32 %v4307, %v3875
    %v4324 = vmul.f32 %v4308, 1.442695
    %v4325 = vpow.pop %v4324
    %v4326 = vmul.f32 %v4309, 1.442695
    %v4327 = vpow.pop %v4326
    %v4328 = vmul.f32 %v4310, 1.442695
    %v4329 = vpow.pop %v4328
    %v4330 = vmul.f32 %v4311, 1.442695
    %v4331 = vpow.pop %v4330
    %v4332 = vmul.f32 %v4312, 1.442695
    %v4333 = vpow.pop %v4332
    %v4334 = vmul.f32 %v4313, 1.442695
    %v4335 = vpow.pop %v4334
    %v4336 = vmul.f32 %v4314, 1.442695
    %v4337 = vpow.pop %v4336
    %v4338 = vmul.f32 %v4315, 1.442695
    %v4339 = vpow.pop %v4338
    %v4340 = vmul.f32 %v4316, 1.442695
    %v4341 = vpow.pop %v4340
    %v4342 = vmul.f32 %v4317, 1.442695
    %v4343 = vpow.pop %v4342
    %v4344 = vmul.f32 %v4318, 1.442695
    %v4345 = vpow.pop %v4344
    %v4346 = vmul.f32 %v4319, 1.442695
    %v4347 = vpow.pop %v4346
    %v4348 = vmul.f32 %v4320, 1.442695
    %v4349 = vpow.pop %v4348
    %v4350 = vmul.f32 %v4321, 1.442695
    %v4351 = vpow.pop %v4350
    %v4352 = vmul.f32 %v4322, 1.442695
    %v4353 = vpow.pop %v4352
    %v4354 = vmul.f32 %v4323, 1.442695
    %v4355 = vpow.pop %v4354
    %v4356 = vmul.f32 %v4276, %v4325
    %v4357 = vmul.f32 %v4277, %v4327
    %v4358 = vmul.f32 %v4278, %v4329
    %v4359 = vmul.f32 %v4279, %v4331
    %v4360 = vmul.f32 %v4280, %v4333
    %v4361 = vmul.f32 %v4281, %v4335
    %v4362 = vmul.f32 %v4282, %v4337
    %v4363 = vmul.f32 %v4283, %v4339
    %v4364 = vmul.f32 %v4284, %v4341
    %v4365 = vmul.f32 %v4285, %v4343
    %v4366 = vmul.f32 %v4286, %v4345
    %v4367 = vmul.f32 %v4287, %v4347
    %v4368 = vmul.f32 %v4288, %v4349
    %v4369 = vmul.f32 %v4289, %v4351
    %v4370 = vmul.f32 %v4290, %v4353
    %v4371 = vmul.f32 %v4291, %v4355
    %v4372 = vsub.f32 1.0, %v4356
    %v4373 = vsub.f32 1.0, %v4357
    %v4374 = vsub.f32 1.0, %v4358
    %v4375 = vsub.f32 1.0, %v4359
    %v4376 = vsub.f32 1.0, %v4360
    %v4377 = vsub.f32 1.0, %v4361
    %v4378 = vsub.f32 1.0, %v4362
    %v4379 = vsub.f32 1.0, %v4363
    %v4380 = vsub.f32 1.0, %v4364
    %v4381 = vsub.f32 1.0, %v4365
    %v4382 = vsub.f32 1.0, %v4366
    %v4383 = vsub.f32 1.0, %v4367
    %v4384 = vsub.f32 1.0, %v4368
    %v4385 = vsub.f32 1.0, %v4369
    %v4386 = vsub.f32 1.0, %v4370
    %v4387 = vsub.f32 1.0, %v4371
    %vm4388 = vcmp.ge.f32.partialorder %v3844, 0.0
    %vm4389 = vcmp.ge.f32.partialorder %v3845, 0.0
    %vm4390 = vcmp.ge.f32.partialorder %v3846, 0.0
    %vm4391 = vcmp.ge.f32.partialorder %v3847, 0.0
    %vm4392 = vcmp.ge.f32.partialorder %v3848, 0.0
    %vm4393 = vcmp.ge.f32.partialorder %v3849, 0.0
    %vm4394 = vcmp.ge.f32.partialorder %v3850, 0.0
    %vm4395 = vcmp.ge.f32.partialorder %v3851, 0.0
    %vm4396 = vcmp.ge.f32.partialorder %v3852, 0.0
    %vm4397 = vcmp.ge.f32.partialorder %v3853, 0.0
    %vm4398 = vcmp.ge.f32.partialorder %v3854, 0.0
    %vm4399 = vcmp.ge.f32.partialorder %v3855, 0.0
    %vm4400 = vcmp.ge.f32.partialorder %v3856, 0.0
    %vm4401 = vcmp.ge.f32.partialorder %v3857, 0.0
    %vm4402 = vcmp.ge.f32.partialorder %v3858, 0.0
    %vm4403 = vcmp.ge.f32.partialorder %v3859, 0.0
    %v4404 = vsub.f32 0.0, %v4372
    %v4405 = vsub.f32 0.0, %v4373
    %v4406 = vsub.f32 0.0, %v4374
    %v4407 = vsub.f32 0.0, %v4375
    %v4408 = vsub.f32 0.0, %v4376
    %v4409 = vsub.f32 0.0, %v4377
    %v4410 = vsub.f32 0.0, %v4378
    %v4411 = vsub.f32 0.0, %v4379
    %v4412 = vsub.f32 0.0, %v4380
    %v4413 = vsub.f32 0.0, %v4381
    %v4414 = vsub.f32 0.0, %v4382
    %v4415 = vsub.f32 0.0, %v4383
    %v4416 = vsub.f32 0.0, %v4384
    %v4417 = vsub.f32 0.0, %v4385
    %v4418 = vsub.f32 0.0, %v4386
    %v4419 = vsub.f32 0.0, %v4387
    %v4420 = vsel %vm4388, %v4372, %v4404
    %v4421 = vsel %vm4389, %v4373, %v4405
    %v4422 = vsel %vm4390, %v4374, %v4406
    %v4423 = vsel %vm4391, %v4375, %v4407
    %v4424 = vsel %vm4392, %v4376, %v4408
    %v4425 = vsel %vm4393, %v4377, %v4409
    %v4426 = vsel %vm4394, %v4378, %v4410
    %v4427 = vsel %vm4395, %v4379, %v4411
    %v4428 = vsel %vm4396, %v4380, %v4412
    %v4429 = vsel %vm4397, %v4381, %v4413
    %v4430 = vsel %vm4398, %v4382, %v4414
    %v4431 = vsel %vm4399, %v4383, %v4415
    %v4432 = vsel %vm4400, %v4384, %v4416
    %v4433 = vsel %vm4401, %v4385, %v4417
    %v4434 = vsel %vm4402, %v4386, %v4418
    %v4435 = vsel %vm4403, %v4387, %v4419
    %v4436 = vmul.f32 %v3797, 0.5
    %v4437 = vmul.f32 %v3800, 0.5
    %v4438 = vmul.f32 %v3803, 0.5
    %v4439 = vmul.f32 %v3806, 0.5
    %v4440 = vmul.f32 %v3809, 0.5
    %v4441 = vmul.f32 %v3812, 0.5
    %v4442 = vmul.f32 %v3815, 0.5
    %v4443 = vmul.f32 %v3818, 0.5
    %v4444 = vmul.f32 %v3821, 0.5
    %v4445 = vmul.f32 %v3824, 0.5
    %v4446 = vmul.f32 %v3827, 0.5
    %v4447 = vmul.f32 %v3830, 0.5
    %v4448 = vmul.f32 %v3833, 0.5
    %v4449 = vmul.f32 %v3836, 0.5
    %v4450 = vmul.f32 %v3839, 0.5
    %v4451 = vmul.f32 %v3842, 0.5
    %v4452 = vadd.f32 %v4420, 1.0
    %v4453 = vadd.f32 %v4421, 1.0
    %v4454 = vadd.f32 %v4422, 1.0
    %v4455 = vadd.f32 %v4423, 1.0
    %v4456 = vadd.f32 %v4424, 1.0
    %v4457 = vadd.f32 %v4425, 1.0
    %v4458 = vadd.f32 %v4426, 1.0
    %v4459 = vadd.f32 %v4427, 1.0
    %v4460 = vadd.f32 %v4428, 1.0
    %v4461 = vadd.f32 %v4429, 1.0
    %v4462 = vadd.f32 %v4430, 1.0
    %v4463 = vadd.f32 %v4431, 1.0
    %v4464 = vadd.f32 %v4432, 1.0
    %v4465 = vadd.f32 %v4433, 1.0
    %v4466 = vadd.f32 %v4434, 1.0
    %v4467 = vadd.f32 %v4435, 1.0
    %v4468 = vmul.f32 %v4436, %v4452
    %v4469 = vmul.f32 %v4437, %v4453
    %v4470 = vmul.f32 %v4438, %v4454
    %v4471 = vmul.f32 %v4439, %v4455
    %v4472 = vmul.f32 %v4440, %v4456
    %v4473 = vmul.f32 %v4441, %v4457
    %v4474 = vmul.f32 %v4442, %v4458
    %v4475 = vmul.f32 %v4443, %v4459
    %v4476 = vmul.f32 %v4444, %v4460
    %v4477 = vmul.f32 %v4445, %v4461
    %v4478 = vmul.f32 %v4446, %v4462
    %v4479 = vmul.f32 %v4447, %v4463
    %v4480 = vmul.f32 %v4448, %v4464
    %v4481 = vmul.f32 %v4449, %v4465
    %v4482 = vmul.f32 %v4450, %v4466
    %v4483 = vmul.f32 %v4451, %v4467
    %4484 = vmatpush.msra.mxu0 %v430
    %4485 = vmatpush.msra.mxu0 %v429
    %4486 = vmatpush.msra.mxu0 %v428
    %4487 = vmatpush.msra.mxu0 %v427
    %4488 = vmatpush.msra.mxu0 %v426
    %4489 = vmatpush.msra.mxu0 %v425
    %4490 = vmatpush.msra.mxu0 %v424
    %4491 = vmatpush.msra.mxu0 %v423
    %4492 = vmatpush.msra.mxu0 %v422
    %4493 = vmatpush.msra.mxu0 %v421
    %4494 = vmatpush.msra.mxu0 %v420
    %4495 = vmatpush.msra.mxu0 %v419
    %4496 = vmatpush.msra.mxu0 %v418
    %4497 = vmatpush.msra.mxu0 %v417
    %4498 = vmatpush.msra.mxu0 %v416
    %4499 = vmatpush.msra.mxu0 %v415
    %4500 = vmatmul.f32.gmra.mxu0 %v4468
    %v4501 = vpop.f32.mrf.mxu0
    %v4502 = vadd.f32 0.0, %v4501
    %4503 = vmatmul.f32.gmra.mxu0 %v4469
    %v4504 = vpop.f32.mrf.mxu0
    %v4505 = vadd.f32 0.0, %v4504
    %4506 = vmatmul.f32.gmra.mxu0 %v4470
    %v4507 = vpop.f32.mrf.mxu0
    %v4508 = vadd.f32 0.0, %v4507
    %4509 = vmatmul.f32.gmra.mxu0 %v4471
    %v4510 = vpop.f32.mrf.mxu0
    %v4511 = vadd.f32 0.0, %v4510
    %4512 = vmatmul.f32.gmra.mxu0 %v4472
    %v4513 = vpop.f32.mrf.mxu0
    %v4514 = vadd.f32 0.0, %v4513
    %4515 = vmatmul.f32.gmra.mxu0 %v4473
    %v4516 = vpop.f32.mrf.mxu0
    %v4517 = vadd.f32 0.0, %v4516
    %4518 = vmatmul.f32.gmra.mxu0 %v4474
    %v4519 = vpop.f32.mrf.mxu0
    %v4520 = vadd.f32 0.0, %v4519
    %4521 = vmatmul.f32.gmra.mxu0 %v4475
    %v4522 = vpop.f32.mrf.mxu0
    %v4523 = vadd.f32 0.0, %v4522
    %4524 = vmatmul.f32.gmra.mxu0 %v4476
    %v4525 = vpop.f32.mrf.mxu0
    %v4526 = vadd.f32 0.0, %v4525
    %4527 = vmatmul.f32.gmra.mxu0 %v4477
    %v4528 = vpop.f32.mrf.mxu0
    %v4529 = vadd.f32 0.0, %v4528
    %4530 = vmatmul.f32.gmra.mxu0 %v4478
    %v4531 = vpop.f32.mrf.mxu0
    %v4532 = vadd.f32 0.0, %v4531
    %4533 = vmatmul.f32.gmra.mxu0 %v4479
    %v4534 = vpop.f32.mrf.mxu0
    %v4535 = vadd.f32 0.0, %v4534
    %4536 = vmatmul.f32.gmra.mxu0 %v4480
    %v4537 = vpop.f32.mrf.mxu0
    %v4538 = vadd.f32 0.0, %v4537
    %4539 = vmatmul.f32.gmra.mxu0 %v4481
    %v4540 = vpop.f32.mrf.mxu0
    %v4541 = vadd.f32 0.0, %v4540
    %4542 = vmatmul.f32.gmra.mxu0 %v4482
    %v4543 = vpop.f32.mrf.mxu0
    %v4544 = vadd.f32 0.0, %v4543
    %4545 = vmatmul.f32.gmra.mxu0 %v4483
    %v4546 = vpop.f32.mrf.mxu0
    %v4547 = vadd.f32 0.0, %v4546
    %4548 = vdwg.mxu0
    %v4549 = vadd.f32 %v3322, %v4502
    %v4550 = vadd.f32 %v3323, %v4505
    %v4551 = vadd.f32 %v3324, %v4508
    %v4552 = vadd.f32 %v3325, %v4511
    %v4553 = vadd.f32 %v3326, %v4514
    %v4554 = vadd.f32 %v3327, %v4517
    %v4555 = vadd.f32 %v3328, %v4520
    %v4556 = vadd.f32 %v3329, %v4523
    %v4557 = vadd.f32 %v3330, %v4526
    %v4558 = vadd.f32 %v3331, %v4529
    %v4559 = vadd.f32 %v3332, %v4532
    %v4560 = vadd.f32 %v3333, %v4535
    %v4561 = vadd.f32 %v3334, %v4538
    %v4562 = vadd.f32 %v3335, %v4541
    %v4563 = vadd.f32 %v3336, %v4544
    %v4564 = vadd.f32 %v3337, %v4547
    %v4566 = vperm.slane %v431, 0
    %v4568 = vadd.f32 %v4549, %v4566
    %v4569 = vadd.f32 %v4550, %v4566
    %v4570 = vadd.f32 %v4551, %v4566
    %v4571 = vadd.f32 %v4552, %v4566
    %v4572 = vadd.f32 %v4553, %v4566
    %v4573 = vadd.f32 %v4554, %v4566
    %v4574 = vadd.f32 %v4555, %v4566
    %v4575 = vadd.f32 %v4556, %v4566
    %v4576 = vadd.f32 %v4557, %v4566
    %v4577 = vadd.f32 %v4558, %v4566
    %v4578 = vadd.f32 %v4559, %v4566
    %v4579 = vadd.f32 %v4560, %v4566
    %v4580 = vadd.f32 %v4561, %v4566
    %v4581 = vadd.f32 %v4562, %v4566
    %v4582 = vadd.f32 %v4563, %v4566
    %v4583 = vadd.f32 %v4564, %v4566
    %v4584 = vld [vmem:[%s45] sm:$0x1]
    %v4585 = vld [vmem:[%s47] sm:$0x1]
    %v4586 = vld [vmem:[#allocation18] sm:$0xff]
    %v4587 = vld [vmem:[#allocation18 + $0x8] sm:$0xff]
    %v4588 = vld [vmem:[#allocation18 + $0x10] sm:$0xff]
    %v4589 = vld [vmem:[#allocation18 + $0x18] sm:$0xff]
    %v4590 = vld [vmem:[%s51] sm:$0x1]
    %v4591 = vld [vmem:[#allocation19] sm:$0xff]
    %v4592 = vld [vmem:[#allocation19 + $0x8] sm:$0xff]
    %v4593 = vld [vmem:[#allocation19 + $0x10] sm:$0xff]
    %v4594 = vld [vmem:[#allocation19 + $0x18] sm:$0xff]
    %v4595 = vld [vmem:[#allocation21] sm:$0xff]
    %v4596 = vld [vmem:[#allocation21 + $0x8] sm:$0xff]
    %v4597 = vld [vmem:[#allocation21 + $0x10] sm:$0xff]
    %v4598 = vld [vmem:[#allocation21 + $0x18] sm:$0xff]
    %v4599 = vld [vmem:[%s57] sm:$0x1]
    %v4600 = vld [vmem:[%s59] sm:$0x1]
    %v4601 = vld [vmem:[%s61] sm:$0x1]
    %v4602 = vld [vmem:[#allocation22] sm:$0xff]
    %v4603 = vld [vmem:[#allocation22 + $0x8] sm:$0xff]
    %v4604 = vld [vmem:[#allocation22 + $0x10] sm:$0xff]
    %v4605 = vld [vmem:[#allocation22 + $0x18] sm:$0xff]
    %v4606 = vld [vmem:[%s65] sm:$0x1]
    %v4607 = vld [vmem:[%s67] sm:$0xff]
    %v4608 = vld [vmem:[%s67 + $0x8] sm:$0xff]
    %v4609 = vld [vmem:[%s67 + $0x10] sm:$0xff]
    %v4610 = vld [vmem:[%s67 + $0x18] sm:$0xff]
    %v4611 = vld [vmem:[%s67 + $0x20] sm:$0xff]
    %v4612 = vld [vmem:[%s67 + $0x28] sm:$0xff]
    %v4613 = vld [vmem:[%s67 + $0x30] sm:$0xff]
    %v4614 = vld [vmem:[%s67 + $0x38] sm:$0xff]
    %v4615 = vld [vmem:[%s67 + $0x40] sm:$0xff]
    %v4616 = vld [vmem:[%s67 + $0x48] sm:$0xff]
    %v4617 = vld [vmem:[%s67 + $0x50] sm:$0xff]
    %v4618 = vld [vmem:[%s67 + $0x58] sm:$0xff]
    %v4619 = vld [vmem:[%s67 + $0x60] sm:$0xff]
    %v4620 = vld [vmem:[%s67 + $0x68] sm:$0xff]
    %v4621 = vld [vmem:[%s67 + $0x70] sm:$0xff]
    %v4622 = vld [vmem:[%s67 + $0x78] sm:$0xff]
    %v4623 = vld [vmem:[%s69] sm:$0x1]
    %v4624 = vld [vmem:[#allocation6] sm:$0xff]
    %v4625 = vld [vmem:[#allocation6 + $0x8] sm:$0xff]
    %v4626 = vld [vmem:[#allocation6 + $0x10] sm:$0xff]
    %v4627 = vld [vmem:[#allocation6 + $0x18] sm:$0xff]
    %v4628 = vld [vmem:[#allocation6 + $0x20] sm:$0xff]
    %v4629 = vld [vmem:[#allocation6 + $0x28] sm:$0xff]
    %v4630 = vld [vmem:[#allocation6 + $0x30] sm:$0xff]
    %v4631 = vld [vmem:[#allocation6 + $0x38] sm:$0xff]
    %v4632 = vld [vmem:[#allocation6 + $0x40] sm:$0xff]
    %v4633 = vld [vmem:[#allocation6 + $0x48] sm:$0xff]
    %v4634 = vld [vmem:[#allocation6 + $0x50] sm:$0xff]
    %v4635 = vld [vmem:[#allocation6 + $0x58] sm:$0xff]
    %v4636 = vld [vmem:[#allocation6 + $0x60] sm:$0xff]
    %v4637 = vld [vmem:[#allocation6 + $0x68] sm:$0xff]
    %v4638 = vld [vmem:[#allocation6 + $0x70] sm:$0xff]
    %v4639 = vld [vmem:[#allocation6 + $0x78] sm:$0xff]
    %v4640 = vld [vmem:[#allocation7] sm:$0xff]
    %v4641 = vld [vmem:[#allocation7 + $0x8] sm:$0xff]
    %v4642 = vld [vmem:[#allocation7 + $0x10] sm:$0xff]
    %v4643 = vld [vmem:[#allocation7 + $0x18] sm:$0xff]
    %v4644 = vld [vmem:[#allocation7 + $0x20] sm:$0xff]
    %v4645 = vld [vmem:[#allocation7 + $0x28] sm:$0xff]
    %v4646 = vld [vmem:[#allocation7 + $0x30] sm:$0xff]
    %v4647 = vld [vmem:[#allocation7 + $0x38] sm:$0xff]
    %v4648 = vld [vmem:[#allocation7 + $0x40] sm:$0xff]
    %v4649 = vld [vmem:[#allocation7 + $0x48] sm:$0xff]
    %v4650 = vld [vmem:[#allocation7 + $0x50] sm:$0xff]
    %v4651 = vld [vmem:[#allocation7 + $0x58] sm:$0xff]
    %v4652 = vld [vmem:[#allocation7 + $0x60] sm:$0xff]
    %v4653 = vld [vmem:[#allocation7 + $0x68] sm:$0xff]
    %v4654 = vld [vmem:[#allocation7 + $0x70] sm:$0xff]
    %v4655 = vld [vmem:[#allocation7 + $0x78] sm:$0xff]
    %v4656 = vsel %vm464, %v4568, 0.0
    %4657 = vadd.xlane.f32.xlu0 %v4656
    %v4658 = vpop.xlane.xlu0 %4657
    %v4659 = vsel %vm464, %v4569, 0.0
    %4660 = vadd.xlane.f32.xlu0 %v4659
    %v4661 = vpop.xlane.xlu0 %4660
    %v4662 = vsel %vm464, %v4570, 0.0
    %4663 = vadd.xlane.f32.xlu0 %v4662
    %v4664 = vpop.xlane.xlu0 %4663
    %v4665 = vsel %vm464, %v4571, 0.0
    %4666 = vadd.xlane.f32.xlu0 %v4665
    %v4667 = vpop.xlane.xlu0 %4666
    %v4668 = vsel %vm464, %v4572, 0.0
    %4669 = vadd.xlane.f32.xlu0 %v4668
    %v4670 = vpop.xlane.xlu0 %4669
    %v4671 = vsel %vm464, %v4573, 0.0
    %4672 = vadd.xlane.f32.xlu0 %v4671
    %v4673 = vpop.xlane.xlu0 %4672
    %v4674 = vsel %vm464, %v4574, 0.0
    %4675 = vadd.xlane.f32.xlu0 %v4674
    %v4676 = vpop.xlane.xlu0 %4675
    %v4677 = vsel %vm464, %v4575, 0.0
    %4678 = vadd.xlane.f32.xlu0 %v4677
    %v4679 = vpop.xlane.xlu0 %4678
    %v4680 = vsel %vm464, %v4576, 0.0
    %4681 = vadd.xlane.f32.xlu0 %v4680
    %v4682 = vpop.xlane.xlu0 %4681
    %v4683 = vsel %vm464, %v4577, 0.0
    %4684 = vadd.xlane.f32.xlu0 %v4683
    %v4685 = vpop.xlane.xlu0 %4684
    %v4686 = vsel %vm464, %v4578, 0.0
    %4687 = vadd.xlane.f32.xlu0 %v4686
    %v4688 = vpop.xlane.xlu0 %4687
    %v4689 = vsel %vm464, %v4579, 0.0
    %4690 = vadd.xlane.f32.xlu0 %v4689
    %v4691 = vpop.xlane.xlu0 %4690
    %v4692 = vsel %vm464, %v4580, 0.0
    %4693 = vadd.xlane.f32.xlu0 %v4692
    %v4694 = vpop.xlane.xlu0 %4693
    %v4695 = vsel %vm464, %v4581, 0.0
    %4696 = vadd.xlane.f32.xlu0 %v4695
    %v4697 = vpop.xlane.xlu0 %4696
    %v4698 = vsel %vm464, %v4582, 0.0
    %4699 = vadd.xlane.f32.xlu0 %v4698
    %v4700 = vpop.xlane.xlu0 %4699
    %v4701 = vsel %vm464, %v4583, 0.0
    %4702 = vadd.xlane.f32.xlu0 %v4701
    %v4703 = vpop.xlane.xlu0 %4702
    %v4704 = vmul.f32 %v4658, %v519
    %v4705 = vmul.f32 %v4661, %v519
    %v4706 = vmul.f32 %v4664, %v519
    %v4707 = vmul.f32 %v4667, %v519
    %v4708 = vmul.f32 %v4670, %v519
    %v4709 = vmul.f32 %v4673, %v519
    %v4710 = vmul.f32 %v4676, %v519
    %v4711 = vmul.f32 %v4679, %v519
    %v4712 = vmul.f32 %v4682, %v519
    %v4713 = vmul.f32 %v4685, %v519
    %v4714 = vmul.f32 %v4688, %v519
    %v4715 = vmul.f32 %v4691, %v519
    %v4716 = vmul.f32 %v4694, %v519
    %v4717 = vmul.f32 %v4697, %v519
    %v4718 = vmul.f32 %v4700, %v519
    %v4719 = vmul.f32 %v4703, %v519
    %v4720 = vsub.f32 %v4568, %v4704
    %v4721 = vsub.f32 %v4569, %v4705
    %v4722 = vsub.f32 %v4570, %v4706
    %v4723 = vsub.f32 %v4571, %v4707
    %v4724 = vsub.f32 %v4572, %v4708
    %v4725 = vsub.f32 %v4573, %v4709
    %v4726 = vsub.f32 %v4574, %v4710
    %v4727 = vsub.f32 %v4575, %v4711
    %v4728 = vsub.f32 %v4576, %v4712
    %v4729 = vsub.f32 %v4577, %v4713
    %v4730 = vsub.f32 %v4578, %v4714
    %v4731 = vsub.f32 %v4579, %v4715
    %v4732 = vsub.f32 %v4580, %v4716
    %v4733 = vsub.f32 %v4581, %v4717
    %v4734 = vsub.f32 %v4582, %v4718
    %v4735 = vsub.f32 %v4583, %v4719
    %v4736 = vmul.f32 %v4720, %v4720
    %v4737 = vmul.f32 %v4721, %v4721
    %v4738 = vmul.f32 %v4722, %v4722
    %v4739 = vmul.f32 %v4723, %v4723
    %v4740 = vmul.f32 %v4724, %v4724
    %v4741 = vmul.f32 %v4725, %v4725
    %v4742 = vmul.f32 %v4726, %v4726
    %v4743 = vmul.f32 %v4727, %v4727
    %v4744 = vmul.f32 %v4728, %v4728
    %v4745 = vmul.f32 %v4729, %v4729
    %v4746 = vmul.f32 %v4730, %v4730
    %v4747 = vmul.f32 %v4731, %v4731
    %v4748 = vmul.f32 %v4732, %v4732
    %v4749 = vmul.f32 %v4733, %v4733
    %v4750 = vmul.f32 %v4734, %v4734
    %v4751 = vmul.f32 %v4735, %v4735
    %v4752 = vsel %vm464, %v4736, 0.0
    %4753 = vadd.xlane.f32.xlu0 %v4752
    %v4754 = vpop.xlane.xlu0 %4753
    %v4755 = vsel %vm464, %v4737, 0.0
    %4756 = vadd.xlane.f32.xlu0 %v4755
    %v4757 = vpop.xlane.xlu0 %4756
    %v4758 = vsel %vm464, %v4738, 0.0
    %4759 = vadd.xlane.f32.xlu0 %v4758
    %v4760 = vpop.xlane.xlu0 %4759
    %v4761 = vsel %vm464, %v4739, 0.0
    %4762 = vadd.xlane.f32.xlu0 %v4761
    %v4763 = vpop.xlane.xlu0 %4762
    %v4764 = vsel %vm464, %v4740, 0.0
    %4765 = vadd.xlane.f32.xlu0 %v4764
    %v4766 = vpop.xlane.xlu0 %4765
    %v4767 = vsel %vm464, %v4741, 0.0
    %4768 = vadd.xlane.f32.xlu0 %v4767
    %v4769 = vpop.xlane.xlu0 %4768
    %v4770 = vsel %vm464, %v4742, 0.0
    %4771 = vadd.xlane.f32.xlu0 %v4770
    %v4772 = vpop.xlane.xlu0 %4771
    %v4773 = vsel %vm464, %v4743, 0.0
    %4774 = vadd.xlane.f32.xlu0 %v4773
    %v4775 = vpop.xlane.xlu0 %4774
    %v4776 = vsel %vm464, %v4744, 0.0
    %4777 = vadd.xlane.f32.xlu0 %v4776
    %v4778 = vpop.xlane.xlu0 %4777
    %v4779 = vsel %vm464, %v4745, 0.0
    %4780 = vadd.xlane.f32.xlu0 %v4779
    %v4781 = vpop.xlane.xlu0 %4780
    %v4782 = vsel %vm464, %v4746, 0.0
    %4783 = vadd.xlane.f32.xlu0 %v4782
    %v4784 = vpop.xlane.xlu0 %4783
    %v4785 = vsel %vm464, %v4747, 0.0
    %4786 = vadd.xlane.f32.xlu0 %v4785
    %v4787 = vpop.xlane.xlu0 %4786
    %v4788 = vsel %vm464, %v4748, 0.0
    %4789 = vadd.xlane.f32.xlu0 %v4788
    %v4790 = vpop.xlane.xlu0 %4789
    %v4791 = vsel %vm464, %v4749, 0.0
    %4792 = vadd.xlane.f32.xlu0 %v4791
    %v4793 = vpop.xlane.xlu0 %4792
    %v4794 = vsel %vm464, %v4750, 0.0
    %4795 = vadd.xlane.f32.xlu0 %v4794
    %v4796 = vpop.xlane.xlu0 %4795
    %v4797 = vsel %vm464, %v4751, 0.0
    %4798 = vadd.xlane.f32.xlu0 %v4797
    %v4799 = vpop.xlane.xlu0 %4798
    %v4800 = vmul.f32 %v4754, %v519
    %v4801 = vmul.f32 %v4757, %v519
    %v4802 = vmul.f32 %v4760, %v519
    %v4803 = vmul.f32 %v4763, %v519
    %v4804 = vmul.f32 %v4766, %v519
    %v4805 = vmul.f32 %v4769, %v519
    %v4806 = vmul.f32 %v4772, %v519
    %v4807 = vmul.f32 %v4775, %v519
    %v4808 = vmul.f32 %v4778, %v519
    %v4809 = vmul.f32 %v4781, %v519
    %v4810 = vmul.f32 %v4784, %v519
    %v4811 = vmul.f32 %v4787, %v519
    %v4812 = vmul.f32 %v4790, %v519
    %v4813 = vmul.f32 %v4793, %v519
    %v4814 = vmul.f32 %v4796, %v519
    %v4815 = vmul.f32 %v4799, %v519
    %v4816 = vadd.f32 %v4800, 1e-05
    %v4817 = vadd.f32 %v4801, 1e-05
    %v4818 = vadd.f32 %v4802, 1e-05
    %v4819 = vadd.f32 %v4803, 1e-05
    %v4820 = vadd.f32 %v4804, 1e-05
    %v4821 = vadd.f32 %v4805, 1e-05
    %v4822 = vadd.f32 %v4806, 1e-05
    %v4823 = vadd.f32 %v4807, 1e-05
    %v4824 = vadd.f32 %v4808, 1e-05
    %v4825 = vadd.f32 %v4809, 1e-05
    %v4826 = vadd.f32 %v4810, 1e-05
    %v4827 = vadd.f32 %v4811, 1e-05
    %v4828 = vadd.f32 %v4812, 1e-05
    %v4829 = vadd.f32 %v4813, 1e-05
    %v4830 = vadd.f32 %v4814, 1e-05
    %v4831 = vadd.f32 %v4815, 1e-05
    %v4832 = vrsqrt.pop %v4816
    %v4833 = vmul.f32 %v4832, %v4816
    %v4834 = vmul.f32 %v4833, %v4832
    %v4835 = vmul.f32 0.5, %v4834
    %v4836 = vsub.f32 1.5, %v4835
    %v4837 = vmul.f32 %v4832, %v4836
    %vm4838 = vweird.f32 %v4816
    %vm4839 = vweird.f32 %v4832
    %vm4840 = vmor %vm4838, %vm4839
    %v4841 = vsel %vm4840, %v4832, %v4837
    %v4842 = vrsqrt.pop %v4817
    %v4843 = vmul.f32 %v4842, %v4817
    %v4844 = vmul.f32 %v4843, %v4842
    %v4845 = vmul.f32 0.5, %v4844
    %v4846 = vsub.f32 1.5, %v4845
    %v4847 = vmul.f32 %v4842, %v4846
    %vm4848 = vweird.f32 %v4817
    %vm4849 = vweird.f32 %v4842
    %vm4850 = vmor %vm4848, %vm4849
    %v4851 = vsel %vm4850, %v4842, %v4847
    %v4852 = vrsqrt.pop %v4818
    %v4853 = vmul.f32 %v4852, %v4818
    %v4854 = vmul.f32 %v4853, %v4852
    %v4855 = vmul.f32 0.5, %v4854
    %v4856 = vsub.f32 1.5, %v4855
    %v4857 = vmul.f32 %v4852, %v4856
    %vm4858 = vweird.f32 %v4818
    %vm4859 = vweird.f32 %v4852
    %vm4860 = vmor %vm4858, %vm4859
    %v4861 = vsel %vm4860, %v4852, %v4857
    %v4862 = vrsqrt.pop %v4819
    %v4863 = vmul.f32 %v4862, %v4819
    %v4864 = vmul.f32 %v4863, %v4862
    %v4865 = vmul.f32 0.5, %v4864
    %v4866 = vsub.f32 1.5, %v4865
    %v4867 = vmul.f32 %v4862, %v4866
    %vm4868 = vweird.f32 %v4819
    %vm4869 = vweird.f32 %v4862
    %vm4870 = vmor %vm4868, %vm4869
    %v4871 = vsel %vm4870, %v4862, %v4867
    %v4872 = vrsqrt.pop %v4820
    %v4873 = vmul.f32 %v4872, %v4820
    %v4874 = vmul.f32 %v4873, %v4872
    %v4875 = vmul.f32 0.5, %v4874
    %v4876 = vsub.f32 1.5, %v4875
    %v4877 = vmul.f32 %v4872, %v4876
    %vm4878 = vweird.f32 %v4820
    %vm4879 = vweird.f32 %v4872
    %vm4880 = vmor %vm4878, %vm4879
    %v4881 = vsel %vm4880, %v4872, %v4877
    %v4882 = vrsqrt.pop %v4821
    %v4883 = vmul.f32 %v4882, %v4821
    %v4884 = vmul.f32 %v4883, %v4882
    %v4885 = vmul.f32 0.5, %v4884
    %v4886 = vsub.f32 1.5, %v4885
    %v4887 = vmul.f32 %v4882, %v4886
    %vm4888 = vweird.f32 %v4821
    %vm4889 = vweird.f32 %v4882
    %vm4890 = vmor %vm4888, %vm4889
    %v4891 = vsel %vm4890, %v4882, %v4887
    %v4892 = vrsqrt.pop %v4822
    %v4893 = vmul.f32 %v4892, %v4822
    %v4894 = vmul.f32 %v4893, %v4892
    %v4895 = vmul.f32 0.5, %v4894
    %v4896 = vsub.f32 1.5, %v4895
    %v4897 = vmul.f32 %v4892, %v4896
    %vm4898 = vweird.f32 %v4822
    %vm4899 = vweird.f32 %v4892
    %vm4900 = vmor %vm4898, %vm4899
    %v4901 = vsel %vm4900, %v4892, %v4897
    %v4902 = vrsqrt.pop %v4823
    %v4903 = vmul.f32 %v4902, %v4823
    %v4904 = vmul.f32 %v4903, %v4902
    %v4905 = vmul.f32 0.5, %v4904
    %v4906 = vsub.f32 1.5, %v4905
    %v4907 = vmul.f32 %v4902, %v4906
    %vm4908 = vweird.f32 %v4823
    %vm4909 = vweird.f32 %v4902
    %vm4910 = vmor %vm4908, %vm4909
    %v4911 = vsel %vm4910, %v4902, %v4907
    %v4912 = vrsqrt.pop %v4824
    %v4913 = vmul.f32 %v4912, %v4824
    %v4914 = vmul.f32 %v4913, %v4912
    %v4915 = vmul.f32 0.5, %v4914
    %v4916 = vsub.f32 1.5, %v4915
    %v4917 = vmul.f32 %v4912, %v4916
    %vm4918 = vweird.f32 %v4824
    %vm4919 = vweird.f32 %v4912
    %vm4920 = vmor %vm4918, %vm4919
    %v4921 = vsel %vm4920, %v4912, %v4917
    %v4922 = vrsqrt.pop %v4825
    %v4923 = vmul.f32 %v4922, %v4825
    %v4924 = vmul.f32 %v4923, %v4922
    %v4925 = vmul.f32 0.5, %v4924
    %v4926 = vsub.f32 1.5, %v4925
    %v4927 = vmul.f32 %v4922, %v4926
    %vm4928 = vweird.f32 %v4825
    %vm4929 = vweird.f32 %v4922
    %vm4930 = vmor %vm4928, %vm4929
    %v4931 = vsel %vm4930, %v4922, %v4927
    %v4932 = vrsqrt.pop %v4826
    %v4933 = vmul.f32 %v4932, %v4826
    %v4934 = vmul.f32 %v4933, %v4932
    %v4935 = vmul.f32 0.5, %v4934
    %v4936 = vsub.f32 1.5, %v4935
    %v4937 = vmul.f32 %v4932, %v4936
    %vm4938 = vweird.f32 %v4826
    %vm4939 = vweird.f32 %v4932
    %vm4940 = vmor %vm4938, %vm4939
    %v4941 = vsel %vm4940, %v4932, %v4937
    %v4942 = vrsqrt.pop %v4827
    %v4943 = vmul.f32 %v4942, %v4827
    %v4944 = vmul.f32 %v4943, %v4942
    %v4945 = vmul.f32 0.5, %v4944
    %v4946 = vsub.f32 1.5, %v4945
    %v4947 = vmul.f32 %v4942, %v4946
    %vm4948 = vweird.f32 %v4827
    %vm4949 = vweird.f32 %v4942
    %vm4950 = vmor %vm4948, %vm4949
    %v4951 = vsel %vm4950, %v4942, %v4947
    %v4952 = vrsqrt.pop %v4828
    %v4953 = vmul.f32 %v4952, %v4828
    %v4954 = vmul.f32 %v4953, %v4952
    %v4955 = vmul.f32 0.5, %v4954
    %v4956 = vsub.f32 1.5, %v4955
    %v4957 = vmul.f32 %v4952, %v4956
    %vm4958 = vweird.f32 %v4828
    %vm4959 = vweird.f32 %v4952
    %vm4960 = vmor %vm4958, %vm4959
    %v4961 = vsel %vm4960, %v4952, %v4957
    %v4962 = vrsqrt.pop %v4829
    %v4963 = vmul.f32 %v4962, %v4829
    %v4964 = vmul.f32 %v4963, %v4962
    %v4965 = vmul.f32 0.5, %v4964
    %v4966 = vsub.f32 1.5, %v4965
    %v4967 = vmul.f32 %v4962, %v4966
    %vm4968 = vweird.f32 %v4829
    %vm4969 = vweird.f32 %v4962
    %vm4970 = vmor %vm4968, %vm4969
    %v4971 = vsel %vm4970, %v4962, %v4967
    %v4972 = vrsqrt.pop %v4830
    %v4973 = vmul.f32 %v4972, %v4830
    %v4974 = vmul.f32 %v4973, %v4972
    %v4975 = vmul.f32 0.5, %v4974
    %v4976 = vsub.f32 1.5, %v4975
    %v4977 = vmul.f32 %v4972, %v4976
    %vm4978 = vweird.f32 %v4830
    %vm4979 = vweird.f32 %v4972
    %vm4980 = vmor %vm4978, %vm4979
    %v4981 = vsel %vm4980, %v4972, %v4977
    %v4982 = vrsqrt.pop %v4831
    %v4983 = vmul.f32 %v4982, %v4831
    %v4984 = vmul.f32 %v4983, %v4982
    %v4985 = vmul.f32 0.5, %v4984
    %v4986 = vsub.f32 1.5, %v4985
    %v4987 = vmul.f32 %v4982, %v4986
    %vm4988 = vweird.f32 %v4831
    %vm4989 = vweird.f32 %v4982
    %vm4990 = vmor %vm4988, %vm4989
    %v4991 = vsel %vm4990, %v4982, %v4987
    %v4992 = vmul.f32 %v4720, %v4841
    %v4993 = vmul.f32 %v4721, %v4851
    %v4994 = vmul.f32 %v4722, %v4861
    %v4995 = vmul.f32 %v4723, %v4871
    %v4996 = vmul.f32 %v4724, %v4881
    %v4997 = vmul.f32 %v4725, %v4891
    %v4998 = vmul.f32 %v4726, %v4901
    %v4999 = vmul.f32 %v4727, %v4911
    %v5000 = vmul.f32 %v4728, %v4921
    %v5001 = vmul.f32 %v4729, %v4931
    %v5002 = vmul.f32 %v4730, %v4941
    %v5003 = vmul.f32 %v4731, %v4951
    %v5004 = vmul.f32 %v4732, %v4961
    %v5005 = vmul.f32 %v4733, %v4971
    %v5006 = vmul.f32 %v4734, %v4981
    %v5007 = vmul.f32 %v4735, %v4991
    %v5009 = vperm.slane %v4584, 0
    %v5011 = vmul.f32 %v4992, %v5009
    %v5012 = vmul.f32 %v4993, %v5009
    %v5013 = vmul.f32 %v4994, %v5009
    %v5014 = vmul.f32 %v4995, %v5009
    %v5015 = vmul.f32 %v4996, %v5009
    %v5016 = vmul.f32 %v4997, %v5009
    %v5017 = vmul.f32 %v4998, %v5009
    %v5018 = vmul.f32 %v4999, %v5009
    %v5019 = vmul.f32 %v5000, %v5009
    %v5020 = vmul.f32 %v5001, %v5009
    %v5021 = vmul.f32 %v5002, %v5009
    %v5022 = vmul.f32 %v5003, %v5009
    %v5023 = vmul.f32 %v5004, %v5009
    %v5024 = vmul.f32 %v5005, %v5009
    %v5025 = vmul.f32 %v5006, %v5009
    %v5026 = vmul.f32 %v5007, %v5009
    %v5028 = vperm.slane %v4585, 0
    %v5030 = vadd.f32 %v5011, %v5028
    %v5031 = vadd.f32 %v5012, %v5028
    %v5032 = vadd.f32 %v5013, %v5028
    %v5033 = vadd.f32 %v5014, %v5028
    %v5034 = vadd.f32 %v5015, %v5028
    %v5035 = vadd.f32 %v5016, %v5028
    %v5036 = vadd.f32 %v5017, %v5028
    %v5037 = vadd.f32 %v5018, %v5028
    %v5038 = vadd.f32 %v5019, %v5028
    %v5039 = vadd.f32 %v5020, %v5028
    %v5040 = vadd.f32 %v5021, %v5028
    %v5041 = vadd.f32 %v5022, %v5028
    %v5042 = vadd.f32 %v5023, %v5028
    %v5043 = vadd.f32 %v5024, %v5028
    %v5044 = vadd.f32 %v5025, %v5028
    %v5045 = vadd.f32 %v5026, %v5028
    %5046 = vmatpush.msra.mxu0 %v5045
    %5047 = vmatpush.msra.mxu0 %v5044
    %5048 = vmatpush.msra.mxu0 %v5043
    %5049 = vmatpush.msra.mxu0 %v5042
    %5050 = vmatpush.msra.mxu0 %v5041
    %5051 = vmatpush.msra.mxu0 %v5040
    %5052 = vmatpush.msra.mxu0 %v5039
    %5053 = vmatpush.msra.mxu0 %v5038
    %5054 = vmatpush.msra.mxu0 %v5037
    %5055 = vmatpush.msra.mxu0 %v5036
    %5056 = vmatpush.msra.mxu0 %v5035
    %5057 = vmatpush.msra.mxu0 %v5034
    %5058 = vmatpush.msra.mxu0 %v5033
    %5059 = vmatpush.msra.mxu0 %v5032
    %5060 = vmatpush.msra.mxu0 %v5031
    %5061 = vmatpush.msra.mxu0 %v5030
    %5062 = vmatmul.f32.gmra.mxu0 %v4624
    %v5063 = vpop.f32.mrf.mxu0
    %v5064 = vadd.f32 0.0, %v5063
    %5065 = vmatmul.f32.gmra.mxu0 %v4625
    %v5066 = vpop.f32.mrf.mxu0
    %v5067 = vadd.f32 0.0, %v5066
    %5068 = vmatmul.f32.gmra.mxu0 %v4626
    %v5069 = vpop.f32.mrf.mxu0
    %v5070 = vadd.f32 0.0, %v5069
    %5071 = vmatmul.f32.gmra.mxu0 %v4627
    %v5072 = vpop.f32.mrf.mxu0
    %v5073 = vadd.f32 0.0, %v5072
    %5074 = vmatmul.f32.gmra.mxu0 %v4628
    %v5075 = vpop.f32.mrf.mxu0
    %v5076 = vadd.f32 0.0, %v5075
    %5077 = vmatmul.f32.gmra.mxu0 %v4629
    %v5078 = vpop.f32.mrf.mxu0
    %v5079 = vadd.f32 0.0, %v5078
    %5080 = vmatmul.f32.gmra.mxu0 %v4630
    %v5081 = vpop.f32.mrf.mxu0
    %v5082 = vadd.f32 0.0, %v5081
    %5083 = vmatmul.f32.gmra.mxu0 %v4631
    %v5084 = vpop.f32.mrf.mxu0
    %v5085 = vadd.f32 0.0, %v5084
    %5086 = vmatmul.f32.gmra.mxu0 %v4632
    %v5087 = vpop.f32.mrf.mxu0
    %v5088 = vadd.f32 0.0, %v5087
    %5089 = vmatmul.f32.gmra.mxu0 %v4633
    %v5090 = vpop.f32.mrf.mxu0
    %v5091 = vadd.f32 0.0, %v5090
    %5092 = vmatmul.f32.gmra.mxu0 %v4634
    %v5093 = vpop.f32.mrf.mxu0
    %v5094 = vadd.f32 0.0, %v5093
    %5095 = vmatmul.f32.gmra.mxu0 %v4635
    %v5096 = vpop.f32.mrf.mxu0
    %v5097 = vadd.f32 0.0, %v5096
    %5098 = vmatmul.f32.gmra.mxu0 %v4636
    %v5099 = vpop.f32.mrf.mxu0
    %v5100 = vadd.f32 0.0, %v5099
    %5101 = vmatmul.f32.gmra.mxu0 %v4637
    %v5102 = vpop.f32.mrf.mxu0
    %v5103 = vadd.f32 0.0, %v5102
    %5104 = vmatmul.f32.gmra.mxu0 %v4638
    %v5105 = vpop.f32.mrf.mxu0
    %v5106 = vadd.f32 0.0, %v5105
    %5107 = vmatmul.f32.gmra.mxu0 %v4639
    %v5108 = vpop.f32.mrf.mxu0
    %v5109 = vadd.f32 0.0, %v5108
    %5110 = vdwg.mxu0
    %v5112 = vperm.slane %v4590, 0
    %v5115 = vsel %vm464, %v5064, 0
    %v5118 = vsel %vm464, %v5067, 0
    %v5121 = vsel %vm464, %v5070, 0
    %v5124 = vsel %vm464, %v5073, 0
    %v5127 = vsel %vm464, %v5076, 0
    %v5130 = vsel %vm464, %v5079, 0
    %v5133 = vsel %vm464, %v5082, 0
    %v5136 = vsel %vm464, %v5085, 0
    %v5139 = vsel %vm464, %v5088, 0
    %v5142 = vsel %vm464, %v5091, 0
    %v5145 = vsel %vm464, %v5094, 0
    %v5148 = vsel %vm464, %v5097, 0
    %v5151 = vsel %vm464, %v5100, 0
    %v5154 = vsel %vm464, %v5103, 0
    %v5157 = vsel %vm464, %v5106, 0
    %v5160 = vsel %vm464, %v5109, 0
    %5162 = vmatpush.msra.mxu0 0.0
    %5163 = vmatpush.msra.mxu0 0.0
    %5164 = vmatpush.msra.mxu0 0.0
    %5165 = vmatpush.msra.mxu0 0.0
    %5166 = vmatpush.msra.mxu0 0.0
    %5167 = vmatpush.msra.mxu0 0.0
    %5168 = vmatpush.msra.mxu0 0.0
    %5169 = vmatpush.msra.mxu0 0.0
    %5170 = vmatpush.msra.mxu0 0.0
    %5171 = vmatpush.msra.mxu0 0.0
    %5172 = vmatpush.msra.mxu0 0.0
    %5173 = vmatpush.msra.mxu0 0.0
    %5174 = vmatpush.msra.mxu0 %v4589
    %5175 = vmatpush.msra.mxu0 %v4588
    %5176 = vmatpush.msra.mxu0 %v4587
    %5177 = vmatpush.msra.mxu0 %v4586
    %5178 = vmatmul.f32.gmra.mxu0 %v5115
    %v5179 = vpop.f32.mrf.mxu0
    %v5180 = vadd.f32 %v5112, %v5179
    %5181 = vmatmul.f32.gmra.mxu0 %v5118
    %v5182 = vpop.f32.mrf.mxu0
    %v5183 = vadd.f32 %v5112, %v5182
    %5184 = vmatmul.f32.gmra.mxu0 %v5121
    %v5185 = vpop.f32.mrf.mxu0
    %v5186 = vadd.f32 %v5112, %v5185
    %5187 = vmatmul.f32.gmra.mxu0 %v5124
    %v5188 = vpop.f32.mrf.mxu0
    %v5189 = vadd.f32 %v5112, %v5188
    %5190 = vmatmul.f32.gmra.mxu0 %v5127
    %v5191 = vpop.f32.mrf.mxu0
    %v5192 = vadd.f32 %v5112, %v5191
    %5193 = vmatmul.f32.gmra.mxu0 %v5130
    %v5194 = vpop.f32.mrf.mxu0
    %v5195 = vadd.f32 %v5112, %v5194
    %5196 = vmatmul.f32.gmra.mxu0 %v5133
    %v5197 = vpop.f32.mrf.mxu0
    %v5198 = vadd.f32 %v5112, %v5197
    %5199 = vmatmul.f32.gmra.mxu0 %v5136
    %v5200 = vpop.f32.mrf.mxu0
    %v5201 = vadd.f32 %v5112, %v5200
    %5202 = vmatmul.f32.gmra.mxu0 %v5139
    %v5203 = vpop.f32.mrf.mxu0
    %v5204 = vadd.f32 %v5112, %v5203
    %5205 = vmatmul.f32.gmra.mxu0 %v5142
    %v5206 = vpop.f32.mrf.mxu0
    %v5207 = vadd.f32 %v5112, %v5206
    %5208 = vmatmul.f32.gmra.mxu0 %v5145
    %v5209 = vpop.f32.mrf.mxu0
    %v5210 = vadd.f32 %v5112, %v5209
    %5211 = vmatmul.f32.gmra.mxu0 %v5148
    %v5212 = vpop.f32.mrf.mxu0
    %v5213 = vadd.f32 %v5112, %v5212
    %5214 = vmatmul.f32.gmra.mxu0 %v5151
    %v5215 = vpop.f32.mrf.mxu0
    %v5216 = vadd.f32 %v5112, %v5215
    %5217 = vmatmul.f32.gmra.mxu0 %v5154
    %v5218 = vpop.f32.mrf.mxu0
    %v5219 = vadd.f32 %v5112, %v5218
    %5220 = vmatmul.f32.gmra.mxu0 %v5157
    %v5221 = vpop.f32.mrf.mxu0
    %v5222 = vadd.f32 %v5112, %v5221
    %5223 = vmatmul.f32.gmra.mxu0 %v5160
    %v5224 = vpop.f32.mrf.mxu0
    %v5225 = vadd.f32 %v5112, %v5224
    %5226 = vdwg.mxu0
    %v5227 = vmul.f32 %v5180, 0.25
    %v5228 = vmul.f32 %v5183, 0.25
    %v5229 = vmul.f32 %v5186, 0.25
    %v5230 = vmul.f32 %v5189, 0.25
    %v5231 = vmul.f32 %v5192, 0.25
    %v5232 = vmul.f32 %v5195, 0.25
    %v5233 = vmul.f32 %v5198, 0.25
    %v5234 = vmul.f32 %v5201, 0.25
    %v5235 = vmul.f32 %v5204, 0.25
    %v5236 = vmul.f32 %v5207, 0.25
    %v5237 = vmul.f32 %v5210, 0.25
    %v5238 = vmul.f32 %v5213, 0.25
    %v5239 = vmul.f32 %v5216, 0.25
    %v5240 = vmul.f32 %v5219, 0.25
    %v5241 = vmul.f32 %v5222, 0.25
    %v5242 = vmul.f32 %v5225, 0.25
    %5245 = vrot.lane.b32.xlu0 %v5180, 96
    %v5246 = vpop.permute.xlu0 %5245
    %5247 = vrot.lane.b32.xlu0 %v5183, 96
    %v5248 = vpop.permute.xlu0 %5247
    %v5250 = vsel %vm1065, %v5227, 0
    %v5253 = vsel %vm1065, %v5228, 0
    %v5255 = vsel %vm1065, %v5246, 0
    %v5257 = vsel %vm1065, %v5248, 0
    %5259 = vmatpush.xpose.msra.mxu0 0.0
    %5260 = vmatpush.xpose.msra.mxu0 0.0
    %5261 = vmatpush.xpose.msra.mxu0 0.0
    %5262 = vmatpush.xpose.msra.mxu0 0.0
    %5263 = vmatpush.xpose.msra.mxu0 0.0
    %5264 = vmatpush.xpose.msra.mxu0 0.0
    %5265 = vmatpush.xpose.msra.mxu0 0.0
    %5266 = vmatpush.xpose.msra.mxu0 0.0
    %5267 = vmatpush.xpose.msra.mxu0 0.0
    %5268 = vmatpush.xpose.msra.mxu0 0.0
    %5269 = vmatpush.xpose.msra.mxu0 0.0
    %5270 = vmatpush.xpose.msra.mxu0 0.0
    %5271 = vmatpush.xpose.msra.mxu0 0.0
    %5272 = vmatpush.xpose.msra.mxu0 0.0
    %5273 = vmatpush.xpose.msra.mxu0 %v5257
    %5274 = vmatpush.xpose.msra.mxu0 %v5255
    %5275 = vmatmul.f32.gmra.mxu0 %v5250
    %v5276 = vpop.f32.mrf.mxu0
    %v5277 = vadd.f32 %v4591, %v5276
    %5278 = vmatmul.f32.gmra.mxu0 %v5253
    %v5279 = vpop.f32.mrf.mxu0
    %v5280 = vadd.f32 %v4592, %v5279
    %5281 = vdwg.mxu0
    %5284 = vrot.lane.b32.xlu0 %v5186, 96
    %v5285 = vpop.permute.xlu0 %5284
    %5286 = vrot.lane.b32.xlu0 %v5189, 96
    %v5287 = vpop.permute.xlu0 %5286
    %v5289 = vsel %vm1065, %v5229, 0
    %v5292 = vsel %vm1065, %v5230, 0
    %v5294 = vsel %vm1065, %v5285, 0
    %v5296 = vsel %vm1065, %v5287, 0
    %5298 = vmatpush.xpose.msra.mxu0 0.0
    %5299 = vmatpush.xpose.msra.mxu0 0.0
    %5300 = vmatpush.xpose.msra.mxu0 0.0
    %5301 = vmatpush.xpose.msra.mxu0 0.0
    %5302 = vmatpush.xpose.msra.mxu0 0.0
    %5303 = vmatpush.xpose.msra.mxu0 0.0
    %5304 = vmatpush.xpose.msra.mxu0 0.0
    %5305 = vmatpush.xpose.msra.mxu0 0.0
    %5306 = vmatpush.xpose.msra.mxu0 0.0
    %5307 = vmatpush.xpose.msra.mxu0 0.0
    %5308 = vmatpush.xpose.msra.mxu0 0.0
    %5309 = vmatpush.xpose.msra.mxu0 0.0
    %5310 = vmatpush.xpose.msra.mxu0 0.0
    %5311 = vmatpush.xpose.msra.mxu0 0.0
    %5312 = vmatpush.xpose.msra.mxu0 %v5296
    %5313 = vmatpush.xpose.msra.mxu0 %v5294
    %5314 = vmatmul.f32.gmra.mxu0 %v5289
    %v5315 = vpop.f32.mrf.mxu0
    %v5316 = vadd.f32 %v4591, %v5315
    %5317 = vmatmul.f32.gmra.mxu0 %v5292
    %v5318 = vpop.f32.mrf.mxu0
    %v5319 = vadd.f32 %v4592, %v5318
    %5320 = vdwg.mxu0
    %5323 = vrot.lane.b32.xlu0 %v5192, 96
    %v5324 = vpop.permute.xlu0 %5323
    %5325 = vrot.lane.b32.xlu0 %v5195, 96
    %v5326 = vpop.permute.xlu0 %5325
    %v5328 = vsel %vm1065, %v5231, 0
    %v5331 = vsel %vm1065, %v5232, 0
    %v5333 = vsel %vm1065, %v5324, 0
    %v5335 = vsel %vm1065, %v5326, 0
    %5337 = vmatpush.xpose.msra.mxu0 0.0
    %5338 = vmatpush.xpose.msra.mxu0 0.0
    %5339 = vmatpush.xpose.msra.mxu0 0.0
    %5340 = vmatpush.xpose.msra.mxu0 0.0
    %5341 = vmatpush.xpose.msra.mxu0 0.0
    %5342 = vmatpush.xpose.msra.mxu0 0.0
    %5343 = vmatpush.xpose.msra.mxu0 0.0
    %5344 = vmatpush.xpose.msra.mxu0 0.0
    %5345 = vmatpush.xpose.msra.mxu0 0.0
    %5346 = vmatpush.xpose.msra.mxu0 0.0
    %5347 = vmatpush.xpose.msra.mxu0 0.0
    %5348 = vmatpush.xpose.msra.mxu0 0.0
    %5349 = vmatpush.xpose.msra.mxu0 0.0
    %5350 = vmatpush.xpose.msra.mxu0 0.0
    %5351 = vmatpush.xpose.msra.mxu0 %v5335
    %5352 = vmatpush.xpose.msra.mxu0 %v5333
    %5353 = vmatmul.f32.gmra.mxu0 %v5328
    %v5354 = vpop.f32.mrf.mxu0
    %v5355 = vadd.f32 %v4591, %v5354
    %5356 = vmatmul.f32.gmra.mxu0 %v5331
    %v5357 = vpop.f32.mrf.mxu0
    %v5358 = vadd.f32 %v4592, %v5357
    %5359 = vdwg.mxu0
    %5362 = vrot.lane.b32.xlu0 %v5198, 96
    %v5363 = vpop.permute.xlu0 %5362
    %5364 = vrot.lane.b32.xlu0 %v5201, 96
    %v5365 = vpop.permute.xlu0 %5364
    %v5367 = vsel %vm1065, %v5233, 0
    %v5370 = vsel %vm1065, %v5234, 0
    %v5372 = vsel %vm1065, %v5363, 0
    %v5374 = vsel %vm1065, %v5365, 0
    %5376 = vmatpush.xpose.msra.mxu0 0.0
    %5377 = vmatpush.xpose.msra.mxu0 0.0
    %5378 = vmatpush.xpose.msra.mxu0 0.0
    %5379 = vmatpush.xpose.msra.mxu0 0.0
    %5380 = vmatpush.xpose.msra.mxu0 0.0
    %5381 = vmatpush.xpose.msra.mxu0 0.0
    %5382 = vmatpush.xpose.msra.mxu0 0.0
    %5383 = vmatpush.xpose.msra.mxu0 0.0
    %5384 = vmatpush.xpose.msra.mxu0 0.0
    %5385 = vmatpush.xpose.msra.mxu0 0.0
    %5386 = vmatpush.xpose.msra.mxu0 0.0
    %5387 = vmatpush.xpose.msra.mxu0 0.0
    %5388 = vmatpush.xpose.msra.mxu0 0.0
    %5389 = vmatpush.xpose.msra.mxu0 0.0
    %5390 = vmatpush.xpose.msra.mxu0 %v5374
    %5391 = vmatpush.xpose.msra.mxu0 %v5372
    %5392 = vmatmul.f32.gmra.mxu0 %v5367
    %v5393 = vpop.f32.mrf.mxu0
    %v5394 = vadd.f32 %v4591, %v5393
    %5395 = vmatmul.f32.gmra.mxu0 %v5370
    %v5396 = vpop.f32.mrf.mxu0
    %v5397 = vadd.f32 %v4592, %v5396
    %5398 = vdwg.mxu0
    %5401 = vrot.lane.b32.xlu0 %v5204, 96
    %v5402 = vpop.permute.xlu0 %5401
    %5403 = vrot.lane.b32.xlu0 %v5207, 96
    %v5404 = vpop.permute.xlu0 %5403
    %v5406 = vsel %vm1065, %v5235, 0
    %v5409 = vsel %vm1065, %v5236, 0
    %v5411 = vsel %vm1065, %v5402, 0
    %v5413 = vsel %vm1065, %v5404, 0
    %5415 = vmatpush.xpose.msra.mxu0 0.0
    %5416 = vmatpush.xpose.msra.mxu0 0.0
    %5417 = vmatpush.xpose.msra.mxu0 0.0
    %5418 = vmatpush.xpose.msra.mxu0 0.0
    %5419 = vmatpush.xpose.msra.mxu0 0.0
    %5420 = vmatpush.xpose.msra.mxu0 0.0
    %5421 = vmatpush.xpose.msra.mxu0 0.0
    %5422 = vmatpush.xpose.msra.mxu0 0.0
    %5423 = vmatpush.xpose.msra.mxu0 0.0
    %5424 = vmatpush.xpose.msra.mxu0 0.0
    %5425 = vmatpush.xpose.msra.mxu0 0.0
    %5426 = vmatpush.xpose.msra.mxu0 0.0
    %5427 = vmatpush.xpose.msra.mxu0 0.0
    %5428 = vmatpush.xpose.msra.mxu0 0.0
    %5429 = vmatpush.xpose.msra.mxu0 %v5413
    %5430 = vmatpush.xpose.msra.mxu0 %v5411
    %5431 = vmatmul.f32.gmra.mxu0 %v5406
    %v5432 = vpop.f32.mrf.mxu0
    %v5433 = vadd.f32 %v4591, %v5432
    %5434 = vmatmul.f32.gmra.mxu0 %v5409
    %v5435 = vpop.f32.mrf.mxu0
    %v5436 = vadd.f32 %v4592, %v5435
    %5437 = vdwg.mxu0
    %5440 = vrot.lane.b32.xlu0 %v5210, 96
    %v5441 = vpop.permute.xlu0 %5440
    %5442 = vrot.lane.b32.xlu0 %v5213, 96
    %v5443 = vpop.permute.xlu0 %5442
    %v5445 = vsel %vm1065, %v5237, 0
    %v5448 = vsel %vm1065, %v5238, 0
    %v5450 = vsel %vm1065, %v5441, 0
    %v5452 = vsel %vm1065, %v5443, 0
    %5454 = vmatpush.xpose.msra.mxu0 0.0
    %5455 = vmatpush.xpose.msra.mxu0 0.0
    %5456 = vmatpush.xpose.msra.mxu0 0.0
    %5457 = vmatpush.xpose.msra.mxu0 0.0
    %5458 = vmatpush.xpose.msra.mxu0 0.0
    %5459 = vmatpush.xpose.msra.mxu0 0.0
    %5460 = vmatpush.xpose.msra.mxu0 0.0
    %5461 = vmatpush.xpose.msra.mxu0 0.0
    %5462 = vmatpush.xpose.msra.mxu0 0.0
    %5463 = vmatpush.xpose.msra.mxu0 0.0
    %5464 = vmatpush.xpose.msra.mxu0 0.0
    %5465 = vmatpush.xpose.msra.mxu0 0.0
    %5466 = vmatpush.xpose.msra.mxu0 0.0
    %5467 = vmatpush.xpose.msra.mxu0 0.0
    %5468 = vmatpush.xpose.msra.mxu0 %v5452
    %5469 = vmatpush.xpose.msra.mxu0 %v5450
    %5470 = vmatmul.f32.gmra.mxu0 %v5445
    %v5471 = vpop.f32.mrf.mxu0
    %v5472 = vadd.f32 %v4591, %v5471
    %5473 = vmatmul.f32.gmra.mxu0 %v5448
    %v5474 = vpop.f32.mrf.mxu0
    %v5475 = vadd.f32 %v4592, %v5474
    %5476 = vdwg.mxu0
    %5479 = vrot.lane.b32.xlu0 %v5216, 96
    %v5480 = vpop.permute.xlu0 %5479
    %5481 = vrot.lane.b32.xlu0 %v5219, 96
    %v5482 = vpop.permute.xlu0 %5481
    %v5484 = vsel %vm1065, %v5239, 0
    %v5487 = vsel %vm1065, %v5240, 0
    %v5489 = vsel %vm1065, %v5480, 0
    %v5491 = vsel %vm1065, %v5482, 0
    %5493 = vmatpush.xpose.msra.mxu0 0.0
    %5494 = vmatpush.xpose.msra.mxu0 0.0
    %5495 = vmatpush.xpose.msra.mxu0 0.0
    %5496 = vmatpush.xpose.msra.mxu0 0.0
    %5497 = vmatpush.xpose.msra.mxu0 0.0
    %5498 = vmatpush.xpose.msra.mxu0 0.0
    %5499 = vmatpush.xpose.msra.mxu0 0.0
    %5500 = vmatpush.xpose.msra.mxu0 0.0
    %5501 = vmatpush.xpose.msra.mxu0 0.0
    %5502 = vmatpush.xpose.msra.mxu0 0.0
    %5503 = vmatpush.xpose.msra.mxu0 0.0
    %5504 = vmatpush.xpose.msra.mxu0 0.0
    %5505 = vmatpush.xpose.msra.mxu0 0.0
    %5506 = vmatpush.xpose.msra.mxu0 0.0
    %5507 = vmatpush.xpose.msra.mxu0 %v5491
    %5508 = vmatpush.xpose.msra.mxu0 %v5489
    %5509 = vmatmul.f32.gmra.mxu0 %v5484
    %v5510 = vpop.f32.mrf.mxu0
    %v5511 = vadd.f32 %v4591, %v5510
    %5512 = vmatmul.f32.gmra.mxu0 %v5487
    %v5513 = vpop.f32.mrf.mxu0
    %v5514 = vadd.f32 %v4592, %v5513
    %5515 = vdwg.mxu0
    %5518 = vrot.lane.b32.xlu0 %v5222, 96
    %v5519 = vpop.permute.xlu0 %5518
    %5520 = vrot.lane.b32.xlu0 %v5225, 96
    %v5521 = vpop.permute.xlu0 %5520
    %v5523 = vsel %vm1065, %v5241, 0
    %v5526 = vsel %vm1065, %v5242, 0
    %v5528 = vsel %vm1065, %v5519, 0
    %v5530 = vsel %vm1065, %v5521, 0
    %5532 = vmatpush.xpose.msra.mxu0 0.0
    %5533 = vmatpush.xpose.msra.mxu0 0.0
    %5534 = vmatpush.xpose.msra.mxu0 0.0
    %5535 = vmatpush.xpose.msra.mxu0 0.0
    %5536 = vmatpush.xpose.msra.mxu0 0.0
    %5537 = vmatpush.xpose.msra.mxu0 0.0
    %5538 = vmatpush.xpose.msra.mxu0 0.0
    %5539 = vmatpush.xpose.msra.mxu0 0.0
    %5540 = vmatpush.xpose.msra.mxu0 0.0
    %5541 = vmatpush.xpose.msra.mxu0 0.0
    %5542 = vmatpush.xpose.msra.mxu0 0.0
    %5543 = vmatpush.xpose.msra.mxu0 0.0
    %5544 = vmatpush.xpose.msra.mxu0 0.0
    %5545 = vmatpush.xpose.msra.mxu0 0.0
    %5546 = vmatpush.xpose.msra.mxu0 %v5530
    %5547 = vmatpush.xpose.msra.mxu0 %v5528
    %5548 = vmatmul.f32.gmra.mxu0 %v5523
    %v5549 = vpop.f32.mrf.mxu0
    %v5550 = vadd.f32 %v4591, %v5549
    %5551 = vmatmul.f32.gmra.mxu0 %v5526
    %v5552 = vpop.f32.mrf.mxu0
    %v5553 = vadd.f32 %v4592, %v5552
    %5554 = vdwg.mxu0
    %v5555 = vadd.f32 %v5277, %v376
    %v5556 = vadd.f32 %v5280, %v377
    %v5557 = vadd.f32 %v5316, %v378
    %v5558 = vadd.f32 %v5319, %v379
    %v5559 = vadd.f32 %v5355, %v380
    %v5560 = vadd.f32 %v5358, %v381
    %v5561 = vadd.f32 %v5394, %v382
    %v5562 = vadd.f32 %v5397, %v383
    %v5563 = vadd.f32 %v5433, %v384
    %v5564 = vadd.f32 %v5436, %v385
    %v5565 = vadd.f32 %v5472, %v386
    %v5566 = vadd.f32 %v5475, %v387
    %v5567 = vadd.f32 %v5511, %v388
    %v5568 = vadd.f32 %v5514, %v389
    %v5569 = vadd.f32 %v5550, %v390
    %v5570 = vadd.f32 %v5553, %v391
    %v5571 = vsel %vm1065, %v5555, -inf
    %5572 = vmax.xlane.f32.xlu0 %v5571
    %v5573 = vpop.xlane.xlu0 %5572
    %v5574 = vsel %vm1065, %v5556, -inf
    %5575 = vmax.xlane.f32.xlu0 %v5574
    %v5576 = vpop.xlane.xlu0 %5575
    %v5577 = vsel %vm1065, %v5557, -inf
    %5578 = vmax.xlane.f32.xlu0 %v5577
    %v5579 = vpop.xlane.xlu0 %5578
    %v5580 = vsel %vm1065, %v5558, -inf
    %5581 = vmax.xlane.f32.xlu0 %v5580
    %v5582 = vpop.xlane.xlu0 %5581
    %v5583 = vsel %vm1065, %v5559, -inf
    %5584 = vmax.xlane.f32.xlu0 %v5583
    %v5585 = vpop.xlane.xlu0 %5584
    %v5586 = vsel %vm1065, %v5560, -inf
    %5587 = vmax.xlane.f32.xlu0 %v5586
    %v5588 = vpop.xlane.xlu0 %5587
    %v5589 = vsel %vm1065, %v5561, -inf
    %5590 = vmax.xlane.f32.xlu0 %v5589
    %v5591 = vpop.xlane.xlu0 %5590
    %v5592 = vsel %vm1065, %v5562, -inf
    %5593 = vmax.xlane.f32.xlu0 %v5592
    %v5594 = vpop.xlane.xlu0 %5593
    %v5595 = vsel %vm1065, %v5563, -inf
    %5596 = vmax.xlane.f32.xlu0 %v5595
    %v5597 = vpop.xlane.xlu0 %5596
    %v5598 = vsel %vm1065, %v5564, -inf
    %5599 = vmax.xlane.f32.xlu0 %v5598
    %v5600 = vpop.xlane.xlu0 %5599
    %v5601 = vsel %vm1065, %v5565, -inf
    %5602 = vmax.xlane.f32.xlu0 %v5601
    %v5603 = vpop.xlane.xlu0 %5602
    %v5604 = vsel %vm1065, %v5566, -inf
    %5605 = vmax.xlane.f32.xlu0 %v5604
    %v5606 = vpop.xlane.xlu0 %5605
    %v5607 = vsel %vm1065, %v5567, -inf
    %5608 = vmax.xlane.f32.xlu0 %v5607
    %v5609 = vpop.xlane.xlu0 %5608
    %v5610 = vsel %vm1065, %v5568, -inf
    %5611 = vmax.xlane.f32.xlu0 %v5610
    %v5612 = vpop.xlane.xlu0 %5611
    %v5613 = vsel %vm1065, %v5569, -inf
    %5614 = vmax.xlane.f32.xlu0 %v5613
    %v5615 = vpop.xlane.xlu0 %5614
    %v5616 = vsel %vm1065, %v5570, -inf
    %5617 = vmax.xlane.f32.xlu0 %v5616
    %v5618 = vpop.xlane.xlu0 %5617
    %v5619 = vsub.f32 %v5555, %v5573
    %v5620 = vsub.f32 %v5556, %v5576
    %v5621 = vsub.f32 %v5557, %v5579
    %v5622 = vsub.f32 %v5558, %v5582
    %v5623 = vsub.f32 %v5559, %v5585
    %v5624 = vsub.f32 %v5560, %v5588
    %v5625 = vsub.f32 %v5561, %v5591
    %v5626 = vsub.f32 %v5562, %v5594
    %v5627 = vsub.f32 %v5563, %v5597
    %v5628 = vsub.f32 %v5564, %v5600
    %v5629 = vsub.f32 %v5565, %v5603
    %v5630 = vsub.f32 %v5566, %v5606
    %v5631 = vsub.f32 %v5567, %v5609
    %v5632 = vsub.f32 %v5568, %v5612
    %v5633 = vsub.f32 %v5569, %v5615
    %v5634 = vsub.f32 %v5570, %v5618
    %v5635 = vmul.f32 %v5619, 1.442695
    %v5636 = vpow.pop %v5635
    %v5637 = vmul.f32 %v5620, 1.442695
    %v5638 = vpow.pop %v5637
    %v5639 = vmul.f32 %v5621, 1.442695
    %v5640 = vpow.pop %v5639
    %v5641 = vmul.f32 %v5622, 1.442695
    %v5642 = vpow.pop %v5641
    %v5643 = vmul.f32 %v5623, 1.442695
    %v5644 = vpow.pop %v5643
    %v5645 = vmul.f32 %v5624, 1.442695
    %v5646 = vpow.pop %v5645
    %v5647 = vmul.f32 %v5625, 1.442695
    %v5648 = vpow.pop %v5647
    %v5649 = vmul.f32 %v5626, 1.442695
    %v5650 = vpow.pop %v5649
    %v5651 = vmul.f32 %v5627, 1.442695
    %v5652 = vpow.pop %v5651
    %v5653 = vmul.f32 %v5628, 1.442695
    %v5654 = vpow.pop %v5653
    %v5655 = vmul.f32 %v5629, 1.442695
    %v5656 = vpow.pop %v5655
    %v5657 = vmul.f32 %v5630, 1.442695
    %v5658 = vpow.pop %v5657
    %v5659 = vmul.f32 %v5631, 1.442695
    %v5660 = vpow.pop %v5659
    %v5661 = vmul.f32 %v5632, 1.442695
    %v5662 = vpow.pop %v5661
    %v5663 = vmul.f32 %v5633, 1.442695
    %v5664 = vpow.pop %v5663
    %v5665 = vmul.f32 %v5634, 1.442695
    %v5666 = vpow.pop %v5665
    %v5667 = vsel %vm1065, %v5636, 0.0
    %5668 = vadd.xlane.f32.xlu0 %v5667
    %v5669 = vpop.xlane.xlu0 %5668
    %v5670 = vsel %vm1065, %v5638, 0.0
    %5671 = vadd.xlane.f32.xlu0 %v5670
    %v5672 = vpop.xlane.xlu0 %5671
    %v5673 = vsel %vm1065, %v5640, 0.0
    %5674 = vadd.xlane.f32.xlu0 %v5673
    %v5675 = vpop.xlane.xlu0 %5674
    %v5676 = vsel %vm1065, %v5642, 0.0
    %5677 = vadd.xlane.f32.xlu0 %v5676
    %v5678 = vpop.xlane.xlu0 %5677
    %v5679 = vsel %vm1065, %v5644, 0.0
    %5680 = vadd.xlane.f32.xlu0 %v5679
    %v5681 = vpop.xlane.xlu0 %5680
    %v5682 = vsel %vm1065, %v5646, 0.0
    %5683 = vadd.xlane.f32.xlu0 %v5682
    %v5684 = vpop.xlane.xlu0 %5683
    %v5685 = vsel %vm1065, %v5648, 0.0
    %5686 = vadd.xlane.f32.xlu0 %v5685
    %v5687 = vpop.xlane.xlu0 %5686
    %v5688 = vsel %vm1065, %v5650, 0.0
    %5689 = vadd.xlane.f32.xlu0 %v5688
    %v5690 = vpop.xlane.xlu0 %5689
    %v5691 = vsel %vm1065, %v5652, 0.0
    %5692 = vadd.xlane.f32.xlu0 %v5691
    %v5693 = vpop.xlane.xlu0 %5692
    %v5694 = vsel %vm1065, %v5654, 0.0
    %5695 = vadd.xlane.f32.xlu0 %v5694
    %v5696 = vpop.xlane.xlu0 %5695
    %v5697 = vsel %vm1065, %v5656, 0.0
    %5698 = vadd.xlane.f32.xlu0 %v5697
    %v5699 = vpop.xlane.xlu0 %5698
    %v5700 = vsel %vm1065, %v5658, 0.0
    %5701 = vadd.xlane.f32.xlu0 %v5700
    %v5702 = vpop.xlane.xlu0 %5701
    %v5703 = vsel %vm1065, %v5660, 0.0
    %5704 = vadd.xlane.f32.xlu0 %v5703
    %v5705 = vpop.xlane.xlu0 %5704
    %v5706 = vsel %vm1065, %v5662, 0.0
    %5707 = vadd.xlane.f32.xlu0 %v5706
    %v5708 = vpop.xlane.xlu0 %5707
    %v5709 = vsel %vm1065, %v5664, 0.0
    %5710 = vadd.xlane.f32.xlu0 %v5709
    %v5711 = vpop.xlane.xlu0 %5710
    %v5712 = vsel %vm1065, %v5666, 0.0
    %5713 = vadd.xlane.f32.xlu0 %v5712
    %v5714 = vpop.xlane.xlu0 %5713
    %v5715 = vrcp.pop %v5669
    %v5716 = vmul.f32 %v5669, %v5715
    %v5717 = vsub.f32 1.0, %v5716
    %v5718 = vmul.f32 %v5715, %v5717
    %v5719 = vadd.f32 %v5715, %v5718
    %vm5720 = vweird.f32 %v5669
    %vm5721 = vweird.f32 %v5715
    %vm5722 = vmor %vm5720, %vm5721
    %v5723 = vsel %vm5722, %v5715, %v5719
    %v5724 = vand.u32 2147483647, %v5669
    %vm5725 = vcmp.eq.f32.partialorder %v5724, 8.507059e+37
    %v5726 = vand.u32 %v5669, 2147483648
    %v5727 = vor.u32 1.1754944e-38, %v5726
    %v5728 = vsel %vm5725, %v5727, %v5723
    %v5729 = vmul.f32 %v5636, %v5728
    %v5730 = vrcp.pop %v5672
    %v5731 = vmul.f32 %v5672, %v5730
    %v5732 = vsub.f32 1.0, %v5731
    %v5733 = vmul.f32 %v5730, %v5732
    %v5734 = vadd.f32 %v5730, %v5733
    %vm5735 = vweird.f32 %v5672
    %vm5736 = vweird.f32 %v5730
    %vm5737 = vmor %vm5735, %vm5736
    %v5738 = vsel %vm5737, %v5730, %v5734
    %v5739 = vand.u32 2147483647, %v5672
    %vm5740 = vcmp.eq.f32.partialorder %v5739, 8.507059e+37
    %v5741 = vand.u32 %v5672, 2147483648
    %v5742 = vor.u32 1.1754944e-38, %v5741
    %v5743 = vsel %vm5740, %v5742, %v5738
    %v5744 = vmul.f32 %v5638, %v5743
    %v5745 = vrcp.pop %v5675
    %v5746 = vmul.f32 %v5675, %v5745
    %v5747 = vsub.f32 1.0, %v5746
    %v5748 = vmul.f32 %v5745, %v5747
    %v5749 = vadd.f32 %v5745, %v5748
    %vm5750 = vweird.f32 %v5675
    %vm5751 = vweird.f32 %v5745
    %vm5752 = vmor %vm5750, %vm5751
    %v5753 = vsel %vm5752, %v5745, %v5749
    %v5754 = vand.u32 2147483647, %v5675
    %vm5755 = vcmp.eq.f32.partialorder %v5754, 8.507059e+37
    %v5756 = vand.u32 %v5675, 2147483648
    %v5757 = vor.u32 1.1754944e-38, %v5756
    %v5758 = vsel %vm5755, %v5757, %v5753
    %v5759 = vmul.f32 %v5640, %v5758
    %v5760 = vrcp.pop %v5678
    %v5761 = vmul.f32 %v5678, %v5760
    %v5762 = vsub.f32 1.0, %v5761
    %v5763 = vmul.f32 %v5760, %v5762
    %v5764 = vadd.f32 %v5760, %v5763
    %vm5765 = vweird.f32 %v5678
    %vm5766 = vweird.f32 %v5760
    %vm5767 = vmor %vm5765, %vm5766
    %v5768 = vsel %vm5767, %v5760, %v5764
    %v5769 = vand.u32 2147483647, %v5678
    %vm5770 = vcmp.eq.f32.partialorder %v5769, 8.507059e+37
    %v5771 = vand.u32 %v5678, 2147483648
    %v5772 = vor.u32 1.1754944e-38, %v5771
    %v5773 = vsel %vm5770, %v5772, %v5768
    %v5774 = vmul.f32 %v5642, %v5773
    %v5775 = vrcp.pop %v5681
    %v5776 = vmul.f32 %v5681, %v5775
    %v5777 = vsub.f32 1.0, %v5776
    %v5778 = vmul.f32 %v5775, %v5777
    %v5779 = vadd.f32 %v5775, %v5778
    %vm5780 = vweird.f32 %v5681
    %vm5781 = vweird.f32 %v5775
    %vm5782 = vmor %vm5780, %vm5781
    %v5783 = vsel %vm5782, %v5775, %v5779
    %v5784 = vand.u32 2147483647, %v5681
    %vm5785 = vcmp.eq.f32.partialorder %v5784, 8.507059e+37
    %v5786 = vand.u32 %v5681, 2147483648
    %v5787 = vor.u32 1.1754944e-38, %v5786
    %v5788 = vsel %vm5785, %v5787, %v5783
    %v5789 = vmul.f32 %v5644, %v5788
    %v5790 = vrcp.pop %v5684
    %v5791 = vmul.f32 %v5684, %v5790
    %v5792 = vsub.f32 1.0, %v5791
    %v5793 = vmul.f32 %v5790, %v5792
    %v5794 = vadd.f32 %v5790, %v5793
    %vm5795 = vweird.f32 %v5684
    %vm5796 = vweird.f32 %v5790
    %vm5797 = vmor %vm5795, %vm5796
    %v5798 = vsel %vm5797, %v5790, %v5794
    %v5799 = vand.u32 2147483647, %v5684
    %vm5800 = vcmp.eq.f32.partialorder %v5799, 8.507059e+37
    %v5801 = vand.u32 %v5684, 2147483648
    %v5802 = vor.u32 1.1754944e-38, %v5801
    %v5803 = vsel %vm5800, %v5802, %v5798
    %v5804 = vmul.f32 %v5646, %v5803
    %v5805 = vrcp.pop %v5687
    %v5806 = vmul.f32 %v5687, %v5805
    %v5807 = vsub.f32 1.0, %v5806
    %v5808 = vmul.f32 %v5805, %v5807
    %v5809 = vadd.f32 %v5805, %v5808
    %vm5810 = vweird.f32 %v5687
    %vm5811 = vweird.f32 %v5805
    %vm5812 = vmor %vm5810, %vm5811
    %v5813 = vsel %vm5812, %v5805, %v5809
    %v5814 = vand.u32 2147483647, %v5687
    %vm5815 = vcmp.eq.f32.partialorder %v5814, 8.507059e+37
    %v5816 = vand.u32 %v5687, 2147483648
    %v5817 = vor.u32 1.1754944e-38, %v5816
    %v5818 = vsel %vm5815, %v5817, %v5813
    %v5819 = vmul.f32 %v5648, %v5818
    %v5820 = vrcp.pop %v5690
    %v5821 = vmul.f32 %v5690, %v5820
    %v5822 = vsub.f32 1.0, %v5821
    %v5823 = vmul.f32 %v5820, %v5822
    %v5824 = vadd.f32 %v5820, %v5823
    %vm5825 = vweird.f32 %v5690
    %vm5826 = vweird.f32 %v5820
    %vm5827 = vmor %vm5825, %vm5826
    %v5828 = vsel %vm5827, %v5820, %v5824
    %v5829 = vand.u32 2147483647, %v5690
    %vm5830 = vcmp.eq.f32.partialorder %v5829, 8.507059e+37
    %v5831 = vand.u32 %v5690, 2147483648
    %v5832 = vor.u32 1.1754944e-38, %v5831
    %v5833 = vsel %vm5830, %v5832, %v5828
    %v5834 = vmul.f32 %v5650, %v5833
    %v5835 = vrcp.pop %v5693
    %v5836 = vmul.f32 %v5693, %v5835
    %v5837 = vsub.f32 1.0, %v5836
    %v5838 = vmul.f32 %v5835, %v5837
    %v5839 = vadd.f32 %v5835, %v5838
    %vm5840 = vweird.f32 %v5693
    %vm5841 = vweird.f32 %v5835
    %vm5842 = vmor %vm5840, %vm5841
    %v5843 = vsel %vm5842, %v5835, %v5839
    %v5844 = vand.u32 2147483647, %v5693
    %vm5845 = vcmp.eq.f32.partialorder %v5844, 8.507059e+37
    %v5846 = vand.u32 %v5693, 2147483648
    %v5847 = vor.u32 1.1754944e-38, %v5846
    %v5848 = vsel %vm5845, %v5847, %v5843
    %v5849 = vmul.f32 %v5652, %v5848
    %v5850 = vrcp.pop %v5696
    %v5851 = vmul.f32 %v5696, %v5850
    %v5852 = vsub.f32 1.0, %v5851
    %v5853 = vmul.f32 %v5850, %v5852
    %v5854 = vadd.f32 %v5850, %v5853
    %vm5855 = vweird.f32 %v5696
    %vm5856 = vweird.f32 %v5850
    %vm5857 = vmor %vm5855, %vm5856
    %v5858 = vsel %vm5857, %v5850, %v5854
    %v5859 = vand.u32 2147483647, %v5696
    %vm5860 = vcmp.eq.f32.partialorder %v5859, 8.507059e+37
    %v5861 = vand.u32 %v5696, 2147483648
    %v5862 = vor.u32 1.1754944e-38, %v5861
    %v5863 = vsel %vm5860, %v5862, %v5858
    %v5864 = vmul.f32 %v5654, %v5863
    %v5865 = vrcp.pop %v5699
    %v5866 = vmul.f32 %v5699, %v5865
    %v5867 = vsub.f32 1.0, %v5866
    %v5868 = vmul.f32 %v5865, %v5867
    %v5869 = vadd.f32 %v5865, %v5868
    %vm5870 = vweird.f32 %v5699
    %vm5871 = vweird.f32 %v5865
    %vm5872 = vmor %vm5870, %vm5871
    %v5873 = vsel %vm5872, %v5865, %v5869
    %v5874 = vand.u32 2147483647, %v5699
    %vm5875 = vcmp.eq.f32.partialorder %v5874, 8.507059e+37
    %v5876 = vand.u32 %v5699, 2147483648
    %v5877 = vor.u32 1.1754944e-38, %v5876
    %v5878 = vsel %vm5875, %v5877, %v5873
    %v5879 = vmul.f32 %v5656, %v5878
    %v5880 = vrcp.pop %v5702
    %v5881 = vmul.f32 %v5702, %v5880
    %v5882 = vsub.f32 1.0, %v5881
    %v5883 = vmul.f32 %v5880, %v5882
    %v5884 = vadd.f32 %v5880, %v5883
    %vm5885 = vweird.f32 %v5702
    %vm5886 = vweird.f32 %v5880
    %vm5887 = vmor %vm5885, %vm5886
    %v5888 = vsel %vm5887, %v5880, %v5884
    %v5889 = vand.u32 2147483647, %v5702
    %vm5890 = vcmp.eq.f32.partialorder %v5889, 8.507059e+37
    %v5891 = vand.u32 %v5702, 2147483648
    %v5892 = vor.u32 1.1754944e-38, %v5891
    %v5893 = vsel %vm5890, %v5892, %v5888
    %v5894 = vmul.f32 %v5658, %v5893
    %v5895 = vrcp.pop %v5705
    %v5896 = vmul.f32 %v5705, %v5895
    %v5897 = vsub.f32 1.0, %v5896
    %v5898 = vmul.f32 %v5895, %v5897
    %v5899 = vadd.f32 %v5895, %v5898
    %vm5900 = vweird.f32 %v5705
    %vm5901 = vweird.f32 %v5895
    %vm5902 = vmor %vm5900, %vm5901
    %v5903 = vsel %vm5902, %v5895, %v5899
    %v5904 = vand.u32 2147483647, %v5705
    %vm5905 = vcmp.eq.f32.partialorder %v5904, 8.507059e+37
    %v5906 = vand.u32 %v5705, 2147483648
    %v5907 = vor.u32 1.1754944e-38, %v5906
    %v5908 = vsel %vm5905, %v5907, %v5903
    %v5909 = vmul.f32 %v5660, %v5908
    %v5910 = vrcp.pop %v5708
    %v5911 = vmul.f32 %v5708, %v5910
    %v5912 = vsub.f32 1.0, %v5911
    %v5913 = vmul.f32 %v5910, %v5912
    %v5914 = vadd.f32 %v5910, %v5913
    %vm5915 = vweird.f32 %v5708
    %vm5916 = vweird.f32 %v5910
    %vm5917 = vmor %vm5915, %vm5916
    %v5918 = vsel %vm5917, %v5910, %v5914
    %v5919 = vand.u32 2147483647, %v5708
    %vm5920 = vcmp.eq.f32.partialorder %v5919, 8.507059e+37
    %v5921 = vand.u32 %v5708, 2147483648
    %v5922 = vor.u32 1.1754944e-38, %v5921
    %v5923 = vsel %vm5920, %v5922, %v5918
    %v5924 = vmul.f32 %v5662, %v5923
    %v5925 = vrcp.pop %v5711
    %v5926 = vmul.f32 %v5711, %v5925
    %v5927 = vsub.f32 1.0, %v5926
    %v5928 = vmul.f32 %v5925, %v5927
    %v5929 = vadd.f32 %v5925, %v5928
    %vm5930 = vweird.f32 %v5711
    %vm5931 = vweird.f32 %v5925
    %vm5932 = vmor %vm5930, %vm5931
    %v5933 = vsel %vm5932, %v5925, %v5929
    %v5934 = vand.u32 2147483647, %v5711
    %vm5935 = vcmp.eq.f32.partialorder %v5934, 8.507059e+37
    %v5936 = vand.u32 %v5711, 2147483648
    %v5937 = vor.u32 1.1754944e-38, %v5936
    %v5938 = vsel %vm5935, %v5937, %v5933
    %v5939 = vmul.f32 %v5664, %v5938
    %v5940 = vrcp.pop %v5714
    %v5941 = vmul.f32 %v5714, %v5940
    %v5942 = vsub.f32 1.0, %v5941
    %v5943 = vmul.f32 %v5940, %v5942
    %v5944 = vadd.f32 %v5940, %v5943
    %vm5945 = vweird.f32 %v5714
    %vm5946 = vweird.f32 %v5940
    %vm5947 = vmor %vm5945, %vm5946
    %v5948 = vsel %vm5947, %v5940, %v5944
    %v5949 = vand.u32 2147483647, %v5714
    %vm5950 = vcmp.eq.f32.partialorder %v5949, 8.507059e+37
    %v5951 = vand.u32 %v5714, 2147483648
    %v5952 = vor.u32 1.1754944e-38, %v5951
    %v5953 = vsel %vm5950, %v5952, %v5948
    %v5954 = vmul.f32 %v5666, %v5953
    %5955 = vrot.lane.b32.xlu0 %v5180, 64
    %v5956 = vpop.permute.xlu0 %5955
    %5957 = vrot.lane.b32.xlu0 %v5183, 64
    %v5958 = vpop.permute.xlu0 %5957
    %v5962 = vsel %vm1065, %v5729, 0
    %v5965 = vsel %vm1065, %v5744, 0
    %5967 = vmatpush.msra.mxu0 0.0
    %5968 = vmatpush.msra.mxu0 0.0
    %5969 = vmatpush.msra.mxu0 0.0
    %5970 = vmatpush.msra.mxu0 0.0
    %5971 = vmatpush.msra.mxu0 0.0
    %5972 = vmatpush.msra.mxu0 0.0
    %5973 = vmatpush.msra.mxu0 0.0
    %5974 = vmatpush.msra.mxu0 0.0
    %5975 = vmatpush.msra.mxu0 0.0
    %5976 = vmatpush.msra.mxu0 0.0
    %5977 = vmatpush.msra.mxu0 0.0
    %5978 = vmatpush.msra.mxu0 0.0
    %5979 = vmatpush.msra.mxu0 0.0
    %5980 = vmatpush.msra.mxu0 0.0
    %5981 = vmatpush.msra.mxu0 %v5958
    %5982 = vmatpush.msra.mxu0 %v5956
    %5983 = vmatmul.f32.gmra.mxu0 %v5962
    %v5984 = vpop.f32.mrf.mxu0
    %v5985 = vadd.f32 0.0, %v5984
    %5986 = vmatmul.f32.gmra.mxu0 %v5965
    %v5987 = vpop.f32.mrf.mxu0
    %v5988 = vadd.f32 0.0, %v5987
    %5989 = vdwg.mxu0
    %5990 = vrot.lane.b32.xlu0 %v5186, 64
    %v5991 = vpop.permute.xlu0 %5990
    %5992 = vrot.lane.b32.xlu0 %v5189, 64
    %v5993 = vpop.permute.xlu0 %5992
    %v5997 = vsel %vm1065, %v5759, 0
    %v6000 = vsel %vm1065, %v5774, 0
    %6002 = vmatpush.msra.mxu0 0.0
    %6003 = vmatpush.msra.mxu0 0.0
    %6004 = vmatpush.msra.mxu0 0.0
    %6005 = vmatpush.msra.mxu0 0.0
    %6006 = vmatpush.msra.mxu0 0.0
    %6007 = vmatpush.msra.mxu0 0.0
    %6008 = vmatpush.msra.mxu0 0.0
    %6009 = vmatpush.msra.mxu0 0.0
    %6010 = vmatpush.msra.mxu0 0.0
    %6011 = vmatpush.msra.mxu0 0.0
    %6012 = vmatpush.msra.mxu0 0.0
    %6013 = vmatpush.msra.mxu0 0.0
    %6014 = vmatpush.msra.mxu0 0.0
    %6015 = vmatpush.msra.mxu0 0.0
    %6016 = vmatpush.msra.mxu0 %v5993
    %6017 = vmatpush.msra.mxu0 %v5991
    %6018 = vmatmul.f32.gmra.mxu0 %v5997
    %v6019 = vpop.f32.mrf.mxu0
    %v6020 = vadd.f32 0.0, %v6019
    %6021 = vmatmul.f32.gmra.mxu0 %v6000
    %v6022 = vpop.f32.mrf.mxu0
    %v6023 = vadd.f32 0.0, %v6022
    %6024 = vdwg.mxu0
    %6025 = vrot.lane.b32.xlu0 %v5192, 64
    %v6026 = vpop.permute.xlu0 %6025
    %6027 = vrot.lane.b32.xlu0 %v5195, 64
    %v6028 = vpop.permute.xlu0 %6027
    %v6032 = vsel %vm1065, %v5789, 0
    %v6035 = vsel %vm1065, %v5804, 0
    %6037 = vmatpush.msra.mxu0 0.0
    %6038 = vmatpush.msra.mxu0 0.0
    %6039 = vmatpush.msra.mxu0 0.0
    %6040 = vmatpush.msra.mxu0 0.0
    %6041 = vmatpush.msra.mxu0 0.0
    %6042 = vmatpush.msra.mxu0 0.0
    %6043 = vmatpush.msra.mxu0 0.0
    %6044 = vmatpush.msra.mxu0 0.0
    %6045 = vmatpush.msra.mxu0 0.0
    %6046 = vmatpush.msra.mxu0 0.0
    %6047 = vmatpush.msra.mxu0 0.0
    %6048 = vmatpush.msra.mxu0 0.0
    %6049 = vmatpush.msra.mxu0 0.0
    %6050 = vmatpush.msra.mxu0 0.0
    %6051 = vmatpush.msra.mxu0 %v6028
    %6052 = vmatpush.msra.mxu0 %v6026
    %6053 = vmatmul.f32.gmra.mxu0 %v6032
    %v6054 = vpop.f32.mrf.mxu0
    %v6055 = vadd.f32 0.0, %v6054
    %6056 = vmatmul.f32.gmra.mxu0 %v6035
    %v6057 = vpop.f32.mrf.mxu0
    %v6058 = vadd.f32 0.0, %v6057
    %6059 = vdwg.mxu0
    %6060 = vrot.lane.b32.xlu0 %v5198, 64
    %v6061 = vpop.permute.xlu0 %6060
    %6062 = vrot.lane.b32.xlu0 %v5201, 64
    %v6063 = vpop.permute.xlu0 %6062
    %v6067 = vsel %vm1065, %v5819, 0
    %v6070 = vsel %vm1065, %v5834, 0
    %6072 = vmatpush.msra.mxu0 0.0
    %6073 = vmatpush.msra.mxu0 0.0
    %6074 = vmatpush.msra.mxu0 0.0
    %6075 = vmatpush.msra.mxu0 0.0
    %6076 = vmatpush.msra.mxu0 0.0
    %6077 = vmatpush.msra.mxu0 0.0
    %6078 = vmatpush.msra.mxu0 0.0
    %6079 = vmatpush.msra.mxu0 0.0
    %6080 = vmatpush.msra.mxu0 0.0
    %6081 = vmatpush.msra.mxu0 0.0
    %6082 = vmatpush.msra.mxu0 0.0
    %6083 = vmatpush.msra.mxu0 0.0
    %6084 = vmatpush.msra.mxu0 0.0
    %6085 = vmatpush.msra.mxu0 0.0
    %6086 = vmatpush.msra.mxu0 %v6063
    %6087 = vmatpush.msra.mxu0 %v6061
    %6088 = vmatmul.f32.gmra.mxu0 %v6067
    %v6089 = vpop.f32.mrf.mxu0
    %v6090 = vadd.f32 0.0, %v6089
    %6091 = vmatmul.f32.gmra.mxu0 %v6070
    %v6092 = vpop.f32.mrf.mxu0
    %v6093 = vadd.f32 0.0, %v6092
    %6094 = vdwg.mxu0
    %6095 = vrot.lane.b32.xlu0 %v5204, 64
    %v6096 = vpop.permute.xlu0 %6095
    %6097 = vrot.lane.b32.xlu0 %v5207, 64
    %v6098 = vpop.permute.xlu0 %6097
    %v6102 = vsel %vm1065, %v5849, 0
    %v6105 = vsel %vm1065, %v5864, 0
    %6107 = vmatpush.msra.mxu0 0.0
    %6108 = vmatpush.msra.mxu0 0.0
    %6109 = vmatpush.msra.mxu0 0.0
    %6110 = vmatpush.msra.mxu0 0.0
    %6111 = vmatpush.msra.mxu0 0.0
    %6112 = vmatpush.msra.mxu0 0.0
    %6113 = vmatpush.msra.mxu0 0.0
    %6114 = vmatpush.msra.mxu0 0.0
    %6115 = vmatpush.msra.mxu0 0.0
    %6116 = vmatpush.msra.mxu0 0.0
    %6117 = vmatpush.msra.mxu0 0.0
    %6118 = vmatpush.msra.mxu0 0.0
    %6119 = vmatpush.msra.mxu0 0.0
    %6120 = vmatpush.msra.mxu0 0.0
    %6121 = vmatpush.msra.mxu0 %v6098
    %6122 = vmatpush.msra.mxu0 %v6096
    %6123 = vmatmul.f32.gmra.mxu0 %v6102
    %v6124 = vpop.f32.mrf.mxu0
    %v6125 = vadd.f32 0.0, %v6124
    %6126 = vmatmul.f32.gmra.mxu0 %v6105
    %v6127 = vpop.f32.mrf.mxu0
    %v6128 = vadd.f32 0.0, %v6127
    %6129 = vdwg.mxu0
    %6130 = vrot.lane.b32.xlu0 %v5210, 64
    %v6131 = vpop.permute.xlu0 %6130
    %6132 = vrot.lane.b32.xlu0 %v5213, 64
    %v6133 = vpop.permute.xlu0 %6132
    %v6137 = vsel %vm1065, %v5879, 0
    %v6140 = vsel %vm1065, %v5894, 0
    %6142 = vmatpush.msra.mxu0 0.0
    %6143 = vmatpush.msra.mxu0 0.0
    %6144 = vmatpush.msra.mxu0 0.0
    %6145 = vmatpush.msra.mxu0 0.0
    %6146 = vmatpush.msra.mxu0 0.0
    %6147 = vmatpush.msra.mxu0 0.0
    %6148 = vmatpush.msra.mxu0 0.0
    %6149 = vmatpush.msra.mxu0 0.0
    %6150 = vmatpush.msra.mxu0 0.0
    %6151 = vmatpush.msra.mxu0 0.0
    %6152 = vmatpush.msra.mxu0 0.0
    %6153 = vmatpush.msra.mxu0 0.0
    %6154 = vmatpush.msra.mxu0 0.0
    %6155 = vmatpush.msra.mxu0 0.0
    %6156 = vmatpush.msra.mxu0 %v6133
    %6157 = vmatpush.msra.mxu0 %v6131
    %6158 = vmatmul.f32.gmra.mxu0 %v6137
    %v6159 = vpop.f32.mrf.mxu0
    %v6160 = vadd.f32 0.0, %v6159
    %6161 = vmatmul.f32.gmra.mxu0 %v6140
    %v6162 = vpop.f32.mrf.mxu0
    %v6163 = vadd.f32 0.0, %v6162
    %6164 = vdwg.mxu0
    %6165 = vrot.lane.b32.xlu0 %v5216, 64
    %v6166 = vpop.permute.xlu0 %6165
    %6167 = vrot.lane.b32.xlu0 %v5219, 64
    %v6168 = vpop.permute.xlu0 %6167
    %v6172 = vsel %vm1065, %v5909, 0
    %v6175 = vsel %vm1065, %v5924, 0
    %6177 = vmatpush.msra.mxu0 0.0
    %6178 = vmatpush.msra.mxu0 0.0
    %6179 = vmatpush.msra.mxu0 0.0
    %6180 = vmatpush.msra.mxu0 0.0
    %6181 = vmatpush.msra.mxu0 0.0
    %6182 = vmatpush.msra.mxu0 0.0
    %6183 = vmatpush.msra.mxu0 0.0
    %6184 = vmatpush.msra.mxu0 0.0
    %6185 = vmatpush.msra.mxu0 0.0
    %6186 = vmatpush.msra.mxu0 0.0
    %6187 = vmatpush.msra.mxu0 0.0
    %6188 = vmatpush.msra.mxu0 0.0
    %6189 = vmatpush.msra.mxu0 0.0
    %6190 = vmatpush.msra.mxu0 0.0
    %6191 = vmatpush.msra.mxu0 %v6168
    %6192 = vmatpush.msra.mxu0 %v6166
    %6193 = vmatmul.f32.gmra.mxu0 %v6172
    %v6194 = vpop.f32.mrf.mxu0
    %v6195 = vadd.f32 0.0, %v6194
    %6196 = vmatmul.f32.gmra.mxu0 %v6175
    %v6197 = vpop.f32.mrf.mxu0
    %v6198 = vadd.f32 0.0, %v6197
    %6199 = vdwg.mxu0
    %6200 = vrot.lane.b32.xlu0 %v5222, 64
    %v6201 = vpop.permute.xlu0 %6200
    %6202 = vrot.lane.b32.xlu0 %v5225, 64
    %v6203 = vpop.permute.xlu0 %6202
    %v6207 = vsel %vm1065, %v5939, 0
    %v6210 = vsel %vm1065, %v5954, 0
    %6212 = vmatpush.msra.mxu0 0.0
    %6213 = vmatpush.msra.mxu0 0.0
    %6214 = vmatpush.msra.mxu0 0.0
    %6215 = vmatpush.msra.mxu0 0.0
    %6216 = vmatpush.msra.mxu0 0.0
    %6217 = vmatpush.msra.mxu0 0.0
    %6218 = vmatpush.msra.mxu0 0.0
    %6219 = vmatpush.msra.mxu0 0.0
    %6220 = vmatpush.msra.mxu0 0.0
    %6221 = vmatpush.msra.mxu0 0.0
    %6222 = vmatpush.msra.mxu0 0.0
    %6223 = vmatpush.msra.mxu0 0.0
    %6224 = vmatpush.msra.mxu0 0.0
    %6225 = vmatpush.msra.mxu0 0.0
    %6226 = vmatpush.msra.mxu0 %v6203
    %6227 = vmatpush.msra.mxu0 %v6201
    %6228 = vmatmul.f32.gmra.mxu0 %v6207
    %v6229 = vpop.f32.mrf.mxu0
    %v6230 = vadd.f32 0.0, %v6229
    %6231 = vmatmul.f32.gmra.mxu0 %v6210
    %v6232 = vpop.f32.mrf.mxu0
    %v6233 = vadd.f32 0.0, %v6232
    %6234 = vdwg.mxu0
    %6235 = vrot.lane.b32.xlu0 %v5227, 112
    %v6236 = vpop.permute.xlu0 %6235
    %6237 = vrot.lane.b32.xlu0 %v5228, 112
    %v6238 = vpop.permute.xlu0 %6237
    %6239 = vrot.lane.b32.xlu0 %v5180, 80
    %v6240 = vpop.permute.xlu0 %6239
    %6241 = vrot.lane.b32.xlu0 %v5183, 80
    %v6242 = vpop.permute.xlu0 %6241
    %v6243 = vsel %vm1065, %v6236, 0
    %v6245 = vsel %vm1065, %v6238, 0
    %v6247 = vsel %vm1065, %v6240, 0
    %v6249 = vsel %vm1065, %v6242, 0
    %6251 = vmatpush.xpose.msra.mxu0 0.0
    %6252 = vmatpush.xpose.msra.mxu0 0.0
    %6253 = vmatpush.xpose.msra.mxu0 0.0
    %6254 = vmatpush.xpose.msra.mxu0 0.0
    %6255 = vmatpush.xpose.msra.mxu0 0.0
    %6256 = vmatpush.xpose.msra.mxu0 0.0
    %6257 = vmatpush.xpose.msra.mxu0 0.0
    %6258 = vmatpush.xpose.msra.mxu0 0.0
    %6259 = vmatpush.xpose.msra.mxu0 0.0
    %6260 = vmatpush.xpose.msra.mxu0 0.0
    %6261 = vmatpush.xpose.msra.mxu0 0.0
    %6262 = vmatpush.xpose.msra.mxu0 0.0
    %6263 = vmatpush.xpose.msra.mxu0 0.0
    %6264 = vmatpush.xpose.msra.mxu0 0.0
    %6265 = vmatpush.xpose.msra.mxu0 %v6249
    %6266 = vmatpush.xpose.msra.mxu0 %v6247
    %6267 = vmatmul.f32.gmra.mxu0 %v6243
    %v6268 = vpop.f32.mrf.mxu0
    %v6269 = vadd.f32 %v4593, %v6268
    %6270 = vmatmul.f32.gmra.mxu0 %v6245
    %v6271 = vpop.f32.mrf.mxu0
    %v6272 = vadd.f32 %v4594, %v6271
    %6273 = vdwg.mxu0
    %6274 = vrot.lane.b32.xlu0 %v5229, 112
    %v6275 = vpop.permute.xlu0 %6274
    %6276 = vrot.lane.b32.xlu0 %v5230, 112
    %v6277 = vpop.permute.xlu0 %6276
    %6278 = vrot.lane.b32.xlu0 %v5186, 80
    %v6279 = vpop.permute.xlu0 %6278
    %6280 = vrot.lane.b32.xlu0 %v5189, 80
    %v6281 = vpop.permute.xlu0 %6280
    %v6282 = vsel %vm1065, %v6275, 0
    %v6284 = vsel %vm1065, %v6277, 0
    %v6286 = vsel %vm1065, %v6279, 0
    %v6288 = vsel %vm1065, %v6281, 0
    %6290 = vmatpush.xpose.msra.mxu0 0.0
    %6291 = vmatpush.xpose.msra.mxu0 0.0
    %6292 = vmatpush.xpose.msra.mxu0 0.0
    %6293 = vmatpush.xpose.msra.mxu0 0.0
    %6294 = vmatpush.xpose.msra.mxu0 0.0
    %6295 = vmatpush.xpose.msra.mxu0 0.0
    %6296 = vmatpush.xpose.msra.mxu0 0.0
    %6297 = vmatpush.xpose.msra.mxu0 0.0
    %6298 = vmatpush.xpose.msra.mxu0 0.0
    %6299 = vmatpush.xpose.msra.mxu0 0.0
    %6300 = vmatpush.xpose.msra.mxu0 0.0
    %6301 = vmatpush.xpose.msra.mxu0 0.0
    %6302 = vmatpush.xpose.msra.mxu0 0.0
    %6303 = vmatpush.xpose.msra.mxu0 0.0
    %6304 = vmatpush.xpose.msra.mxu0 %v6288
    %6305 = vmatpush.xpose.msra.mxu0 %v6286
    %6306 = vmatmul.f32.gmra.mxu0 %v6282
    %v6307 = vpop.f32.mrf.mxu0
    %v6308 = vadd.f32 %v4593, %v6307
    %6309 = vmatmul.f32.gmra.mxu0 %v6284
    %v6310 = vpop.f32.mrf.mxu0
    %v6311 = vadd.f32 %v4594, %v6310
    %6312 = vdwg.mxu0
    %6313 = vrot.lane.b32.xlu0 %v5231, 112
    %v6314 = vpop.permute.xlu0 %6313
    %6315 = vrot.lane.b32.xlu0 %v5232, 112
    %v6316 = vpop.permute.xlu0 %6315
    %6317 = vrot.lane.b32.xlu0 %v5192, 80
    %v6318 = vpop.permute.xlu0 %6317
    %6319 = vrot.lane.b32.xlu0 %v5195, 80
    %v6320 = vpop.permute.xlu0 %6319
    %v6321 = vsel %vm1065, %v6314, 0
    %v6323 = vsel %vm1065, %v6316, 0
    %v6325 = vsel %vm1065, %v6318, 0
    %v6327 = vsel %vm1065, %v6320, 0
    %6329 = vmatpush.xpose.msra.mxu0 0.0
    %6330 = vmatpush.xpose.msra.mxu0 0.0
    %6331 = vmatpush.xpose.msra.mxu0 0.0
    %6332 = vmatpush.xpose.msra.mxu0 0.0
    %6333 = vmatpush.xpose.msra.mxu0 0.0
    %6334 = vmatpush.xpose.msra.mxu0 0.0
    %6335 = vmatpush.xpose.msra.mxu0 0.0
    %6336 = vmatpush.xpose.msra.mxu0 0.0
    %6337 = vmatpush.xpose.msra.mxu0 0.0
    %6338 = vmatpush.xpose.msra.mxu0 0.0
    %6339 = vmatpush.xpose.msra.mxu0 0.0
    %6340 = vmatpush.xpose.msra.mxu0 0.0
    %6341 = vmatpush.xpose.msra.mxu0 0.0
    %6342 = vmatpush.xpose.msra.mxu0 0.0
    %6343 = vmatpush.xpose.msra.mxu0 %v6327
    %6344 = vmatpush.xpose.msra.mxu0 %v6325
    %6345 = vmatmul.f32.gmra.mxu0 %v6321
    %v6346 = vpop.f32.mrf.mxu0
    %v6347 = vadd.f32 %v4593, %v6346
    %6348 = vmatmul.f32.gmra.mxu0 %v6323
    %v6349 = vpop.f32.mrf.mxu0
    %v6350 = vadd.f32 %v4594, %v6349
    %6351 = vdwg.mxu0
    %6352 = vrot.lane.b32.xlu0 %v5233, 112
    %v6353 = vpop.permute.xlu0 %6352
    %6354 = vrot.lane.b32.xlu0 %v5234, 112
    %v6355 = vpop.permute.xlu0 %6354
    %6356 = vrot.lane.b32.xlu0 %v5198, 80
    %v6357 = vpop.permute.xlu0 %6356
    %6358 = vrot.lane.b32.xlu0 %v5201, 80
    %v6359 = vpop.permute.xlu0 %6358
    %v6360 = vsel %vm1065, %v6353, 0
    %v6362 = vsel %vm1065, %v6355, 0
    %v6364 = vsel %vm1065, %v6357, 0
    %v6366 = vsel %vm1065, %v6359, 0
    %6368 = vmatpush.xpose.msra.mxu0 0.0
    %6369 = vmatpush.xpose.msra.mxu0 0.0
    %6370 = vmatpush.xpose.msra.mxu0 0.0
    %6371 = vmatpush.xpose.msra.mxu0 0.0
    %6372 = vmatpush.xpose.msra.mxu0 0.0
    %6373 = vmatpush.xpose.msra.mxu0 0.0
    %6374 = vmatpush.xpose.msra.mxu0 0.0
    %6375 = vmatpush.xpose.msra.mxu0 0.0
    %6376 = vmatpush.xpose.msra.mxu0 0.0
    %6377 = vmatpush.xpose.msra.mxu0 0.0
    %6378 = vmatpush.xpose.msra.mxu0 0.0
    %6379 = vmatpush.xpose.msra.mxu0 0.0
    %6380 = vmatpush.xpose.msra.mxu0 0.0
    %6381 = vmatpush.xpose.msra.mxu0 0.0
    %6382 = vmatpush.xpose.msra.mxu0 %v6366
    %6383 = vmatpush.xpose.msra.mxu0 %v6364
    %6384 = vmatmul.f32.gmra.mxu0 %v6360
    %v6385 = vpop.f32.mrf.mxu0
    %v6386 = vadd.f32 %v4593, %v6385
    %6387 = vmatmul.f32.gmra.mxu0 %v6362
    %v6388 = vpop.f32.mrf.mxu0
    %v6389 = vadd.f32 %v4594, %v6388
    %6390 = vdwg.mxu0
    %6391 = vrot.lane.b32.xlu0 %v5235, 112
    %v6392 = vpop.permute.xlu0 %6391
    %6393 = vrot.lane.b32.xlu0 %v5236, 112
    %v6394 = vpop.permute.xlu0 %6393
    %6395 = vrot.lane.b32.xlu0 %v5204, 80
    %v6396 = vpop.permute.xlu0 %6395
    %6397 = vrot.lane.b32.xlu0 %v5207, 80
    %v6398 = vpop.permute.xlu0 %6397
    %v6399 = vsel %vm1065, %v6392, 0
    %v6401 = vsel %vm1065, %v6394, 0
    %v6403 = vsel %vm1065, %v6396, 0
    %v6405 = vsel %vm1065, %v6398, 0
    %6407 = vmatpush.xpose.msra.mxu0 0.0
    %6408 = vmatpush.xpose.msra.mxu0 0.0
    %6409 = vmatpush.xpose.msra.mxu0 0.0
    %6410 = vmatpush.xpose.msra.mxu0 0.0
    %6411 = vmatpush.xpose.msra.mxu0 0.0
    %6412 = vmatpush.xpose.msra.mxu0 0.0
    %6413 = vmatpush.xpose.msra.mxu0 0.0
    %6414 = vmatpush.xpose.msra.mxu0 0.0
    %6415 = vmatpush.xpose.msra.mxu0 0.0
    %6416 = vmatpush.xpose.msra.mxu0 0.0
    %6417 = vmatpush.xpose.msra.mxu0 0.0
    %6418 = vmatpush.xpose.msra.mxu0 0.0
    %6419 = vmatpush.xpose.msra.mxu0 0.0
    %6420 = vmatpush.xpose.msra.mxu0 0.0
    %6421 = vmatpush.xpose.msra.mxu0 %v6405
    %6422 = vmatpush.xpose.msra.mxu0 %v6403
    %6423 = vmatmul.f32.gmra.mxu0 %v6399
    %v6424 = vpop.f32.mrf.mxu0
    %v6425 = vadd.f32 %v4593, %v6424
    %6426 = vmatmul.f32.gmra.mxu0 %v6401
    %v6427 = vpop.f32.mrf.mxu0
    %v6428 = vadd.f32 %v4594, %v6427
    %6429 = vdwg.mxu0
    %6430 = vrot.lane.b32.xlu0 %v5237, 112
    %v6431 = vpop.permute.xlu0 %6430
    %6432 = vrot.lane.b32.xlu0 %v5238, 112
    %v6433 = vpop.permute.xlu0 %6432
    %6434 = vrot.lane.b32.xlu0 %v5210, 80
    %v6435 = vpop.permute.xlu0 %6434
    %6436 = vrot.lane.b32.xlu0 %v5213, 80
    %v6437 = vpop.permute.xlu0 %6436
    %v6438 = vsel %vm1065, %v6431, 0
    %v6440 = vsel %vm1065, %v6433, 0
    %v6442 = vsel %vm1065, %v6435, 0
    %v6444 = vsel %vm1065, %v6437, 0
    %6446 = vmatpush.xpose.msra.mxu0 0.0
    %6447 = vmatpush.xpose.msra.mxu0 0.0
    %6448 = vmatpush.xpose.msra.mxu0 0.0
    %6449 = vmatpush.xpose.msra.mxu0 0.0
    %6450 = vmatpush.xpose.msra.mxu0 0.0
    %6451 = vmatpush.xpose.msra.mxu0 0.0
    %6452 = vmatpush.xpose.msra.mxu0 0.0
    %6453 = vmatpush.xpose.msra.mxu0 0.0
    %6454 = vmatpush.xpose.msra.mxu0 0.0
    %6455 = vmatpush.xpose.msra.mxu0 0.0
    %6456 = vmatpush.xpose.msra.mxu0 0.0
    %6457 = vmatpush.xpose.msra.mxu0 0.0
    %6458 = vmatpush.xpose.msra.mxu0 0.0
    %6459 = vmatpush.xpose.msra.mxu0 0.0
    %6460 = vmatpush.xpose.msra.mxu0 %v6444
    %6461 = vmatpush.xpose.msra.mxu0 %v6442
    %6462 = vmatmul.f32.gmra.mxu0 %v6438
    %v6463 = vpop.f32.mrf.mxu0
    %v6464 = vadd.f32 %v4593, %v6463
    %6465 = vmatmul.f32.gmra.mxu0 %v6440
    %v6466 = vpop.f32.mrf.mxu0
    %v6467 = vadd.f32 %v4594, %v6466
    %6468 = vdwg.mxu0
    %6469 = vrot.lane.b32.xlu0 %v5239, 112
    %v6470 = vpop.permute.xlu0 %6469
    %6471 = vrot.lane.b32.xlu0 %v5240, 112
    %v6472 = vpop.permute.xlu0 %6471
    %6473 = vrot.lane.b32.xlu0 %v5216, 80
    %v6474 = vpop.permute.xlu0 %6473
    %6475 = vrot.lane.b32.xlu0 %v5219, 80
    %v6476 = vpop.permute.xlu0 %6475
    %v6477 = vsel %vm1065, %v6470, 0
    %v6479 = vsel %vm1065, %v6472, 0
    %v6481 = vsel %vm1065, %v6474, 0
    %v6483 = vsel %vm1065, %v6476, 0
    %6485 = vmatpush.xpose.msra.mxu0 0.0
    %6486 = vmatpush.xpose.msra.mxu0 0.0
    %6487 = vmatpush.xpose.msra.mxu0 0.0
    %6488 = vmatpush.xpose.msra.mxu0 0.0
    %6489 = vmatpush.xpose.msra.mxu0 0.0
    %6490 = vmatpush.xpose.msra.mxu0 0.0
    %6491 = vmatpush.xpose.msra.mxu0 0.0
    %6492 = vmatpush.xpose.msra.mxu0 0.0
    %6493 = vmatpush.xpose.msra.mxu0 0.0
    %6494 = vmatpush.xpose.msra.mxu0 0.0
    %6495 = vmatpush.xpose.msra.mxu0 0.0
    %6496 = vmatpush.xpose.msra.mxu0 0.0
    %6497 = vmatpush.xpose.msra.mxu0 0.0
    %6498 = vmatpush.xpose.msra.mxu0 0.0
    %6499 = vmatpush.xpose.msra.mxu0 %v6483
    %6500 = vmatpush.xpose.msra.mxu0 %v6481
    %6501 = vmatmul.f32.gmra.mxu0 %v6477
    %v6502 = vpop.f32.mrf.mxu0
    %v6503 = vadd.f32 %v4593, %v6502
    %6504 = vmatmul.f32.gmra.mxu0 %v6479
    %v6505 = vpop.f32.mrf.mxu0
    %v6506 = vadd.f32 %v4594, %v6505
    %6507 = vdwg.mxu0
    %6508 = vrot.lane.b32.xlu0 %v5241, 112
    %v6509 = vpop.permute.xlu0 %6508
    %6510 = vrot.lane.b32.xlu0 %v5242, 112
    %v6511 = vpop.permute.xlu0 %6510
    %6512 = vrot.lane.b32.xlu0 %v5222, 80
    %v6513 = vpop.permute.xlu0 %6512
    %6514 = vrot.lane.b32.xlu0 %v5225, 80
    %v6515 = vpop.permute.xlu0 %6514
    %v6516 = vsel %vm1065, %v6509, 0
    %v6518 = vsel %vm1065, %v6511, 0
    %v6520 = vsel %vm1065, %v6513, 0
    %v6522 = vsel %vm1065, %v6515, 0
    %6524 = vmatpush.xpose.msra.mxu0 0.0
    %6525 = vmatpush.xpose.msra.mxu0 0.0
    %6526 = vmatpush.xpose.msra.mxu0 0.0
    %6527 = vmatpush.xpose.msra.mxu0 0.0
    %6528 = vmatpush.xpose.msra.mxu0 0.0
    %6529 = vmatpush.xpose.msra.mxu0 0.0
    %6530 = vmatpush.xpose.msra.mxu0 0.0
    %6531 = vmatpush.xpose.msra.mxu0 0.0
    %6532 = vmatpush.xpose.msra.mxu0 0.0
    %6533 = vmatpush.xpose.msra.mxu0 0.0
    %6534 = vmatpush.xpose.msra.mxu0 0.0
    %6535 = vmatpush.xpose.msra.mxu0 0.0
    %6536 = vmatpush.xpose.msra.mxu0 0.0
    %6537 = vmatpush.xpose.msra.mxu0 0.0
    %6538 = vmatpush.xpose.msra.mxu0 %v6522
    %6539 = vmatpush.xpose.msra.mxu0 %v6520
    %6540 = vmatmul.f32.gmra.mxu0 %v6516
    %v6541 = vpop.f32.mrf.mxu0
    %v6542 = vadd.f32 %v4593, %v6541
    %6543 = vmatmul.f32.gmra.mxu0 %v6518
    %v6544 = vpop.f32.mrf.mxu0
    %v6545 = vadd.f32 %v4594, %v6544
    %6546 = vdwg.mxu0
    %v6547 = vadd.f32 %v6269, %v376
    %v6548 = vadd.f32 %v6272, %v377
    %v6549 = vadd.f32 %v6308, %v378
    %v6550 = vadd.f32 %v6311, %v379
    %v6551 = vadd.f32 %v6347, %v380
    %v6552 = vadd.f32 %v6350, %v381
    %v6553 = vadd.f32 %v6386, %v382
    %v6554 = vadd.f32 %v6389, %v383
    %v6555 = vadd.f32 %v6425, %v384
    %v6556 = vadd.f32 %v6428, %v385
    %v6557 = vadd.f32 %v6464, %v386
    %v6558 = vadd.f32 %v6467, %v387
    %v6559 = vadd.f32 %v6503, %v388
    %v6560 = vadd.f32 %v6506, %v389
    %v6561 = vadd.f32 %v6542, %v390
    %v6562 = vadd.f32 %v6545, %v391
    %v6563 = vsel %vm1065, %v6547, -inf
    %6564 = vmax.xlane.f32.xlu0 %v6563
    %v6565 = vpop.xlane.xlu0 %6564
    %v6566 = vsel %vm1065, %v6548, -inf
    %6567 = vmax.xlane.f32.xlu0 %v6566
    %v6568 = vpop.xlane.xlu0 %6567
    %v6569 = vsel %vm1065, %v6549, -inf
    %6570 = vmax.xlane.f32.xlu0 %v6569
    %v6571 = vpop.xlane.xlu0 %6570
    %v6572 = vsel %vm1065, %v6550, -inf
    %6573 = vmax.xlane.f32.xlu0 %v6572
    %v6574 = vpop.xlane.xlu0 %6573
    %v6575 = vsel %vm1065, %v6551, -inf
    %6576 = vmax.xlane.f32.xlu0 %v6575
    %v6577 = vpop.xlane.xlu0 %6576
    %v6578 = vsel %vm1065, %v6552, -inf
    %6579 = vmax.xlane.f32.xlu0 %v6578
    %v6580 = vpop.xlane.xlu0 %6579
    %v6581 = vsel %vm1065, %v6553, -inf
    %6582 = vmax.xlane.f32.xlu0 %v6581
    %v6583 = vpop.xlane.xlu0 %6582
    %v6584 = vsel %vm1065, %v6554, -inf
    %6585 = vmax.xlane.f32.xlu0 %v6584
    %v6586 = vpop.xlane.xlu0 %6585
    %v6587 = vsel %vm1065, %v6555, -inf
    %6588 = vmax.xlane.f32.xlu0 %v6587
    %v6589 = vpop.xlane.xlu0 %6588
    %v6590 = vsel %vm1065, %v6556, -inf
    %6591 = vmax.xlane.f32.xlu0 %v6590
    %v6592 = vpop.xlane.xlu0 %6591
    %v6593 = vsel %vm1065, %v6557, -inf
    %6594 = vmax.xlane.f32.xlu0 %v6593
    %v6595 = vpop.xlane.xlu0 %6594
    %v6596 = vsel %vm1065, %v6558, -inf
    %6597 = vmax.xlane.f32.xlu0 %v6596
    %v6598 = vpop.xlane.xlu0 %6597
    %v6599 = vsel %vm1065, %v6559, -inf
    %6600 = vmax.xlane.f32.xlu0 %v6599
    %v6601 = vpop.xlane.xlu0 %6600
    %v6602 = vsel %vm1065, %v6560, -inf
    %6603 = vmax.xlane.f32.xlu0 %v6602
    %v6604 = vpop.xlane.xlu0 %6603
    %v6605 = vsel %vm1065, %v6561, -inf
    %6606 = vmax.xlane.f32.xlu0 %v6605
    %v6607 = vpop.xlane.xlu0 %6606
    %v6608 = vsel %vm1065, %v6562, -inf
    %6609 = vmax.xlane.f32.xlu0 %v6608
    %v6610 = vpop.xlane.xlu0 %6609
    %v6611 = vsub.f32 %v6547, %v6565
    %v6612 = vsub.f32 %v6548, %v6568
    %v6613 = vsub.f32 %v6549, %v6571
    %v6614 = vsub.f32 %v6550, %v6574
    %v6615 = vsub.f32 %v6551, %v6577
    %v6616 = vsub.f32 %v6552, %v6580
    %v6617 = vsub.f32 %v6553, %v6583
    %v6618 = vsub.f32 %v6554, %v6586
    %v6619 = vsub.f32 %v6555, %v6589
    %v6620 = vsub.f32 %v6556, %v6592
    %v6621 = vsub.f32 %v6557, %v6595
    %v6622 = vsub.f32 %v6558, %v6598
    %v6623 = vsub.f32 %v6559, %v6601
    %v6624 = vsub.f32 %v6560, %v6604
    %v6625 = vsub.f32 %v6561, %v6607
    %v6626 = vsub.f32 %v6562, %v6610
    %v6627 = vmul.f32 %v6611, 1.442695
    %v6628 = vpow.pop %v6627
    %v6629 = vmul.f32 %v6612, 1.442695
    %v6630 = vpow.pop %v6629
    %v6631 = vmul.f32 %v6613, 1.442695
    %v6632 = vpow.pop %v6631
    %v6633 = vmul.f32 %v6614, 1.442695
    %v6634 = vpow.pop %v6633
    %v6635 = vmul.f32 %v6615, 1.442695
    %v6636 = vpow.pop %v6635
    %v6637 = vmul.f32 %v6616, 1.442695
    %v6638 = vpow.pop %v6637
    %v6639 = vmul.f32 %v6617, 1.442695
    %v6640 = vpow.pop %v6639
    %v6641 = vmul.f32 %v6618, 1.442695
    %v6642 = vpow.pop %v6641
    %v6643 = vmul.f32 %v6619, 1.442695
    %v6644 = vpow.pop %v6643
    %v6645 = vmul.f32 %v6620, 1.442695
    %v6646 = vpow.pop %v6645
    %v6647 = vmul.f32 %v6621, 1.442695
    %v6648 = vpow.pop %v6647
    %v6649 = vmul.f32 %v6622, 1.442695
    %v6650 = vpow.pop %v6649
    %v6651 = vmul.f32 %v6623, 1.442695
    %v6652 = vpow.pop %v6651
    %v6653 = vmul.f32 %v6624, 1.442695
    %v6654 = vpow.pop %v6653
    %v6655 = vmul.f32 %v6625, 1.442695
    %v6656 = vpow.pop %v6655
    %v6657 = vmul.f32 %v6626, 1.442695
    %v6658 = vpow.pop %v6657
    %v6659 = vsel %vm1065, %v6628, 0.0
    %6660 = vadd.xlane.f32.xlu0 %v6659
    %v6661 = vpop.xlane.xlu0 %6660
    %v6662 = vsel %vm1065, %v6630, 0.0
    %6663 = vadd.xlane.f32.xlu0 %v6662
    %v6664 = vpop.xlane.xlu0 %6663
    %v6665 = vsel %vm1065, %v6632, 0.0
    %6666 = vadd.xlane.f32.xlu0 %v6665
    %v6667 = vpop.xlane.xlu0 %6666
    %v6668 = vsel %vm1065, %v6634, 0.0
    %6669 = vadd.xlane.f32.xlu0 %v6668
    %v6670 = vpop.xlane.xlu0 %6669
    %v6671 = vsel %vm1065, %v6636, 0.0
    %6672 = vadd.xlane.f32.xlu0 %v6671
    %v6673 = vpop.xlane.xlu0 %6672
    %v6674 = vsel %vm1065, %v6638, 0.0
    %6675 = vadd.xlane.f32.xlu0 %v6674
    %v6676 = vpop.xlane.xlu0 %6675
    %v6677 = vsel %vm1065, %v6640, 0.0
    %6678 = vadd.xlane.f32.xlu0 %v6677
    %v6679 = vpop.xlane.xlu0 %6678
    %v6680 = vsel %vm1065, %v6642, 0.0
    %6681 = vadd.xlane.f32.xlu0 %v6680
    %v6682 = vpop.xlane.xlu0 %6681
    %v6683 = vsel %vm1065, %v6644, 0.0
    %6684 = vadd.xlane.f32.xlu0 %v6683
    %v6685 = vpop.xlane.xlu0 %6684
    %v6686 = vsel %vm1065, %v6646, 0.0
    %6687 = vadd.xlane.f32.xlu0 %v6686
    %v6688 = vpop.xlane.xlu0 %6687
    %v6689 = vsel %vm1065, %v6648, 0.0
    %6690 = vadd.xlane.f32.xlu0 %v6689
    %v6691 = vpop.xlane.xlu0 %6690
    %v6692 = vsel %vm1065, %v6650, 0.0
    %6693 = vadd.xlane.f32.xlu0 %v6692
    %v6694 = vpop.xlane.xlu0 %6693
    %v6695 = vsel %vm1065, %v6652, 0.0
    %6696 = vadd.xlane.f32.xlu0 %v6695
    %v6697 = vpop.xlane.xlu0 %6696
    %v6698 = vsel %vm1065, %v6654, 0.0
    %6699 = vadd.xlane.f32.xlu0 %v6698
    %v6700 = vpop.xlane.xlu0 %6699
    %v6701 = vsel %vm1065, %v6656, 0.0
    %6702 = vadd.xlane.f32.xlu0 %v6701
    %v6703 = vpop.xlane.xlu0 %6702
    %v6704 = vsel %vm1065, %v6658, 0.0
    %6705 = vadd.xlane.f32.xlu0 %v6704
    %v6706 = vpop.xlane.xlu0 %6705
    %v6707 = vrcp.pop %v6661
    %v6708 = vmul.f32 %v6661, %v6707
    %v6709 = vsub.f32 1.0, %v6708
    %v6710 = vmul.f32 %v6707, %v6709
    %v6711 = vadd.f32 %v6707, %v6710
    %vm6712 = vweird.f32 %v6661
    %vm6713 = vweird.f32 %v6707
    %vm6714 = vmor %vm6712, %vm6713
    %v6715 = vsel %vm6714, %v6707, %v6711
    %v6716 = vand.u32 2147483647, %v6661
    %vm6717 = vcmp.eq.f32.partialorder %v6716, 8.507059e+37
    %v6718 = vand.u32 %v6661, 2147483648
    %v6719 = vor.u32 1.1754944e-38, %v6718
    %v6720 = vsel %vm6717, %v6719, %v6715
    %v6721 = vmul.f32 %v6628, %v6720
    %v6722 = vrcp.pop %v6664
    %v6723 = vmul.f32 %v6664, %v6722
    %v6724 = vsub.f32 1.0, %v6723
    %v6725 = vmul.f32 %v6722, %v6724
    %v6726 = vadd.f32 %v6722, %v6725
    %vm6727 = vweird.f32 %v6664
    %vm6728 = vweird.f32 %v6722
    %vm6729 = vmor %vm6727, %vm6728
    %v6730 = vsel %vm6729, %v6722, %v6726
    %v6731 = vand.u32 2147483647, %v6664
    %vm6732 = vcmp.eq.f32.partialorder %v6731, 8.507059e+37
    %v6733 = vand.u32 %v6664, 2147483648
    %v6734 = vor.u32 1.1754944e-38, %v6733
    %v6735 = vsel %vm6732, %v6734, %v6730
    %v6736 = vmul.f32 %v6630, %v6735
    %v6737 = vrcp.pop %v6667
    %v6738 = vmul.f32 %v6667, %v6737
    %v6739 = vsub.f32 1.0, %v6738
    %v6740 = vmul.f32 %v6737, %v6739
    %v6741 = vadd.f32 %v6737, %v6740
    %vm6742 = vweird.f32 %v6667
    %vm6743 = vweird.f32 %v6737
    %vm6744 = vmor %vm6742, %vm6743
    %v6745 = vsel %vm6744, %v6737, %v6741
    %v6746 = vand.u32 2147483647, %v6667
    %vm6747 = vcmp.eq.f32.partialorder %v6746, 8.507059e+37
    %v6748 = vand.u32 %v6667, 2147483648
    %v6749 = vor.u32 1.1754944e-38, %v6748
    %v6750 = vsel %vm6747, %v6749, %v6745
    %v6751 = vmul.f32 %v6632, %v6750
    %v6752 = vrcp.pop %v6670
    %v6753 = vmul.f32 %v6670, %v6752
    %v6754 = vsub.f32 1.0, %v6753
    %v6755 = vmul.f32 %v6752, %v6754
    %v6756 = vadd.f32 %v6752, %v6755
    %vm6757 = vweird.f32 %v6670
    %vm6758 = vweird.f32 %v6752
    %vm6759 = vmor %vm6757, %vm6758
    %v6760 = vsel %vm6759, %v6752, %v6756
    %v6761 = vand.u32 2147483647, %v6670
    %vm6762 = vcmp.eq.f32.partialorder %v6761, 8.507059e+37
    %v6763 = vand.u32 %v6670, 2147483648
    %v6764 = vor.u32 1.1754944e-38, %v6763
    %v6765 = vsel %vm6762, %v6764, %v6760
    %v6766 = vmul.f32 %v6634, %v6765
    %v6767 = vrcp.pop %v6673
    %v6768 = vmul.f32 %v6673, %v6767
    %v6769 = vsub.f32 1.0, %v6768
    %v6770 = vmul.f32 %v6767, %v6769
    %v6771 = vadd.f32 %v6767, %v6770
    %vm6772 = vweird.f32 %v6673
    %vm6773 = vweird.f32 %v6767
    %vm6774 = vmor %vm6772, %vm6773
    %v6775 = vsel %vm6774, %v6767, %v6771
    %v6776 = vand.u32 2147483647, %v6673
    %vm6777 = vcmp.eq.f32.partialorder %v6776, 8.507059e+37
    %v6778 = vand.u32 %v6673, 2147483648
    %v6779 = vor.u32 1.1754944e-38, %v6778
    %v6780 = vsel %vm6777, %v6779, %v6775
    %v6781 = vmul.f32 %v6636, %v6780
    %v6782 = vrcp.pop %v6676
    %v6783 = vmul.f32 %v6676, %v6782
    %v6784 = vsub.f32 1.0, %v6783
    %v6785 = vmul.f32 %v6782, %v6784
    %v6786 = vadd.f32 %v6782, %v6785
    %vm6787 = vweird.f32 %v6676
    %vm6788 = vweird.f32 %v6782
    %vm6789 = vmor %vm6787, %vm6788
    %v6790 = vsel %vm6789, %v6782, %v6786
    %v6791 = vand.u32 2147483647, %v6676
    %vm6792 = vcmp.eq.f32.partialorder %v6791, 8.507059e+37
    %v6793 = vand.u32 %v6676, 2147483648
    %v6794 = vor.u32 1.1754944e-38, %v6793
    %v6795 = vsel %vm6792, %v6794, %v6790
    %v6796 = vmul.f32 %v6638, %v6795
    %v6797 = vrcp.pop %v6679
    %v6798 = vmul.f32 %v6679, %v6797
    %v6799 = vsub.f32 1.0, %v6798
    %v6800 = vmul.f32 %v6797, %v6799
    %v6801 = vadd.f32 %v6797, %v6800
    %vm6802 = vweird.f32 %v6679
    %vm6803 = vweird.f32 %v6797
    %vm6804 = vmor %vm6802, %vm6803
    %v6805 = vsel %vm6804, %v6797, %v6801
    %v6806 = vand.u32 2147483647, %v6679
    %vm6807 = vcmp.eq.f32.partialorder %v6806, 8.507059e+37
    %v6808 = vand.u32 %v6679, 2147483648
    %v6809 = vor.u32 1.1754944e-38, %v6808
    %v6810 = vsel %vm6807, %v6809, %v6805
    %v6811 = vmul.f32 %v6640, %v6810
    %v6812 = vrcp.pop %v6682
    %v6813 = vmul.f32 %v6682, %v6812
    %v6814 = vsub.f32 1.0, %v6813
    %v6815 = vmul.f32 %v6812, %v6814
    %v6816 = vadd.f32 %v6812, %v6815
    %vm6817 = vweird.f32 %v6682
    %vm6818 = vweird.f32 %v6812
    %vm6819 = vmor %vm6817, %vm6818
    %v6820 = vsel %vm6819, %v6812, %v6816
    %v6821 = vand.u32 2147483647, %v6682
    %vm6822 = vcmp.eq.f32.partialorder %v6821, 8.507059e+37
    %v6823 = vand.u32 %v6682, 2147483648
    %v6824 = vor.u32 1.1754944e-38, %v6823
    %v6825 = vsel %vm6822, %v6824, %v6820
    %v6826 = vmul.f32 %v6642, %v6825
    %v6827 = vrcp.pop %v6685
    %v6828 = vmul.f32 %v6685, %v6827
    %v6829 = vsub.f32 1.0, %v6828
    %v6830 = vmul.f32 %v6827, %v6829
    %v6831 = vadd.f32 %v6827, %v6830
    %vm6832 = vweird.f32 %v6685
    %vm6833 = vweird.f32 %v6827
    %vm6834 = vmor %vm6832, %vm6833
    %v6835 = vsel %vm6834, %v6827, %v6831
    %v6836 = vand.u32 2147483647, %v6685
    %vm6837 = vcmp.eq.f32.partialorder %v6836, 8.507059e+37
    %v6838 = vand.u32 %v6685, 2147483648
    %v6839 = vor.u32 1.1754944e-38, %v6838
    %v6840 = vsel %vm6837, %v6839, %v6835
    %v6841 = vmul.f32 %v6644, %v6840
    %v6842 = vrcp.pop %v6688
    %v6843 = vmul.f32 %v6688, %v6842
    %v6844 = vsub.f32 1.0, %v6843
    %v6845 = vmul.f32 %v6842, %v6844
    %v6846 = vadd.f32 %v6842, %v6845
    %vm6847 = vweird.f32 %v6688
    %vm6848 = vweird.f32 %v6842
    %vm6849 = vmor %vm6847, %vm6848
    %v6850 = vsel %vm6849, %v6842, %v6846
    %v6851 = vand.u32 2147483647, %v6688
    %vm6852 = vcmp.eq.f32.partialorder %v6851, 8.507059e+37
    %v6853 = vand.u32 %v6688, 2147483648
    %v6854 = vor.u32 1.1754944e-38, %v6853
    %v6855 = vsel %vm6852, %v6854, %v6850
    %v6856 = vmul.f32 %v6646, %v6855
    %v6857 = vrcp.pop %v6691
    %v6858 = vmul.f32 %v6691, %v6857
    %v6859 = vsub.f32 1.0, %v6858
    %v6860 = vmul.f32 %v6857, %v6859
    %v6861 = vadd.f32 %v6857, %v6860
    %vm6862 = vweird.f32 %v6691
    %vm6863 = vweird.f32 %v6857
    %vm6864 = vmor %vm6862, %vm6863
    %v6865 = vsel %vm6864, %v6857, %v6861
    %v6866 = vand.u32 2147483647, %v6691
    %vm6867 = vcmp.eq.f32.partialorder %v6866, 8.507059e+37
    %v6868 = vand.u32 %v6691, 2147483648
    %v6869 = vor.u32 1.1754944e-38, %v6868
    %v6870 = vsel %vm6867, %v6869, %v6865
    %v6871 = vmul.f32 %v6648, %v6870
    %v6872 = vrcp.pop %v6694
    %v6873 = vmul.f32 %v6694, %v6872
    %v6874 = vsub.f32 1.0, %v6873
    %v6875 = vmul.f32 %v6872, %v6874
    %v6876 = vadd.f32 %v6872, %v6875
    %vm6877 = vweird.f32 %v6694
    %vm6878 = vweird.f32 %v6872
    %vm6879 = vmor %vm6877, %vm6878
    %v6880 = vsel %vm6879, %v6872, %v6876
    %v6881 = vand.u32 2147483647, %v6694
    %vm6882 = vcmp.eq.f32.partialorder %v6881, 8.507059e+37
    %v6883 = vand.u32 %v6694, 2147483648
    %v6884 = vor.u32 1.1754944e-38, %v6883
    %v6885 = vsel %vm6882, %v6884, %v6880
    %v6886 = vmul.f32 %v6650, %v6885
    %v6887 = vrcp.pop %v6697
    %v6888 = vmul.f32 %v6697, %v6887
    %v6889 = vsub.f32 1.0, %v6888
    %v6890 = vmul.f32 %v6887, %v6889
    %v6891 = vadd.f32 %v6887, %v6890
    %vm6892 = vweird.f32 %v6697
    %vm6893 = vweird.f32 %v6887
    %vm6894 = vmor %vm6892, %vm6893
    %v6895 = vsel %vm6894, %v6887, %v6891
    %v6896 = vand.u32 2147483647, %v6697
    %vm6897 = vcmp.eq.f32.partialorder %v6896, 8.507059e+37
    %v6898 = vand.u32 %v6697, 2147483648
    %v6899 = vor.u32 1.1754944e-38, %v6898
    %v6900 = vsel %vm6897, %v6899, %v6895
    %v6901 = vmul.f32 %v6652, %v6900
    %v6902 = vrcp.pop %v6700
    %v6903 = vmul.f32 %v6700, %v6902
    %v6904 = vsub.f32 1.0, %v6903
    %v6905 = vmul.f32 %v6902, %v6904
    %v6906 = vadd.f32 %v6902, %v6905
    %vm6907 = vweird.f32 %v6700
    %vm6908 = vweird.f32 %v6902
    %vm6909 = vmor %vm6907, %vm6908
    %v6910 = vsel %vm6909, %v6902, %v6906
    %v6911 = vand.u32 2147483647, %v6700
    %vm6912 = vcmp.eq.f32.partialorder %v6911, 8.507059e+37
    %v6913 = vand.u32 %v6700, 2147483648
    %v6914 = vor.u32 1.1754944e-38, %v6913
    %v6915 = vsel %vm6912, %v6914, %v6910
    %v6916 = vmul.f32 %v6654, %v6915
    %v6917 = vrcp.pop %v6703
    %v6918 = vmul.f32 %v6703, %v6917
    %v6919 = vsub.f32 1.0, %v6918
    %v6920 = vmul.f32 %v6917, %v6919
    %v6921 = vadd.f32 %v6917, %v6920
    %vm6922 = vweird.f32 %v6703
    %vm6923 = vweird.f32 %v6917
    %vm6924 = vmor %vm6922, %vm6923
    %v6925 = vsel %vm6924, %v6917, %v6921
    %v6926 = vand.u32 2147483647, %v6703
    %vm6927 = vcmp.eq.f32.partialorder %v6926, 8.507059e+37
    %v6928 = vand.u32 %v6703, 2147483648
    %v6929 = vor.u32 1.1754944e-38, %v6928
    %v6930 = vsel %vm6927, %v6929, %v6925
    %v6931 = vmul.f32 %v6656, %v6930
    %v6932 = vrcp.pop %v6706
    %v6933 = vmul.f32 %v6706, %v6932
    %v6934 = vsub.f32 1.0, %v6933
    %v6935 = vmul.f32 %v6932, %v6934
    %v6936 = vadd.f32 %v6932, %v6935
    %vm6937 = vweird.f32 %v6706
    %vm6938 = vweird.f32 %v6932
    %vm6939 = vmor %vm6937, %vm6938
    %v6940 = vsel %vm6939, %v6932, %v6936
    %v6941 = vand.u32 2147483647, %v6706
    %vm6942 = vcmp.eq.f32.partialorder %v6941, 8.507059e+37
    %v6943 = vand.u32 %v6706, 2147483648
    %v6944 = vor.u32 1.1754944e-38, %v6943
    %v6945 = vsel %vm6942, %v6944, %v6940
    %v6946 = vmul.f32 %v6658, %v6945
    %6947 = vrot.lane.b32.xlu0 %v5180, 48
    %v6948 = vpop.permute.xlu0 %6947
    %6949 = vrot.lane.b32.xlu0 %v5183, 48
    %v6950 = vpop.permute.xlu0 %6949
    %v6954 = vsel %vm1065, %v6721, 0
    %v6957 = vsel %vm1065, %v6736, 0
    %6959 = vmatpush.msra.mxu0 0.0
    %6960 = vmatpush.msra.mxu0 0.0
    %6961 = vmatpush.msra.mxu0 0.0
    %6962 = vmatpush.msra.mxu0 0.0
    %6963 = vmatpush.msra.mxu0 0.0
    %6964 = vmatpush.msra.mxu0 0.0
    %6965 = vmatpush.msra.mxu0 0.0
    %6966 = vmatpush.msra.mxu0 0.0
    %6967 = vmatpush.msra.mxu0 0.0
    %6968 = vmatpush.msra.mxu0 0.0
    %6969 = vmatpush.msra.mxu0 0.0
    %6970 = vmatpush.msra.mxu0 0.0
    %6971 = vmatpush.msra.mxu0 0.0
    %6972 = vmatpush.msra.mxu0 0.0
    %6973 = vmatpush.msra.mxu0 %v6950
    %6974 = vmatpush.msra.mxu0 %v6948
    %6975 = vmatmul.f32.gmra.mxu0 %v6954
    %v6976 = vpop.f32.mrf.mxu0
    %v6977 = vadd.f32 0.0, %v6976
    %6978 = vmatmul.f32.gmra.mxu0 %v6957
    %v6979 = vpop.f32.mrf.mxu0
    %v6980 = vadd.f32 0.0, %v6979
    %6981 = vdwg.mxu0
    %6982 = vrot.lane.b32.xlu0 %v5186, 48
    %v6983 = vpop.permute.xlu0 %6982
    %6984 = vrot.lane.b32.xlu0 %v5189, 48
    %v6985 = vpop.permute.xlu0 %6984
    %v6989 = vsel %vm1065, %v6751, 0
    %v6992 = vsel %vm1065, %v6766, 0
    %6994 = vmatpush.msra.mxu0 0.0
    %6995 = vmatpush.msra.mxu0 0.0
    %6996 = vmatpush.msra.mxu0 0.0
    %6997 = vmatpush.msra.mxu0 0.0
    %6998 = vmatpush.msra.mxu0 0.0
    %6999 = vmatpush.msra.mxu0 0.0
    %7000 = vmatpush.msra.mxu0 0.0
    %7001 = vmatpush.msra.mxu0 0.0
    %7002 = vmatpush.msra.mxu0 0.0
    %7003 = vmatpush.msra.mxu0 0.0
    %7004 = vmatpush.msra.mxu0 0.0
    %7005 = vmatpush.msra.mxu0 0.0
    %7006 = vmatpush.msra.mxu0 0.0
    %7007 = vmatpush.msra.mxu0 0.0
    %7008 = vmatpush.msra.mxu0 %v6985
    %7009 = vmatpush.msra.mxu0 %v6983
    %7010 = vmatmul.f32.gmra.mxu0 %v6989
    %v7011 = vpop.f32.mrf.mxu0
    %v7012 = vadd.f32 0.0, %v7011
    %7013 = vmatmul.f32.gmra.mxu0 %v6992
    %v7014 = vpop.f32.mrf.mxu0
    %v7015 = vadd.f32 0.0, %v7014
    %7016 = vdwg.mxu0
    %7017 = vrot.lane.b32.xlu0 %v5192, 48
    %v7018 = vpop.permute.xlu0 %7017
    %7019 = vrot.lane.b32.xlu0 %v5195, 48
    %v7020 = vpop.permute.xlu0 %7019
    %v7024 = vsel %vm1065, %v6781, 0
    %v7027 = vsel %vm1065, %v6796, 0
    %7029 = vmatpush.msra.mxu0 0.0
    %7030 = vmatpush.msra.mxu0 0.0
    %7031 = vmatpush.msra.mxu0 0.0
    %7032 = vmatpush.msra.mxu0 0.0
    %7033 = vmatpush.msra.mxu0 0.0
    %7034 = vmatpush.msra.mxu0 0.0
    %7035 = vmatpush.msra.mxu0 0.0
    %7036 = vmatpush.msra.mxu0 0.0
    %7037 = vmatpush.msra.mxu0 0.0
    %7038 = vmatpush.msra.mxu0 0.0
    %7039 = vmatpush.msra.mxu0 0.0
    %7040 = vmatpush.msra.mxu0 0.0
    %7041 = vmatpush.msra.mxu0 0.0
    %7042 = vmatpush.msra.mxu0 0.0
    %7043 = vmatpush.msra.mxu0 %v7020
    %7044 = vmatpush.msra.mxu0 %v7018
    %7045 = vmatmul.f32.gmra.mxu0 %v7024
    %v7046 = vpop.f32.mrf.mxu0
    %v7047 = vadd.f32 0.0, %v7046
    %7048 = vmatmul.f32.gmra.mxu0 %v7027
    %v7049 = vpop.f32.mrf.mxu0
    %v7050 = vadd.f32 0.0, %v7049
    %7051 = vdwg.mxu0
    %7052 = vrot.lane.b32.xlu0 %v5198, 48
    %v7053 = vpop.permute.xlu0 %7052
    %7054 = vrot.lane.b32.xlu0 %v5201, 48
    %v7055 = vpop.permute.xlu0 %7054
    %v7059 = vsel %vm1065, %v6811, 0
    %v7062 = vsel %vm1065, %v6826, 0
    %7064 = vmatpush.msra.mxu0 0.0
    %7065 = vmatpush.msra.mxu0 0.0
    %7066 = vmatpush.msra.mxu0 0.0
    %7067 = vmatpush.msra.mxu0 0.0
    %7068 = vmatpush.msra.mxu0 0.0
    %7069 = vmatpush.msra.mxu0 0.0
    %7070 = vmatpush.msra.mxu0 0.0
    %7071 = vmatpush.msra.mxu0 0.0
    %7072 = vmatpush.msra.mxu0 0.0
    %7073 = vmatpush.msra.mxu0 0.0
    %7074 = vmatpush.msra.mxu0 0.0
    %7075 = vmatpush.msra.mxu0 0.0
    %7076 = vmatpush.msra.mxu0 0.0
    %7077 = vmatpush.msra.mxu0 0.0
    %7078 = vmatpush.msra.mxu0 %v7055
    %7079 = vmatpush.msra.mxu0 %v7053
    %7080 = vmatmul.f32.gmra.mxu0 %v7059
    %v7081 = vpop.f32.mrf.mxu0
    %v7082 = vadd.f32 0.0, %v7081
    %7083 = vmatmul.f32.gmra.mxu0 %v7062
    %v7084 = vpop.f32.mrf.mxu0
    %v7085 = vadd.f32 0.0, %v7084
    %7086 = vdwg.mxu0
    %7087 = vrot.lane.b32.xlu0 %v5204, 48
    %v7088 = vpop.permute.xlu0 %7087
    %7089 = vrot.lane.b32.xlu0 %v5207, 48
    %v7090 = vpop.permute.xlu0 %7089
    %v7094 = vsel %vm1065, %v6841, 0
    %v7097 = vsel %vm1065, %v6856, 0
    %7099 = vmatpush.msra.mxu0 0.0
    %7100 = vmatpush.msra.mxu0 0.0
    %7101 = vmatpush.msra.mxu0 0.0
    %7102 = vmatpush.msra.mxu0 0.0
    %7103 = vmatpush.msra.mxu0 0.0
    %7104 = vmatpush.msra.mxu0 0.0
    %7105 = vmatpush.msra.mxu0 0.0
    %7106 = vmatpush.msra.mxu0 0.0
    %7107 = vmatpush.msra.mxu0 0.0
    %7108 = vmatpush.msra.mxu0 0.0
    %7109 = vmatpush.msra.mxu0 0.0
    %7110 = vmatpush.msra.mxu0 0.0
    %7111 = vmatpush.msra.mxu0 0.0
    %7112 = vmatpush.msra.mxu0 0.0
    %7113 = vmatpush.msra.mxu0 %v7090
    %7114 = vmatpush.msra.mxu0 %v7088
    %7115 = vmatmul.f32.gmra.mxu0 %v7094
    %v7116 = vpop.f32.mrf.mxu0
    %v7117 = vadd.f32 0.0, %v7116
    %7118 = vmatmul.f32.gmra.mxu0 %v7097
    %v7119 = vpop.f32.mrf.mxu0
    %v7120 = vadd.f32 0.0, %v7119
    %7121 = vdwg.mxu0
    %7122 = vrot.lane.b32.xlu0 %v5210, 48
    %v7123 = vpop.permute.xlu0 %7122
    %7124 = vrot.lane.b32.xlu0 %v5213, 48
    %v7125 = vpop.permute.xlu0 %7124
    %v7129 = vsel %vm1065, %v6871, 0
    %v7132 = vsel %vm1065, %v6886, 0
    %7134 = vmatpush.msra.mxu0 0.0
    %7135 = vmatpush.msra.mxu0 0.0
    %7136 = vmatpush.msra.mxu0 0.0
    %7137 = vmatpush.msra.mxu0 0.0
    %7138 = vmatpush.msra.mxu0 0.0
    %7139 = vmatpush.msra.mxu0 0.0
    %7140 = vmatpush.msra.mxu0 0.0
    %7141 = vmatpush.msra.mxu0 0.0
    %7142 = vmatpush.msra.mxu0 0.0
    %7143 = vmatpush.msra.mxu0 0.0
    %7144 = vmatpush.msra.mxu0 0.0
    %7145 = vmatpush.msra.mxu0 0.0
    %7146 = vmatpush.msra.mxu0 0.0
    %7147 = vmatpush.msra.mxu0 0.0
    %7148 = vmatpush.msra.mxu0 %v7125
    %7149 = vmatpush.msra.mxu0 %v7123
    %7150 = vmatmul.f32.gmra.mxu0 %v7129
    %v7151 = vpop.f32.mrf.mxu0
    %v7152 = vadd.f32 0.0, %v7151
    %7153 = vmatmul.f32.gmra.mxu0 %v7132
    %v7154 = vpop.f32.mrf.mxu0
    %v7155 = vadd.f32 0.0, %v7154
    %7156 = vdwg.mxu0
    %7157 = vrot.lane.b32.xlu0 %v5216, 48
    %v7158 = vpop.permute.xlu0 %7157
    %7159 = vrot.lane.b32.xlu0 %v5219, 48
    %v7160 = vpop.permute.xlu0 %7159
    %v7164 = vsel %vm1065, %v6901, 0
    %v7167 = vsel %vm1065, %v6916, 0
    %7169 = vmatpush.msra.mxu0 0.0
    %7170 = vmatpush.msra.mxu0 0.0
    %7171 = vmatpush.msra.mxu0 0.0
    %7172 = vmatpush.msra.mxu0 0.0
    %7173 = vmatpush.msra.mxu0 0.0
    %7174 = vmatpush.msra.mxu0 0.0
    %7175 = vmatpush.msra.mxu0 0.0
    %7176 = vmatpush.msra.mxu0 0.0
    %7177 = vmatpush.msra.mxu0 0.0
    %7178 = vmatpush.msra.mxu0 0.0
    %7179 = vmatpush.msra.mxu0 0.0
    %7180 = vmatpush.msra.mxu0 0.0
    %7181 = vmatpush.msra.mxu0 0.0
    %7182 = vmatpush.msra.mxu0 0.0
    %7183 = vmatpush.msra.mxu0 %v7160
    %7184 = vmatpush.msra.mxu0 %v7158
    %7185 = vmatmul.f32.gmra.mxu0 %v7164
    %v7186 = vpop.f32.mrf.mxu0
    %v7187 = vadd.f32 0.0, %v7186
    %7188 = vmatmul.f32.gmra.mxu0 %v7167
    %v7189 = vpop.f32.mrf.mxu0
    %v7190 = vadd.f32 0.0, %v7189
    %7191 = vdwg.mxu0
    %7192 = vrot.lane.b32.xlu0 %v5222, 48
    %v7193 = vpop.permute.xlu0 %7192
    %7194 = vrot.lane.b32.xlu0 %v5225, 48
    %v7195 = vpop.permute.xlu0 %7194
    %v7199 = vsel %vm1065, %v6931, 0
    %v7202 = vsel %vm1065, %v6946, 0
    %7204 = vmatpush.msra.mxu0 0.0
    %7205 = vmatpush.msra.mxu0 0.0
    %7206 = vmatpush.msra.mxu0 0.0
    %7207 = vmatpush.msra.mxu0 0.0
    %7208 = vmatpush.msra.mxu0 0.0
    %7209 = vmatpush.msra.mxu0 0.0
    %7210 = vmatpush.msra.mxu0 0.0
    %7211 = vmatpush.msra.mxu0 0.0
    %7212 = vmatpush.msra.mxu0 0.0
    %7213 = vmatpush.msra.mxu0 0.0
    %7214 = vmatpush.msra.mxu0 0.0
    %7215 = vmatpush.msra.mxu0 0.0
    %7216 = vmatpush.msra.mxu0 0.0
    %7217 = vmatpush.msra.mxu0 0.0
    %7218 = vmatpush.msra.mxu0 %v7195
    %7219 = vmatpush.msra.mxu0 %v7193
    %7220 = vmatmul.f32.gmra.mxu0 %v7199
    %v7221 = vpop.f32.mrf.mxu0
    %v7222 = vadd.f32 0.0, %v7221
    %7223 = vmatmul.f32.gmra.mxu0 %v7202
    %v7224 = vpop.f32.mrf.mxu0
    %v7225 = vadd.f32 0.0, %v7224
    %7226 = vdwg.mxu0
    %v7228 = vsel %vm1065, %v6977, 0
    %v7231 = vsel %vm1065, %v6980, 0
    %v7234 = vsel %vm1065, %v7012, 0
    %v7237 = vsel %vm1065, %v7015, 0
    %v7240 = vsel %vm1065, %v7047, 0
    %v7243 = vsel %vm1065, %v7050, 0
    %v7246 = vsel %vm1065, %v7082, 0
    %v7249 = vsel %vm1065, %v7085, 0
    %v7252 = vsel %vm1065, %v7117, 0
    %v7255 = vsel %vm1065, %v7120, 0
    %v7258 = vsel %vm1065, %v7152, 0
    %v7261 = vsel %vm1065, %v7155, 0
    %v7264 = vsel %vm1065, %v7187, 0
    %v7267 = vsel %vm1065, %v7190, 0
    %v7270 = vsel %vm1065, %v7222, 0
    %v7273 = vsel %vm1065, %v7225, 0
    %7275 = vmatpush.msra.mxu0 0.0
    %7276 = vmatpush.msra.mxu0 0.0
    %7277 = vmatpush.msra.mxu0 0.0
    %7278 = vmatpush.msra.mxu0 0.0
    %7279 = vmatpush.msra.mxu0 0.0
    %7280 = vmatpush.msra.mxu0 0.0
    %7281 = vmatpush.msra.mxu0 0.0
    %7282 = vmatpush.msra.mxu0 0.0
    %7283 = vmatpush.msra.mxu0 0.0
    %7284 = vmatpush.msra.mxu0 0.0
    %7285 = vmatpush.msra.mxu0 0.0
    %7286 = vmatpush.msra.mxu0 0.0
    %7287 = vmatpush.msra.mxu0 0.0
    %7288 = vmatpush.msra.mxu0 0.0
    %7289 = vmatpush.msra.mxu0 %v4598
    %7290 = vmatpush.msra.mxu0 %v4597
    %7291 = vmatmul.f32.gmra.mxu0 %v7228
    %v7292 = vpop.f32.mrf.mxu0
    %v7293 = vadd.f32 0.0, %v7292
    %7294 = vmatmul.f32.gmra.mxu0 %v7231
    %v7295 = vpop.f32.mrf.mxu0
    %v7296 = vadd.f32 0.0, %v7295
    %7297 = vmatmul.f32.gmra.mxu0 %v7234
    %v7298 = vpop.f32.mrf.mxu0
    %v7299 = vadd.f32 0.0, %v7298
    %7300 = vmatmul.f32.gmra.mxu0 %v7237
    %v7301 = vpop.f32.mrf.mxu0
    %v7302 = vadd.f32 0.0, %v7301
    %7303 = vmatmul.f32.gmra.mxu0 %v7240
    %v7304 = vpop.f32.mrf.mxu0
    %v7305 = vadd.f32 0.0, %v7304
    %7306 = vmatmul.f32.gmra.mxu0 %v7243
    %v7307 = vpop.f32.mrf.mxu0
    %v7308 = vadd.f32 0.0, %v7307
    %7309 = vmatmul.f32.gmra.mxu0 %v7246
    %v7310 = vpop.f32.mrf.mxu0
    %v7311 = vadd.f32 0.0, %v7310
    %7312 = vmatmul.f32.gmra.mxu0 %v7249
    %v7313 = vpop.f32.mrf.mxu0
    %v7314 = vadd.f32 0.0, %v7313
    %7315 = vmatmul.f32.gmra.mxu0 %v7252
    %v7316 = vpop.f32.mrf.mxu0
    %v7317 = vadd.f32 0.0, %v7316
    %7318 = vmatmul.f32.gmra.mxu0 %v7255
    %v7319 = vpop.f32.mrf.mxu0
    %v7320 = vadd.f32 0.0, %v7319
    %7321 = vmatmul.f32.gmra.mxu0 %v7258
    %v7322 = vpop.f32.mrf.mxu0
    %v7323 = vadd.f32 0.0, %v7322
    %7324 = vmatmul.f32.gmra.mxu0 %v7261
    %v7325 = vpop.f32.mrf.mxu0
    %v7326 = vadd.f32 0.0, %v7325
    %7327 = vmatmul.f32.gmra.mxu0 %v7264
    %v7328 = vpop.f32.mrf.mxu0
    %v7329 = vadd.f32 0.0, %v7328
    %7330 = vmatmul.f32.gmra.mxu0 %v7267
    %v7331 = vpop.f32.mrf.mxu0
    %v7332 = vadd.f32 0.0, %v7331
    %7333 = vmatmul.f32.gmra.mxu0 %v7270
    %v7334 = vpop.f32.mrf.mxu0
    %v7335 = vadd.f32 0.0, %v7334
    %7336 = vmatmul.f32.gmra.mxu0 %v7273
    %v7337 = vpop.f32.mrf.mxu0
    %v7338 = vadd.f32 0.0, %v7337
    %7339 = vdwg.mxu0
    %v7341 = vsel %vm1065, %v5985, 0
    %v7344 = vsel %vm1065, %v5988, 0
    %v7347 = vsel %vm1065, %v6020, 0
    %v7350 = vsel %vm1065, %v6023, 0
    %v7353 = vsel %vm1065, %v6055, 0
    %v7356 = vsel %vm1065, %v6058, 0
    %v7359 = vsel %vm1065, %v6090, 0
    %v7362 = vsel %vm1065, %v6093, 0
    %v7365 = vsel %vm1065, %v6125, 0
    %v7368 = vsel %vm1065, %v6128, 0
    %v7371 = vsel %vm1065, %v6160, 0
    %v7374 = vsel %vm1065, %v6163, 0
    %v7377 = vsel %vm1065, %v6195, 0
    %v7380 = vsel %vm1065, %v6198, 0
    %v7383 = vsel %vm1065, %v6230, 0
    %v7386 = vsel %vm1065, %v6233, 0
    %7388 = vmatpush.msra.mxu0 0.0
    %7389 = vmatpush.msra.mxu0 0.0
    %7390 = vmatpush.msra.mxu0 0.0
    %7391 = vmatpush.msra.mxu0 0.0
    %7392 = vmatpush.msra.mxu0 0.0
    %7393 = vmatpush.msra.mxu0 0.0
    %7394 = vmatpush.msra.mxu0 0.0
    %7395 = vmatpush.msra.mxu0 0.0
    %7396 = vmatpush.msra.mxu0 0.0
    %7397 = vmatpush.msra.mxu0 0.0
    %7398 = vmatpush.msra.mxu0 0.0
    %7399 = vmatpush.msra.mxu0 0.0
    %7400 = vmatpush.msra.mxu0 0.0
    %7401 = vmatpush.msra.mxu0 0.0
    %7402 = vmatpush.msra.mxu0 %v4596
    %7403 = vmatpush.msra.mxu0 %v4595
    %7404 = vmatmul.f32.gmra.mxu0 %v7341
    %v7405 = vpop.f32.mrf.mxu0
    %v7406 = vadd.f32 %v7293, %v7405
    %7407 = vmatmul.f32.gmra.mxu0 %v7344
    %v7408 = vpop.f32.mrf.mxu0
    %v7409 = vadd.f32 %v7296, %v7408
    %7410 = vmatmul.f32.gmra.mxu0 %v7347
    %v7411 = vpop.f32.mrf.mxu0
    %v7412 = vadd.f32 %v7299, %v7411
    %7413 = vmatmul.f32.gmra.mxu0 %v7350
    %v7414 = vpop.f32.mrf.mxu0
    %v7415 = vadd.f32 %v7302, %v7414
    %7416 = vmatmul.f32.gmra.mxu0 %v7353
    %v7417 = vpop.f32.mrf.mxu0
    %v7418 = vadd.f32 %v7305, %v7417
    %7419 = vmatmul.f32.gmra.mxu0 %v7356
    %v7420 = vpop.f32.mrf.mxu0
    %v7421 = vadd.f32 %v7308, %v7420
    %7422 = vmatmul.f32.gmra.mxu0 %v7359
    %v7423 = vpop.f32.mrf.mxu0
    %v7424 = vadd.f32 %v7311, %v7423
    %7425 = vmatmul.f32.gmra.mxu0 %v7362
    %v7426 = vpop.f32.mrf.mxu0
    %v7427 = vadd.f32 %v7314, %v7426
    %7428 = vmatmul.f32.gmra.mxu0 %v7365
    %v7429 = vpop.f32.mrf.mxu0
    %v7430 = vadd.f32 %v7317, %v7429
    %7431 = vmatmul.f32.gmra.mxu0 %v7368
    %v7432 = vpop.f32.mrf.mxu0
    %v7433 = vadd.f32 %v7320, %v7432
    %7434 = vmatmul.f32.gmra.mxu0 %v7371
    %v7435 = vpop.f32.mrf.mxu0
    %v7436 = vadd.f32 %v7323, %v7435
    %7437 = vmatmul.f32.gmra.mxu0 %v7374
    %v7438 = vpop.f32.mrf.mxu0
    %v7439 = vadd.f32 %v7326, %v7438
    %7440 = vmatmul.f32.gmra.mxu0 %v7377
    %v7441 = vpop.f32.mrf.mxu0
    %v7442 = vadd.f32 %v7329, %v7441
    %7443 = vmatmul.f32.gmra.mxu0 %v7380
    %v7444 = vpop.f32.mrf.mxu0
    %v7445 = vadd.f32 %v7332, %v7444
    %7446 = vmatmul.f32.gmra.mxu0 %v7383
    %v7447 = vpop.f32.mrf.mxu0
    %v7448 = vadd.f32 %v7335, %v7447
    %7449 = vmatmul.f32.gmra.mxu0 %v7386
    %v7450 = vpop.f32.mrf.mxu0
    %v7451 = vadd.f32 %v7338, %v7450
    %7452 = vdwg.mxu0
    %v7454 = vperm.slane %v4599, 0
    %v7456 = vadd.f32 %v7406, %v7454
    %v7457 = vadd.f32 %v7409, %v7454
    %v7458 = vadd.f32 %v7412, %v7454
    %v7459 = vadd.f32 %v7415, %v7454
    %v7460 = vadd.f32 %v7418, %v7454
    %v7461 = vadd.f32 %v7421, %v7454
    %v7462 = vadd.f32 %v7424, %v7454
    %v7463 = vadd.f32 %v7427, %v7454
    %v7464 = vadd.f32 %v7430, %v7454
    %v7465 = vadd.f32 %v7433, %v7454
    %v7466 = vadd.f32 %v7436, %v7454
    %v7467 = vadd.f32 %v7439, %v7454
    %v7468 = vadd.f32 %v7442, %v7454
    %v7469 = vadd.f32 %v7445, %v7454
    %v7470 = vadd.f32 %v7448, %v7454
    %v7471 = vadd.f32 %v7451, %v7454
    %7472 = vmatpush.msra.mxu0 %v7471
    %7473 = vmatpush.msra.mxu0 %v7470
    %7474 = vmatpush.msra.mxu0 %v7469
    %7475 = vmatpush.msra.mxu0 %v7468
    %7476 = vmatpush.msra.mxu0 %v7467
    %7477 = vmatpush.msra.mxu0 %v7466
    %7478 = vmatpush.msra.mxu0 %v7465
    %7479 = vmatpush.msra.mxu0 %v7464
    %7480 = vmatpush.msra.mxu0 %v7463
    %7481 = vmatpush.msra.mxu0 %v7462
    %7482 = vmatpush.msra.mxu0 %v7461
    %7483 = vmatpush.msra.mxu0 %v7460
    %7484 = vmatpush.msra.mxu0 %v7459
    %7485 = vmatpush.msra.mxu0 %v7458
    %7486 = vmatpush.msra.mxu0 %v7457
    %7487 = vmatpush.msra.mxu0 %v7456
    %7488 = vmatmul.f32.gmra.mxu0 %v4640
    %v7489 = vpop.f32.mrf.mxu0
    %v7490 = vadd.f32 0.0, %v7489
    %7491 = vmatmul.f32.gmra.mxu0 %v4641
    %v7492 = vpop.f32.mrf.mxu0
    %v7493 = vadd.f32 0.0, %v7492
    %7494 = vmatmul.f32.gmra.mxu0 %v4642
    %v7495 = vpop.f32.mrf.mxu0
    %v7496 = vadd.f32 0.0, %v7495
    %7497 = vmatmul.f32.gmra.mxu0 %v4643
    %v7498 = vpop.f32.mrf.mxu0
    %v7499 = vadd.f32 0.0, %v7498
    %7500 = vmatmul.f32.gmra.mxu0 %v4644
    %v7501 = vpop.f32.mrf.mxu0
    %v7502 = vadd.f32 0.0, %v7501
    %7503 = vmatmul.f32.gmra.mxu0 %v4645
    %v7504 = vpop.f32.mrf.mxu0
    %v7505 = vadd.f32 0.0, %v7504
    %7506 = vmatmul.f32.gmra.mxu0 %v4646
    %v7507 = vpop.f32.mrf.mxu0
    %v7508 = vadd.f32 0.0, %v7507
    %7509 = vmatmul.f32.gmra.mxu0 %v4647
    %v7510 = vpop.f32.mrf.mxu0
    %v7511 = vadd.f32 0.0, %v7510
    %7512 = vmatmul.f32.gmra.mxu0 %v4648
    %v7513 = vpop.f32.mrf.mxu0
    %v7514 = vadd.f32 0.0, %v7513
    %7515 = vmatmul.f32.gmra.mxu0 %v4649
    %v7516 = vpop.f32.mrf.mxu0
    %v7517 = vadd.f32 0.0, %v7516
    %7518 = vmatmul.f32.gmra.mxu0 %v4650
    %v7519 = vpop.f32.mrf.mxu0
    %v7520 = vadd.f32 0.0, %v7519
    %7521 = vmatmul.f32.gmra.mxu0 %v4651
    %v7522 = vpop.f32.mrf.mxu0
    %v7523 = vadd.f32 0.0, %v7522
    %7524 = vmatmul.f32.gmra.mxu0 %v4652
    %v7525 = vpop.f32.mrf.mxu0
    %v7526 = vadd.f32 0.0, %v7525
    %7527 = vmatmul.f32.gmra.mxu0 %v4653
    %v7528 = vpop.f32.mrf.mxu0
    %v7529 = vadd.f32 0.0, %v7528
    %7530 = vmatmul.f32.gmra.mxu0 %v4654
    %v7531 = vpop.f32.mrf.mxu0
    %v7532 = vadd.f32 0.0, %v7531
    %7533 = vmatmul.f32.gmra.mxu0 %v4655
    %v7534 = vpop.f32.mrf.mxu0
    %v7535 = vadd.f32 0.0, %v7534
    %7536 = vdwg.mxu0
    %v7537 = vadd.f32 %v4568, %v7490
    %v7538 = vadd.f32 %v4569, %v7493
    %v7539 = vadd.f32 %v4570, %v7496
    %v7540 = vadd.f32 %v4571, %v7499
    %v7541 = vadd.f32 %v4572, %v7502
    %v7542 = vadd.f32 %v4573, %v7505
    %v7543 = vadd.f32 %v4574, %v7508
    %v7544 = vadd.f32 %v4575, %v7511
    %v7545 = vadd.f32 %v4576, %v7514
    %v7546 = vadd.f32 %v4577, %v7517
    %v7547 = vadd.f32 %v4578, %v7520
    %v7548 = vadd.f32 %v4579, %v7523
    %v7549 = vadd.f32 %v4580, %v7526
    %v7550 = vadd.f32 %v4581, %v7529
    %v7551 = vadd.f32 %v4582, %v7532
    %v7552 = vadd.f32 %v4583, %v7535
    %v7553 = vsel %vm464, %v7537, 0.0
    %7554 = vadd.xlane.f32.xlu0 %v7553
    %v7555 = vpop.xlane.xlu0 %7554
    %v7556 = vsel %vm464, %v7538, 0.0
    %7557 = vadd.xlane.f32.xlu0 %v7556
    %v7558 = vpop.xlane.xlu0 %7557
    %v7559 = vsel %vm464, %v7539, 0.0
    %7560 = vadd.xlane.f32.xlu0 %v7559
    %v7561 = vpop.xlane.xlu0 %7560
    %v7562 = vsel %vm464, %v7540, 0.0
    %7563 = vadd.xlane.f32.xlu0 %v7562
    %v7564 = vpop.xlane.xlu0 %7563
    %v7565 = vsel %vm464, %v7541, 0.0
    %7566 = vadd.xlane.f32.xlu0 %v7565
    %v7567 = vpop.xlane.xlu0 %7566
    %v7568 = vsel %vm464, %v7542, 0.0
    %7569 = vadd.xlane.f32.xlu0 %v7568
    %v7570 = vpop.xlane.xlu0 %7569
    %v7571 = vsel %vm464, %v7543, 0.0
    %7572 = vadd.xlane.f32.xlu0 %v7571
    %v7573 = vpop.xlane.xlu0 %7572
    %v7574 = vsel %vm464, %v7544, 0.0
    %7575 = vadd.xlane.f32.xlu0 %v7574
    %v7576 = vpop.xlane.xlu0 %7575
    %v7577 = vsel %vm464, %v7545, 0.0
    %7578 = vadd.xlane.f32.xlu0 %v7577
    %v7579 = vpop.xlane.xlu0 %7578
    %v7580 = vsel %vm464, %v7546, 0.0
    %7581 = vadd.xlane.f32.xlu0 %v7580
    %v7582 = vpop.xlane.xlu0 %7581
    %v7583 = vsel %vm464, %v7547, 0.0
    %7584 = vadd.xlane.f32.xlu0 %v7583
    %v7585 = vpop.xlane.xlu0 %7584
    %v7586 = vsel %vm464, %v7548, 0.0
    %7587 = vadd.xlane.f32.xlu0 %v7586
    %v7588 = vpop.xlane.xlu0 %7587
    %v7589 = vsel %vm464, %v7549, 0.0
    %7590 = vadd.xlane.f32.xlu0 %v7589
    %v7591 = vpop.xlane.xlu0 %7590
    %v7592 = vsel %vm464, %v7550, 0.0
    %7593 = vadd.xlane.f32.xlu0 %v7592
    %v7594 = vpop.xlane.xlu0 %7593
    %v7595 = vsel %vm464, %v7551, 0.0
    %7596 = vadd.xlane.f32.xlu0 %v7595
    %v7597 = vpop.xlane.xlu0 %7596
    %v7598 = vsel %vm464, %v7552, 0.0
    %7599 = vadd.xlane.f32.xlu0 %v7598
    %v7600 = vpop.xlane.xlu0 %7599
    %v7601 = vmul.f32 %v7555, %v519
    %v7602 = vmul.f32 %v7558, %v519
    %v7603 = vmul.f32 %v7561, %v519
    %v7604 = vmul.f32 %v7564, %v519
    %v7605 = vmul.f32 %v7567, %v519
    %v7606 = vmul.f32 %v7570, %v519
    %v7607 = vmul.f32 %v7573, %v519
    %v7608 = vmul.f32 %v7576, %v519
    %v7609 = vmul.f32 %v7579, %v519
    %v7610 = vmul.f32 %v7582, %v519
    %v7611 = vmul.f32 %v7585, %v519
    %v7612 = vmul.f32 %v7588, %v519
    %v7613 = vmul.f32 %v7591, %v519
    %v7614 = vmul.f32 %v7594, %v519
    %v7615 = vmul.f32 %v7597, %v519
    %v7616 = vmul.f32 %v7600, %v519
    %v7617 = vsub.f32 %v7537, %v7601
    %v7618 = vsub.f32 %v7538, %v7602
    %v7619 = vsub.f32 %v7539, %v7603
    %v7620 = vsub.f32 %v7540, %v7604
    %v7621 = vsub.f32 %v7541, %v7605
    %v7622 = vsub.f32 %v7542, %v7606
    %v7623 = vsub.f32 %v7543, %v7607
    %v7624 = vsub.f32 %v7544, %v7608
    %v7625 = vsub.f32 %v7545, %v7609
    %v7626 = vsub.f32 %v7546, %v7610
    %v7627 = vsub.f32 %v7547, %v7611
    %v7628 = vsub.f32 %v7548, %v7612
    %v7629 = vsub.f32 %v7549, %v7613
    %v7630 = vsub.f32 %v7550, %v7614
    %v7631 = vsub.f32 %v7551, %v7615
    %v7632 = vsub.f32 %v7552, %v7616
    %v7633 = vmul.f32 %v7617, %v7617
    %v7634 = vmul.f32 %v7618, %v7618
    %v7635 = vmul.f32 %v7619, %v7619
    %v7636 = vmul.f32 %v7620, %v7620
    %v7637 = vmul.f32 %v7621, %v7621
    %v7638 = vmul.f32 %v7622, %v7622
    %v7639 = vmul.f32 %v7623, %v7623
    %v7640 = vmul.f32 %v7624, %v7624
    %v7641 = vmul.f32 %v7625, %v7625
    %v7642 = vmul.f32 %v7626, %v7626
    %v7643 = vmul.f32 %v7627, %v7627
    %v7644 = vmul.f32 %v7628, %v7628
    %v7645 = vmul.f32 %v7629, %v7629
    %v7646 = vmul.f32 %v7630, %v7630
    %v7647 = vmul.f32 %v7631, %v7631
    %v7648 = vmul.f32 %v7632, %v7632
    %v7649 = vsel %vm464, %v7633, 0.0
    %7650 = vadd.xlane.f32.xlu0 %v7649
    %v7651 = vpop.xlane.xlu0 %7650
    %v7652 = vsel %vm464, %v7634, 0.0
    %7653 = vadd.xlane.f32.xlu0 %v7652
    %v7654 = vpop.xlane.xlu0 %7653
    %v7655 = vsel %vm464, %v7635, 0.0
    %7656 = vadd.xlane.f32.xlu0 %v7655
    %v7657 = vpop.xlane.xlu0 %7656
    %v7658 = vsel %vm464, %v7636, 0.0
    %7659 = vadd.xlane.f32.xlu0 %v7658
    %v7660 = vpop.xlane.xlu0 %7659
    %v7661 = vsel %vm464, %v7637, 0.0
    %7662 = vadd.xlane.f32.xlu0 %v7661
    %v7663 = vpop.xlane.xlu0 %7662
    %v7664 = vsel %vm464, %v7638, 0.0
    %7665 = vadd.xlane.f32.xlu0 %v7664
    %v7666 = vpop.xlane.xlu0 %7665
    %v7667 = vsel %vm464, %v7639, 0.0
    %7668 = vadd.xlane.f32.xlu0 %v7667
    %v7669 = vpop.xlane.xlu0 %7668
    %v7670 = vsel %vm464, %v7640, 0.0
    %7671 = vadd.xlane.f32.xlu0 %v7670
    %v7672 = vpop.xlane.xlu0 %7671
    %v7673 = vsel %vm464, %v7641, 0.0
    %7674 = vadd.xlane.f32.xlu0 %v7673
    %v7675 = vpop.xlane.xlu0 %7674
    %v7676 = vsel %vm464, %v7642, 0.0
    %7677 = vadd.xlane.f32.xlu0 %v7676
    %v7678 = vpop.xlane.xlu0 %7677
    %v7679 = vsel %vm464, %v7643, 0.0
    %7680 = vadd.xlane.f32.xlu0 %v7679
    %v7681 = vpop.xlane.xlu0 %7680
    %v7682 = vsel %vm464, %v7644, 0.0
    %7683 = vadd.xlane.f32.xlu0 %v7682
    %v7684 = vpop.xlane.xlu0 %7683
    %v7685 = vsel %vm464, %v7645, 0.0
    %7686 = vadd.xlane.f32.xlu0 %v7685
    %v7687 = vpop.xlane.xlu0 %7686
    %v7688 = vsel %vm464, %v7646, 0.0
    %7689 = vadd.xlane.f32.xlu0 %v7688
    %v7690 = vpop.xlane.xlu0 %7689
    %v7691 = vsel %vm464, %v7647, 0.0
    %7692 = vadd.xlane.f32.xlu0 %v7691
    %v7693 = vpop.xlane.xlu0 %7692
    %v7694 = vsel %vm464, %v7648, 0.0
    %7695 = vadd.xlane.f32.xlu0 %v7694
    %v7696 = vpop.xlane.xlu0 %7695
    %v7697 = vmul.f32 %v7651, %v519
    %v7698 = vmul.f32 %v7654, %v519
    %v7699 = vmul.f32 %v7657, %v519
    %v7700 = vmul.f32 %v7660, %v519
    %v7701 = vmul.f32 %v7663, %v519
    %v7702 = vmul.f32 %v7666, %v519
    %v7703 = vmul.f32 %v7669, %v519
    %v7704 = vmul.f32 %v7672, %v519
    %v7705 = vmul.f32 %v7675, %v519
    %v7706 = vmul.f32 %v7678, %v519
    %v7707 = vmul.f32 %v7681, %v519
    %v7708 = vmul.f32 %v7684, %v519
    %v7709 = vmul.f32 %v7687, %v519
    %v7710 = vmul.f32 %v7690, %v519
    %v7711 = vmul.f32 %v7693, %v519
    %v7712 = vmul.f32 %v7696, %v519
    %v7713 = vadd.f32 %v7697, 1e-05
    %v7714 = vadd.f32 %v7698, 1e-05
    %v7715 = vadd.f32 %v7699, 1e-05
    %v7716 = vadd.f32 %v7700, 1e-05
    %v7717 = vadd.f32 %v7701, 1e-05
    %v7718 = vadd.f32 %v7702, 1e-05
    %v7719 = vadd.f32 %v7703, 1e-05
    %v7720 = vadd.f32 %v7704, 1e-05
    %v7721 = vadd.f32 %v7705, 1e-05
    %v7722 = vadd.f32 %v7706, 1e-05
    %v7723 = vadd.f32 %v7707, 1e-05
    %v7724 = vadd.f32 %v7708, 1e-05
    %v7725 = vadd.f32 %v7709, 1e-05
    %v7726 = vadd.f32 %v7710, 1e-05
    %v7727 = vadd.f32 %v7711, 1e-05
    %v7728 = vadd.f32 %v7712, 1e-05
    %v7729 = vrsqrt.pop %v7713
    %v7730 = vmul.f32 %v7729, %v7713
    %v7731 = vmul.f32 %v7730, %v7729
    %v7732 = vmul.f32 0.5, %v7731
    %v7733 = vsub.f32 1.5, %v7732
    %v7734 = vmul.f32 %v7729, %v7733
    %vm7735 = vweird.f32 %v7713
    %vm7736 = vweird.f32 %v7729
    %vm7737 = vmor %vm7735, %vm7736
    %v7738 = vsel %vm7737, %v7729, %v7734
    %v7739 = vrsqrt.pop %v7714
    %v7740 = vmul.f32 %v7739, %v7714
    %v7741 = vmul.f32 %v7740, %v7739
    %v7742 = vmul.f32 0.5, %v7741
    %v7743 = vsub.f32 1.5, %v7742
    %v7744 = vmul.f32 %v7739, %v7743
    %vm7745 = vweird.f32 %v7714
    %vm7746 = vweird.f32 %v7739
    %vm7747 = vmor %vm7745, %vm7746
    %v7748 = vsel %vm7747, %v7739, %v7744
    %v7749 = vrsqrt.pop %v7715
    %v7750 = vmul.f32 %v7749, %v7715
    %v7751 = vmul.f32 %v7750, %v7749
    %v7752 = vmul.f32 0.5, %v7751
    %v7753 = vsub.f32 1.5, %v7752
    %v7754 = vmul.f32 %v7749, %v7753
    %vm7755 = vweird.f32 %v7715
    %vm7756 = vweird.f32 %v7749
    %vm7757 = vmor %vm7755, %vm7756
    %v7758 = vsel %vm7757, %v7749, %v7754
    %v7759 = vrsqrt.pop %v7716
    %v7760 = vmul.f32 %v7759, %v7716
    %v7761 = vmul.f32 %v7760, %v7759
    %v7762 = vmul.f32 0.5, %v7761
    %v7763 = vsub.f32 1.5, %v7762
    %v7764 = vmul.f32 %v7759, %v7763
    %vm7765 = vweird.f32 %v7716
    %vm7766 = vweird.f32 %v7759
    %vm7767 = vmor %vm7765, %vm7766
    %v7768 = vsel %vm7767, %v7759, %v7764
    %v7769 = vrsqrt.pop %v7717
    %v7770 = vmul.f32 %v7769, %v7717
    %v7771 = vmul.f32 %v7770, %v7769
    %v7772 = vmul.f32 0.5, %v7771
    %v7773 = vsub.f32 1.5, %v7772
    %v7774 = vmul.f32 %v7769, %v7773
    %vm7775 = vweird.f32 %v7717
    %vm7776 = vweird.f32 %v7769
    %vm7777 = vmor %vm7775, %vm7776
    %v7778 = vsel %vm7777, %v7769, %v7774
    %v7779 = vrsqrt.pop %v7718
    %v7780 = vmul.f32 %v7779, %v7718
    %v7781 = vmul.f32 %v7780, %v7779
    %v7782 = vmul.f32 0.5, %v7781
    %v7783 = vsub.f32 1.5, %v7782
    %v7784 = vmul.f32 %v7779, %v7783
    %vm7785 = vweird.f32 %v7718
    %vm7786 = vweird.f32 %v7779
    %vm7787 = vmor %vm7785, %vm7786
    %v7788 = vsel %vm7787, %v7779, %v7784
    %v7789 = vrsqrt.pop %v7719
    %v7790 = vmul.f32 %v7789, %v7719
    %v7791 = vmul.f32 %v7790, %v7789
    %v7792 = vmul.f32 0.5, %v7791
    %v7793 = vsub.f32 1.5, %v7792
    %v7794 = vmul.f32 %v7789, %v7793
    %vm7795 = vweird.f32 %v7719
    %vm7796 = vweird.f32 %v7789
    %vm7797 = vmor %vm7795, %vm7796
    %v7798 = vsel %vm7797, %v7789, %v7794
    %v7799 = vrsqrt.pop %v7720
    %v7800 = vmul.f32 %v7799, %v7720
    %v7801 = vmul.f32 %v7800, %v7799
    %v7802 = vmul.f32 0.5, %v7801
    %v7803 = vsub.f32 1.5, %v7802
    %v7804 = vmul.f32 %v7799, %v7803
    %vm7805 = vweird.f32 %v7720
    %vm7806 = vweird.f32 %v7799
    %vm7807 = vmor %vm7805, %vm7806
    %v7808 = vsel %vm7807, %v7799, %v7804
    %v7809 = vrsqrt.pop %v7721
    %v7810 = vmul.f32 %v7809, %v7721
    %v7811 = vmul.f32 %v7810, %v7809
    %v7812 = vmul.f32 0.5, %v7811
    %v7813 = vsub.f32 1.5, %v7812
    %v7814 = vmul.f32 %v7809, %v7813
    %vm7815 = vweird.f32 %v7721
    %vm7816 = vweird.f32 %v7809
    %vm7817 = vmor %vm7815, %vm7816
    %v7818 = vsel %vm7817, %v7809, %v7814
    %v7819 = vrsqrt.pop %v7722
    %v7820 = vmul.f32 %v7819, %v7722
    %v7821 = vmul.f32 %v7820, %v7819
    %v7822 = vmul.f32 0.5, %v7821
    %v7823 = vsub.f32 1.5, %v7822
    %v7824 = vmul.f32 %v7819, %v7823
    %vm7825 = vweird.f32 %v7722
    %vm7826 = vweird.f32 %v7819
    %vm7827 = vmor %vm7825, %vm7826
    %v7828 = vsel %vm7827, %v7819, %v7824
    %v7829 = vrsqrt.pop %v7723
    %v7830 = vmul.f32 %v7829, %v7723
    %v7831 = vmul.f32 %v7830, %v7829
    %v7832 = vmul.f32 0.5, %v7831
    %v7833 = vsub.f32 1.5, %v7832
    %v7834 = vmul.f32 %v7829, %v7833
    %vm7835 = vweird.f32 %v7723
    %vm7836 = vweird.f32 %v7829
    %vm7837 = vmor %vm7835, %vm7836
    %v7838 = vsel %vm7837, %v7829, %v7834
    %v7839 = vrsqrt.pop %v7724
    %v7840 = vmul.f32 %v7839, %v7724
    %v7841 = vmul.f32 %v7840, %v7839
    %v7842 = vmul.f32 0.5, %v7841
    %v7843 = vsub.f32 1.5, %v7842
    %v7844 = vmul.f32 %v7839, %v7843
    %vm7845 = vweird.f32 %v7724
    %vm7846 = vweird.f32 %v7839
    %vm7847 = vmor %vm7845, %vm7846
    %v7848 = vsel %vm7847, %v7839, %v7844
    %v7849 = vrsqrt.pop %v7725
    %v7850 = vmul.f32 %v7849, %v7725
    %v7851 = vmul.f32 %v7850, %v7849
    %v7852 = vmul.f32 0.5, %v7851
    %v7853 = vsub.f32 1.5, %v7852
    %v7854 = vmul.f32 %v7849, %v7853
    %vm7855 = vweird.f32 %v7725
    %vm7856 = vweird.f32 %v7849
    %vm7857 = vmor %vm7855, %vm7856
    %v7858 = vsel %vm7857, %v7849, %v7854
    %v7859 = vrsqrt.pop %v7726
    %v7860 = vmul.f32 %v7859, %v7726
    %v7861 = vmul.f32 %v7860, %v7859
    %v7862 = vmul.f32 0.5, %v7861
    %v7863 = vsub.f32 1.5, %v7862
    %v7864 = vmul.f32 %v7859, %v7863
    %vm7865 = vweird.f32 %v7726
    %vm7866 = vweird.f32 %v7859
    %vm7867 = vmor %vm7865, %vm7866
    %v7868 = vsel %vm7867, %v7859, %v7864
    %v7869 = vrsqrt.pop %v7727
    %v7870 = vmul.f32 %v7869, %v7727
    %v7871 = vmul.f32 %v7870, %v7869
    %v7872 = vmul.f32 0.5, %v7871
    %v7873 = vsub.f32 1.5, %v7872
    %v7874 = vmul.f32 %v7869, %v7873
    %vm7875 = vweird.f32 %v7727
    %vm7876 = vweird.f32 %v7869
    %vm7877 = vmor %vm7875, %vm7876
    %v7878 = vsel %vm7877, %v7869, %v7874
    %v7879 = vrsqrt.pop %v7728
    %v7880 = vmul.f32 %v7879, %v7728
    %v7881 = vmul.f32 %v7880, %v7879
    %v7882 = vmul.f32 0.5, %v7881
    %v7883 = vsub.f32 1.5, %v7882
    %v7884 = vmul.f32 %v7879, %v7883
    %vm7885 = vweird.f32 %v7728
    %vm7886 = vweird.f32 %v7879
    %vm7887 = vmor %vm7885, %vm7886
    %v7888 = vsel %vm7887, %v7879, %v7884
    %v7889 = vmul.f32 %v7617, %v7738
    %v7890 = vmul.f32 %v7618, %v7748
    %v7891 = vmul.f32 %v7619, %v7758
    %v7892 = vmul.f32 %v7620, %v7768
    %v7893 = vmul.f32 %v7621, %v7778
    %v7894 = vmul.f32 %v7622, %v7788
    %v7895 = vmul.f32 %v7623, %v7798
    %v7896 = vmul.f32 %v7624, %v7808
    %v7897 = vmul.f32 %v7625, %v7818
    %v7898 = vmul.f32 %v7626, %v7828
    %v7899 = vmul.f32 %v7627, %v7838
    %v7900 = vmul.f32 %v7628, %v7848
    %v7901 = vmul.f32 %v7629, %v7858
    %v7902 = vmul.f32 %v7630, %v7868
    %v7903 = vmul.f32 %v7631, %v7878
    %v7904 = vmul.f32 %v7632, %v7888
    %v7906 = vperm.slane %v4600, 0
    %v7908 = vmul.f32 %v7889, %v7906
    %v7909 = vmul.f32 %v7890, %v7906
    %v7910 = vmul.f32 %v7891, %v7906
    %v7911 = vmul.f32 %v7892, %v7906
    %v7912 = vmul.f32 %v7893, %v7906
    %v7913 = vmul.f32 %v7894, %v7906
    %v7914 = vmul.f32 %v7895, %v7906
    %v7915 = vmul.f32 %v7896, %v7906
    %v7916 = vmul.f32 %v7897, %v7906
    %v7917 = vmul.f32 %v7898, %v7906
    %v7918 = vmul.f32 %v7899, %v7906
    %v7919 = vmul.f32 %v7900, %v7906
    %v7920 = vmul.f32 %v7901, %v7906
    %v7921 = vmul.f32 %v7902, %v7906
    %v7922 = vmul.f32 %v7903, %v7906
    %v7923 = vmul.f32 %v7904, %v7906
    %v7925 = vperm.slane %v4601, 0
    %v7927 = vadd.f32 %v7908, %v7925
    %v7928 = vadd.f32 %v7909, %v7925
    %v7929 = vadd.f32 %v7910, %v7925
    %v7930 = vadd.f32 %v7911, %v7925
    %v7931 = vadd.f32 %v7912, %v7925
    %v7932 = vadd.f32 %v7913, %v7925
    %v7933 = vadd.f32 %v7914, %v7925
    %v7934 = vadd.f32 %v7915, %v7925
    %v7935 = vadd.f32 %v7916, %v7925
    %v7936 = vadd.f32 %v7917, %v7925
    %v7937 = vadd.f32 %v7918, %v7925
    %v7938 = vadd.f32 %v7919, %v7925
    %v7939 = vadd.f32 %v7920, %v7925
    %v7940 = vadd.f32 %v7921, %v7925
    %v7941 = vadd.f32 %v7922, %v7925
    %v7942 = vadd.f32 %v7923, %v7925
    %v7944 = vperm.slane %v4606, 0
    %v7947 = vsel %vm464, %v7927, 0
    %v7950 = vsel %vm464, %v7928, 0
    %v7953 = vsel %vm464, %v7929, 0
    %v7956 = vsel %vm464, %v7930, 0
    %v7959 = vsel %vm464, %v7931, 0
    %v7962 = vsel %vm464, %v7932, 0
    %v7965 = vsel %vm464, %v7933, 0
    %v7968 = vsel %vm464, %v7934, 0
    %v7971 = vsel %vm464, %v7935, 0
    %v7974 = vsel %vm464, %v7936, 0
    %v7977 = vsel %vm464, %v7937, 0
    %v7980 = vsel %vm464, %v7938, 0
    %v7983 = vsel %vm464, %v7939, 0
    %v7986 = vsel %vm464, %v7940, 0
    %v7989 = vsel %vm464, %v7941, 0
    %v7992 = vsel %vm464, %v7942, 0
    %7994 = vmatpush.msra.mxu0 0.0
    %7995 = vmatpush.msra.mxu0 0.0
    %7996 = vmatpush.msra.mxu0 0.0
    %7997 = vmatpush.msra.mxu0 0.0
    %7998 = vmatpush.msra.mxu0 0.0
    %7999 = vmatpush.msra.mxu0 0.0
    %8000 = vmatpush.msra.mxu0 0.0
    %8001 = vmatpush.msra.mxu0 0.0
    %8002 = vmatpush.msra.mxu0 0.0
    %8003 = vmatpush.msra.mxu0 0.0
    %8004 = vmatpush.msra.mxu0 0.0
    %8005 = vmatpush.msra.mxu0 0.0
    %8006 = vmatpush.msra.mxu0 %v4605
    %8007 = vmatpush.msra.mxu0 %v4604
    %8008 = vmatpush.msra.mxu0 %v4603
    %8009 = vmatpush.msra.mxu0 %v4602
    %8010 = vmatmul.f32.gmra.mxu0 %v7947
    %v8011 = vpop.f32.mrf.mxu0
    %v8012 = vadd.f32 %v7944, %v8011
    %8013 = vmatmul.f32.gmra.mxu0 %v7950
    %v8014 = vpop.f32.mrf.mxu0
    %v8015 = vadd.f32 %v7944, %v8014
    %8016 = vmatmul.f32.gmra.mxu0 %v7953
    %v8017 = vpop.f32.mrf.mxu0
    %v8018 = vadd.f32 %v7944, %v8017
    %8019 = vmatmul.f32.gmra.mxu0 %v7956
    %v8020 = vpop.f32.mrf.mxu0
    %v8021 = vadd.f32 %v7944, %v8020
    %8022 = vmatmul.f32.gmra.mxu0 %v7959
    %v8023 = vpop.f32.mrf.mxu0
    %v8024 = vadd.f32 %v7944, %v8023
    %8025 = vmatmul.f32.gmra.mxu0 %v7962
    %v8026 = vpop.f32.mrf.mxu0
    %v8027 = vadd.f32 %v7944, %v8026
    %8028 = vmatmul.f32.gmra.mxu0 %v7965
    %v8029 = vpop.f32.mrf.mxu0
    %v8030 = vadd.f32 %v7944, %v8029
    %8031 = vmatmul.f32.gmra.mxu0 %v7968
    %v8032 = vpop.f32.mrf.mxu0
    %v8033 = vadd.f32 %v7944, %v8032
    %8034 = vmatmul.f32.gmra.mxu0 %v7971
    %v8035 = vpop.f32.mrf.mxu0
    %v8036 = vadd.f32 %v7944, %v8035
    %8037 = vmatmul.f32.gmra.mxu0 %v7974
    %v8038 = vpop.f32.mrf.mxu0
    %v8039 = vadd.f32 %v7944, %v8038
    %8040 = vmatmul.f32.gmra.mxu0 %v7977
    %v8041 = vpop.f32.mrf.mxu0
    %v8042 = vadd.f32 %v7944, %v8041
    %8043 = vmatmul.f32.gmra.mxu0 %v7980
    %v8044 = vpop.f32.mrf.mxu0
    %v8045 = vadd.f32 %v7944, %v8044
    %8046 = vmatmul.f32.gmra.mxu0 %v7983
    %v8047 = vpop.f32.mrf.mxu0
    %v8048 = vadd.f32 %v7944, %v8047
    %8049 = vmatmul.f32.gmra.mxu0 %v7986
    %v8050 = vpop.f32.mrf.mxu0
    %v8051 = vadd.f32 %v7944, %v8050
    %8052 = vmatmul.f32.gmra.mxu0 %v7989
    %v8053 = vpop.f32.mrf.mxu0
    %v8054 = vadd.f32 %v7944, %v8053
    %8055 = vmatmul.f32.gmra.mxu0 %v7992
    %v8056 = vpop.f32.mrf.mxu0
    %v8057 = vadd.f32 %v7944, %v8056
    %8058 = vdwg.mxu0
    %v8059 = vmul.f32 %v8012, 0.70710677
    %v8060 = vmul.f32 %v8015, 0.70710677
    %v8061 = vmul.f32 %v8018, 0.70710677
    %v8062 = vmul.f32 %v8021, 0.70710677
    %v8063 = vmul.f32 %v8024, 0.70710677
    %v8064 = vmul.f32 %v8027, 0.70710677
    %v8065 = vmul.f32 %v8030, 0.70710677
    %v8066 = vmul.f32 %v8033, 0.70710677
    %v8067 = vmul.f32 %v8036, 0.70710677
    %v8068 = vmul.f32 %v8039, 0.70710677
    %v8069 = vmul.f32 %v8042, 0.70710677
    %v8070 = vmul.f32 %v8045, 0.70710677
    %v8071 = vmul.f32 %v8048, 0.70710677
    %v8072 = vmul.f32 %v8051, 0.70710677
    %v8073 = vmul.f32 %v8054, 0.70710677
    %v8074 = vmul.f32 %v8057, 0.70710677
    %v8075 = vand.u32 2147483647, %v8059
    %v8076 = vand.u32 2147483647, %v8060
    %v8077 = vand.u32 2147483647, %v8061
    %v8078 = vand.u32 2147483647, %v8062
    %v8079 = vand.u32 2147483647, %v8063
    %v8080 = vand.u32 2147483647, %v8064
    %v8081 = vand.u32 2147483647, %v8065
    %v8082 = vand.u32 2147483647, %v8066
    %v8083 = vand.u32 2147483647, %v8067
    %v8084 = vand.u32 2147483647, %v8068
    %v8085 = vand.u32 2147483647, %v8069
    %v8086 = vand.u32 2147483647, %v8070
    %v8087 = vand.u32 2147483647, %v8071
    %v8088 = vand.u32 2147483647, %v8072
    %v8089 = vand.u32 2147483647, %v8073
    %v8090 = vand.u32 2147483647, %v8074
    %v8091 = vmul.f32 %v8075, 0.3275911
    %v8092 = vmul.f32 %v8076, 0.3275911
    %v8093 = vmul.f32 %v8077, 0.3275911
    %v8094 = vmul.f32 %v8078, 0.3275911
    %v8095 = vmul.f32 %v8079, 0.3275911
    %v8096 = vmul.f32 %v8080, 0.3275911
    %v8097 = vmul.f32 %v8081, 0.3275911
    %v8098 = vmul.f32 %v8082, 0.3275911
    %v8099 = vmul.f32 %v8083, 0.3275911
    %v8100 = vmul.f32 %v8084, 0.3275911
    %v8101 = vmul.f32 %v8085, 0.3275911
    %v8102 = vmul.f32 %v8086, 0.3275911
    %v8103 = vmul.f32 %v8087, 0.3275911
    %v8104 = vmul.f32 %v8088, 0.3275911
    %v8105 = vmul.f32 %v8089, 0.3275911
    %v8106 = vmul.f32 %v8090, 0.3275911
    %v8107 = vadd.f32 %v8091, 1.0
    %v8108 = vadd.f32 %v8092, 1.0
    %v8109 = vadd.f32 %v8093, 1.0
    %v8110 = vadd.f32 %v8094, 1.0
    %v8111 = vadd.f32 %v8095, 1.0
    %v8112 = vadd.f32 %v8096, 1.0
    %v8113 = vadd.f32 %v8097, 1.0
    %v8114 = vadd.f32 %v8098, 1.0
    %v8115 = vadd.f32 %v8099, 1.0
    %v8116 = vadd.f32 %v8100, 1.0
    %v8117 = vadd.f32 %v8101, 1.0
    %v8118 = vadd.f32 %v8102, 1.0
    %v8119 = vadd.f32 %v8103, 1.0
    %v8120 = vadd.f32 %v8104, 1.0
    %v8121 = vadd.f32 %v8105, 1.0
    %v8122 = vadd.f32 %v8106, 1.0
    %v8123 = vrcp.pop %v8107
    %v8124 = vmul.f32 %v8107, %v8123
    %v8125 = vsub.f32 1.0, %v8124
    %v8126 = vmul.f32 %v8123, %v8125
    %v8127 = vadd.f32 %v8123, %v8126
    %vm8128 = vweird.f32 %v8107
    %vm8129 = vweird.f32 %v8123
    %vm8130 = vmor %vm8128, %vm8129
    %v8131 = vsel %vm8130, %v8123, %v8127
    %v8132 = vand.u32 2147483647, %v8107
    %vm8133 = vcmp.eq.f32.partialorder %v8132, 8.507059e+37
    %v8134 = vand.u32 %v8107, 2147483648
    %v8135 = vor.u32 1.1754944e-38, %v8134
    %v8136 = vsel %vm8133, %v8135, %v8131
    %v8137 = vmul.f32 1.0, %v8136
    %v8138 = vrcp.pop %v8108
    %v8139 = vmul.f32 %v8108, %v8138
    %v8140 = vsub.f32 1.0, %v8139
    %v8141 = vmul.f32 %v8138, %v8140
    %v8142 = vadd.f32 %v8138, %v8141
    %vm8143 = vweird.f32 %v8108
    %vm8144 = vweird.f32 %v8138
    %vm8145 = vmor %vm8143, %vm8144
    %v8146 = vsel %vm8145, %v8138, %v8142
    %v8147 = vand.u32 2147483647, %v8108
    %vm8148 = vcmp.eq.f32.partialorder %v8147, 8.507059e+37
    %v8149 = vand.u32 %v8108, 2147483648
    %v8150 = vor.u32 1.1754944e-38, %v8149
    %v8151 = vsel %vm8148, %v8150, %v8146
    %v8152 = vmul.f32 1.0, %v8151
    %v8153 = vrcp.pop %v8109
    %v8154 = vmul.f32 %v8109, %v8153
    %v8155 = vsub.f32 1.0, %v8154
    %v8156 = vmul.f32 %v8153, %v8155
    %v8157 = vadd.f32 %v8153, %v8156
    %vm8158 = vweird.f32 %v8109
    %vm8159 = vweird.f32 %v8153
    %vm8160 = vmor %vm8158, %vm8159
    %v8161 = vsel %vm8160, %v8153, %v8157
    %v8162 = vand.u32 2147483647, %v8109
    %vm8163 = vcmp.eq.f32.partialorder %v8162, 8.507059e+37
    %v8164 = vand.u32 %v8109, 2147483648
    %v8165 = vor.u32 1.1754944e-38, %v8164
    %v8166 = vsel %vm8163, %v8165, %v8161
    %v8167 = vmul.f32 1.0, %v8166
    %v8168 = vrcp.pop %v8110
    %v8169 = vmul.f32 %v8110, %v8168
    %v8170 = vsub.f32 1.0, %v8169
    %v8171 = vmul.f32 %v8168, %v8170
    %v8172 = vadd.f32 %v8168, %v8171
    %vm8173 = vweird.f32 %v8110
    %vm8174 = vweird.f32 %v8168
    %vm8175 = vmor %vm8173, %vm8174
    %v8176 = vsel %vm8175, %v8168, %v8172
    %v8177 = vand.u32 2147483647, %v8110
    %vm8178 = vcmp.eq.f32.partialorder %v8177, 8.507059e+37
    %v8179 = vand.u32 %v8110, 2147483648
    %v8180 = vor.u32 1.1754944e-38, %v8179
    %v8181 = vsel %vm8178, %v8180, %v8176
    %v8182 = vmul.f32 1.0, %v8181
    %v8183 = vrcp.pop %v8111
    %v8184 = vmul.f32 %v8111, %v8183
    %v8185 = vsub.f32 1.0, %v8184
    %v8186 = vmul.f32 %v8183, %v8185
    %v8187 = vadd.f32 %v8183, %v8186
    %vm8188 = vweird.f32 %v8111
    %vm8189 = vweird.f32 %v8183
    %vm8190 = vmor %vm8188, %vm8189
    %v8191 = vsel %vm8190, %v8183, %v8187
    %v8192 = vand.u32 2147483647, %v8111
    %vm8193 = vcmp.eq.f32.partialorder %v8192, 8.507059e+37
    %v8194 = vand.u32 %v8111, 2147483648
    %v8195 = vor.u32 1.1754944e-38, %v8194
    %v8196 = vsel %vm8193, %v8195, %v8191
    %v8197 = vmul.f32 1.0, %v8196
    %v8198 = vrcp.pop %v8112
    %v8199 = vmul.f32 %v8112, %v8198
    %v8200 = vsub.f32 1.0, %v8199
    %v8201 = vmul.f32 %v8198, %v8200
    %v8202 = vadd.f32 %v8198, %v8201
    %vm8203 = vweird.f32 %v8112
    %vm8204 = vweird.f32 %v8198
    %vm8205 = vmor %vm8203, %vm8204
    %v8206 = vsel %vm8205, %v8198, %v8202
    %v8207 = vand.u32 2147483647, %v8112
    %vm8208 = vcmp.eq.f32.partialorder %v8207, 8.507059e+37
    %v8209 = vand.u32 %v8112, 2147483648
    %v8210 = vor.u32 1.1754944e-38, %v8209
    %v8211 = vsel %vm8208, %v8210, %v8206
    %v8212 = vmul.f32 1.0, %v8211
    %v8213 = vrcp.pop %v8113
    %v8214 = vmul.f32 %v8113, %v8213
    %v8215 = vsub.f32 1.0, %v8214
    %v8216 = vmul.f32 %v8213, %v8215
    %v8217 = vadd.f32 %v8213, %v8216
    %vm8218 = vweird.f32 %v8113
    %vm8219 = vweird.f32 %v8213
    %vm8220 = vmor %vm8218, %vm8219
    %v8221 = vsel %vm8220, %v8213, %v8217
    %v8222 = vand.u32 2147483647, %v8113
    %vm8223 = vcmp.eq.f32.partialorder %v8222, 8.507059e+37
    %v8224 = vand.u32 %v8113, 2147483648
    %v8225 = vor.u32 1.1754944e-38, %v8224
    %v8226 = vsel %vm8223, %v8225, %v8221
    %v8227 = vmul.f32 1.0, %v8226
    %v8228 = vrcp.pop %v8114
    %v8229 = vmul.f32 %v8114, %v8228
    %v8230 = vsub.f32 1.0, %v8229
    %v8231 = vmul.f32 %v8228, %v8230
    %v8232 = vadd.f32 %v8228, %v8231
    %vm8233 = vweird.f32 %v8114
    %vm8234 = vweird.f32 %v8228
    %vm8235 = vmor %vm8233, %vm8234
    %v8236 = vsel %vm8235, %v8228, %v8232
    %v8237 = vand.u32 2147483647, %v8114
    %vm8238 = vcmp.eq.f32.partialorder %v8237, 8.507059e+37
    %v8239 = vand.u32 %v8114, 2147483648
    %v8240 = vor.u32 1.1754944e-38, %v8239
    %v8241 = vsel %vm8238, %v8240, %v8236
    %v8242 = vmul.f32 1.0, %v8241
    %v8243 = vrcp.pop %v8115
    %v8244 = vmul.f32 %v8115, %v8243
    %v8245 = vsub.f32 1.0, %v8244
    %v8246 = vmul.f32 %v8243, %v8245
    %v8247 = vadd.f32 %v8243, %v8246
    %vm8248 = vweird.f32 %v8115
    %vm8249 = vweird.f32 %v8243
    %vm8250 = vmor %vm8248, %vm8249
    %v8251 = vsel %vm8250, %v8243, %v8247
    %v8252 = vand.u32 2147483647, %v8115
    %vm8253 = vcmp.eq.f32.partialorder %v8252, 8.507059e+37
    %v8254 = vand.u32 %v8115, 2147483648
    %v8255 = vor.u32 1.1754944e-38, %v8254
    %v8256 = vsel %vm8253, %v8255, %v8251
    %v8257 = vmul.f32 1.0, %v8256
    %v8258 = vrcp.pop %v8116
    %v8259 = vmul.f32 %v8116, %v8258
    %v8260 = vsub.f32 1.0, %v8259
    %v8261 = vmul.f32 %v8258, %v8260
    %v8262 = vadd.f32 %v8258, %v8261
    %vm8263 = vweird.f32 %v8116
    %vm8264 = vweird.f32 %v8258
    %vm8265 = vmor %vm8263, %vm8264
    %v8266 = vsel %vm8265, %v8258, %v8262
    %v8267 = vand.u32 2147483647, %v8116
    %vm8268 = vcmp.eq.f32.partialorder %v8267, 8.507059e+37
    %v8269 = vand.u32 %v8116, 2147483648
    %v8270 = vor.u32 1.1754944e-38, %v8269
    %v8271 = vsel %vm8268, %v8270, %v8266
    %v8272 = vmul.f32 1.0, %v8271
    %v8273 = vrcp.pop %v8117
    %v8274 = vmul.f32 %v8117, %v8273
    %v8275 = vsub.f32 1.0, %v8274
    %v8276 = vmul.f32 %v8273, %v8275
    %v8277 = vadd.f32 %v8273, %v8276
    %vm8278 = vweird.f32 %v8117
    %vm8279 = vweird.f32 %v8273
    %vm8280 = vmor %vm8278, %vm8279
    %v8281 = vsel %vm8280, %v8273, %v8277
    %v8282 = vand.u32 2147483647, %v8117
    %vm8283 = vcmp.eq.f32.partialorder %v8282, 8.507059e+37
    %v8284 = vand.u32 %v8117, 2147483648
    %v8285 = vor.u32 1.1754944e-38, %v8284
    %v8286 = vsel %vm8283, %v8285, %v8281
    %v8287 = vmul.f32 1.0, %v8286
    %v8288 = vrcp.pop %v8118
    %v8289 = vmul.f32 %v8118, %v8288
    %v8290 = vsub.f32 1.0, %v8289
    %v8291 = vmul.f32 %v8288, %v8290
    %v8292 = vadd.f32 %v8288, %v8291
    %vm8293 = vweird.f32 %v8118
    %vm8294 = vweird.f32 %v8288
    %vm8295 = vmor %vm8293, %vm8294
    %v8296 = vsel %vm8295, %v8288, %v8292
    %v8297 = vand.u32 2147483647, %v8118
    %vm8298 = vcmp.eq.f32.partialorder %v8297, 8.507059e+37
    %v8299 = vand.u32 %v8118, 2147483648
    %v8300 = vor.u32 1.1754944e-38, %v8299
    %v8301 = vsel %vm8298, %v8300, %v8296
    %v8302 = vmul.f32 1.0, %v8301
    %v8303 = vrcp.pop %v8119
    %v8304 = vmul.f32 %v8119, %v8303
    %v8305 = vsub.f32 1.0, %v8304
    %v8306 = vmul.f32 %v8303, %v8305
    %v8307 = vadd.f32 %v8303, %v8306
    %vm8308 = vweird.f32 %v8119
    %vm8309 = vweird.f32 %v8303
    %vm8310 = vmor %vm8308, %vm8309
    %v8311 = vsel %vm8310, %v8303, %v8307
    %v8312 = vand.u32 2147483647, %v8119
    %vm8313 = vcmp.eq.f32.partialorder %v8312, 8.507059e+37
    %v8314 = vand.u32 %v8119, 2147483648
    %v8315 = vor.u32 1.1754944e-38, %v8314
    %v8316 = vsel %vm8313, %v8315, %v8311
    %v8317 = vmul.f32 1.0, %v8316
    %v8318 = vrcp.pop %v8120
    %v8319 = vmul.f32 %v8120, %v8318
    %v8320 = vsub.f32 1.0, %v8319
    %v8321 = vmul.f32 %v8318, %v8320
    %v8322 = vadd.f32 %v8318, %v8321
    %vm8323 = vweird.f32 %v8120
    %vm8324 = vweird.f32 %v8318
    %vm8325 = vmor %vm8323, %vm8324
    %v8326 = vsel %vm8325, %v8318, %v8322
    %v8327 = vand.u32 2147483647, %v8120
    %vm8328 = vcmp.eq.f32.partialorder %v8327, 8.507059e+37
    %v8329 = vand.u32 %v8120, 2147483648
    %v8330 = vor.u32 1.1754944e-38, %v8329
    %v8331 = vsel %vm8328, %v8330, %v8326
    %v8332 = vmul.f32 1.0, %v8331
    %v8333 = vrcp.pop %v8121
    %v8334 = vmul.f32 %v8121, %v8333
    %v8335 = vsub.f32 1.0, %v8334
    %v8336 = vmul.f32 %v8333, %v8335
    %v8337 = vadd.f32 %v8333, %v8336
    %vm8338 = vweird.f32 %v8121
    %vm8339 = vweird.f32 %v8333
    %vm8340 = vmor %vm8338, %vm8339
    %v8341 = vsel %vm8340, %v8333, %v8337
    %v8342 = vand.u32 2147483647, %v8121
    %vm8343 = vcmp.eq.f32.partialorder %v8342, 8.507059e+37
    %v8344 = vand.u32 %v8121, 2147483648
    %v8345 = vor.u32 1.1754944e-38, %v8344
    %v8346 = vsel %vm8343, %v8345, %v8341
    %v8347 = vmul.f32 1.0, %v8346
    %v8348 = vrcp.pop %v8122
    %v8349 = vmul.f32 %v8122, %v8348
    %v8350 = vsub.f32 1.0, %v8349
    %v8351 = vmul.f32 %v8348, %v8350
    %v8352 = vadd.f32 %v8348, %v8351
    %vm8353 = vweird.f32 %v8122
    %vm8354 = vweird.f32 %v8348
    %vm8355 = vmor %vm8353, %vm8354
    %v8356 = vsel %vm8355, %v8348, %v8352
    %v8357 = vand.u32 2147483647, %v8122
    %vm8358 = vcmp.eq.f32.partialorder %v8357, 8.507059e+37
    %v8359 = vand.u32 %v8122, 2147483648
    %v8360 = vor.u32 1.1754944e-38, %v8359
    %v8361 = vsel %vm8358, %v8360, %v8356
    %v8362 = vmul.f32 1.0, %v8361
    %v8363 = vmul.f32 %v8137, 1.0614054
    %v8364 = vmul.f32 %v8152, 1.0614054
    %v8365 = vmul.f32 %v8167, 1.0614054
    %v8366 = vmul.f32 %v8182, 1.0614054
    %v8367 = vmul.f32 %v8197, 1.0614054
    %v8368 = vmul.f32 %v8212, 1.0614054
    %v8369 = vmul.f32 %v8227, 1.0614054
    %v8370 = vmul.f32 %v8242, 1.0614054
    %v8371 = vmul.f32 %v8257, 1.0614054
    %v8372 = vmul.f32 %v8272, 1.0614054
    %v8373 = vmul.f32 %v8287, 1.0614054
    %v8374 = vmul.f32 %v8302, 1.0614054
    %v8375 = vmul.f32 %v8317, 1.0614054
    %v8376 = vmul.f32 %v8332, 1.0614054
    %v8377 = vmul.f32 %v8347, 1.0614054
    %v8378 = vmul.f32 %v8362, 1.0614054
    %v8379 = vadd.f32 %v8363, -1.4531521
    %v8380 = vadd.f32 %v8364, -1.4531521
    %v8381 = vadd.f32 %v8365, -1.4531521
    %v8382 = vadd.f32 %v8366, -1.4531521
    %v8383 = vadd.f32 %v8367, -1.4531521
    %v8384 = vadd.f32 %v8368, -1.4531521
    %v8385 = vadd.f32 %v8369, -1.4531521
    %v8386 = vadd.f32 %v8370, -1.4531521
    %v8387 = vadd.f32 %v8371, -1.4531521
    %v8388 = vadd.f32 %v8372, -1.4531521
    %v8389 = vadd.f32 %v8373, -1.4531521
    %v8390 = vadd.f32 %v8374, -1.4531521
    %v8391 = vadd.f32 %v8375, -1.4531521
    %v8392 = vadd.f32 %v8376, -1.4531521
    %v8393 = vadd.f32 %v8377, -1.4531521
    %v8394 = vadd.f32 %v8378, -1.4531521
    %v8395 = vmul.f32 %v8379, %v8137
    %v8396 = vmul.f32 %v8380, %v8152
    %v8397 = vmul.f32 %v8381, %v8167
    %v8398 = vmul.f32 %v8382, %v8182
    %v8399 = vmul.f32 %v8383, %v8197
    %v8400 = vmul.f32 %v8384, %v8212
    %v8401 = vmul.f32 %v8385, %v8227
    %v8402 = vmul.f32 %v8386, %v8242
    %v8403 = vmul.f32 %v8387, %v8257
    %v8404 = vmul.f32 %v8388, %v8272
    %v8405 = vmul.f32 %v8389, %v8287
    %v8406 = vmul.f32 %v8390, %v8302
    %v8407 = vmul.f32 %v8391, %v8317
    %v8408 = vmul.f32 %v8392, %v8332
    %v8409 = vmul.f32 %v8393, %v8347
    %v8410 = vmul.f32 %v8394, %v8362
    %v8411 = vadd.f32 %v8395, 1.4214138
    %v8412 = vadd.f32 %v8396, 1.4214138
    %v8413 = vadd.f32 %v8397, 1.4214138
    %v8414 = vadd.f32 %v8398, 1.4214138
    %v8415 = vadd.f32 %v8399, 1.4214138
    %v8416 = vadd.f32 %v8400, 1.4214138
    %v8417 = vadd.f32 %v8401, 1.4214138
    %v8418 = vadd.f32 %v8402, 1.4214138
    %v8419 = vadd.f32 %v8403, 1.4214138
    %v8420 = vadd.f32 %v8404, 1.4214138
    %v8421 = vadd.f32 %v8405, 1.4214138
    %v8422 = vadd.f32 %v8406, 1.4214138
    %v8423 = vadd.f32 %v8407, 1.4214138
    %v8424 = vadd.f32 %v8408, 1.4214138
    %v8425 = vadd.f32 %v8409, 1.4214138
    %v8426 = vadd.f32 %v8410, 1.4214138
    %v8427 = vmul.f32 %v8411, %v8137
    %v8428 = vmul.f32 %v8412, %v8152
    %v8429 = vmul.f32 %v8413, %v8167
    %v8430 = vmul.f32 %v8414, %v8182
    %v8431 = vmul.f32 %v8415, %v8197
    %v8432 = vmul.f32 %v8416, %v8212
    %v8433 = vmul.f32 %v8417, %v8227
    %v8434 = vmul.f32 %v8418, %v8242
    %v8435 = vmul.f32 %v8419, %v8257
    %v8436 = vmul.f32 %v8420, %v8272
    %v8437 = vmul.f32 %v8421, %v8287
    %v8438 = vmul.f32 %v8422, %v8302
    %v8439 = vmul.f32 %v8423, %v8317
    %v8440 = vmul.f32 %v8424, %v8332
    %v8441 = vmul.f32 %v8425, %v8347
    %v8442 = vmul.f32 %v8426, %v8362
    %v8443 = vadd.f32 %v8427, -0.28449672
    %v8444 = vadd.f32 %v8428, -0.28449672
    %v8445 = vadd.f32 %v8429, -0.28449672
    %v8446 = vadd.f32 %v8430, -0.28449672
    %v8447 = vadd.f32 %v8431, -0.28449672
    %v8448 = vadd.f32 %v8432, -0.28449672
    %v8449 = vadd.f32 %v8433, -0.28449672
    %v8450 = vadd.f32 %v8434, -0.28449672
    %v8451 = vadd.f32 %v8435, -0.28449672
    %v8452 = vadd.f32 %v8436, -0.28449672
    %v8453 = vadd.f32 %v8437, -0.28449672
    %v8454 = vadd.f32 %v8438, -0.28449672
    %v8455 = vadd.f32 %v8439, -0.28449672
    %v8456 = vadd.f32 %v8440, -0.28449672
    %v8457 = vadd.f32 %v8441, -0.28449672
    %v8458 = vadd.f32 %v8442, -0.28449672
    %v8459 = vmul.f32 %v8443, %v8137
    %v8460 = vmul.f32 %v8444, %v8152
    %v8461 = vmul.f32 %v8445, %v8167
    %v8462 = vmul.f32 %v8446, %v8182
    %v8463 = vmul.f32 %v8447, %v8197
    %v8464 = vmul.f32 %v8448, %v8212
    %v8465 = vmul.f32 %v8449, %v8227
    %v8466 = vmul.f32 %v8450, %v8242
    %v8467 = vmul.f32 %v8451, %v8257
    %v8468 = vmul.f32 %v8452, %v8272
    %v8469 = vmul.f32 %v8453, %v8287
    %v8470 = vmul.f32 %v8454, %v8302
    %v8471 = vmul.f32 %v8455, %v8317
    %v8472 = vmul.f32 %v8456, %v8332
    %v8473 = vmul.f32 %v8457, %v8347
    %v8474 = vmul.f32 %v8458, %v8362
    %v8475 = vadd.f32 %v8459, 0.2548296
    %v8476 = vadd.f32 %v8460, 0.2548296
    %v8477 = vadd.f32 %v8461, 0.2548296
    %v8478 = vadd.f32 %v8462, 0.2548296
    %v8479 = vadd.f32 %v8463, 0.2548296
    %v8480 = vadd.f32 %v8464, 0.2548296
    %v8481 = vadd.f32 %v8465, 0.2548296
    %v8482 = vadd.f32 %v8466, 0.2548296
    %v8483 = vadd.f32 %v8467, 0.2548296
    %v8484 = vadd.f32 %v8468, 0.2548296
    %v8485 = vadd.f32 %v8469, 0.2548296
    %v8486 = vadd.f32 %v8470, 0.2548296
    %v8487 = vadd.f32 %v8471, 0.2548296
    %v8488 = vadd.f32 %v8472, 0.2548296
    %v8489 = vadd.f32 %v8473, 0.2548296
    %v8490 = vadd.f32 %v8474, 0.2548296
    %v8491 = vmul.f32 %v8475, %v8137
    %v8492 = vmul.f32 %v8476, %v8152
    %v8493 = vmul.f32 %v8477, %v8167
    %v8494 = vmul.f32 %v8478, %v8182
    %v8495 = vmul.f32 %v8479, %v8197
    %v8496 = vmul.f32 %v8480, %v8212
    %v8497 = vmul.f32 %v8481, %v8227
    %v8498 = vmul.f32 %v8482, %v8242
    %v8499 = vmul.f32 %v8483, %v8257
    %v8500 = vmul.f32 %v8484, %v8272
    %v8501 = vmul.f32 %v8485, %v8287
    %v8502 = vmul.f32 %v8486, %v8302
    %v8503 = vmul.f32 %v8487, %v8317
    %v8504 = vmul.f32 %v8488, %v8332
    %v8505 = vmul.f32 %v8489, %v8347
    %v8506 = vmul.f32 %v8490, %v8362
    %v8507 = vsub.f32 0.0, %v8075
    %v8508 = vsub.f32 0.0, %v8076
    %v8509 = vsub.f32 0.0, %v8077
    %v8510 = vsub.f32 0.0, %v8078
    %v8511 = vsub.f32 0.0, %v8079
    %v8512 = vsub.f32 0.0, %v8080
    %v8513 = vsub.f32 0.0, %v8081
    %v8514 = vsub.f32 0.0, %v8082
    %v8515 = vsub.f32 0.0, %v8083
    %v8516 = vsub.f32 0.0, %v8084
    %v8517 = vsub.f32 0.0, %v8085
    %v8518 = vsub.f32 0.0, %v8086
    %v8519 = vsub.f32 0.0, %v8087
    %v8520 = vsub.f32 0.0, %v8088
    %v8521 = vsub.f32 0.0, %v8089
    %v8522 = vsub.f32 0.0, %v8090
    %v8523 = vmul.f32 %v8507, %v8075
    %v8524 = vmul.f32 %v8508, %v8076
    %v8525 = vmul.f32 %v8509, %v8077
    %v8526 = vmul.f32 %v8510, %v8078
    %v8527 = vmul.f32 %v8511, %v8079
    %v8528 = vmul.f32 %v8512, %v8080
    %v8529 = vmul.f32 %v8513, %v8081
    %v8530 = vmul.f32 %v8514, %v8082
    %v8531 = vmul.f32 %v8515, %v8083
    %v8532 = vmul.f32 %v8516, %v8084
    %v8533 = vmul.f32 %v8517, %v8085
    %v8534 = vmul.f32 %v8518, %v8086
    %v8535 = vmul.f32 %v8519, %v8087
    %v8536 = vmul.f32 %v8520, %v8088
    %v8537 = vmul.f32 %v8521, %v8089
    %v8538 = vmul.f32 %v8522, %v8090
    %v8539 = vmul.f32 %v8523, 1.442695
    %v8540 = vpow.pop %v8539
    %v8541 = vmul.f32 %v8524, 1.442695
    %v8542 = vpow.pop %v8541
    %v8543 = vmul.f32 %v8525, 1.442695
    %v8544 = vpow.pop %v8543
    %v8545 = vmul.f32 %v8526, 1.442695
    %v8546 = vpow.pop %v8545
    %v8547 = vmul.f32 %v8527, 1.442695
    %v8548 = vpow.pop %v8547
    %v8549 = vmul.f32 %v8528, 1.442695
    %v8550 = vpow.pop %v8549
    %v8551 = vmul.f32 %v8529, 1.442695
    %v8552 = vpow.pop %v8551
    %v8553 = vmul.f32 %v8530, 1.442695
    %v8554 = vpow.pop %v8553
    %v8555 = vmul.f32 %v8531, 1.442695
    %v8556 = vpow.pop %v8555
    %v8557 = vmul.f32 %v8532, 1.442695
    %v8558 = vpow.pop %v8557
    %v8559 = vmul.f32 %v8533, 1.442695
    %v8560 = vpow.pop %v8559
    %v8561 = vmul.f32 %v8534, 1.442695
    %v8562 = vpow.pop %v8561
    %v8563 = vmul.f32 %v8535, 1.442695
    %v8564 = vpow.pop %v8563
    %v8565 = vmul.f32 %v8536, 1.442695
    %v8566 = vpow.pop %v8565
    %v8567 = vmul.f32 %v8537, 1.442695
    %v8568 = vpow.pop %v8567
    %v8569 = vmul.f32 %v8538, 1.442695
    %v8570 = vpow.pop %v8569
    %v8571 = vmul.f32 %v8491, %v8540
    %v8572 = vmul.f32 %v8492, %v8542
    %v8573 = vmul.f32 %v8493, %v8544
    %v8574 = vmul.f32 %v8494, %v8546
    %v8575 = vmul.f32 %v8495, %v8548
    %v8576 = vmul.f32 %v8496, %v8550
    %v8577 = vmul.f32 %v8497, %v8552
    %v8578 = vmul.f32 %v8498, %v8554
    %v8579 = vmul.f32 %v8499, %v8556
    %v8580 = vmul.f32 %v8500, %v8558
    %v8581 = vmul.f32 %v8501, %v8560
    %v8582 = vmul.f32 %v8502, %v8562
    %v8583 = vmul.f32 %v8503, %v8564
    %v8584 = vmul.f32 %v8504, %v8566
    %v8585 = vmul.f32 %v8505, %v8568
    %v8586 = vmul.f32 %v8506, %v8570
    %v8587 = vsub.f32 1.0, %v8571
    %v8588 = vsub.f32 1.0, %v8572
    %v8589 = vsub.f32 1.0, %v8573
    %v8590 = vsub.f32 1.0, %v8574
    %v8591 = vsub.f32 1.0, %v8575
    %v8592 = vsub.f32 1.0, %v8576
    %v8593 = vsub.f32 1.0, %v8577
    %v8594 = vsub.f32 1.0, %v8578
    %v8595 = vsub.f32 1.0, %v8579
    %v8596 = vsub.f32 1.0, %v8580
    %v8597 = vsub.f32 1.0, %v8581
    %v8598 = vsub.f32 1.0, %v8582
    %v8599 = vsub.f32 1.0, %v8583
    %v8600 = vsub.f32 1.0, %v8584
    %v8601 = vsub.f32 1.0, %v8585
    %v8602 = vsub.f32 1.0, %v8586
    %vm8603 = vcmp.ge.f32.partialorder %v8059, 0.0
    %vm8604 = vcmp.ge.f32.partialorder %v8060, 0.0
    %vm8605 = vcmp.ge.f32.partialorder %v8061, 0.0
    %vm8606 = vcmp.ge.f32.partialorder %v8062, 0.0
    %vm8607 = vcmp.ge.f32.partialorder %v8063, 0.0
    %vm8608 = vcmp.ge.f32.partialorder %v8064, 0.0
    %vm8609 = vcmp.ge.f32.partialorder %v8065, 0.0
    %vm8610 = vcmp.ge.f32.partialorder %v8066, 0.0
    %vm8611 = vcmp.ge.f32.partialorder %v8067, 0.0
    %vm8612 = vcmp.ge.f32.partialorder %v8068, 0.0
    %vm8613 = vcmp.ge.f32.partialorder %v8069, 0.0
    %vm8614 = vcmp.ge.f32.partialorder %v8070, 0.0
    %vm8615 = vcmp.ge.f32.partialorder %v8071, 0.0
    %vm8616 = vcmp.ge.f32.partialorder %v8072, 0.0
    %vm8617 = vcmp.ge.f32.partialorder %v8073, 0.0
    %vm8618 = vcmp.ge.f32.partialorder %v8074, 0.0
    %v8619 = vsub.f32 0.0, %v8587
    %v8620 = vsub.f32 0.0, %v8588
    %v8621 = vsub.f32 0.0, %v8589
    %v8622 = vsub.f32 0.0, %v8590
    %v8623 = vsub.f32 0.0, %v8591
    %v8624 = vsub.f32 0.0, %v8592
    %v8625 = vsub.f32 0.0, %v8593
    %v8626 = vsub.f32 0.0, %v8594
    %v8627 = vsub.f32 0.0, %v8595
    %v8628 = vsub.f32 0.0, %v8596
    %v8629 = vsub.f32 0.0, %v8597
    %v8630 = vsub.f32 0.0, %v8598
    %v8631 = vsub.f32 0.0, %v8599
    %v8632 = vsub.f32 0.0, %v8600
    %v8633 = vsub.f32 0.0, %v8601
    %v8634 = vsub.f32 0.0, %v8602
    %v8635 = vsel %vm8603, %v8587, %v8619
    %v8636 = vsel %vm8604, %v8588, %v8620
    %v8637 = vsel %vm8605, %v8589, %v8621
    %v8638 = vsel %vm8606, %v8590, %v8622
    %v8639 = vsel %vm8607, %v8591, %v8623
    %v8640 = vsel %vm8608, %v8592, %v8624
    %v8641 = vsel %vm8609, %v8593, %v8625
    %v8642 = vsel %vm8610, %v8594, %v8626
    %v8643 = vsel %vm8611, %v8595, %v8627
    %v8644 = vsel %vm8612, %v8596, %v8628
    %v8645 = vsel %vm8613, %v8597, %v8629
    %v8646 = vsel %vm8614, %v8598, %v8630
    %v8647 = vsel %vm8615, %v8599, %v8631
    %v8648 = vsel %vm8616, %v8600, %v8632
    %v8649 = vsel %vm8617, %v8601, %v8633
    %v8650 = vsel %vm8618, %v8602, %v8634
    %v8651 = vmul.f32 %v8012, 0.5
    %v8652 = vmul.f32 %v8015, 0.5
    %v8653 = vmul.f32 %v8018, 0.5
    %v8654 = vmul.f32 %v8021, 0.5
    %v8655 = vmul.f32 %v8024, 0.5
    %v8656 = vmul.f32 %v8027, 0.5
    %v8657 = vmul.f32 %v8030, 0.5
    %v8658 = vmul.f32 %v8033, 0.5
    %v8659 = vmul.f32 %v8036, 0.5
    %v8660 = vmul.f32 %v8039, 0.5
    %v8661 = vmul.f32 %v8042, 0.5
    %v8662 = vmul.f32 %v8045, 0.5
    %v8663 = vmul.f32 %v8048, 0.5
    %v8664 = vmul.f32 %v8051, 0.5
    %v8665 = vmul.f32 %v8054, 0.5
    %v8666 = vmul.f32 %v8057, 0.5
    %v8667 = vadd.f32 %v8635, 1.0
    %v8668 = vadd.f32 %v8636, 1.0
    %v8669 = vadd.f32 %v8637, 1.0
    %v8670 = vadd.f32 %v8638, 1.0
    %v8671 = vadd.f32 %v8639, 1.0
    %v8672 = vadd.f32 %v8640, 1.0
    %v8673 = vadd.f32 %v8641, 1.0
    %v8674 = vadd.f32 %v8642, 1.0
    %v8675 = vadd.f32 %v8643, 1.0
    %v8676 = vadd.f32 %v8644, 1.0
    %v8677 = vadd.f32 %v8645, 1.0
    %v8678 = vadd.f32 %v8646, 1.0
    %v8679 = vadd.f32 %v8647, 1.0
    %v8680 = vadd.f32 %v8648, 1.0
    %v8681 = vadd.f32 %v8649, 1.0
    %v8682 = vadd.f32 %v8650, 1.0
    %v8683 = vmul.f32 %v8651, %v8667
    %v8684 = vmul.f32 %v8652, %v8668
    %v8685 = vmul.f32 %v8653, %v8669
    %v8686 = vmul.f32 %v8654, %v8670
    %v8687 = vmul.f32 %v8655, %v8671
    %v8688 = vmul.f32 %v8656, %v8672
    %v8689 = vmul.f32 %v8657, %v8673
    %v8690 = vmul.f32 %v8658, %v8674
    %v8691 = vmul.f32 %v8659, %v8675
    %v8692 = vmul.f32 %v8660, %v8676
    %v8693 = vmul.f32 %v8661, %v8677
    %v8694 = vmul.f32 %v8662, %v8678
    %v8695 = vmul.f32 %v8663, %v8679
    %v8696 = vmul.f32 %v8664, %v8680
    %v8697 = vmul.f32 %v8665, %v8681
    %v8698 = vmul.f32 %v8666, %v8682
    %8699 = vmatpush.msra.mxu0 %v4622
    %8700 = vmatpush.msra.mxu0 %v4621
    %8701 = vmatpush.msra.mxu0 %v4620
    %8702 = vmatpush.msra.mxu0 %v4619
    %8703 = vmatpush.msra.mxu0 %v4618
    %8704 = vmatpush.msra.mxu0 %v4617
    %8705 = vmatpush.msra.mxu0 %v4616
    %8706 = vmatpush.msra.mxu0 %v4615
    %8707 = vmatpush.msra.mxu0 %v4614
    %8708 = vmatpush.msra.mxu0 %v4613
    %8709 = vmatpush.msra.mxu0 %v4612
    %8710 = vmatpush.msra.mxu0 %v4611
    %8711 = vmatpush.msra.mxu0 %v4610
    %8712 = vmatpush.msra.mxu0 %v4609
    %8713 = vmatpush.msra.mxu0 %v4608
    %8714 = vmatpush.msra.mxu0 %v4607
    %8715 = vmatmul.f32.gmra.mxu0 %v8683
    %v8716 = vpop.f32.mrf.mxu0
    %v8717 = vadd.f32 0.0, %v8716
    %8718 = vmatmul.f32.gmra.mxu0 %v8684
    %v8719 = vpop.f32.mrf.mxu0
    %v8720 = vadd.f32 0.0, %v8719
    %8721 = vmatmul.f32.gmra.mxu0 %v8685
    %v8722 = vpop.f32.mrf.mxu0
    %v8723 = vadd.f32 0.0, %v8722
    %8724 = vmatmul.f32.gmra.mxu0 %v8686
    %v8725 = vpop.f32.mrf.mxu0
    %v8726 = vadd.f32 0.0, %v8725
    %8727 = vmatmul.f32.gmra.mxu0 %v8687
    %v8728 = vpop.f32.mrf.mxu0
    %v8729 = vadd.f32 0.0, %v8728
    %8730 = vmatmul.f32.gmra.mxu0 %v8688
    %v8731 = vpop.f32.mrf.mxu0
    %v8732 = vadd.f32 0.0, %v8731
    %8733 = vmatmul.f32.gmra.mxu0 %v8689
    %v8734 = vpop.f32.mrf.mxu0
    %v8735 = vadd.f32 0.0, %v8734
    %8736 = vmatmul.f32.gmra.mxu0 %v8690
    %v8737 = vpop.f32.mrf.mxu0
    %v8738 = vadd.f32 0.0, %v8737
    %8739 = vmatmul.f32.gmra.mxu0 %v8691
    %v8740 = vpop.f32.mrf.mxu0
    %v8741 = vadd.f32 0.0, %v8740
    %8742 = vmatmul.f32.gmra.mxu0 %v8692
    %v8743 = vpop.f32.mrf.mxu0
    %v8744 = vadd.f32 0.0, %v8743
    %8745 = vmatmul.f32.gmra.mxu0 %v8693
    %v8746 = vpop.f32.mrf.mxu0
    %v8747 = vadd.f32 0.0, %v8746
    %8748 = vmatmul.f32.gmra.mxu0 %v8694
    %v8749 = vpop.f32.mrf.mxu0
    %v8750 = vadd.f32 0.0, %v8749
    %8751 = vmatmul.f32.gmra.mxu0 %v8695
    %v8752 = vpop.f32.mrf.mxu0
    %v8753 = vadd.f32 0.0, %v8752
    %8754 = vmatmul.f32.gmra.mxu0 %v8696
    %v8755 = vpop.f32.mrf.mxu0
    %v8756 = vadd.f32 0.0, %v8755
    %8757 = vmatmul.f32.gmra.mxu0 %v8697
    %v8758 = vpop.f32.mrf.mxu0
    %v8759 = vadd.f32 0.0, %v8758
    %8760 = vmatmul.f32.gmra.mxu0 %v8698
    %v8761 = vpop.f32.mrf.mxu0
    %v8762 = vadd.f32 0.0, %v8761
    %8763 = vdwg.mxu0
    %v8764 = vadd.f32 %v7537, %v8717
    %v8765 = vadd.f32 %v7538, %v8720
    %v8766 = vadd.f32 %v7539, %v8723
    %v8767 = vadd.f32 %v7540, %v8726
    %v8768 = vadd.f32 %v7541, %v8729
    %v8769 = vadd.f32 %v7542, %v8732
    %v8770 = vadd.f32 %v7543, %v8735
    %v8771 = vadd.f32 %v7544, %v8738
    %v8772 = vadd.f32 %v7545, %v8741
    %v8773 = vadd.f32 %v7546, %v8744
    %v8774 = vadd.f32 %v7547, %v8747
    %v8775 = vadd.f32 %v7548, %v8750
    %v8776 = vadd.f32 %v7549, %v8753
    %v8777 = vadd.f32 %v7550, %v8756
    %v8778 = vadd.f32 %v7551, %v8759
    %v8779 = vadd.f32 %v7552, %v8762
    %v8781 = vperm.slane %v4623, 0
    %v8783 = vadd.f32 %v8764, %v8781
    %v8784 = vadd.f32 %v8765, %v8781
    %v8785 = vadd.f32 %v8766, %v8781
    %v8786 = vadd.f32 %v8767, %v8781
    %v8787 = vadd.f32 %v8768, %v8781
    %v8788 = vadd.f32 %v8769, %v8781
    %v8789 = vadd.f32 %v8770, %v8781
    %v8790 = vadd.f32 %v8771, %v8781
    %v8791 = vadd.f32 %v8772, %v8781
    %v8792 = vadd.f32 %v8773, %v8781
    %v8793 = vadd.f32 %v8774, %v8781
    %v8794 = vadd.f32 %v8775, %v8781
    %v8795 = vadd.f32 %v8776, %v8781
    %v8796 = vadd.f32 %v8777, %v8781
    %v8797 = vadd.f32 %v8778, %v8781
    %v8798 = vadd.f32 %v8779, %v8781
    %v8799 = vld [vmem:[#allocation10] sm:$0x1]
    %v8801 = vperm.slane %v8799, 0
    %v8803 = vadd.f32 %v360, %v8801
    %v8804 = vadd.f32 %v361, %v8801
    %v8805 = vadd.f32 %v362, %v8801
    %v8806 = vadd.f32 %v363, %v8801
    %v8807 = vadd.f32 %v364, %v8801
    %v8808 = vadd.f32 %v365, %v8801
    %v8809 = vadd.f32 %v366, %v8801
    %v8810 = vadd.f32 %v367, %v8801
    %v8811 = vadd.f32 %v368, %v8801
    %v8812 = vadd.f32 %v369, %v8801
    %v8813 = vadd.f32 %v370, %v8801
    %v8814 = vadd.f32 %v371, %v8801
    %v8815 = vadd.f32 %v372, %v8801
    %v8816 = vadd.f32 %v373, %v8801
    %v8817 = vadd.f32 %v374, %v8801
    %v8818 = vadd.f32 %v375, %v8801
    %v8819 = vld [vmem:[%s15] sm:$0xff]
    %v8820 = vld [vmem:[%s15 + $0x8] sm:$0xff]
    %v8821 = vld [vmem:[%s15 + $0x10] sm:$0xff]
    %v8822 = vld [vmem:[%s15 + $0x18] sm:$0xff]
    %v8824 = vsel %vm464, %v8783, 0
    %v8827 = vsel %vm464, %v8784, 0
    %v8830 = vsel %vm464, %v8785, 0
    %v8833 = vsel %vm464, %v8786, 0
    %v8836 = vsel %vm464, %v8787, 0
    %v8839 = vsel %vm464, %v8788, 0
    %v8842 = vsel %vm464, %v8789, 0
    %v8845 = vsel %vm464, %v8790, 0
    %v8848 = vsel %vm464, %v8791, 0
    %v8851 = vsel %vm464, %v8792, 0
    %v8854 = vsel %vm464, %v8793, 0
    %v8857 = vsel %vm464, %v8794, 0
    %v8860 = vsel %vm464, %v8795, 0
    %v8863 = vsel %vm464, %v8796, 0
    %v8866 = vsel %vm464, %v8797, 0
    %v8869 = vsel %vm464, %v8798, 0
    %8871 = vmatpush.msra.mxu0 0.0
    %8872 = vmatpush.msra.mxu0 0.0
    %8873 = vmatpush.msra.mxu0 0.0
    %8874 = vmatpush.msra.mxu0 0.0
    %8875 = vmatpush.msra.mxu0 0.0
    %8876 = vmatpush.msra.mxu0 0.0
    %8877 = vmatpush.msra.mxu0 0.0
    %8878 = vmatpush.msra.mxu0 0.0
    %8879 = vmatpush.msra.mxu0 0.0
    %8880 = vmatpush.msra.mxu0 0.0
    %8881 = vmatpush.msra.mxu0 0.0
    %8882 = vmatpush.msra.mxu0 0.0
    %8883 = vmatpush.msra.mxu0 %v8822
    %8884 = vmatpush.msra.mxu0 %v8821
    %8885 = vmatpush.msra.mxu0 %v8820
    %8886 = vmatpush.msra.mxu0 %v8819
    %8887 = vmatmul.f32.gmra.mxu0 %v8824
    %v8888 = vpop.f32.mrf.mxu0
    %v8889 = vadd.f32 0.0, %v8888
    %8890 = vmatmul.f32.gmra.mxu0 %v8827
    %v8891 = vpop.f32.mrf.mxu0
    %v8892 = vadd.f32 0.0, %v8891
    %8893 = vmatmul.f32.gmra.mxu0 %v8830
    %v8894 = vpop.f32.mrf.mxu0
    %v8895 = vadd.f32 0.0, %v8894
    %8896 = vmatmul.f32.gmra.mxu0 %v8833
    %v8897 = vpop.f32.mrf.mxu0
    %v8898 = vadd.f32 0.0, %v8897
    %8899 = vmatmul.f32.gmra.mxu0 %v8836
    %v8900 = vpop.f32.mrf.mxu0
    %v8901 = vadd.f32 0.0, %v8900
    %8902 = vmatmul.f32.gmra.mxu0 %v8839
    %v8903 = vpop.f32.mrf.mxu0
    %v8904 = vadd.f32 0.0, %v8903
    %8905 = vmatmul.f32.gmra.mxu0 %v8842
    %v8906 = vpop.f32.mrf.mxu0
    %v8907 = vadd.f32 0.0, %v8906
    %8908 = vmatmul.f32.gmra.mxu0 %v8845
    %v8909 = vpop.f32.mrf.mxu0
    %v8910 = vadd.f32 0.0, %v8909
    %8911 = vmatmul.f32.gmra.mxu0 %v8848
    %v8912 = vpop.f32.mrf.mxu0
    %v8913 = vadd.f32 0.0, %v8912
    %8914 = vmatmul.f32.gmra.mxu0 %v8851
    %v8915 = vpop.f32.mrf.mxu0
    %v8916 = vadd.f32 0.0, %v8915
    %8917 = vmatmul.f32.gmra.mxu0 %v8854
    %v8918 = vpop.f32.mrf.mxu0
    %v8919 = vadd.f32 0.0, %v8918
    %8920 = vmatmul.f32.gmra.mxu0 %v8857
    %v8921 = vpop.f32.mrf.mxu0
    %v8922 = vadd.f32 0.0, %v8921
    %8923 = vmatmul.f32.gmra.mxu0 %v8860
    %v8924 = vpop.f32.mrf.mxu0
    %v8925 = vadd.f32 0.0, %v8924
    %8926 = vmatmul.f32.gmra.mxu0 %v8863
    %v8927 = vpop.f32.mrf.mxu0
    %v8928 = vadd.f32 0.0, %v8927
    %8929 = vmatmul.f32.gmra.mxu0 %v8866
    %v8930 = vpop.f32.mrf.mxu0
    %v8931 = vadd.f32 0.0, %v8930
    %8932 = vmatmul.f32.gmra.mxu0 %v8869
    %v8933 = vpop.f32.mrf.mxu0
    %v8934 = vadd.f32 0.0, %v8933
    %8935 = vdwg.mxu0
    %v8936 = vld [vmem:[#allocation9] sm:$0xff]
    %v8937 = vld [vmem:[#allocation9 + $0x8] sm:$0xff]
    %v8938 = vld [vmem:[#allocation9 + $0x10] sm:$0xff]
    %v8939 = vld [vmem:[#allocation9 + $0x18] sm:$0xff]
    %v8940 = vld [vmem:[#allocation9 + $0x20] sm:$0xff]
    %v8941 = vld [vmem:[#allocation9 + $0x28] sm:$0xff]
    %v8942 = vld [vmem:[#allocation9 + $0x30] sm:$0xff]
    %v8943 = vld [vmem:[#allocation9 + $0x38] sm:$0xff]
    %v8944 = vld [vmem:[#allocation9 + $0x40] sm:$0xff]
    %v8945 = vld [vmem:[#allocation9 + $0x48] sm:$0xff]
    %v8946 = vld [vmem:[#allocation9 + $0x50] sm:$0xff]
    %v8947 = vld [vmem:[#allocation9 + $0x58] sm:$0xff]
    %v8948 = vld [vmem:[#allocation9 + $0x60] sm:$0xff]
    %v8949 = vld [vmem:[#allocation9 + $0x68] sm:$0xff]
    %v8950 = vld [vmem:[#allocation9 + $0x70] sm:$0xff]
    %v8951 = vld [vmem:[#allocation9 + $0x78] sm:$0xff]
    %8952 = vmatpush.msra.mxu0 %v8934
    %8953 = vmatpush.msra.mxu0 %v8931
    %8954 = vmatpush.msra.mxu0 %v8928
    %8955 = vmatpush.msra.mxu0 %v8925
    %8956 = vmatpush.msra.mxu0 %v8922
    %8957 = vmatpush.msra.mxu0 %v8919
    %8958 = vmatpush.msra.mxu0 %v8916
    %8959 = vmatpush.msra.mxu0 %v8913
    %8960 = vmatpush.msra.mxu0 %v8910
    %8961 = vmatpush.msra.mxu0 %v8907
    %8962 = vmatpush.msra.mxu0 %v8904
    %8963 = vmatpush.msra.mxu0 %v8901
    %8964 = vmatpush.msra.mxu0 %v8898
    %8965 = vmatpush.msra.mxu0 %v8895
    %8966 = vmatpush.msra.mxu0 %v8892
    %8967 = vmatpush.msra.mxu0 %v8889
    %8968 = vmatmul.f32.gmra.mxu0 %v8936
    %v8969 = vpop.f32.mrf.mxu0
    %v8970 = vadd.f32 0.0, %v8969
    %8971 = vmatmul.f32.gmra.mxu0 %v8937
    %v8972 = vpop.f32.mrf.mxu0
    %v8973 = vadd.f32 0.0, %v8972
    %8974 = vmatmul.f32.gmra.mxu0 %v8938
    %v8975 = vpop.f32.mrf.mxu0
    %v8976 = vadd.f32 0.0, %v8975
    %8977 = vmatmul.f32.gmra.mxu0 %v8939
    %v8978 = vpop.f32.mrf.mxu0
    %v8979 = vadd.f32 0.0, %v8978
    %8980 = vmatmul.f32.gmra.mxu0 %v8940
    %v8981 = vpop.f32.mrf.mxu0
    %v8982 = vadd.f32 0.0, %v8981
    %8983 = vmatmul.f32.gmra.mxu0 %v8941
    %v8984 = vpop.f32.mrf.mxu0
    %v8985 = vadd.f32 0.0, %v8984
    %8986 = vmatmul.f32.gmra.mxu0 %v8942
    %v8987 = vpop.f32.mrf.mxu0
    %v8988 = vadd.f32 0.0, %v8987
    %8989 = vmatmul.f32.gmra.mxu0 %v8943
    %v8990 = vpop.f32.mrf.mxu0
    %v8991 = vadd.f32 0.0, %v8990
    %8992 = vmatmul.f32.gmra.mxu0 %v8944
    %v8993 = vpop.f32.mrf.mxu0
    %v8994 = vadd.f32 0.0, %v8993
    %8995 = vmatmul.f32.gmra.mxu0 %v8945
    %v8996 = vpop.f32.mrf.mxu0
    %v8997 = vadd.f32 0.0, %v8996
    %8998 = vmatmul.f32.gmra.mxu0 %v8946
    %v8999 = vpop.f32.mrf.mxu0
    %v9000 = vadd.f32 0.0, %v8999
    %9001 = vmatmul.f32.gmra.mxu0 %v8947
    %v9002 = vpop.f32.mrf.mxu0
    %v9003 = vadd.f32 0.0, %v9002
    %9004 = vmatmul.f32.gmra.mxu0 %v8948
    %v9005 = vpop.f32.mrf.mxu0
    %v9006 = vadd.f32 0.0, %v9005
    %9007 = vmatmul.f32.gmra.mxu0 %v8949
    %v9008 = vpop.f32.mrf.mxu0
    %v9009 = vadd.f32 0.0, %v9008
    %9010 = vmatmul.f32.gmra.mxu0 %v8950
    %v9011 = vpop.f32.mrf.mxu0
    %v9012 = vadd.f32 0.0, %v9011
    %9013 = vmatmul.f32.gmra.mxu0 %v8951
    %v9014 = vpop.f32.mrf.mxu0
    %v9015 = vadd.f32 0.0, %v9014
    %9016 = vdwg.mxu0
    %v9017 = vadd.f32 %v8803, %v8970
    %v9018 = vadd.f32 %v8804, %v8973
    %v9019 = vadd.f32 %v8805, %v8976
    %v9020 = vadd.f32 %v8806, %v8979
    %v9021 = vadd.f32 %v8807, %v8982
    %v9022 = vadd.f32 %v8808, %v8985
    %v9023 = vadd.f32 %v8809, %v8988
    %v9024 = vadd.f32 %v8810, %v8991
    %v9025 = vadd.f32 %v8811, %v8994
    %v9026 = vadd.f32 %v8812, %v8997
    %v9027 = vadd.f32 %v8813, %v9000
    %v9028 = vadd.f32 %v8814, %v9003
    %v9029 = vadd.f32 %v8815, %v9006
    %v9030 = vadd.f32 %v8816, %v9009
    %v9031 = vadd.f32 %v8817, %v9012
    %v9032 = vadd.f32 %v8818, %v9015
    %s9033 = scalar_lea.vmem %s15, 32
    %v9034 = vld [vmem:[%s9033] sm:$0xff]
    %v9035 = vld [vmem:[%s9033 + $0x8] sm:$0xff]
    %v9036 = vld [vmem:[%s9033 + $0x10] sm:$0xff]
    %v9037 = vld [vmem:[%s9033 + $0x18] sm:$0xff]
    %9038 = vmatpush.msra.mxu0 0.0
    %9039 = vmatpush.msra.mxu0 0.0
    %9040 = vmatpush.msra.mxu0 0.0
    %9041 = vmatpush.msra.mxu0 0.0
    %9042 = vmatpush.msra.mxu0 0.0
    %9043 = vmatpush.msra.mxu0 0.0
    %9044 = vmatpush.msra.mxu0 0.0
    %9045 = vmatpush.msra.mxu0 0.0
    %9046 = vmatpush.msra.mxu0 0.0
    %9047 = vmatpush.msra.mxu0 0.0
    %9048 = vmatpush.msra.mxu0 0.0
    %9049 = vmatpush.msra.mxu0 0.0
    %9050 = vmatpush.msra.mxu0 %v9037
    %9051 = vmatpush.msra.mxu0 %v9036
    %9052 = vmatpush.msra.mxu0 %v9035
    %9053 = vmatpush.msra.mxu0 %v9034
    %9054 = vmatmul.f32.gmra.mxu0 %v8824
    %v9055 = vpop.f32.mrf.mxu0
    %v9056 = vadd.f32 0.0, %v9055
    %9057 = vmatmul.f32.gmra.mxu0 %v8827
    %v9058 = vpop.f32.mrf.mxu0
    %v9059 = vadd.f32 0.0, %v9058
    %9060 = vmatmul.f32.gmra.mxu0 %v8830
    %v9061 = vpop.f32.mrf.mxu0
    %v9062 = vadd.f32 0.0, %v9061
    %9063 = vmatmul.f32.gmra.mxu0 %v8833
    %v9064 = vpop.f32.mrf.mxu0
    %v9065 = vadd.f32 0.0, %v9064
    %9066 = vmatmul.f32.gmra.mxu0 %v8836
    %v9067 = vpop.f32.mrf.mxu0
    %v9068 = vadd.f32 0.0, %v9067
    %9069 = vmatmul.f32.gmra.mxu0 %v8839
    %v9070 = vpop.f32.mrf.mxu0
    %v9071 = vadd.f32 0.0, %v9070
    %9072 = vmatmul.f32.gmra.mxu0 %v8842
    %v9073 = vpop.f32.mrf.mxu0
    %v9074 = vadd.f32 0.0, %v9073
    %9075 = vmatmul.f32.gmra.mxu0 %v8845
    %v9076 = vpop.f32.mrf.mxu0
    %v9077 = vadd.f32 0.0, %v9076
    %9078 = vmatmul.f32.gmra.mxu0 %v8848
    %v9079 = vpop.f32.mrf.mxu0
    %v9080 = vadd.f32 0.0, %v9079
    %9081 = vmatmul.f32.gmra.mxu0 %v8851
    %v9082 = vpop.f32.mrf.mxu0
    %v9083 = vadd.f32 0.0, %v9082
    %9084 = vmatmul.f32.gmra.mxu0 %v8854
    %v9085 = vpop.f32.mrf.mxu0
    %v9086 = vadd.f32 0.0, %v9085
    %9087 = vmatmul.f32.gmra.mxu0 %v8857
    %v9088 = vpop.f32.mrf.mxu0
    %v9089 = vadd.f32 0.0, %v9088
    %9090 = vmatmul.f32.gmra.mxu0 %v8860
    %v9091 = vpop.f32.mrf.mxu0
    %v9092 = vadd.f32 0.0, %v9091
    %9093 = vmatmul.f32.gmra.mxu0 %v8863
    %v9094 = vpop.f32.mrf.mxu0
    %v9095 = vadd.f32 0.0, %v9094
    %9096 = vmatmul.f32.gmra.mxu0 %v8866
    %v9097 = vpop.f32.mrf.mxu0
    %v9098 = vadd.f32 0.0, %v9097
    %9099 = vmatmul.f32.gmra.mxu0 %v8869
    %v9100 = vpop.f32.mrf.mxu0
    %v9101 = vadd.f32 0.0, %v9100
    %9102 = vdwg.mxu0
    %s9103 = scalar_lea.vmem [#allocation9], 128
    %v9104 = vld [vmem:[%s9103] sm:$0xff]
    %v9105 = vld [vmem:[%s9103 + $0x8] sm:$0xff]
    %v9106 = vld [vmem:[%s9103 + $0x10] sm:$0xff]
    %v9107 = vld [vmem:[%s9103 + $0x18] sm:$0xff]
    %v9108 = vld [vmem:[%s9103 + $0x20] sm:$0xff]
    %v9109 = vld [vmem:[%s9103 + $0x28] sm:$0xff]
    %v9110 = vld [vmem:[%s9103 + $0x30] sm:$0xff]
    %v9111 = vld [vmem:[%s9103 + $0x38] sm:$0xff]
    %v9112 = vld [vmem:[%s9103 + $0x40] sm:$0xff]
    %v9113 = vld [vmem:[%s9103 + $0x48] sm:$0xff]
    %v9114 = vld [vmem:[%s9103 + $0x50] sm:$0xff]
    %v9115 = vld [vmem:[%s9103 + $0x58] sm:$0xff]
    %v9116 = vld [vmem:[%s9103 + $0x60] sm:$0xff]
    %v9117 = vld [vmem:[%s9103 + $0x68] sm:$0xff]
    %v9118 = vld [vmem:[%s9103 + $0x70] sm:$0xff]
    %v9119 = vld [vmem:[%s9103 + $0x78] sm:$0xff]
    %9120 = vmatpush.msra.mxu0 %v9101
    %9121 = vmatpush.msra.mxu0 %v9098
    %9122 = vmatpush.msra.mxu0 %v9095
    %9123 = vmatpush.msra.mxu0 %v9092
    %9124 = vmatpush.msra.mxu0 %v9089
    %9125 = vmatpush.msra.mxu0 %v9086
    %9126 = vmatpush.msra.mxu0 %v9083
    %9127 = vmatpush.msra.mxu0 %v9080
    %9128 = vmatpush.msra.mxu0 %v9077
    %9129 = vmatpush.msra.mxu0 %v9074
    %9130 = vmatpush.msra.mxu0 %v9071
    %9131 = vmatpush.msra.mxu0 %v9068
    %9132 = vmatpush.msra.mxu0 %v9065
    %9133 = vmatpush.msra.mxu0 %v9062
    %9134 = vmatpush.msra.mxu0 %v9059
    %9135 = vmatpush.msra.mxu0 %v9056
    %9136 = vmatmul.f32.gmra.mxu0 %v9104
    %v9137 = vpop.f32.mrf.mxu0
    %v9138 = vadd.f32 0.0, %v9137
    %9139 = vmatmul.f32.gmra.mxu0 %v9105
    %v9140 = vpop.f32.mrf.mxu0
    %v9141 = vadd.f32 0.0, %v9140
    %9142 = vmatmul.f32.gmra.mxu0 %v9106
    %v9143 = vpop.f32.mrf.mxu0
    %v9144 = vadd.f32 0.0, %v9143
    %9145 = vmatmul.f32.gmra.mxu0 %v9107
    %v9146 = vpop.f32.mrf.mxu0
    %v9147 = vadd.f32 0.0, %v9146
    %9148 = vmatmul.f32.gmra.mxu0 %v9108
    %v9149 = vpop.f32.mrf.mxu0
    %v9150 = vadd.f32 0.0, %v9149
    %9151 = vmatmul.f32.gmra.mxu0 %v9109
    %v9152 = vpop.f32.mrf.mxu0
    %v9153 = vadd.f32 0.0, %v9152
    %9154 = vmatmul.f32.gmra.mxu0 %v9110
    %v9155 = vpop.f32.mrf.mxu0
    %v9156 = vadd.f32 0.0, %v9155
    %9157 = vmatmul.f32.gmra.mxu0 %v9111
    %v9158 = vpop.f32.mrf.mxu0
    %v9159 = vadd.f32 0.0, %v9158
    %9160 = vmatmul.f32.gmra.mxu0 %v9112
    %v9161 = vpop.f32.mrf.mxu0
    %v9162 = vadd.f32 0.0, %v9161
    %9163 = vmatmul.f32.gmra.mxu0 %v9113
    %v9164 = vpop.f32.mrf.mxu0
    %v9165 = vadd.f32 0.0, %v9164
    %9166 = vmatmul.f32.gmra.mxu0 %v9114
    %v9167 = vpop.f32.mrf.mxu0
    %v9168 = vadd.f32 0.0, %v9167
    %9169 = vmatmul.f32.gmra.mxu0 %v9115
    %v9170 = vpop.f32.mrf.mxu0
    %v9171 = vadd.f32 0.0, %v9170
    %9172 = vmatmul.f32.gmra.mxu0 %v9116
    %v9173 = vpop.f32.mrf.mxu0
    %v9174 = vadd.f32 0.0, %v9173
    %9175 = vmatmul.f32.gmra.mxu0 %v9117
    %v9176 = vpop.f32.mrf.mxu0
    %v9177 = vadd.f32 0.0, %v9176
    %9178 = vmatmul.f32.gmra.mxu0 %v9118
    %v9179 = vpop.f32.mrf.mxu0
    %v9180 = vadd.f32 0.0, %v9179
    %9181 = vmatmul.f32.gmra.mxu0 %v9119
    %v9182 = vpop.f32.mrf.mxu0
    %v9183 = vadd.f32 0.0, %v9182
    %9184 = vdwg.mxu0
    %v9185 = vadd.f32 %v9017, %v9138
    %v9186 = vadd.f32 %v9018, %v9141
    %v9187 = vadd.f32 %v9019, %v9144
    %v9188 = vadd.f32 %v9020, %v9147
    %v9189 = vadd.f32 %v9021, %v9150
    %v9190 = vadd.f32 %v9022, %v9153
    %v9191 = vadd.f32 %v9023, %v9156
    %v9192 = vadd.f32 %v9024, %v9159
    %v9193 = vadd.f32 %v9025, %v9162
    %v9194 = vadd.f32 %v9026, %v9165
    %v9195 = vadd.f32 %v9027, %v9168
    %v9196 = vadd.f32 %v9028, %v9171
    %v9197 = vadd.f32 %v9029, %v9174
    %v9198 = vadd.f32 %v9030, %v9177
    %v9199 = vadd.f32 %v9031, %v9180
    %v9200 = vadd.f32 %v9032, %v9183
    %s9201 = scalar_lea.vmem %s15, 64
    %v9202 = vld [vmem:[%s9201] sm:$0xff]
    %v9203 = vld [vmem:[%s9201 + $0x8] sm:$0xff]
    %v9204 = vld [vmem:[%s9201 + $0x10] sm:$0xff]
    %v9205 = vld [vmem:[%s9201 + $0x18] sm:$0xff]
    %9206 = vmatpush.msra.mxu0 0.0
    %9207 = vmatpush.msra.mxu0 0.0
    %9208 = vmatpush.msra.mxu0 0.0
    %9209 = vmatpush.msra.mxu0 0.0
    %9210 = vmatpush.msra.mxu0 0.0
    %9211 = vmatpush.msra.mxu0 0.0
    %9212 = vmatpush.msra.mxu0 0.0
    %9213 = vmatpush.msra.mxu0 0.0
    %9214 = vmatpush.msra.mxu0 0.0
    %9215 = vmatpush.msra.mxu0 0.0
    %9216 = vmatpush.msra.mxu0 0.0
    %9217 = vmatpush.msra.mxu0 0.0
    %9218 = vmatpush.msra.mxu0 %v9205
    %9219 = vmatpush.msra.mxu0 %v9204
    %9220 = vmatpush.msra.mxu0 %v9203
    %9221 = vmatpush.msra.mxu0 %v9202
    %9222 = vmatmul.f32.gmra.mxu0 %v8824
    %v9223 = vpop.f32.mrf.mxu0
    %v9224 = vadd.f32 0.0, %v9223
    %9225 = vmatmul.f32.gmra.mxu0 %v8827
    %v9226 = vpop.f32.mrf.mxu0
    %v9227 = vadd.f32 0.0, %v9226
    %9228 = vmatmul.f32.gmra.mxu0 %v8830
    %v9229 = vpop.f32.mrf.mxu0
    %v9230 = vadd.f32 0.0, %v9229
    %9231 = vmatmul.f32.gmra.mxu0 %v8833
    %v9232 = vpop.f32.mrf.mxu0
    %v9233 = vadd.f32 0.0, %v9232
    %9234 = vmatmul.f32.gmra.mxu0 %v8836
    %v9235 = vpop.f32.mrf.mxu0
    %v9236 = vadd.f32 0.0, %v9235
    %9237 = vmatmul.f32.gmra.mxu0 %v8839
    %v9238 = vpop.f32.mrf.mxu0
    %v9239 = vadd.f32 0.0, %v9238
    %9240 = vmatmul.f32.gmra.mxu0 %v8842
    %v9241 = vpop.f32.mrf.mxu0
    %v9242 = vadd.f32 0.0, %v9241
    %9243 = vmatmul.f32.gmra.mxu0 %v8845
    %v9244 = vpop.f32.mrf.mxu0
    %v9245 = vadd.f32 0.0, %v9244
    %9246 = vmatmul.f32.gmra.mxu0 %v8848
    %v9247 = vpop.f32.mrf.mxu0
    %v9248 = vadd.f32 0.0, %v9247
    %9249 = vmatmul.f32.gmra.mxu0 %v8851
    %v9250 = vpop.f32.mrf.mxu0
    %v9251 = vadd.f32 0.0, %v9250
    %9252 = vmatmul.f32.gmra.mxu0 %v8854
    %v9253 = vpop.f32.mrf.mxu0
    %v9254 = vadd.f32 0.0, %v9253
    %9255 = vmatmul.f32.gmra.mxu0 %v8857
    %v9256 = vpop.f32.mrf.mxu0
    %v9257 = vadd.f32 0.0, %v9256
    %9258 = vmatmul.f32.gmra.mxu0 %v8860
    %v9259 = vpop.f32.mrf.mxu0
    %v9260 = vadd.f32 0.0, %v9259
    %9261 = vmatmul.f32.gmra.mxu0 %v8863
    %v9262 = vpop.f32.mrf.mxu0
    %v9263 = vadd.f32 0.0, %v9262
    %9264 = vmatmul.f32.gmra.mxu0 %v8866
    %v9265 = vpop.f32.mrf.mxu0
    %v9266 = vadd.f32 0.0, %v9265
    %9267 = vmatmul.f32.gmra.mxu0 %v8869
    %v9268 = vpop.f32.mrf.mxu0
    %v9269 = vadd.f32 0.0, %v9268
    %9270 = vdwg.mxu0
    %s9271 = scalar_lea.vmem [#allocation9], 256
    %v9272 = vld [vmem:[%s9271] sm:$0xff]
    %v9273 = vld [vmem:[%s9271 + $0x8] sm:$0xff]
    %v9274 = vld [vmem:[%s9271 + $0x10] sm:$0xff]
    %v9275 = vld [vmem:[%s9271 + $0x18] sm:$0xff]
    %v9276 = vld [vmem:[%s9271 + $0x20] sm:$0xff]
    %v9277 = vld [vmem:[%s9271 + $0x28] sm:$0xff]
    %v9278 = vld [vmem:[%s9271 + $0x30] sm:$0xff]
    %v9279 = vld [vmem:[%s9271 + $0x38] sm:$0xff]
    %v9280 = vld [vmem:[%s9271 + $0x40] sm:$0xff]
    %v9281 = vld [vmem:[%s9271 + $0x48] sm:$0xff]
    %v9282 = vld [vmem:[%s9271 + $0x50] sm:$0xff]
    %v9283 = vld [vmem:[%s9271 + $0x58] sm:$0xff]
    %v9284 = vld [vmem:[%s9271 + $0x60] sm:$0xff]
    %v9285 = vld [vmem:[%s9271 + $0x68] sm:$0xff]
    %v9286 = vld [vmem:[%s9271 + $0x70] sm:$0xff]
    %v9287 = vld [vmem:[%s9271 + $0x78] sm:$0xff]
    %9288 = vmatpush.msra.mxu0 %v9269
    %9289 = vmatpush.msra.mxu0 %v9266
    %9290 = vmatpush.msra.mxu0 %v9263
    %9291 = vmatpush.msra.mxu0 %v9260
    %9292 = vmatpush.msra.mxu0 %v9257
    %9293 = vmatpush.msra.mxu0 %v9254
    %9294 = vmatpush.msra.mxu0 %v9251
    %9295 = vmatpush.msra.mxu0 %v9248
    %9296 = vmatpush.msra.mxu0 %v9245
    %9297 = vmatpush.msra.mxu0 %v9242
    %9298 = vmatpush.msra.mxu0 %v9239
    %9299 = vmatpush.msra.mxu0 %v9236
    %9300 = vmatpush.msra.mxu0 %v9233
    %9301 = vmatpush.msra.mxu0 %v9230
    %9302 = vmatpush.msra.mxu0 %v9227
    %9303 = vmatpush.msra.mxu0 %v9224
    %9304 = vmatmul.f32.gmra.mxu0 %v9272
    %v9305 = vpop.f32.mrf.mxu0
    %v9306 = vadd.f32 0.0, %v9305
    %9307 = vmatmul.f32.gmra.mxu0 %v9273
    %v9308 = vpop.f32.mrf.mxu0
    %v9309 = vadd.f32 0.0, %v9308
    %9310 = vmatmul.f32.gmra.mxu0 %v9274
    %v9311 = vpop.f32.mrf.mxu0
    %v9312 = vadd.f32 0.0, %v9311
    %9313 = vmatmul.f32.gmra.mxu0 %v9275
    %v9314 = vpop.f32.mrf.mxu0
    %v9315 = vadd.f32 0.0, %v9314
    %9316 = vmatmul.f32.gmra.mxu0 %v9276
    %v9317 = vpop.f32.mrf.mxu0
    %v9318 = vadd.f32 0.0, %v9317
    %9319 = vmatmul.f32.gmra.mxu0 %v9277
    %v9320 = vpop.f32.mrf.mxu0
    %v9321 = vadd.f32 0.0, %v9320
    %9322 = vmatmul.f32.gmra.mxu0 %v9278
    %v9323 = vpop.f32.mrf.mxu0
    %v9324 = vadd.f32 0.0, %v9323
    %9325 = vmatmul.f32.gmra.mxu0 %v9279
    %v9326 = vpop.f32.mrf.mxu0
    %v9327 = vadd.f32 0.0, %v9326
    %9328 = vmatmul.f32.gmra.mxu0 %v9280
    %v9329 = vpop.f32.mrf.mxu0
    %v9330 = vadd.f32 0.0, %v9329
    %9331 = vmatmul.f32.gmra.mxu0 %v9281
    %v9332 = vpop.f32.mrf.mxu0
    %v9333 = vadd.f32 0.0, %v9332
    %9334 = vmatmul.f32.gmra.mxu0 %v9282
    %v9335 = vpop.f32.mrf.mxu0
    %v9336 = vadd.f32 0.0, %v9335
    %9337 = vmatmul.f32.gmra.mxu0 %v9283
    %v9338 = vpop.f32.mrf.mxu0
    %v9339 = vadd.f32 0.0, %v9338
    %9340 = vmatmul.f32.gmra.mxu0 %v9284
    %v9341 = vpop.f32.mrf.mxu0
    %v9342 = vadd.f32 0.0, %v9341
    %9343 = vmatmul.f32.gmra.mxu0 %v9285
    %v9344 = vpop.f32.mrf.mxu0
    %v9345 = vadd.f32 0.0, %v9344
    %9346 = vmatmul.f32.gmra.mxu0 %v9286
    %v9347 = vpop.f32.mrf.mxu0
    %v9348 = vadd.f32 0.0, %v9347
    %9349 = vmatmul.f32.gmra.mxu0 %v9287
    %v9350 = vpop.f32.mrf.mxu0
    %v9351 = vadd.f32 0.0, %v9350
    %9352 = vdwg.mxu0
    %v9353 = vadd.f32 %v9185, %v9306
    %v9354 = vadd.f32 %v9186, %v9309
    %v9355 = vadd.f32 %v9187, %v9312
    %v9356 = vadd.f32 %v9188, %v9315
    %v9357 = vadd.f32 %v9189, %v9318
    %v9358 = vadd.f32 %v9190, %v9321
    %v9359 = vadd.f32 %v9191, %v9324
    %v9360 = vadd.f32 %v9192, %v9327
    %v9361 = vadd.f32 %v9193, %v9330
    %v9362 = vadd.f32 %v9194, %v9333
    %v9363 = vadd.f32 %v9195, %v9336
    %v9364 = vadd.f32 %v9196, %v9339
    %v9365 = vadd.f32 %v9197, %v9342
    %v9366 = vadd.f32 %v9198, %v9345
    %v9367 = vadd.f32 %v9199, %v9348
    %v9368 = vadd.f32 %v9200, %v9351
    %s9369 = scalar_lea.vmem %s15, 96
    %v9370 = vld [vmem:[%s9369] sm:$0xff]
    %v9371 = vld [vmem:[%s9369 + $0x8] sm:$0xff]
    %v9372 = vld [vmem:[%s9369 + $0x10] sm:$0xff]
    %v9373 = vld [vmem:[%s9369 + $0x18] sm:$0xff]
    %9374 = vmatpush.msra.mxu0 0.0
    %9375 = vmatpush.msra.mxu0 0.0
    %9376 = vmatpush.msra.mxu0 0.0
    %9377 = vmatpush.msra.mxu0 0.0
    %9378 = vmatpush.msra.mxu0 0.0
    %9379 = vmatpush.msra.mxu0 0.0
    %9380 = vmatpush.msra.mxu0 0.0
    %9381 = vmatpush.msra.mxu0 0.0
    %9382 = vmatpush.msra.mxu0 0.0
    %9383 = vmatpush.msra.mxu0 0.0
    %9384 = vmatpush.msra.mxu0 0.0
    %9385 = vmatpush.msra.mxu0 0.0
    %9386 = vmatpush.msra.mxu0 %v9373
    %9387 = vmatpush.msra.mxu0 %v9372
    %9388 = vmatpush.msra.mxu0 %v9371
    %9389 = vmatpush.msra.mxu0 %v9370
    %9390 = vmatmul.f32.gmra.mxu0 %v8824
    %v9391 = vpop.f32.mrf.mxu0
    %v9392 = vadd.f32 0.0, %v9391
    %9393 = vmatmul.f32.gmra.mxu0 %v8827
    %v9394 = vpop.f32.mrf.mxu0
    %v9395 = vadd.f32 0.0, %v9394
    %9396 = vmatmul.f32.gmra.mxu0 %v8830
    %v9397 = vpop.f32.mrf.mxu0
    %v9398 = vadd.f32 0.0, %v9397
    %9399 = vmatmul.f32.gmra.mxu0 %v8833
    %v9400 = vpop.f32.mrf.mxu0
    %v9401 = vadd.f32 0.0, %v9400
    %9402 = vmatmul.f32.gmra.mxu0 %v8836
    %v9403 = vpop.f32.mrf.mxu0
    %v9404 = vadd.f32 0.0, %v9403
    %9405 = vmatmul.f32.gmra.mxu0 %v8839
    %v9406 = vpop.f32.mrf.mxu0
    %v9407 = vadd.f32 0.0, %v9406
    %9408 = vmatmul.f32.gmra.mxu0 %v8842
    %v9409 = vpop.f32.mrf.mxu0
    %v9410 = vadd.f32 0.0, %v9409
    %9411 = vmatmul.f32.gmra.mxu0 %v8845
    %v9412 = vpop.f32.mrf.mxu0
    %v9413 = vadd.f32 0.0, %v9412
    %9414 = vmatmul.f32.gmra.mxu0 %v8848
    %v9415 = vpop.f32.mrf.mxu0
    %v9416 = vadd.f32 0.0, %v9415
    %9417 = vmatmul.f32.gmra.mxu0 %v8851
    %v9418 = vpop.f32.mrf.mxu0
    %v9419 = vadd.f32 0.0, %v9418
    %9420 = vmatmul.f32.gmra.mxu0 %v8854
    %v9421 = vpop.f32.mrf.mxu0
    %v9422 = vadd.f32 0.0, %v9421
    %9423 = vmatmul.f32.gmra.mxu0 %v8857
    %v9424 = vpop.f32.mrf.mxu0
    %v9425 = vadd.f32 0.0, %v9424
    %9426 = vmatmul.f32.gmra.mxu0 %v8860
    %v9427 = vpop.f32.mrf.mxu0
    %v9428 = vadd.f32 0.0, %v9427
    %9429 = vmatmul.f32.gmra.mxu0 %v8863
    %v9430 = vpop.f32.mrf.mxu0
    %v9431 = vadd.f32 0.0, %v9430
    %9432 = vmatmul.f32.gmra.mxu0 %v8866
    %v9433 = vpop.f32.mrf.mxu0
    %v9434 = vadd.f32 0.0, %v9433
    %9435 = vmatmul.f32.gmra.mxu0 %v8869
    %v9436 = vpop.f32.mrf.mxu0
    %v9437 = vadd.f32 0.0, %v9436
    %9438 = vdwg.mxu0
    %s9439 = scalar_lea.vmem [#allocation9], 384
    %v9440 = vld [vmem:[%s9439] sm:$0xff]
    %v9441 = vld [vmem:[%s9439 + $0x8] sm:$0xff]
    %v9442 = vld [vmem:[%s9439 + $0x10] sm:$0xff]
    %v9443 = vld [vmem:[%s9439 + $0x18] sm:$0xff]
    %v9444 = vld [vmem:[%s9439 + $0x20] sm:$0xff]
    %v9445 = vld [vmem:[%s9439 + $0x28] sm:$0xff]
    %v9446 = vld [vmem:[%s9439 + $0x30] sm:$0xff]
    %v9447 = vld [vmem:[%s9439 + $0x38] sm:$0xff]
    %v9448 = vld [vmem:[%s9439 + $0x40] sm:$0xff]
    %v9449 = vld [vmem:[%s9439 + $0x48] sm:$0xff]
    %v9450 = vld [vmem:[%s9439 + $0x50] sm:$0xff]
    %v9451 = vld [vmem:[%s9439 + $0x58] sm:$0xff]
    %v9452 = vld [vmem:[%s9439 + $0x60] sm:$0xff]
    %v9453 = vld [vmem:[%s9439 + $0x68] sm:$0xff]
    %v9454 = vld [vmem:[%s9439 + $0x70] sm:$0xff]
    %v9455 = vld [vmem:[%s9439 + $0x78] sm:$0xff]
    %9456 = vmatpush.msra.mxu0 %v9437
    %9457 = vmatpush.msra.mxu0 %v9434
    %9458 = vmatpush.msra.mxu0 %v9431
    %9459 = vmatpush.msra.mxu0 %v9428
    %9460 = vmatpush.msra.mxu0 %v9425
    %9461 = vmatpush.msra.mxu0 %v9422
    %9462 = vmatpush.msra.mxu0 %v9419
    %9463 = vmatpush.msra.mxu0 %v9416
    %9464 = vmatpush.msra.mxu0 %v9413
    %9465 = vmatpush.msra.mxu0 %v9410
    %9466 = vmatpush.msra.mxu0 %v9407
    %9467 = vmatpush.msra.mxu0 %v9404
    %9468 = vmatpush.msra.mxu0 %v9401
    %9469 = vmatpush.msra.mxu0 %v9398
    %9470 = vmatpush.msra.mxu0 %v9395
    %9471 = vmatpush.msra.mxu0 %v9392
    %9472 = vmatmul.f32.gmra.mxu0 %v9440
    %v9473 = vpop.f32.mrf.mxu0
    %v9474 = vadd.f32 0.0, %v9473
    %9475 = vmatmul.f32.gmra.mxu0 %v9441
    %v9476 = vpop.f32.mrf.mxu0
    %v9477 = vadd.f32 0.0, %v9476
    %9478 = vmatmul.f32.gmra.mxu0 %v9442
    %v9479 = vpop.f32.mrf.mxu0
    %v9480 = vadd.f32 0.0, %v9479
    %9481 = vmatmul.f32.gmra.mxu0 %v9443
    %v9482 = vpop.f32.mrf.mxu0
    %v9483 = vadd.f32 0.0, %v9482
    %9484 = vmatmul.f32.gmra.mxu0 %v9444
    %v9485 = vpop.f32.mrf.mxu0
    %v9486 = vadd.f32 0.0, %v9485
    %9487 = vmatmul.f32.gmra.mxu0 %v9445
    %v9488 = vpop.f32.mrf.mxu0
    %v9489 = vadd.f32 0.0, %v9488
    %9490 = vmatmul.f32.gmra.mxu0 %v9446
    %v9491 = vpop.f32.mrf.mxu0
    %v9492 = vadd.f32 0.0, %v9491
    %9493 = vmatmul.f32.gmra.mxu0 %v9447
    %v9494 = vpop.f32.mrf.mxu0
    %v9495 = vadd.f32 0.0, %v9494
    %9496 = vmatmul.f32.gmra.mxu0 %v9448
    %v9497 = vpop.f32.mrf.mxu0
    %v9498 = vadd.f32 0.0, %v9497
    %9499 = vmatmul.f32.gmra.mxu0 %v9449
    %v9500 = vpop.f32.mrf.mxu0
    %v9501 = vadd.f32 0.0, %v9500
    %9502 = vmatmul.f32.gmra.mxu0 %v9450
    %v9503 = vpop.f32.mrf.mxu0
    %v9504 = vadd.f32 0.0, %v9503
    %9505 = vmatmul.f32.gmra.mxu0 %v9451
    %v9506 = vpop.f32.mrf.mxu0
    %v9507 = vadd.f32 0.0, %v9506
    %9508 = vmatmul.f32.gmra.mxu0 %v9452
    %v9509 = vpop.f32.mrf.mxu0
    %v9510 = vadd.f32 0.0, %v9509
    %9511 = vmatmul.f32.gmra.mxu0 %v9453
    %v9512 = vpop.f32.mrf.mxu0
    %v9513 = vadd.f32 0.0, %v9512
    %9514 = vmatmul.f32.gmra.mxu0 %v9454
    %v9515 = vpop.f32.mrf.mxu0
    %v9516 = vadd.f32 0.0, %v9515
    %9517 = vmatmul.f32.gmra.mxu0 %v9455
    %v9518 = vpop.f32.mrf.mxu0
    %v9519 = vadd.f32 0.0, %v9518
    %9520 = vdwg.mxu0
    %v9521 = vadd.f32 %v9353, %v9474
    %v9522 = vadd.f32 %v9354, %v9477
    %v9523 = vadd.f32 %v9355, %v9480
    %v9524 = vadd.f32 %v9356, %v9483
    %v9525 = vadd.f32 %v9357, %v9486
    %v9526 = vadd.f32 %v9358, %v9489
    %v9527 = vadd.f32 %v9359, %v9492
    %v9528 = vadd.f32 %v9360, %v9495
    %v9529 = vadd.f32 %v9361, %v9498
    %v9530 = vadd.f32 %v9362, %v9501
    %v9531 = vadd.f32 %v9363, %v9504
    %v9532 = vadd.f32 %v9364, %v9507
    %v9533 = vadd.f32 %v9365, %v9510
    %v9534 = vadd.f32 %v9366, %v9513
    %v9535 = vadd.f32 %v9367, %v9516
    %v9536 = vadd.f32 %v9368, %v9519
    %s9537 = scalar_lea.vmem %s15, 128
    %v9538 = vld [vmem:[%s9537] sm:$0xff]
    %v9539 = vld [vmem:[%s9537 + $0x8] sm:$0xff]
    %v9540 = vld [vmem:[%s9537 + $0x10] sm:$0xff]
    %v9541 = vld [vmem:[%s9537 + $0x18] sm:$0xff]
    %9542 = vmatpush.msra.mxu0 0.0
    %9543 = vmatpush.msra.mxu0 0.0
    %9544 = vmatpush.msra.mxu0 0.0
    %9545 = vmatpush.msra.mxu0 0.0
    %9546 = vmatpush.msra.mxu0 0.0
    %9547 = vmatpush.msra.mxu0 0.0
    %9548 = vmatpush.msra.mxu0 0.0
    %9549 = vmatpush.msra.mxu0 0.0
    %9550 = vmatpush.msra.mxu0 0.0
    %9551 = vmatpush.msra.mxu0 0.0
    %9552 = vmatpush.msra.mxu0 0.0
    %9553 = vmatpush.msra.mxu0 0.0
    %9554 = vmatpush.msra.mxu0 %v9541
    %9555 = vmatpush.msra.mxu0 %v9540
    %9556 = vmatpush.msra.mxu0 %v9539
    %9557 = vmatpush.msra.mxu0 %v9538
    %9558 = vmatmul.f32.gmra.mxu0 %v8824
    %v9559 = vpop.f32.mrf.mxu0
    %v9560 = vadd.f32 0.0, %v9559
    %9561 = vmatmul.f32.gmra.mxu0 %v8827
    %v9562 = vpop.f32.mrf.mxu0
    %v9563 = vadd.f32 0.0, %v9562
    %9564 = vmatmul.f32.gmra.mxu0 %v8830
    %v9565 = vpop.f32.mrf.mxu0
    %v9566 = vadd.f32 0.0, %v9565
    %9567 = vmatmul.f32.gmra.mxu0 %v8833
    %v9568 = vpop.f32.mrf.mxu0
    %v9569 = vadd.f32 0.0, %v9568
    %9570 = vmatmul.f32.gmra.mxu0 %v8836
    %v9571 = vpop.f32.mrf.mxu0
    %v9572 = vadd.f32 0.0, %v9571
    %9573 = vmatmul.f32.gmra.mxu0 %v8839
    %v9574 = vpop.f32.mrf.mxu0
    %v9575 = vadd.f32 0.0, %v9574
    %9576 = vmatmul.f32.gmra.mxu0 %v8842
    %v9577 = vpop.f32.mrf.mxu0
    %v9578 = vadd.f32 0.0, %v9577
    %9579 = vmatmul.f32.gmra.mxu0 %v8845
    %v9580 = vpop.f32.mrf.mxu0
    %v9581 = vadd.f32 0.0, %v9580
    %9582 = vmatmul.f32.gmra.mxu0 %v8848
    %v9583 = vpop.f32.mrf.mxu0
    %v9584 = vadd.f32 0.0, %v9583
    %9585 = vmatmul.f32.gmra.mxu0 %v8851
    %v9586 = vpop.f32.mrf.mxu0
    %v9587 = vadd.f32 0.0, %v9586
    %9588 = vmatmul.f32.gmra.mxu0 %v8854
    %v9589 = vpop.f32.mrf.mxu0
    %v9590 = vadd.f32 0.0, %v9589
    %9591 = vmatmul.f32.gmra.mxu0 %v8857
    %v9592 = vpop.f32.mrf.mxu0
    %v9593 = vadd.f32 0.0, %v9592
    %9594 = vmatmul.f32.gmra.mxu0 %v8860
    %v9595 = vpop.f32.mrf.mxu0
    %v9596 = vadd.f32 0.0, %v9595
    %9597 = vmatmul.f32.gmra.mxu0 %v8863
    %v9598 = vpop.f32.mrf.mxu0
    %v9599 = vadd.f32 0.0, %v9598
    %9600 = vmatmul.f32.gmra.mxu0 %v8866
    %v9601 = vpop.f32.mrf.mxu0
    %v9602 = vadd.f32 0.0, %v9601
    %9603 = vmatmul.f32.gmra.mxu0 %v8869
    %v9604 = vpop.f32.mrf.mxu0
    %v9605 = vadd.f32 0.0, %v9604
    %9606 = vdwg.mxu0
    %s9607 = scalar_lea.vmem [#allocation9], 512
    %v9608 = vld [vmem:[%s9607] sm:$0xff]
    %v9609 = vld [vmem:[%s9607 + $0x8] sm:$0xff]
    %v9610 = vld [vmem:[%s9607 + $0x10] sm:$0xff]
    %v9611 = vld [vmem:[%s9607 + $0x18] sm:$0xff]
    %v9612 = vld [vmem:[%s9607 + $0x20] sm:$0xff]
    %v9613 = vld [vmem:[%s9607 + $0x28] sm:$0xff]
    %v9614 = vld [vmem:[%s9607 + $0x30] sm:$0xff]
    %v9615 = vld [vmem:[%s9607 + $0x38] sm:$0xff]
    %v9616 = vld [vmem:[%s9607 + $0x40] sm:$0xff]
    %v9617 = vld [vmem:[%s9607 + $0x48] sm:$0xff]
    %v9618 = vld [vmem:[%s9607 + $0x50] sm:$0xff]
    %v9619 = vld [vmem:[%s9607 + $0x58] sm:$0xff]
    %v9620 = vld [vmem:[%s9607 + $0x60] sm:$0xff]
    %v9621 = vld [vmem:[%s9607 + $0x68] sm:$0xff]
    %v9622 = vld [vmem:[%s9607 + $0x70] sm:$0xff]
    %v9623 = vld [vmem:[%s9607 + $0x78] sm:$0xff]
    %9624 = vmatpush.msra.mxu0 %v9605
    %9625 = vmatpush.msra.mxu0 %v9602
    %9626 = vmatpush.msra.mxu0 %v9599
    %9627 = vmatpush.msra.mxu0 %v9596
    %9628 = vmatpush.msra.mxu0 %v9593
    %9629 = vmatpush.msra.mxu0 %v9590
    %9630 = vmatpush.msra.mxu0 %v9587
    %9631 = vmatpush.msra.mxu0 %v9584
    %9632 = vmatpush.msra.mxu0 %v9581
    %9633 = vmatpush.msra.mxu0 %v9578
    %9634 = vmatpush.msra.mxu0 %v9575
    %9635 = vmatpush.msra.mxu0 %v9572
    %9636 = vmatpush.msra.mxu0 %v9569
    %9637 = vmatpush.msra.mxu0 %v9566
    %9638 = vmatpush.msra.mxu0 %v9563
    %9639 = vmatpush.msra.mxu0 %v9560
    %9640 = vmatmul.f32.gmra.mxu0 %v9608
    %v9641 = vpop.f32.mrf.mxu0
    %v9642 = vadd.f32 0.0, %v9641
    %9643 = vmatmul.f32.gmra.mxu0 %v9609
    %v9644 = vpop.f32.mrf.mxu0
    %v9645 = vadd.f32 0.0, %v9644
    %9646 = vmatmul.f32.gmra.mxu0 %v9610
    %v9647 = vpop.f32.mrf.mxu0
    %v9648 = vadd.f32 0.0, %v9647
    %9649 = vmatmul.f32.gmra.mxu0 %v9611
    %v9650 = vpop.f32.mrf.mxu0
    %v9651 = vadd.f32 0.0, %v9650
    %9652 = vmatmul.f32.gmra.mxu0 %v9612
    %v9653 = vpop.f32.mrf.mxu0
    %v9654 = vadd.f32 0.0, %v9653
    %9655 = vmatmul.f32.gmra.mxu0 %v9613
    %v9656 = vpop.f32.mrf.mxu0
    %v9657 = vadd.f32 0.0, %v9656
    %9658 = vmatmul.f32.gmra.mxu0 %v9614
    %v9659 = vpop.f32.mrf.mxu0
    %v9660 = vadd.f32 0.0, %v9659
    %9661 = vmatmul.f32.gmra.mxu0 %v9615
    %v9662 = vpop.f32.mrf.mxu0
    %v9663 = vadd.f32 0.0, %v9662
    %9664 = vmatmul.f32.gmra.mxu0 %v9616
    %v9665 = vpop.f32.mrf.mxu0
    %v9666 = vadd.f32 0.0, %v9665
    %9667 = vmatmul.f32.gmra.mxu0 %v9617
    %v9668 = vpop.f32.mrf.mxu0
    %v9669 = vadd.f32 0.0, %v9668
    %9670 = vmatmul.f32.gmra.mxu0 %v9618
    %v9671 = vpop.f32.mrf.mxu0
    %v9672 = vadd.f32 0.0, %v9671
    %9673 = vmatmul.f32.gmra.mxu0 %v9619
    %v9674 = vpop.f32.mrf.mxu0
    %v9675 = vadd.f32 0.0, %v9674
    %9676 = vmatmul.f32.gmra.mxu0 %v9620
    %v9677 = vpop.f32.mrf.mxu0
    %v9678 = vadd.f32 0.0, %v9677
    %9679 = vmatmul.f32.gmra.mxu0 %v9621
    %v9680 = vpop.f32.mrf.mxu0
    %v9681 = vadd.f32 0.0, %v9680
    %9682 = vmatmul.f32.gmra.mxu0 %v9622
    %v9683 = vpop.f32.mrf.mxu0
    %v9684 = vadd.f32 0.0, %v9683
    %9685 = vmatmul.f32.gmra.mxu0 %v9623
    %v9686 = vpop.f32.mrf.mxu0
    %v9687 = vadd.f32 0.0, %v9686
    %9688 = vdwg.mxu0
    %v9689 = vadd.f32 %v9521, %v9642
    %v9690 = vadd.f32 %v9522, %v9645
    %v9691 = vadd.f32 %v9523, %v9648
    %v9692 = vadd.f32 %v9524, %v9651
    %v9693 = vadd.f32 %v9525, %v9654
    %v9694 = vadd.f32 %v9526, %v9657
    %v9695 = vadd.f32 %v9527, %v9660
    %v9696 = vadd.f32 %v9528, %v9663
    %v9697 = vadd.f32 %v9529, %v9666
    %v9698 = vadd.f32 %v9530, %v9669
    %v9699 = vadd.f32 %v9531, %v9672
    %v9700 = vadd.f32 %v9532, %v9675
    %v9701 = vadd.f32 %v9533, %v9678
    %v9702 = vadd.f32 %v9534, %v9681
    %v9703 = vadd.f32 %v9535, %v9684
    %v9704 = vadd.f32 %v9536, %v9687
    %s9705 = scalar_lea.vmem %s15, 160
    %v9706 = vld [vmem:[%s9705] sm:$0xff]
    %v9707 = vld [vmem:[%s9705 + $0x8] sm:$0xff]
    %v9708 = vld [vmem:[%s9705 + $0x10] sm:$0xff]
    %v9709 = vld [vmem:[%s9705 + $0x18] sm:$0xff]
    %9710 = vmatpush.msra.mxu0 0.0
    %9711 = vmatpush.msra.mxu0 0.0
    %9712 = vmatpush.msra.mxu0 0.0
    %9713 = vmatpush.msra.mxu0 0.0
    %9714 = vmatpush.msra.mxu0 0.0
    %9715 = vmatpush.msra.mxu0 0.0
    %9716 = vmatpush.msra.mxu0 0.0
    %9717 = vmatpush.msra.mxu0 0.0
    %9718 = vmatpush.msra.mxu0 0.0
    %9719 = vmatpush.msra.mxu0 0.0
    %9720 = vmatpush.msra.mxu0 0.0
    %9721 = vmatpush.msra.mxu0 0.0
    %9722 = vmatpush.msra.mxu0 %v9709
    %9723 = vmatpush.msra.mxu0 %v9708
    %9724 = vmatpush.msra.mxu0 %v9707
    %9725 = vmatpush.msra.mxu0 %v9706
    %9726 = vmatmul.f32.gmra.mxu0 %v8824
    %v9727 = vpop.f32.mrf.mxu0
    %v9728 = vadd.f32 0.0, %v9727
    %9729 = vmatmul.f32.gmra.mxu0 %v8827
    %v9730 = vpop.f32.mrf.mxu0
    %v9731 = vadd.f32 0.0, %v9730
    %9732 = vmatmul.f32.gmra.mxu0 %v8830
    %v9733 = vpop.f32.mrf.mxu0
    %v9734 = vadd.f32 0.0, %v9733
    %9735 = vmatmul.f32.gmra.mxu0 %v8833
    %v9736 = vpop.f32.mrf.mxu0
    %v9737 = vadd.f32 0.0, %v9736
    %9738 = vmatmul.f32.gmra.mxu0 %v8836
    %v9739 = vpop.f32.mrf.mxu0
    %v9740 = vadd.f32 0.0, %v9739
    %9741 = vmatmul.f32.gmra.mxu0 %v8839
    %v9742 = vpop.f32.mrf.mxu0
    %v9743 = vadd.f32 0.0, %v9742
    %9744 = vmatmul.f32.gmra.mxu0 %v8842
    %v9745 = vpop.f32.mrf.mxu0
    %v9746 = vadd.f32 0.0, %v9745
    %9747 = vmatmul.f32.gmra.mxu0 %v8845
    %v9748 = vpop.f32.mrf.mxu0
    %v9749 = vadd.f32 0.0, %v9748
    %9750 = vmatmul.f32.gmra.mxu0 %v8848
    %v9751 = vpop.f32.mrf.mxu0
    %v9752 = vadd.f32 0.0, %v9751
    %9753 = vmatmul.f32.gmra.mxu0 %v8851
    %v9754 = vpop.f32.mrf.mxu0
    %v9755 = vadd.f32 0.0, %v9754
    %9756 = vmatmul.f32.gmra.mxu0 %v8854
    %v9757 = vpop.f32.mrf.mxu0
    %v9758 = vadd.f32 0.0, %v9757
    %9759 = vmatmul.f32.gmra.mxu0 %v8857
    %v9760 = vpop.f32.mrf.mxu0
    %v9761 = vadd.f32 0.0, %v9760
    %9762 = vmatmul.f32.gmra.mxu0 %v8860
    %v9763 = vpop.f32.mrf.mxu0
    %v9764 = vadd.f32 0.0, %v9763
    %9765 = vmatmul.f32.gmra.mxu0 %v8863
    %v9766 = vpop.f32.mrf.mxu0
    %v9767 = vadd.f32 0.0, %v9766
    %9768 = vmatmul.f32.gmra.mxu0 %v8866
    %v9769 = vpop.f32.mrf.mxu0
    %v9770 = vadd.f32 0.0, %v9769
    %9771 = vmatmul.f32.gmra.mxu0 %v8869
    %v9772 = vpop.f32.mrf.mxu0
    %v9773 = vadd.f32 0.0, %v9772
    %9774 = vdwg.mxu0
    %s9775 = scalar_lea.vmem [#allocation9], 640
    %v9776 = vld [vmem:[%s9775] sm:$0xff]
    %v9777 = vld [vmem:[%s9775 + $0x8] sm:$0xff]
    %v9778 = vld [vmem:[%s9775 + $0x10] sm:$0xff]
    %v9779 = vld [vmem:[%s9775 + $0x18] sm:$0xff]
    %v9780 = vld [vmem:[%s9775 + $0x20] sm:$0xff]
    %v9781 = vld [vmem:[%s9775 + $0x28] sm:$0xff]
    %v9782 = vld [vmem:[%s9775 + $0x30] sm:$0xff]
    %v9783 = vld [vmem:[%s9775 + $0x38] sm:$0xff]
    %v9784 = vld [vmem:[%s9775 + $0x40] sm:$0xff]
    %v9785 = vld [vmem:[%s9775 + $0x48] sm:$0xff]
    %v9786 = vld [vmem:[%s9775 + $0x50] sm:$0xff]
    %v9787 = vld [vmem:[%s9775 + $0x58] sm:$0xff]
    %v9788 = vld [vmem:[%s9775 + $0x60] sm:$0xff]
    %v9789 = vld [vmem:[%s9775 + $0x68] sm:$0xff]
    %v9790 = vld [vmem:[%s9775 + $0x70] sm:$0xff]
    %v9791 = vld [vmem:[%s9775 + $0x78] sm:$0xff]
    %9792 = vmatpush.msra.mxu0 %v9773
    %9793 = vmatpush.msra.mxu0 %v9770
    %9794 = vmatpush.msra.mxu0 %v9767
    %9795 = vmatpush.msra.mxu0 %v9764
    %9796 = vmatpush.msra.mxu0 %v9761
    %9797 = vmatpush.msra.mxu0 %v9758
    %9798 = vmatpush.msra.mxu0 %v9755
    %9799 = vmatpush.msra.mxu0 %v9752
    %9800 = vmatpush.msra.mxu0 %v9749
    %9801 = vmatpush.msra.mxu0 %v9746
    %9802 = vmatpush.msra.mxu0 %v9743
    %9803 = vmatpush.msra.mxu0 %v9740
    %9804 = vmatpush.msra.mxu0 %v9737
    %9805 = vmatpush.msra.mxu0 %v9734
    %9806 = vmatpush.msra.mxu0 %v9731
    %9807 = vmatpush.msra.mxu0 %v9728
    %9808 = vmatmul.f32.gmra.mxu0 %v9776
    %v9809 = vpop.f32.mrf.mxu0
    %v9810 = vadd.f32 0.0, %v9809
    %9811 = vmatmul.f32.gmra.mxu0 %v9777
    %v9812 = vpop.f32.mrf.mxu0
    %v9813 = vadd.f32 0.0, %v9812
    %9814 = vmatmul.f32.gmra.mxu0 %v9778
    %v9815 = vpop.f32.mrf.mxu0
    %v9816 = vadd.f32 0.0, %v9815
    %9817 = vmatmul.f32.gmra.mxu0 %v9779
    %v9818 = vpop.f32.mrf.mxu0
    %v9819 = vadd.f32 0.0, %v9818
    %9820 = vmatmul.f32.gmra.mxu0 %v9780
    %v9821 = vpop.f32.mrf.mxu0
    %v9822 = vadd.f32 0.0, %v9821
    %9823 = vmatmul.f32.gmra.mxu0 %v9781
    %v9824 = vpop.f32.mrf.mxu0
    %v9825 = vadd.f32 0.0, %v9824
    %9826 = vmatmul.f32.gmra.mxu0 %v9782
    %v9827 = vpop.f32.mrf.mxu0
    %v9828 = vadd.f32 0.0, %v9827
    %9829 = vmatmul.f32.gmra.mxu0 %v9783
    %v9830 = vpop.f32.mrf.mxu0
    %v9831 = vadd.f32 0.0, %v9830
    %9832 = vmatmul.f32.gmra.mxu0 %v9784
    %v9833 = vpop.f32.mrf.mxu0
    %v9834 = vadd.f32 0.0, %v9833
    %9835 = vmatmul.f32.gmra.mxu0 %v9785
    %v9836 = vpop.f32.mrf.mxu0
    %v9837 = vadd.f32 0.0, %v9836
    %9838 = vmatmul.f32.gmra.mxu0 %v9786
    %v9839 = vpop.f32.mrf.mxu0
    %v9840 = vadd.f32 0.0, %v9839
    %9841 = vmatmul.f32.gmra.mxu0 %v9787
    %v9842 = vpop.f32.mrf.mxu0
    %v9843 = vadd.f32 0.0, %v9842
    %9844 = vmatmul.f32.gmra.mxu0 %v9788
    %v9845 = vpop.f32.mrf.mxu0
    %v9846 = vadd.f32 0.0, %v9845
    %9847 = vmatmul.f32.gmra.mxu0 %v9789
    %v9848 = vpop.f32.mrf.mxu0
    %v9849 = vadd.f32 0.0, %v9848
    %9850 = vmatmul.f32.gmra.mxu0 %v9790
    %v9851 = vpop.f32.mrf.mxu0
    %v9852 = vadd.f32 0.0, %v9851
    %9853 = vmatmul.f32.gmra.mxu0 %v9791
    %v9854 = vpop.f32.mrf.mxu0
    %v9855 = vadd.f32 0.0, %v9854
    %9856 = vdwg.mxu0
    %v9857 = vadd.f32 %v9689, %v9810
    %v9858 = vadd.f32 %v9690, %v9813
    %v9859 = vadd.f32 %v9691, %v9816
    %v9860 = vadd.f32 %v9692, %v9819
    %v9861 = vadd.f32 %v9693, %v9822
    %v9862 = vadd.f32 %v9694, %v9825
    %v9863 = vadd.f32 %v9695, %v9828
    %v9864 = vadd.f32 %v9696, %v9831
    %v9865 = vadd.f32 %v9697, %v9834
    %v9866 = vadd.f32 %v9698, %v9837
    %v9867 = vadd.f32 %v9699, %v9840
    %v9868 = vadd.f32 %v9700, %v9843
    %v9869 = vadd.f32 %v9701, %v9846
    %v9870 = vadd.f32 %v9702, %v9849
    %v9871 = vadd.f32 %v9703, %v9852
    %v9872 = vadd.f32 %v9704, %v9855
    %s9873 = scalar_lea.vmem %s15, 192
    %v9874 = vld [vmem:[%s9873] sm:$0xff]
    %v9875 = vld [vmem:[%s9873 + $0x8] sm:$0xff]
    %v9876 = vld [vmem:[%s9873 + $0x10] sm:$0xff]
    %v9877 = vld [vmem:[%s9873 + $0x18] sm:$0xff]
    %9878 = vmatpush.msra.mxu0 0.0
    %9879 = vmatpush.msra.mxu0 0.0
    %9880 = vmatpush.msra.mxu0 0.0
    %9881 = vmatpush.msra.mxu0 0.0
    %9882 = vmatpush.msra.mxu0 0.0
    %9883 = vmatpush.msra.mxu0 0.0
    %9884 = vmatpush.msra.mxu0 0.0
    %9885 = vmatpush.msra.mxu0 0.0
    %9886 = vmatpush.msra.mxu0 0.0
    %9887 = vmatpush.msra.mxu0 0.0
    %9888 = vmatpush.msra.mxu0 0.0
    %9889 = vmatpush.msra.mxu0 0.0
    %9890 = vmatpush.msra.mxu0 %v9877
    %9891 = vmatpush.msra.mxu0 %v9876
    %9892 = vmatpush.msra.mxu0 %v9875
    %9893 = vmatpush.msra.mxu0 %v9874
    %9894 = vmatmul.f32.gmra.mxu0 %v8824
    %v9895 = vpop.f32.mrf.mxu0
    %v9896 = vadd.f32 0.0, %v9895
    %9897 = vmatmul.f32.gmra.mxu0 %v8827
    %v9898 = vpop.f32.mrf.mxu0
    %v9899 = vadd.f32 0.0, %v9898
    %9900 = vmatmul.f32.gmra.mxu0 %v8830
    %v9901 = vpop.f32.mrf.mxu0
    %v9902 = vadd.f32 0.0, %v9901
    %9903 = vmatmul.f32.gmra.mxu0 %v8833
    %v9904 = vpop.f32.mrf.mxu0
    %v9905 = vadd.f32 0.0, %v9904
    %9906 = vmatmul.f32.gmra.mxu0 %v8836
    %v9907 = vpop.f32.mrf.mxu0
    %v9908 = vadd.f32 0.0, %v9907
    %9909 = vmatmul.f32.gmra.mxu0 %v8839
    %v9910 = vpop.f32.mrf.mxu0
    %v9911 = vadd.f32 0.0, %v9910
    %9912 = vmatmul.f32.gmra.mxu0 %v8842
    %v9913 = vpop.f32.mrf.mxu0
    %v9914 = vadd.f32 0.0, %v9913
    %9915 = vmatmul.f32.gmra.mxu0 %v8845
    %v9916 = vpop.f32.mrf.mxu0
    %v9917 = vadd.f32 0.0, %v9916
    %9918 = vmatmul.f32.gmra.mxu0 %v8848
    %v9919 = vpop.f32.mrf.mxu0
    %v9920 = vadd.f32 0.0, %v9919
    %9921 = vmatmul.f32.gmra.mxu0 %v8851
    %v9922 = vpop.f32.mrf.mxu0
    %v9923 = vadd.f32 0.0, %v9922
    %9924 = vmatmul.f32.gmra.mxu0 %v8854
    %v9925 = vpop.f32.mrf.mxu0
    %v9926 = vadd.f32 0.0, %v9925
    %9927 = vmatmul.f32.gmra.mxu0 %v8857
    %v9928 = vpop.f32.mrf.mxu0
    %v9929 = vadd.f32 0.0, %v9928
    %9930 = vmatmul.f32.gmra.mxu0 %v8860
    %v9931 = vpop.f32.mrf.mxu0
    %v9932 = vadd.f32 0.0, %v9931
    %9933 = vmatmul.f32.gmra.mxu0 %v8863
    %v9934 = vpop.f32.mrf.mxu0
    %v9935 = vadd.f32 0.0, %v9934
    %9936 = vmatmul.f32.gmra.mxu0 %v8866
    %v9937 = vpop.f32.mrf.mxu0
    %v9938 = vadd.f32 0.0, %v9937
    %9939 = vmatmul.f32.gmra.mxu0 %v8869
    %v9940 = vpop.f32.mrf.mxu0
    %v9941 = vadd.f32 0.0, %v9940
    %9942 = vdwg.mxu0
    %s9943 = scalar_lea.vmem [#allocation9], 768
    %v9944 = vld [vmem:[%s9943] sm:$0xff]
    %v9945 = vld [vmem:[%s9943 + $0x8] sm:$0xff]
    %v9946 = vld [vmem:[%s9943 + $0x10] sm:$0xff]
    %v9947 = vld [vmem:[%s9943 + $0x18] sm:$0xff]
    %v9948 = vld [vmem:[%s9943 + $0x20] sm:$0xff]
    %v9949 = vld [vmem:[%s9943 + $0x28] sm:$0xff]
    %v9950 = vld [vmem:[%s9943 + $0x30] sm:$0xff]
    %v9951 = vld [vmem:[%s9943 + $0x38] sm:$0xff]
    %v9952 = vld [vmem:[%s9943 + $0x40] sm:$0xff]
    %v9953 = vld [vmem:[%s9943 + $0x48] sm:$0xff]
    %v9954 = vld [vmem:[%s9943 + $0x50] sm:$0xff]
    %v9955 = vld [vmem:[%s9943 + $0x58] sm:$0xff]
    %v9956 = vld [vmem:[%s9943 + $0x60] sm:$0xff]
    %v9957 = vld [vmem:[%s9943 + $0x68] sm:$0xff]
    %v9958 = vld [vmem:[%s9943 + $0x70] sm:$0xff]
    %v9959 = vld [vmem:[%s9943 + $0x78] sm:$0xff]
    %9960 = vmatpush.msra.mxu0 %v9941
    %9961 = vmatpush.msra.mxu0 %v9938
    %9962 = vmatpush.msra.mxu0 %v9935
    %9963 = vmatpush.msra.mxu0 %v9932
    %9964 = vmatpush.msra.mxu0 %v9929
    %9965 = vmatpush.msra.mxu0 %v9926
    %9966 = vmatpush.msra.mxu0 %v9923
    %9967 = vmatpush.msra.mxu0 %v9920
    %9968 = vmatpush.msra.mxu0 %v9917
    %9969 = vmatpush.msra.mxu0 %v9914
    %9970 = vmatpush.msra.mxu0 %v9911
    %9971 = vmatpush.msra.mxu0 %v9908
    %9972 = vmatpush.msra.mxu0 %v9905
    %9973 = vmatpush.msra.mxu0 %v9902
    %9974 = vmatpush.msra.mxu0 %v9899
    %9975 = vmatpush.msra.mxu0 %v9896
    %9976 = vmatmul.f32.gmra.mxu0 %v9944
    %v9977 = vpop.f32.mrf.mxu0
    %v9978 = vadd.f32 0.0, %v9977
    %9979 = vmatmul.f32.gmra.mxu0 %v9945
    %v9980 = vpop.f32.mrf.mxu0
    %v9981 = vadd.f32 0.0, %v9980
    %9982 = vmatmul.f32.gmra.mxu0 %v9946
    %v9983 = vpop.f32.mrf.mxu0
    %v9984 = vadd.f32 0.0, %v9983
    %9985 = vmatmul.f32.gmra.mxu0 %v9947
    %v9986 = vpop.f32.mrf.mxu0
    %v9987 = vadd.f32 0.0, %v9986
    %9988 = vmatmul.f32.gmra.mxu0 %v9948
    %v9989 = vpop.f32.mrf.mxu0
    %v9990 = vadd.f32 0.0, %v9989
    %9991 = vmatmul.f32.gmra.mxu0 %v9949
    %v9992 = vpop.f32.mrf.mxu0
    %v9993 = vadd.f32 0.0, %v9992
    %9994 = vmatmul.f32.gmra.mxu0 %v9950
    %v9995 = vpop.f32.mrf.mxu0
    %v9996 = vadd.f32 0.0, %v9995
    %9997 = vmatmul.f32.gmra.mxu0 %v9951
    %v9998 = vpop.f32.mrf.mxu0
    %v9999 = vadd.f32 0.0, %v9998
    %10000 = vmatmul.f32.gmra.mxu0 %v9952
    %v10001 = vpop.f32.mrf.mxu0
    %v10002 = vadd.f32 0.0, %v10001
    %10003 = vmatmul.f32.gmra.mxu0 %v9953
    %v10004 = vpop.f32.mrf.mxu0
    %v10005 = vadd.f32 0.0, %v10004
    %10006 = vmatmul.f32.gmra.mxu0 %v9954
    %v10007 = vpop.f32.mrf.mxu0
    %v10008 = vadd.f32 0.0, %v10007
    %10009 = vmatmul.f32.gmra.mxu0 %v9955
    %v10010 = vpop.f32.mrf.mxu0
    %v10011 = vadd.f32 0.0, %v10010
    %10012 = vmatmul.f32.gmra.mxu0 %v9956
    %v10013 = vpop.f32.mrf.mxu0
    %v10014 = vadd.f32 0.0, %v10013
    %10015 = vmatmul.f32.gmra.mxu0 %v9957
    %v10016 = vpop.f32.mrf.mxu0
    %v10017 = vadd.f32 0.0, %v10016
    %10018 = vmatmul.f32.gmra.mxu0 %v9958
    %v10019 = vpop.f32.mrf.mxu0
    %v10020 = vadd.f32 0.0, %v10019
    %10021 = vmatmul.f32.gmra.mxu0 %v9959
    %v10022 = vpop.f32.mrf.mxu0
    %v10023 = vadd.f32 0.0, %v10022
    %10024 = vdwg.mxu0
    %v10025 = vadd.f32 %v9857, %v9978
    %v10026 = vadd.f32 %v9858, %v9981
    %v10027 = vadd.f32 %v9859, %v9984
    %v10028 = vadd.f32 %v9860, %v9987
    %v10029 = vadd.f32 %v9861, %v9990
    %v10030 = vadd.f32 %v9862, %v9993
    %v10031 = vadd.f32 %v9863, %v9996
    %v10032 = vadd.f32 %v9864, %v9999
    %v10033 = vadd.f32 %v9865, %v10002
    %v10034 = vadd.f32 %v9866, %v10005
    %v10035 = vadd.f32 %v9867, %v10008
    %v10036 = vadd.f32 %v9868, %v10011
    %v10037 = vadd.f32 %v9869, %v10014
    %v10038 = vadd.f32 %v9870, %v10017
    %v10039 = vadd.f32 %v9871, %v10020
    %v10040 = vadd.f32 %v9872, %v10023
    %s10041 = scalar_lea.vmem %s15, 224
    %v10042 = vld [vmem:[%s10041] sm:$0xff]
    %v10043 = vld [vmem:[%s10041 + $0x8] sm:$0xff]
    %v10044 = vld [vmem:[%s10041 + $0x10] sm:$0xff]
    %v10045 = vld [vmem:[%s10041 + $0x18] sm:$0xff]
    %10046 = vmatpush.msra.mxu0 0.0
    %10047 = vmatpush.msra.mxu0 0.0
    %10048 = vmatpush.msra.mxu0 0.0
    %10049 = vmatpush.msra.mxu0 0.0
    %10050 = vmatpush.msra.mxu0 0.0
    %10051 = vmatpush.msra.mxu0 0.0
    %10052 = vmatpush.msra.mxu0 0.0
    %10053 = vmatpush.msra.mxu0 0.0
    %10054 = vmatpush.msra.mxu0 0.0
    %10055 = vmatpush.msra.mxu0 0.0
    %10056 = vmatpush.msra.mxu0 0.0
    %10057 = vmatpush.msra.mxu0 0.0
    %10058 = vmatpush.msra.mxu0 %v10045
    %10059 = vmatpush.msra.mxu0 %v10044
    %10060 = vmatpush.msra.mxu0 %v10043
    %10061 = vmatpush.msra.mxu0 %v10042
    %10062 = vmatmul.f32.gmra.mxu0 %v8824
    %v10063 = vpop.f32.mrf.mxu0
    %v10064 = vadd.f32 0.0, %v10063
    %10065 = vmatmul.f32.gmra.mxu0 %v8827
    %v10066 = vpop.f32.mrf.mxu0
    %v10067 = vadd.f32 0.0, %v10066
    %10068 = vmatmul.f32.gmra.mxu0 %v8830
    %v10069 = vpop.f32.mrf.mxu0
    %v10070 = vadd.f32 0.0, %v10069
    %10071 = vmatmul.f32.gmra.mxu0 %v8833
    %v10072 = vpop.f32.mrf.mxu0
    %v10073 = vadd.f32 0.0, %v10072
    %10074 = vmatmul.f32.gmra.mxu0 %v8836
    %v10075 = vpop.f32.mrf.mxu0
    %v10076 = vadd.f32 0.0, %v10075
    %10077 = vmatmul.f32.gmra.mxu0 %v8839
    %v10078 = vpop.f32.mrf.mxu0
    %v10079 = vadd.f32 0.0, %v10078
    %10080 = vmatmul.f32.gmra.mxu0 %v8842
    %v10081 = vpop.f32.mrf.mxu0
    %v10082 = vadd.f32 0.0, %v10081
    %10083 = vmatmul.f32.gmra.mxu0 %v8845
    %v10084 = vpop.f32.mrf.mxu0
    %v10085 = vadd.f32 0.0, %v10084
    %10086 = vmatmul.f32.gmra.mxu0 %v8848
    %v10087 = vpop.f32.mrf.mxu0
    %v10088 = vadd.f32 0.0, %v10087
    %10089 = vmatmul.f32.gmra.mxu0 %v8851
    %v10090 = vpop.f32.mrf.mxu0
    %v10091 = vadd.f32 0.0, %v10090
    %10092 = vmatmul.f32.gmra.mxu0 %v8854
    %v10093 = vpop.f32.mrf.mxu0
    %v10094 = vadd.f32 0.0, %v10093
    %10095 = vmatmul.f32.gmra.mxu0 %v8857
    %v10096 = vpop.f32.mrf.mxu0
    %v10097 = vadd.f32 0.0, %v10096
    %10098 = vmatmul.f32.gmra.mxu0 %v8860
    %v10099 = vpop.f32.mrf.mxu0
    %v10100 = vadd.f32 0.0, %v10099
    %10101 = vmatmul.f32.gmra.mxu0 %v8863
    %v10102 = vpop.f32.mrf.mxu0
    %v10103 = vadd.f32 0.0, %v10102
    %10104 = vmatmul.f32.gmra.mxu0 %v8866
    %v10105 = vpop.f32.mrf.mxu0
    %v10106 = vadd.f32 0.0, %v10105
    %10107 = vmatmul.f32.gmra.mxu0 %v8869
    %v10108 = vpop.f32.mrf.mxu0
    %v10109 = vadd.f32 0.0, %v10108
    %10110 = vdwg.mxu0
    %s10111 = scalar_lea.vmem [#allocation9], 896
    %v10112 = vld [vmem:[%s10111] sm:$0xff]
    %v10113 = vld [vmem:[%s10111 + $0x8] sm:$0xff]
    %v10114 = vld [vmem:[%s10111 + $0x10] sm:$0xff]
    %v10115 = vld [vmem:[%s10111 + $0x18] sm:$0xff]
    %v10116 = vld [vmem:[%s10111 + $0x20] sm:$0xff]
    %v10117 = vld [vmem:[%s10111 + $0x28] sm:$0xff]
    %v10118 = vld [vmem:[%s10111 + $0x30] sm:$0xff]
    %v10119 = vld [vmem:[%s10111 + $0x38] sm:$0xff]
    %v10120 = vld [vmem:[%s10111 + $0x40] sm:$0xff]
    %v10121 = vld [vmem:[%s10111 + $0x48] sm:$0xff]
    %v10122 = vld [vmem:[%s10111 + $0x50] sm:$0xff]
    %v10123 = vld [vmem:[%s10111 + $0x58] sm:$0xff]
    %v10124 = vld [vmem:[%s10111 + $0x60] sm:$0xff]
    %v10125 = vld [vmem:[%s10111 + $0x68] sm:$0xff]
    %v10126 = vld [vmem:[%s10111 + $0x70] sm:$0xff]
    %v10127 = vld [vmem:[%s10111 + $0x78] sm:$0xff]
    %10128 = vmatpush.msra.mxu0 %v10109
    %10129 = vmatpush.msra.mxu0 %v10106
    %10130 = vmatpush.msra.mxu0 %v10103
    %10131 = vmatpush.msra.mxu0 %v10100
    %10132 = vmatpush.msra.mxu0 %v10097
    %10133 = vmatpush.msra.mxu0 %v10094
    %10134 = vmatpush.msra.mxu0 %v10091
    %10135 = vmatpush.msra.mxu0 %v10088
    %10136 = vmatpush.msra.mxu0 %v10085
    %10137 = vmatpush.msra.mxu0 %v10082
    %10138 = vmatpush.msra.mxu0 %v10079
    %10139 = vmatpush.msra.mxu0 %v10076
    %10140 = vmatpush.msra.mxu0 %v10073
    %10141 = vmatpush.msra.mxu0 %v10070
    %10142 = vmatpush.msra.mxu0 %v10067
    %10143 = vmatpush.msra.mxu0 %v10064
    %10144 = vmatmul.f32.gmra.mxu0 %v10112
    %v10145 = vpop.f32.mrf.mxu0
    %v10146 = vadd.f32 0.0, %v10145
    %10147 = vmatmul.f32.gmra.mxu0 %v10113
    %v10148 = vpop.f32.mrf.mxu0
    %v10149 = vadd.f32 0.0, %v10148
    %10150 = vmatmul.f32.gmra.mxu0 %v10114
    %v10151 = vpop.f32.mrf.mxu0
    %v10152 = vadd.f32 0.0, %v10151
    %10153 = vmatmul.f32.gmra.mxu0 %v10115
    %v10154 = vpop.f32.mrf.mxu0
    %v10155 = vadd.f32 0.0, %v10154
    %10156 = vmatmul.f32.gmra.mxu0 %v10116
    %v10157 = vpop.f32.mrf.mxu0
    %v10158 = vadd.f32 0.0, %v10157
    %10159 = vmatmul.f32.gmra.mxu0 %v10117
    %v10160 = vpop.f32.mrf.mxu0
    %v10161 = vadd.f32 0.0, %v10160
    %10162 = vmatmul.f32.gmra.mxu0 %v10118
    %v10163 = vpop.f32.mrf.mxu0
    %v10164 = vadd.f32 0.0, %v10163
    %10165 = vmatmul.f32.gmra.mxu0 %v10119
    %v10166 = vpop.f32.mrf.mxu0
    %v10167 = vadd.f32 0.0, %v10166
    %10168 = vmatmul.f32.gmra.mxu0 %v10120
    %v10169 = vpop.f32.mrf.mxu0
    %v10170 = vadd.f32 0.0, %v10169
    %10171 = vmatmul.f32.gmra.mxu0 %v10121
    %v10172 = vpop.f32.mrf.mxu0
    %v10173 = vadd.f32 0.0, %v10172
    %10174 = vmatmul.f32.gmra.mxu0 %v10122
    %v10175 = vpop.f32.mrf.mxu0
    %v10176 = vadd.f32 0.0, %v10175
    %10177 = vmatmul.f32.gmra.mxu0 %v10123
    %v10178 = vpop.f32.mrf.mxu0
    %v10179 = vadd.f32 0.0, %v10178
    %10180 = vmatmul.f32.gmra.mxu0 %v10124
    %v10181 = vpop.f32.mrf.mxu0
    %v10182 = vadd.f32 0.0, %v10181
    %10183 = vmatmul.f32.gmra.mxu0 %v10125
    %v10184 = vpop.f32.mrf.mxu0
    %v10185 = vadd.f32 0.0, %v10184
    %10186 = vmatmul.f32.gmra.mxu0 %v10126
    %v10187 = vpop.f32.mrf.mxu0
    %v10188 = vadd.f32 0.0, %v10187
    %10189 = vmatmul.f32.gmra.mxu0 %v10127
    %v10190 = vpop.f32.mrf.mxu0
    %v10191 = vadd.f32 0.0, %v10190
    %10192 = vdwg.mxu0
    %v10193 = vadd.f32 %v10025, %v10146
    %v10194 = vadd.f32 %v10026, %v10149
    %v10195 = vadd.f32 %v10027, %v10152
    %v10196 = vadd.f32 %v10028, %v10155
    %v10197 = vadd.f32 %v10029, %v10158
    %v10198 = vadd.f32 %v10030, %v10161
    %v10199 = vadd.f32 %v10031, %v10164
    %v10200 = vadd.f32 %v10032, %v10167
    %v10201 = vadd.f32 %v10033, %v10170
    %v10202 = vadd.f32 %v10034, %v10173
    %v10203 = vadd.f32 %v10035, %v10176
    %v10204 = vadd.f32 %v10036, %v10179
    %v10205 = vadd.f32 %v10037, %v10182
    %v10206 = vadd.f32 %v10038, %v10185
    %v10207 = vadd.f32 %v10039, %v10188
    %v10208 = vadd.f32 %v10040, %v10191
    %s10209 = scalar_lea.vmem %s15, 256
    %v10210 = vld [vmem:[%s10209] sm:$0xff]
    %v10211 = vld [vmem:[%s10209 + $0x8] sm:$0xff]
    %v10212 = vld [vmem:[%s10209 + $0x10] sm:$0xff]
    %v10213 = vld [vmem:[%s10209 + $0x18] sm:$0xff]
    %10214 = vmatpush.msra.mxu0 0.0
    %10215 = vmatpush.msra.mxu0 0.0
    %10216 = vmatpush.msra.mxu0 0.0
    %10217 = vmatpush.msra.mxu0 0.0
    %10218 = vmatpush.msra.mxu0 0.0
    %10219 = vmatpush.msra.mxu0 0.0
    %10220 = vmatpush.msra.mxu0 0.0
    %10221 = vmatpush.msra.mxu0 0.0
    %10222 = vmatpush.msra.mxu0 0.0
    %10223 = vmatpush.msra.mxu0 0.0
    %10224 = vmatpush.msra.mxu0 0.0
    %10225 = vmatpush.msra.mxu0 0.0
    %10226 = vmatpush.msra.mxu0 %v10213
    %10227 = vmatpush.msra.mxu0 %v10212
    %10228 = vmatpush.msra.mxu0 %v10211
    %10229 = vmatpush.msra.mxu0 %v10210
    %10230 = vmatmul.f32.gmra.mxu0 %v8824
    %v10231 = vpop.f32.mrf.mxu0
    %v10232 = vadd.f32 0.0, %v10231
    %10233 = vmatmul.f32.gmra.mxu0 %v8827
    %v10234 = vpop.f32.mrf.mxu0
    %v10235 = vadd.f32 0.0, %v10234
    %10236 = vmatmul.f32.gmra.mxu0 %v8830
    %v10237 = vpop.f32.mrf.mxu0
    %v10238 = vadd.f32 0.0, %v10237
    %10239 = vmatmul.f32.gmra.mxu0 %v8833
    %v10240 = vpop.f32.mrf.mxu0
    %v10241 = vadd.f32 0.0, %v10240
    %10242 = vmatmul.f32.gmra.mxu0 %v8836
    %v10243 = vpop.f32.mrf.mxu0
    %v10244 = vadd.f32 0.0, %v10243
    %10245 = vmatmul.f32.gmra.mxu0 %v8839
    %v10246 = vpop.f32.mrf.mxu0
    %v10247 = vadd.f32 0.0, %v10246
    %10248 = vmatmul.f32.gmra.mxu0 %v8842
    %v10249 = vpop.f32.mrf.mxu0
    %v10250 = vadd.f32 0.0, %v10249
    %10251 = vmatmul.f32.gmra.mxu0 %v8845
    %v10252 = vpop.f32.mrf.mxu0
    %v10253 = vadd.f32 0.0, %v10252
    %10254 = vmatmul.f32.gmra.mxu0 %v8848
    %v10255 = vpop.f32.mrf.mxu0
    %v10256 = vadd.f32 0.0, %v10255
    %10257 = vmatmul.f32.gmra.mxu0 %v8851
    %v10258 = vpop.f32.mrf.mxu0
    %v10259 = vadd.f32 0.0, %v10258
    %10260 = vmatmul.f32.gmra.mxu0 %v8854
    %v10261 = vpop.f32.mrf.mxu0
    %v10262 = vadd.f32 0.0, %v10261
    %10263 = vmatmul.f32.gmra.mxu0 %v8857
    %v10264 = vpop.f32.mrf.mxu0
    %v10265 = vadd.f32 0.0, %v10264
    %10266 = vmatmul.f32.gmra.mxu0 %v8860
    %v10267 = vpop.f32.mrf.mxu0
    %v10268 = vadd.f32 0.0, %v10267
    %10269 = vmatmul.f32.gmra.mxu0 %v8863
    %v10270 = vpop.f32.mrf.mxu0
    %v10271 = vadd.f32 0.0, %v10270
    %10272 = vmatmul.f32.gmra.mxu0 %v8866
    %v10273 = vpop.f32.mrf.mxu0
    %v10274 = vadd.f32 0.0, %v10273
    %10275 = vmatmul.f32.gmra.mxu0 %v8869
    %v10276 = vpop.f32.mrf.mxu0
    %v10277 = vadd.f32 0.0, %v10276
    %10278 = vdwg.mxu0
    %s10279 = scalar_lea.vmem [#allocation9], 1024
    %v10280 = vld [vmem:[%s10279] sm:$0xff]
    %v10281 = vld [vmem:[%s10279 + $0x8] sm:$0xff]
    %v10282 = vld [vmem:[%s10279 + $0x10] sm:$0xff]
    %v10283 = vld [vmem:[%s10279 + $0x18] sm:$0xff]
    %v10284 = vld [vmem:[%s10279 + $0x20] sm:$0xff]
    %v10285 = vld [vmem:[%s10279 + $0x28] sm:$0xff]
    %v10286 = vld [vmem:[%s10279 + $0x30] sm:$0xff]
    %v10287 = vld [vmem:[%s10279 + $0x38] sm:$0xff]
    %v10288 = vld [vmem:[%s10279 + $0x40] sm:$0xff]
    %v10289 = vld [vmem:[%s10279 + $0x48] sm:$0xff]
    %v10290 = vld [vmem:[%s10279 + $0x50] sm:$0xff]
    %v10291 = vld [vmem:[%s10279 + $0x58] sm:$0xff]
    %v10292 = vld [vmem:[%s10279 + $0x60] sm:$0xff]
    %v10293 = vld [vmem:[%s10279 + $0x68] sm:$0xff]
    %v10294 = vld [vmem:[%s10279 + $0x70] sm:$0xff]
    %v10295 = vld [vmem:[%s10279 + $0x78] sm:$0xff]
    %10296 = vmatpush.msra.mxu0 %v10277
    %10297 = vmatpush.msra.mxu0 %v10274
    %10298 = vmatpush.msra.mxu0 %v10271
    %10299 = vmatpush.msra.mxu0 %v10268
    %10300 = vmatpush.msra.mxu0 %v10265
    %10301 = vmatpush.msra.mxu0 %v10262
    %10302 = vmatpush.msra.mxu0 %v10259
    %10303 = vmatpush.msra.mxu0 %v10256
    %10304 = vmatpush.msra.mxu0 %v10253
    %10305 = vmatpush.msra.mxu0 %v10250
    %10306 = vmatpush.msra.mxu0 %v10247
    %10307 = vmatpush.msra.mxu0 %v10244
    %10308 = vmatpush.msra.mxu0 %v10241
    %10309 = vmatpush.msra.mxu0 %v10238
    %10310 = vmatpush.msra.mxu0 %v10235
    %10311 = vmatpush.msra.mxu0 %v10232
    %10312 = vmatmul.f32.gmra.mxu0 %v10280
    %v10313 = vpop.f32.mrf.mxu0
    %v10314 = vadd.f32 0.0, %v10313
    %10315 = vmatmul.f32.gmra.mxu0 %v10281
    %v10316 = vpop.f32.mrf.mxu0
    %v10317 = vadd.f32 0.0, %v10316
    %10318 = vmatmul.f32.gmra.mxu0 %v10282
    %v10319 = vpop.f32.mrf.mxu0
    %v10320 = vadd.f32 0.0, %v10319
    %10321 = vmatmul.f32.gmra.mxu0 %v10283
    %v10322 = vpop.f32.mrf.mxu0
    %v10323 = vadd.f32 0.0, %v10322
    %10324 = vmatmul.f32.gmra.mxu0 %v10284
    %v10325 = vpop.f32.mrf.mxu0
    %v10326 = vadd.f32 0.0, %v10325
    %10327 = vmatmul.f32.gmra.mxu0 %v10285
    %v10328 = vpop.f32.mrf.mxu0
    %v10329 = vadd.f32 0.0, %v10328
    %10330 = vmatmul.f32.gmra.mxu0 %v10286
    %v10331 = vpop.f32.mrf.mxu0
    %v10332 = vadd.f32 0.0, %v10331
    %10333 = vmatmul.f32.gmra.mxu0 %v10287
    %v10334 = vpop.f32.mrf.mxu0
    %v10335 = vadd.f32 0.0, %v10334
    %10336 = vmatmul.f32.gmra.mxu0 %v10288
    %v10337 = vpop.f32.mrf.mxu0
    %v10338 = vadd.f32 0.0, %v10337
    %10339 = vmatmul.f32.gmra.mxu0 %v10289
    %v10340 = vpop.f32.mrf.mxu0
    %v10341 = vadd.f32 0.0, %v10340
    %10342 = vmatmul.f32.gmra.mxu0 %v10290
    %v10343 = vpop.f32.mrf.mxu0
    %v10344 = vadd.f32 0.0, %v10343
    %10345 = vmatmul.f32.gmra.mxu0 %v10291
    %v10346 = vpop.f32.mrf.mxu0
    %v10347 = vadd.f32 0.0, %v10346
    %10348 = vmatmul.f32.gmra.mxu0 %v10292
    %v10349 = vpop.f32.mrf.mxu0
    %v10350 = vadd.f32 0.0, %v10349
    %10351 = vmatmul.f32.gmra.mxu0 %v10293
    %v10352 = vpop.f32.mrf.mxu0
    %v10353 = vadd.f32 0.0, %v10352
    %10354 = vmatmul.f32.gmra.mxu0 %v10294
    %v10355 = vpop.f32.mrf.mxu0
    %v10356 = vadd.f32 0.0, %v10355
    %10357 = vmatmul.f32.gmra.mxu0 %v10295
    %v10358 = vpop.f32.mrf.mxu0
    %v10359 = vadd.f32 0.0, %v10358
    %10360 = vdwg.mxu0
    %v10361 = vadd.f32 %v10193, %v10314
    %v10362 = vadd.f32 %v10194, %v10317
    %v10363 = vadd.f32 %v10195, %v10320
    %v10364 = vadd.f32 %v10196, %v10323
    %v10365 = vadd.f32 %v10197, %v10326
    %v10366 = vadd.f32 %v10198, %v10329
    %v10367 = vadd.f32 %v10199, %v10332
    %v10368 = vadd.f32 %v10200, %v10335
    %v10369 = vadd.f32 %v10201, %v10338
    %v10370 = vadd.f32 %v10202, %v10341
    %v10371 = vadd.f32 %v10203, %v10344
    %v10372 = vadd.f32 %v10204, %v10347
    %v10373 = vadd.f32 %v10205, %v10350
    %v10374 = vadd.f32 %v10206, %v10353
    %v10375 = vadd.f32 %v10207, %v10356
    %v10376 = vadd.f32 %v10208, %v10359
    %10377 = vst.msk [vmem:[%s71] sm:$0xff] %vm464, %v10361
    %10378 = vst.msk [vmem:[%s71 + $0x8] sm:$0xff] %vm464, %v10362
    %10379 = vst.msk [vmem:[%s71 + $0x10] sm:$0xff] %vm464, %v10363
    %10380 = vst.msk [vmem:[%s71 + $0x18] sm:$0xff] %vm464, %v10364
    %10381 = vst.msk [vmem:[%s71 + $0x20] sm:$0xff] %vm464, %v10365
    %10382 = vst.msk [vmem:[%s71 + $0x28] sm:$0xff] %vm464, %v10366
    %10383 = vst.msk [vmem:[%s71 + $0x30] sm:$0xff] %vm464, %v10367
    %10384 = vst.msk [vmem:[%s71 + $0x38] sm:$0xff] %vm464, %v10368
    %10385 = vst.msk [vmem:[%s71 + $0x40] sm:$0xff] %vm464, %v10369
    %10386 = vst.msk [vmem:[%s71 + $0x48] sm:$0xff] %vm464, %v10370
    %10387 = vst.msk [vmem:[%s71 + $0x50] sm:$0xff] %vm464, %v10371
    %10388 = vst.msk [vmem:[%s71 + $0x58] sm:$0xff] %vm464, %v10372
    %10389 = vst.msk [vmem:[%s71 + $0x60] sm:$0xff] %vm464, %v10373
    %10390 = vst.msk [vmem:[%s71 + $0x68] sm:$0xff] %vm464, %v10374
    %10391 = vst.msk [vmem:[%s71 + $0x70] sm:$0xff] %vm464, %v10375
    %10392 = vst.msk [vmem:[%s71 + $0x78] sm:$0xff] %vm464, %v10376
    // Predicated region
    $region198: #{rstb_forward.1} parent=1 // pred_check
      _
    $region199: #{rstb_forward.1} parent=1 // pred_check_branch
      %10394 = sbr.rel (0) target = $region201
    $region200: #{rstb_forward.1} parent=1 // pred_region
      _
    $region201: #{rstb_forward.1} parent=1 // pred_fallthru
      _
    // Predicated region
    $region202: #{rstb_forward.1} parent=1 // pred_check
      _
    $region203: #{rstb_forward.1} parent=1 // pred_check_branch
      %10396 = sbr.rel (0) target = $region205
    $region204: #{rstb_forward.1} parent=1 // pred_region
      _
    $region205: #{rstb_forward.1} parent=1 // pred_fallthru
      _
    %10397 = vsyncpa [#allocation3], 1
    %10398 = vsyncpa [#allocation5], 1
    %10399 = vsyncpa [#allocation8], 1
    %10400 = vsyncpa [#allocation11], 1
    %10401 = vsyncpa [#allocation14], 1
    %10402 = vsyncpa [#allocation17], 1
    %10403 = vsyncpa [#allocation20], 1
    %10404 = vsyncpa [#allocation23], 1

</llo_original>
